<compile_context>
chip_gen: v7x
topology: tpu7x:2x2x1
jax: 0.10.0
libtpu: 0.0.40
codegen_flags: <defaults>
</compile_context>

<pallas_src>
import math
from functools import partial

import jax
import jax.numpy as jnp
from jax.experimental import pallas as pl
from jax.experimental.pallas import tpu as pltpu

# ------------------------------ config ---------------------------------------
HIDDEN = 32
INTERMEDIATE = 64
NUM_HEADS = 4
HEAD_DIM = HIDDEN // NUM_HEADS
NUM_AXIOMS = 16
MAX_PROOF_STEPS = 4
BATCH = 4
LN_EPS = 1e-5
SLAB_COLS = 128

VMEM_SPEC = pl.BlockSpec(memory_space=pltpu.MemorySpace.VMEM)

# ------------------------- packed parameter slab ------------------------------
# Every weight/bias lives in one (ROWS, 128) f32 slab (8-row aligned entries),
# moved HBM->VMEM by a single auto-pipelined DMA and carved out in-kernel with
# static slices (zero-cost views, loads placed next to their uses).
_SLAB_SPEC = (
    # packed matmul weights (columns <= 128 so one pack == one MXU pass on v5e)
    ("W_cur_pack",  (HIDDEN, 4 * HIDDEN)),   # [app_w1s | wq | wk | wv]   (LHS = current)
    ("W_cur2",      (HIDDEN, 2 * HIDDEN)),   # [prox_w1c | val_w1c]       (LHS = current)
    ("W_sel_pack",  (HIDDEN, 3 * HIDDEN)),   # [wk | wv | val_w1s]        (LHS = selected consequence)
    ("W_goal_pack", (HIDDEN, 3 * HIDDEN)),   # [prox_w1g | wk | wv]       (LHS = goal, loop-invariant)
    ("app_w1a",     (HIDDEN, HIDDEN)),
    ("cons_w1",     (HIDDEN, HIDDEN)),
    ("cons_w2",     (HIDDEN, HIDDEN)),
    ("prox_w2",     (HIDDEN, 1)),
    ("wo",          (HIDDEN, HIDDEN)),
    ("ffn_w1",      (HIDDEN, INTERMEDIATE)),
    ("ffn_w2",      (INTERMEDIATE, HIDDEN)),
    ("val_w1n",     (HIDDEN, HIDDEN)),
    ("val_w2",      (HIDDEN, 1)),
    ("seg",         (HIDDEN, NUM_HEADS)),    # constant head->segment sum matrix
    ("seg_t",       (NUM_HEADS, HIDDEN)),    # constant head->lane broadcast matrix
    ("axiom_emb",   (NUM_AXIOMS, HIDDEN)),
    # bias / vector rows
    ("b_cur_pack",  (1, 4 * HIDDEN)),        # [0 | bq | bk | bv]
    ("b_cur2",      (1, 2 * HIDDEN)),        # [0 | val_b1]
    ("b_sel_pack",  (1, 3 * HIDDEN)),        # [bk | bv | 0]
    ("b_goal_pack", (1, 3 * HIDDEN)),        # [prox_b1 | bk | bv]
    ("app_b1",      (1, HIDDEN)),
    ("app_w2r",     (1, HIDDEN)),            # Linear(H,1) weight stored as a row
    ("app_b2",      (1, 1)),
    ("cons_b1",     (1, HIDDEN)),
    ("cons_b2",     (1, HIDDEN)),
    ("prox_b2",     (1, 1)),
    ("bo",          (1, HIDDEN)),
    ("ln1_w",       (1, HIDDEN)),
    ("ln1_b",       (1, HIDDEN)),
    ("ffn_b1",      (1, INTERMEDIATE)),
    ("ffn_b2",      (1, HIDDEN)),
    ("ln2_w",       (1, HIDDEN)),
    ("ln2_b",       (1, HIDDEN)),
    ("val_b2",      (1, 1)),
)


def _build_layout(spec):
    layout, row = {}, 0
    for name, (r, c) in spec:
        assert c <= SLAB_COLS
        layout[name] = (row, r, c)
        row += ((r + 7) // 8) * 8           # 8-row (sublane-tile) aligned entries
    return layout, row


_SLAB_LAYOUT, _SLAB_ROWS = _build_layout(_SLAB_SPEC)


def _ld(slab_ref, name):
    r0, r, c = _SLAB_LAYOUT[name]
    return slab_ref[r0:r0 + r, 0:c]          # static slice load at point of use


# ------------------------------ helpers --------------------------------------
def _gelu(x):
    # TODO(synk): PyTorch nn.GELU()/activation='gelu' is exact erf-GELU; tanh
    # approximation (max abs err ~1e-3) is used to avoid relying on erf lowering.
    return jax.nn.gelu(x, approximate=True)


def _layernorm(x, w, b):
    mu = jnp.mean(x, axis=-1, keepdims=True)
    var = jnp.mean((x - mu) ** 2, axis=-1, keepdims=True)
    return (x - mu) * jax.lax.rsqrt(var + LN_EPS) * w + b


# ------------------------------ fused kernel ----------------------------------
def _proof_search_kernel(premise_ref, goal_ref, slab_ref, steps_ref, misc_ref,
                         *, batch_valid):
    f32 = jnp.float32
    dot = lambda a, b: jnp.dot(a, b, preferred_element_type=f32)
    ld = lambda name: _ld(slab_ref, name)
    H, A = HIDDEN, NUM_AXIOMS
    scale = 1.0 / math.sqrt(HEAD_DIM)

    premise = premise_ref[...]                              # (Bp, H), Bp = padded batch
    bp = premise.shape[0]

    # padded rows (>= batch_valid) must never block the early exit
    pad_row = (jax.lax.broadcasted_iota(jnp.int32, (bp, 1), 0)
               >= batch_valid).astype(f32)

    # ---- loop-invariant goal-side projections: one packed MXU pass -----------
    goal = goal_ref[...]
    gp = dot(goal, ld("W_goal_pack")) + ld("b_goal_pack")   # (Bp, 3H)
    prox_goal, k_goal, v_goal = gp[:, 0:H], gp[:, H:2 * H], gp[:, 2 * H:3 * H]
    a_proj = dot(ld("axiom_emb"), ld("app_w1a")) + ld("app_b1")   # (A, H)

    steps_ref[0] = premise
    cur = premise
    vprod = jnp.ones((bp, 1), f32)
    done = jnp.zeros((1, 1), f32)       # sticky: 1.0 once (proximity > 0.9).all()
    count = jnp.zeros((1, 1), f32)      # number of proof steps actually taken

    for t in range(MAX_PROOF_STEPS):    # static unroll (tiny compile-time bound)
        # ---- packed same-LHS projections of the current statement (2 MXU ops)
        cp = dot(cur, ld("W_cur_pack")) + ld("b_cur_pack")        # (Bp, 4H)
        s_proj, q0 = cp[:, 0:H], cp[:, H:2 * H]
        k_cur, v_cur = cp[:, 2 * H:3 * H], cp[:, 3 * H:4 * H]
        cp2 = dot(cur, ld("W_cur2")) + ld("b_cur2")               # (Bp, 2H)
        ph_pre, val_c = cp2[:, 0:H], cp2[:, H:2 * H]

        # ---- goal proximity + sticky device-side early-exit gate -------------
        prox = jax.nn.sigmoid(dot(_gelu(ph_pre + prox_goal), ld("prox_w2"))
                              + ld("prox_b2"))                    # (Bp, 1)
        close = jnp.maximum((prox > 0.9).astype(f32), pad_row)
        done = jnp.maximum(done, jnp.min(close, axis=0, keepdims=True))
        g = 1.0 - done                                            # 1.0 while still searching

        # ---- axiom applicability + in-kernel argmax / selection ---------------
        # TODO(synk): review proposed an MXU dot on the flattened (Bp*A, H) tensor;
        # kept the broadcast + lane-reduce form because the (Bp*A,1)->(Bp,A) result
        # relayout has no guaranteed Mosaic lowering and this block is small.
        h3 = _gelu(s_proj[:, None, :] + a_proj[None, :, :])        # (Bp, A, H)
        logits = jnp.sum(h3 * ld("app_w2r"), axis=-1) + ld("app_b2")   # (Bp, A)
        col = jax.lax.broadcasted_iota(jnp.int32, logits.shape, 1)
        row_max = jnp.max(logits, axis=1, keepdims=True)
        best = jnp.min(jnp.where(logits == row_max, col, A), axis=1, keepdims=True)
        onehot = (col == best).astype(f32)                         # lowest index on ties
        weighted = dot(onehot, ld("axiom_emb")) * jax.nn.sigmoid(row_max)   # (Bp, H)
        sel = dot(_gelu(dot(weighted, ld("cons_w1")) + ld("cons_b1")),
                  ld("cons_w2")) + ld("cons_b2")                   # selected consequence

        # ---- packed projections of the selected consequence (1 MXU op) --------
        sp = dot(sel, ld("W_sel_pack")) + ld("b_sel_pack")         # (Bp, 3H)
        k_sel, v_sel, val_s = sp[:, 0:H], sp[:, H:2 * H], sp[:, 2 * H:3 * H]

        # ---- ProofStep: TransformerEncoderLayer (post-norm, eval), token 0 ----
        qk3 = jnp.concatenate([q0 * k_cur, q0 * k_sel, q0 * k_goal], axis=0)  # (3Bp, H)
        s3 = dot(qk3, ld("seg")) * scale                           # (3Bp, NH) per-head scores
        s0, s1, s2 = s3[0:bp], s3[bp:2 * bp], s3[2 * bp:3 * bp]
        m = jnp.maximum(jnp.maximum(s0, s1), s2)
        e0, e1, e2 = jnp.exp(s0 - m), jnp.exp(s1 - m), jnp.exp(s2 - m)
        inv = pl.reciprocal(e0 + e1 + e2, approx=True)             # EUP slot
        a4 = dot(jnp.concatenate([e0, e1, e2, inv], axis=0), ld("seg_t"))     # (4Bp, H)
        attn = (a4[0:bp] * v_cur + a4[bp:2 * bp] * v_sel
                + a4[2 * bp:3 * bp] * v_goal) * a4[3 * bp:4 * bp]
        attn = dot(attn, ld("wo")) + ld("bo")
        x = _layernorm(cur + attn, ld("ln1_w"), ld("ln1_b"))
        ff = dot(_gelu(dot(x, ld("ffn_w1")) + ld("ffn_b1")),
                 ld("ffn_w2")) + ld("ffn_b2")
        nxt = _layernorm(x + ff, ld("ln2_w"), ld("ln2_b"))

        # ---- step validity: Linear(3H,H) as three summed (H,H) dots -----------
        vh = _gelu(val_c + val_s + dot(nxt, ld("val_w1n")))
        val = jax.nn.sigmoid(dot(vh, ld("val_w2")) + ld("val_b2"))  # (Bp, 1)

        # ---- arithmetically gated state update (frozen after termination) -----
        cur = cur + g * (nxt - cur)
        vprod = vprod * (1.0 + g * (val - 1.0))
        count = count + g
        steps_ref[t + 1] = cur

    # ---- consolidated scalar-ish outputs: one lane-dense (Bp, 128) block ------
    length_factor = jnp.minimum(1.0, count * (1.0 / MAX_PROOF_STEPS))   # (1,1)
    lane = jax.lax.broadcasted_iota(jnp.int32, (bp, SLAB_COLS), 1)
    misc = jnp.where(lane == 0, vprod, 0.0)
    misc = jnp.where(lane == 1, (1.0 - vprod) * (0.5 + 0.5 * length_factor), misc)
    misc = jnp.where(lane == 2, count, misc)
    misc_ref[...] = misc


# --------------------------- pallas_call wrapper -------------------------------
@jax.jit
def _proof_search_device(slab, premise, goal):
    b = premise.shape[0]
    bp = max(8, ((b + 7) // 8) * 8)            # full sublane occupancy, padded rows masked
    premise = jnp.pad(premise.astype(jnp.float32), ((0, bp - b), (0, 0)))
    goal = jnp.pad(goal.astype(jnp.float32), ((0, bp - b), (0, 0)))
    call = pl.pallas_call(
        partial(_proof_search_kernel, batch_valid=b),
        out_shape=(
            jax.ShapeDtypeStruct((MAX_PROOF_STEPS + 1, bp, HIDDEN), jnp.float32),
            jax.ShapeDtypeStruct((bp, SLAB_COLS), jnp.float32),
        ),
        in_specs=[VMEM_SPEC, VMEM_SPEC, VMEM_SPEC],
        out_specs=(VMEM_SPEC, VMEM_SPEC),
    )
    return call(premise, goal, slab)


# ------------------------------ ProofSearch ------------------------------------
def proof_search_forward(param_slab, premise_embedding, goal_embedding):
    """Equivalent of ProofSearch.forward (eval mode): one fused Pallas kernel and
    a single device->host transfer to rebuild the variable-length step list."""
    b = premise_embedding.shape[0]
    steps, misc = jax.block_until_ready(
        _proof_search_device(param_slab, premise_embedding, goal_embedding))
    steps_np, misc_np = jax.device_get((steps, misc))       # one host round-trip
    n_steps = int(misc_np[0, 2])
    proof_steps = [steps_np[i, :b, :] for i in range(n_steps + 1)]   # host views only
    proof_validity = misc_np[:b, 0:1]
    proof_uncertainty = misc_np[:b, 1:2]
    return proof_steps, proof_validity, proof_uncertainty


# ------------------------------ params ----------------------------------------
def init_params(key):
    kit = iter(jax.random.split(key, 24))

    def W(shape, scale=0.05):
        return (scale * jax.random.normal(next(kit), shape)).astype(jnp.float32)

    zeros = lambda s: jnp.zeros(s, jnp.float32)
    ones = lambda s: jnp.ones(s, jnp.float32)

    return dict(
        # AxiomSystem
        axiom_embeddings=W((NUM_AXIOMS, HIDDEN), 1.0),
        app_w1s=W((HIDDEN, HIDDEN)), app_w1a=W((HIDDEN, HIDDEN)), app_b1=zeros((1, HIDDEN)),
        app_w2=W((HIDDEN, 1)), app_b2=zeros((1, 1)),
        cons_w1=W((HIDDEN, HIDDEN)), cons_b1=zeros((1, HIDDEN)),
        cons_w2=W((HIDDEN, HIDDEN)), cons_b2=zeros((1, HIDDEN)),
        # goal_proximity: Linear(2H,H) split into current / goal halves
        prox_w1c=W((HIDDEN, HIDDEN)), prox_w1g=W((HIDDEN, HIDDEN)), prox_b1=zeros((1, HIDDEN)),
        prox_w2=W((HIDDEN, 1)), prox_b2=zeros((1, 1)),
        # ProofStep.step_generation: TransformerEncoderLayer (in_proj split q/k/v)
        wq=W((HIDDEN, HIDDEN)), bq=zeros((1, HIDDEN)),
        wk=W((HIDDEN, HIDDEN)), bk=zeros((1, HIDDEN)),
        wv=W((HIDDEN, HIDDEN)), bv=zeros((1, HIDDEN)),
        wo=W((HIDDEN, HIDDEN)), bo=zeros((1, HIDDEN)),
        ln1_w=ones((1, HIDDEN)), ln1_b=zeros((1, HIDDEN)),
        ffn_w1=W((HIDDEN, INTERMEDIATE)), ffn_b1=zeros((1, INTERMEDIATE)),
        ffn_w2=W((INTERMEDIATE, HIDDEN)), ffn_b2=zeros((1, HIDDEN)),
        ln2_w=ones((1, HIDDEN)), ln2_b=zeros((1, HIDDEN)),
        # ProofStep.step_validity: Linear(3H,H) split into cur / sel / next blocks
        val_w1c=W((HIDDEN, HIDDEN)), val_w1s=W((HIDDEN, HIDDEN)), val_w1n=W((HIDDEN, HIDDEN)),
        val_b1=zeros((1, HIDDEN)),
        val_w2=W((HIDDEN, 1)), val_b2=zeros((1, 1)),
    )


def pack_params(p):
    """Pre-pack every weight/bias (with same-LHS fusion) into one f32 slab."""
    zrow = jnp.zeros((1, HIDDEN), jnp.float32)
    head_seg = (jnp.arange(HIDDEN)[:, None] // HEAD_DIM
                == jnp.arange(NUM_HEADS)[None, :]).astype(jnp.float32)
    t = {
        "W_cur_pack": jnp.concatenate([p["app_w1s"], p["wq"], p["wk"], p["wv"]], axis=1),
        "b_cur_pack": jnp.concatenate([zrow, p["bq"], p["bk"], p["bv"]], axis=1),
        "W_cur2": jnp.concatenate([p["prox_w1c"], p["val_w1c"]], axis=1),
        "b_cur2": jnp.concatenate([zrow, p["val_b1"]], axis=1),
        "W_sel_pack": jnp.concatenate([p["wk"], p["wv"], p["val_w1s"]], axis=1),
        "b_sel_pack": jnp.concatenate([p["bk"], p["bv"], zrow], axis=1),
        "W_goal_pack": jnp.concatenate([p["prox_w1g"], p["wk"], p["wv"]], axis=1),
        "b_goal_pack": jnp.concatenate([p["prox_b1"], p["bk"], p["bv"]], axis=1),
        "app_w1a": p["app_w1a"], "app_b1": p["app_b1"],
        "app_w2r": p["app_w2"].T, "app_b2": p["app_b2"],
        "cons_w1": p["cons_w1"], "cons_b1": p["cons_b1"],
        "cons_w2": p["cons_w2"], "cons_b2": p["cons_b2"],
        "prox_w2": p["prox_w2"], "prox_b2": p["prox_b2"],
        "wo": p["wo"], "bo": p["bo"],
        "ln1_w": p["ln1_w"], "ln1_b": p["ln1_b"],
        "ffn_w1": p["ffn_w1"], "ffn_b1": p["ffn_b1"],
        "ffn_w2": p["ffn_w2"], "ffn_b2": p["ffn_b2"],
        "ln2_w": p["ln2_w"], "ln2_b": p["ln2_b"],
        "val_w1n": p["val_w1n"], "val_w2": p["val_w2"], "val_b2": p["val_b2"],
        "axiom_emb": p["axiom_embeddings"],
        "seg": head_seg, "seg_t": head_seg.T,
    }
    slab = jnp.zeros((_SLAB_ROWS, SLAB_COLS), jnp.float32)
    for name, (r0, r, c) in _SLAB_LAYOUT.items():
        x = t[name].astype(jnp.float32)
        assert x.shape == (r, c), (name, x.shape, (r, c))
        slab = slab.at[r0:r0 + r, 0:c].set(x)
    return slab


# ------------------------------ main -------------------------------------------
if __name__ == "__main__":
    key = jax.random.PRNGKey(0)
    kp, kx, kg = jax.random.split(key, 3)
    params = init_params(kp)
    slab = pack_params(params)
    premise = jax.random.normal(kx, (BATCH, HIDDEN), jnp.float32)
    goal = jax.random.normal(kg, (BATCH, HIDDEN), jnp.float32)

    proof_steps, validity, uncertainty = proof_search_forward(slab, premise, goal)
    jax.block_until_ready((validity, uncertainty))

    assert proof_steps[0].shape == (BATCH, HIDDEN)
    assert validity.shape == (BATCH, 1)
    assert uncertainty.shape == (BATCH, 1)
    assert 1 <= len(proof_steps) <= MAX_PROOF_STEPS + 1
    print("KERNEL_OK")
</pallas_src>

<mosaic_0001>
module attributes {stable_mosaic.version = 11 : i64} {
  func.func @_proof_search_kernel(%arg0: memref<8x32xf32, #tpu.memory_space<vmem>>, %arg1: memref<8x32xf32, #tpu.memory_space<vmem>>, %arg2: memref<648x128xf32, #tpu.memory_space<vmem>>, %arg3: memref<5x8x32xf32, #tpu.memory_space<vmem>>, %arg4: memref<8x128xf32, #tpu.memory_space<vmem>>) attributes {dimension_semantics = [], scalar_prefetch = 0 : i64, scratch_operands = 0 : i64, tpu.core_type = #tpu.core_type<tc>} {
    %c0 = arith.constant 0 : index
    %c0_0 = arith.constant 0 : index
    %0 = vector.load %arg0[%c0, %c0_0] : memref<8x32xf32, #tpu.memory_space<vmem>>, vector<8x32xf32>
    %1 = tpu.iota {dimensions = array<i32: 0>} : vector<8x1xi32>
    %c4_i32 = arith.constant 4 : i32
    %2 = vector.broadcast %c4_i32 : i32 to vector<8x1xi32>
    %3 = arith.cmpi sge, %1, %2 : vector<8x1xi32>
    %4 = arith.extui %3 : vector<8x1xi1> to vector<8x1xi32>
    %5 = arith.sitofp %4 : vector<8x1xi32> to vector<8x1xf32>
    %c0_1 = arith.constant 0 : index
    %c0_2 = arith.constant 0 : index
    %6 = vector.load %arg1[%c0_1, %c0_2] : memref<8x32xf32, #tpu.memory_space<vmem>>, vector<8x32xf32>
    %c96 = arith.constant 96 : index
    %c0_3 = arith.constant 0 : index
    %7 = vector.load %arg2[%c96, %c0_3] : memref<648x128xf32, #tpu.memory_space<vmem>>, vector<32x96xf32>
    %cst = arith.constant dense<0.000000e+00> : vector<8x96xf32>
    %8 = tpu.matmul %6, %7, %cst {dimension_numbers = #tpu.dot_dimension_numbers<[1], [0], [0], [1], [0, 0, 1, 1], [], []>} : vector<8x32xf32>, vector<32x96xf32>, vector<8x96xf32> -> vector<8x96xf32>
    %c528 = arith.constant 528 : index
    %c0_4 = arith.constant 0 : index
    %9 = vector.load %arg2[%c528, %c0_4] : memref<648x128xf32, #tpu.memory_space<vmem>>, vector<1x96xf32>
    %10 = vector.broadcast %9 : vector<1x96xf32> to vector<8x96xf32>
    %11 = arith.addf %8, %10 : vector<8x96xf32>
    %12 = vector.extract_strided_slice %11 {offsets = [0, 0], sizes = [8, 32], strides = [1, 1]} : vector<8x96xf32> to vector<8x32xf32>
    %13 = vector.extract_strided_slice %11 {offsets = [0, 32], sizes = [8, 32], strides = [1, 1]} : vector<8x96xf32> to vector<8x32xf32>
    %14 = vector.extract_strided_slice %11 {offsets = [0, 64], sizes = [8, 32], strides = [1, 1]} : vector<8x96xf32> to vector<8x32xf32>
    %c488 = arith.constant 488 : index
    %c0_5 = arith.constant 0 : index
    %15 = vector.load %arg2[%c488, %c0_5] : memref<648x128xf32, #tpu.memory_space<vmem>>, vector<16x32xf32>
    %c128 = arith.constant 128 : index
    %c0_6 = arith.constant 0 : index
    %16 = vector.load %arg2[%c128, %c0_6] : memref<648x128xf32, #tpu.memory_space<vmem>>, vector<32x32xf32>
    %cst_7 = arith.constant dense<0.000000e+00> : vector<16x32xf32>
    %17 = tpu.matmul %15, %16, %cst_7 {dimension_numbers = #tpu.dot_dimension_numbers<[1], [0], [0], [1], [0, 0, 1, 1], [], []>} : vector<16x32xf32>, vector<32x32xf32>, vector<16x32xf32> -> vector<16x32xf32>
    %c536 = arith.constant 536 : index
    %c0_8 = arith.constant 0 : index
    %18 = vector.load %arg2[%c536, %c0_8] : memref<648x128xf32, #tpu.memory_space<vmem>>, vector<1x32xf32>
    %19 = vector.broadcast %18 : vector<1x32xf32> to vector<16x32xf32>
    %20 = arith.addf %17, %19 : vector<16x32xf32>
    %c0_9 = arith.constant 0 : index
    %c0_10 = arith.constant 0 : index
    %c0_11 = arith.constant 0 : index
    %21 = vector.load %arg3[%c0_9, %c0_10, %c0_11] : memref<5x8x32xf32, #tpu.memory_space<vmem>>, vector<1x8x32xf32>
    %22 = vector.shape_cast %21 : vector<1x8x32xf32> to vector<8x32xf32>
    %23 = vector.shape_cast %0 : vector<8x32xf32> to vector<1x8x32xf32>
    tpu.vector_store %arg3[%c0_9, %c0_10, %c0_11], %23 {strides = array<i32>} : memref<5x8x32xf32, #tpu.memory_space<vmem>>, vector<1x8x32xf32>,
    %cst_12 = arith.constant 1.000000e+00 : f32
    %24 = vector.broadcast %cst_12 : f32 to vector<8x1xf32>
    %cst_13 = arith.constant 0.000000e+00 : f32
    %25 = vector.broadcast %cst_13 : f32 to vector<1x1xf32>
    %cst_14 = arith.constant 0.000000e+00 : f32
    %26 = vector.broadcast %cst_14 : f32 to vector<1x1xf32>
    %c0_15 = arith.constant 0 : index
    %c0_16 = arith.constant 0 : index
    %27 = vector.load %arg2[%c0_15, %c0_16] : memref<648x128xf32, #tpu.memory_space<vmem>>, vector<32x128xf32>
    %cst_17 = arith.constant dense<0.000000e+00> : vector<8x128xf32>
    %28 = tpu.matmul %0, %27, %cst_17 {dimension_numbers = #tpu.dot_dimension_numbers<[1], [0], [0], [1], [0, 0, 1, 1], [], []>} : vector<8x32xf32>, vector<32x128xf32>, vector<8x128xf32> -> vector<8x128xf32>
    %c504 = arith.constant 504 : index
    %c0_18 = arith.constant 0 : index
    %29 = vector.load %arg2[%c504, %c0_18] : memref<648x128xf32, #tpu.memory_space<vmem>>, vector<1x128xf32>
    %30 = vector.broadcast %29 : vector<1x128xf32> to vector<8x128xf32>
    %31 = arith.addf %28, %30 : vector<8x128xf32>
    %32 = vector.extract_strided_slice %31 {offsets = [0, 0], sizes = [8, 32], strides = [1, 1]} : vector<8x128xf32> to vector<8x32xf32>
    %33 = vector.extract_strided_slice %31 {offsets = [0, 32], sizes = [8, 32], strides = [1, 1]} : vector<8x128xf32> to vector<8x32xf32>
    %34 = vector.extract_strided_slice %31 {offsets = [0, 64], sizes = [8, 32], strides = [1, 1]} : vector<8x128xf32> to vector<8x32xf32>
    %35 = vector.extract_strided_slice %31 {offsets = [0, 96], sizes = [8, 32], strides = [1, 1]} : vector<8x128xf32> to vector<8x32xf32>
    %c32 = arith.constant 32 : index
    %c0_19 = arith.constant 0 : index
    %36 = vector.load %arg2[%c32, %c0_19] : memref<648x128xf32, #tpu.memory_space<vmem>>, vector<32x64xf32>
    %cst_20 = arith.constant dense<0.000000e+00> : vector<8x64xf32>
    %37 = tpu.matmul %0, %36, %cst_20 {dimension_numbers = #tpu.dot_dimension_numbers<[1], [0], [0], [1], [0, 0, 1, 1], [], []>} : vector<8x32xf32>, vector<32x64xf32>, vector<8x64xf32> -> vector<8x64xf32>
    %c512 = arith.constant 512 : index
    %c0_21 = arith.constant 0 : index
    %38 = vector.load %arg2[%c512, %c0_21] : memref<648x128xf32, #tpu.memory_space<vmem>>, vector<1x64xf32>
    %39 = vector.broadcast %38 : vector<1x64xf32> to vector<8x64xf32>
    %40 = arith.addf %37, %39 : vector<8x64xf32>
    %41 = vector.extract_strided_slice %40 {offsets = [0, 0], sizes = [8, 32], strides = [1, 1]} : vector<8x64xf32> to vector<8x32xf32>
    %42 = vector.extract_strided_slice %40 {offsets = [0, 32], sizes = [8, 32], strides = [1, 1]} : vector<8x64xf32> to vector<8x32xf32>
    %43 = arith.addf %41, %12 : vector<8x32xf32>
    %44 = arith.mulf %43, %43 : vector<8x32xf32>
    %45 = arith.mulf %43, %44 : vector<8x32xf32>
    %cst_22 = arith.constant 4.471500e-02 : f32
    %46 = vector.broadcast %cst_22 : f32 to vector<8x32xf32>
    %47 = arith.mulf %46, %45 : vector<8x32xf32>
    %48 = arith.addf %43, %47 : vector<8x32xf32>
    %cst_23 = arith.constant 0.797884583 : f32
    %49 = vector.broadcast %cst_23 : f32 to vector<8x32xf32>
    %50 = arith.mulf %49, %48 : vector<8x32xf32>
    %51 = math.tanh %50 : vector<8x32xf32>
    %cst_24 = arith.constant 1.000000e+00 : f32
    %52 = vector.broadcast %cst_24 : f32 to vector<8x32xf32>
    %53 = arith.addf %52, %51 : vector<8x32xf32>
    %cst_25 = arith.constant 5.000000e-01 : f32
    %54 = vector.broadcast %cst_25 : f32 to vector<8x32xf32>
    %55 = arith.mulf %54, %53 : vector<8x32xf32>
    %56 = arith.mulf %43, %55 : vector<8x32xf32>
    %c224 = arith.constant 224 : index
    %c0_26 = arith.constant 0 : index
    %57 = vector.load %arg2[%c224, %c0_26] : memref<648x128xf32, #tpu.memory_space<vmem>>, vector<32x1xf32>
    %cst_27 = arith.constant dense<0.000000e+00> : vector<8x1xf32>
    %58 = tpu.matmul %56, %57, %cst_27 {dimension_numbers = #tpu.dot_dimension_numbers<[1], [0], [0], [1], [0, 0, 1, 1], [], []>} : vector<8x32xf32>, vector<32x1xf32>, vector<8x1xf32> -> vector<8x1xf32>
    %c576 = arith.constant 576 : index
    %c0_28 = arith.constant 0 : index
    %59 = vector.load %arg2[%c576, %c0_28] : memref<648x128xf32, #tpu.memory_space<vmem>>, vector<1x1xf32>
    %60 = vector.broadcast %59 : vector<1x1xf32> to vector<8x1xf32>
    %61 = arith.addf %58, %60 : vector<8x1xf32>
    %62 = arith.negf %61 : vector<8x1xf32>
    %63 = math.exp %62 : vector<8x1xf32>
    %cst_29 = arith.constant 1.000000e+00 : f32
    %64 = vector.broadcast %cst_29 : f32 to vector<8x1xf32>
    %65 = arith.addf %64, %63 : vector<8x1xf32>
    %66 = arith.divf %64, %65 : vector<8x1xf32>
    %cst_30 = arith.constant 0.899999976 : f32
    %67 = vector.broadcast %cst_30 : f32 to vector<8x1xf32>
    %68 = arith.cmpf ogt, %66, %67 : vector<8x1xf32>
    %69 = arith.extui %68 : vector<8x1xi1> to vector<8x1xi32>
    %70 = arith.sitofp %69 : vector<8x1xi32> to vector<8x1xf32>
    %71 = arith.maximumf %70, %5 : vector<8x1xf32>
    %cst_31 = arith.constant dense<0x7F800000> : vector<1xf32>
    %72 = vector.multi_reduction <minimumf>, %71, %cst_31 [0] : vector<8x1xf32> to vector<1xf32>
    %73 = vector.shape_cast %72 : vector<1xf32> to vector<1x1xf32>
    %74 = arith.maximumf %25, %73 : vector<1x1xf32>
    %cst_32 = arith.constant 1.000000e+00 : f32
    %75 = vector.broadcast %cst_32 : f32 to vector<1x1xf32>
    %76 = arith.subf %75, %74 : vector<1x1xf32>
    %77 = vector.shape_cast %32 : vector<8x32xf32> to vector<8x1x32xf32>
    %78 = vector.shape_cast %20 : vector<16x32xf32> to vector<1x16x32xf32>
    %79 = vector.broadcast %77 : vector<8x1x32xf32> to vector<8x16x32xf32>
    %80 = vector.broadcast %78 : vector<1x16x32xf32> to vector<8x16x32xf32>
    %81 = arith.addf %79, %80 : vector<8x16x32xf32>
    %82 = arith.mulf %81, %81 : vector<8x16x32xf32>
    %83 = arith.mulf %81, %82 : vector<8x16x32xf32>
    %cst_33 = arith.constant 4.471500e-02 : f32
    %84 = vector.broadcast %cst_33 : f32 to vector<8x16x32xf32>
    %85 = arith.mulf %84, %83 : vector<8x16x32xf32>
    %86 = arith.addf %81, %85 : vector<8x16x32xf32>
    %cst_34 = arith.constant 0.797884583 : f32
    %87 = vector.broadcast %cst_34 : f32 to vector<8x16x32xf32>
    %88 = arith.mulf %87, %86 : vector<8x16x32xf32>
    %89 = math.tanh %88 : vector<8x16x32xf32>
    %cst_35 = arith.constant 1.000000e+00 : f32
    %90 = vector.broadcast %cst_35 : f32 to vector<8x16x32xf32>
    %91 = arith.addf %90, %89 : vector<8x16x32xf32>
    %cst_36 = arith.constant 5.000000e-01 : f32
    %92 = vector.broadcast %cst_36 : f32 to vector<8x16x32xf32>
    %93 = arith.mulf %92, %91 : vector<8x16x32xf32>
    %94 = arith.mulf %81, %93 : vector<8x16x32xf32>
    %c544 = arith.constant 544 : index
    %c0_37 = arith.constant 0 : index
    %95 = vector.load %arg2[%c544, %c0_37] : memref<648x128xf32, #tpu.memory_space<vmem>>, vector<1x32xf32>
    %96 = vector.shape_cast %95 : vector<1x32xf32> to vector<1x1x32xf32>
    %97 = vector.broadcast %96 : vector<1x1x32xf32> to vector<8x16x32xf32>
    %98 = arith.mulf %94, %97 : vector<8x16x32xf32>
    %cst_38 = arith.constant dense<0.000000e+00> : vector<8x16xf32>
    %99 = vector.multi_reduction <add>, %98, %cst_38 [2] : vector<8x16x32xf32> to vector<8x16xf32>
    %c552 = arith.constant 552 : index
    %c0_39 = arith.constant 0 : index
    %100 = vector.load %arg2[%c552, %c0_39] : memref<648x128xf32, #tpu.memory_space<vmem>>, vector<1x1xf32>
    %101 = vector.broadcast %100 : vector<1x1xf32> to vector<8x16xf32>
    %102 = arith.addf %99, %101 : vector<8x16xf32>
    %103 = tpu.iota {dimensions = array<i32: 1>} : vector<8x16xi32>
    %cst_40 = arith.constant dense<0xFF800000> : vector<8xf32>
    %104 = vector.multi_reduction <maximumf>, %102, %cst_40 [1] : vector<8x16xf32> to vector<8xf32>
    %105 = vector.shape_cast %104 : vector<8xf32> to vector<8x1xf32>
    %106 = vector.broadcast %105 : vector<8x1xf32> to vector<8x16xf32>
    %107 = arith.cmpf oeq, %102, %106 : vector<8x16xf32>
    %c16_i32 = arith.constant 16 : i32
    %108 = vector.broadcast %c16_i32 : i32 to vector<8x16xi32>
    %109 = arith.select %107, %103, %108 : vector<8x16xi1>, vector<8x16xi32>
    %cst_41 = arith.constant dense<2147483647> : vector<8xi32>
    %110 = vector.multi_reduction <minsi>, %109, %cst_41 [1] : vector<8x16xi32> to vector<8xi32>
    %111 = vector.shape_cast %110 : vector<8xi32> to vector<8x1xi32>
    %112 = vector.broadcast %111 : vector<8x1xi32> to vector<8x16xi32>
    %113 = arith.cmpi eq, %103, %112 : vector<8x16xi32>
    %114 = arith.extui %113 : vector<8x16xi1> to vector<8x16xi32>
    %115 = arith.sitofp %114 : vector<8x16xi32> to vector<8x16xf32>
    %c488_42 = arith.constant 488 : index
    %c0_43 = arith.constant 0 : index
    %116 = vector.load %arg2[%c488_42, %c0_43] : memref<648x128xf32, #tpu.memory_space<vmem>>, vector<16x32xf32>
    %cst_44 = arith.constant dense<0.000000e+00> : vector<8x32xf32>
    %117 = tpu.matmul %115, %116, %cst_44 {dimension_numbers = #tpu.dot_dimension_numbers<[1], [0], [0], [1], [0, 0, 1, 1], [], []>} : vector<8x16xf32>, vector<16x32xf32>, vector<8x32xf32> -> vector<8x32xf32>
    %118 = arith.negf %105 : vector<8x1xf32>
    %119 = math.exp %118 : vector<8x1xf32>
    %cst_45 = arith.constant 1.000000e+00 : f32
    %120 = vector.broadcast %cst_45 : f32 to vector<8x1xf32>
    %121 = arith.addf %120, %119 : vector<8x1xf32>
    %122 = arith.divf %120, %121 : vector<8x1xf32>
    %123 = vector.broadcast %122 : vector<8x1xf32> to vector<8x32xf32>
    %124 = arith.mulf %117, %123 : vector<8x32xf32>
    %c160 = arith.constant 160 : index
    %c0_46 = arith.constant 0 : index
    %125 = vector.load %arg2[%c160, %c0_46] : memref<648x128xf32, #tpu.memory_space<vmem>>, vector<32x32xf32>
    %cst_47 = arith.constant dense<0.000000e+00> : vector<8x32xf32>
    %126 = tpu.matmul %124, %125, %cst_47 {dimension_numbers = #tpu.dot_dimension_numbers<[1], [0], [0], [1], [0, 0, 1, 1], [], []>} : vector<8x32xf32>, vector<32x32xf32>, vector<8x32xf32> -> vector<8x32xf32>
    %c560 = arith.constant 560 : index
    %c0_48 = arith.constant 0 : index
    %127 = vector.load %arg2[%c560, %c0_48] : memref<648x128xf32, #tpu.memory_space<vmem>>, vector<1x32xf32>
    %128 = vector.broadcast %127 : vector<1x32xf32> to vector<8x32xf32>
    %129 = arith.addf %126, %128 : vector<8x32xf32>
    %130 = arith.mulf %129, %129 : vector<8x32xf32>
    %131 = arith.mulf %129, %130 : vector<8x32xf32>
    %cst_49 = arith.constant 4.471500e-02 : f32
    %132 = vector.broadcast %cst_49 : f32 to vector<8x32xf32>
    %133 = arith.mulf %132, %131 : vector<8x32xf32>
    %134 = arith.addf %129, %133 : vector<8x32xf32>
    %cst_50 = arith.constant 0.797884583 : f32
    %135 = vector.broadcast %cst_50 : f32 to vector<8x32xf32>
    %136 = arith.mulf %135, %134 : vector<8x32xf32>
    %137 = math.tanh %136 : vector<8x32xf32>
    %cst_51 = arith.constant 1.000000e+00 : f32
    %138 = vector.broadcast %cst_51 : f32 to vector<8x32xf32>
    %139 = arith.addf %138, %137 : vector<8x32xf32>
    %cst_52 = arith.constant 5.000000e-01 : f32
    %140 = vector.broadcast %cst_52 : f32 to vector<8x32xf32>
    %141 = arith.mulf %140, %139 : vector<8x32xf32>
    %142 = arith.mulf %129, %141 : vector<8x32xf32>
    %c192 = arith.constant 192 : index
    %c0_53 = arith.constant 0 : index
    %143 = vector.load %arg2[%c192, %c0_53] : memref<648x128xf32, #tpu.memory_space<vmem>>, vector<32x32xf32>
    %cst_54 = arith.constant dense<0.000000e+00> : vector<8x32xf32>
    %144 = tpu.matmul %142, %143, %cst_54 {dimension_numbers = #tpu.dot_dimension_numbers<[1], [0], [0], [1], [0, 0, 1, 1], [], []>} : vector<8x32xf32>, vector<32x32xf32>, vector<8x32xf32> -> vector<8x32xf32>
    %c568 = arith.constant 568 : index
    %c0_55 = arith.constant 0 : index
    %145 = vector.load %arg2[%c568, %c0_55] : memref<648x128xf32, #tpu.memory_space<vmem>>, vector<1x32xf32>
    %146 = vector.broadcast %145 : vector<1x32xf32> to vector<8x32xf32>
    %147 = arith.addf %144, %146 : vector<8x32xf32>
    %c64 = arith.constant 64 : index
    %c0_56 = arith.constant 0 : index
    %148 = vector.load %arg2[%c64, %c0_56] : memref<648x128xf32, #tpu.memory_space<vmem>>, vector<32x96xf32>
    %cst_57 = arith.constant dense<0.000000e+00> : vector<8x96xf32>
    %149 = tpu.matmul %147, %148, %cst_57 {dimension_numbers = #tpu.dot_dimension_numbers<[1], [0], [0], [1], [0, 0, 1, 1], [], []>} : vector<8x32xf32>, vector<32x96xf32>, vector<8x96xf32> -> vector<8x96xf32>
    %c520 = arith.constant 520 : index
    %c0_58 = arith.constant 0 : index
    %150 = vector.load %arg2[%c520, %c0_58] : memref<648x128xf32, #tpu.memory_space<vmem>>, vector<1x96xf32>
    %151 = vector.broadcast %150 : vector<1x96xf32> to vector<8x96xf32>
    %152 = arith.addf %149, %151 : vector<8x96xf32>
    %153 = vector.extract_strided_slice %152 {offsets = [0, 0], sizes = [8, 32], strides = [1, 1]} : vector<8x96xf32> to vector<8x32xf32>
    %154 = vector.extract_strided_slice %152 {offsets = [0, 32], sizes = [8, 32], strides = [1, 1]} : vector<8x96xf32> to vector<8x32xf32>
    %155 = vector.extract_strided_slice %152 {offsets = [0, 64], sizes = [8, 32], strides = [1, 1]} : vector<8x96xf32> to vector<8x32xf32>
    %156 = arith.mulf %33, %34 : vector<8x32xf32>
    %157 = arith.mulf %33, %153 : vector<8x32xf32>
    %158 = arith.mulf %33, %13 : vector<8x32xf32>
    %159 = tpu.concatenate %156, %157, %158 in 0 : vector<8x32xf32>, vector<8x32xf32>, vector<8x32xf32> -> vector<24x32xf32>
    %c448 = arith.constant 448 : index
    %c0_59 = arith.constant 0 : index
    %160 = vector.load %arg2[%c448, %c0_59] : memref<648x128xf32, #tpu.memory_space<vmem>>, vector<32x4xf32>
    %cst_60 = arith.constant dense<0.000000e+00> : vector<24x4xf32>
    %161 = tpu.matmul %159, %160, %cst_60 {dimension_numbers = #tpu.dot_dimension_numbers<[1], [0], [0], [1], [0, 0, 1, 1], [], []>} : vector<24x32xf32>, vector<32x4xf32>, vector<24x4xf32> -> vector<24x4xf32>
    %cst_61 = arith.constant 0.353553385 : f32
    %162 = vector.broadcast %cst_61 : f32 to vector<24x4xf32>
    %163 = arith.mulf %161, %162 : vector<24x4xf32>
    %164 = vector.extract_strided_slice %163 {offsets = [0, 0], sizes = [8, 4], strides = [1, 1]} : vector<24x4xf32> to vector<8x4xf32>
    %165 = vector.extract_strided_slice %163 {offsets = [8, 0], sizes = [8, 4], strides = [1, 1]} : vector<24x4xf32> to vector<8x4xf32>
    %166 = vector.extract_strided_slice %163 {offsets = [16, 0], sizes = [8, 4], strides = [1, 1]} : vector<24x4xf32> to vector<8x4xf32>
    %167 = arith.maximumf %164, %165 : vector<8x4xf32>
    %168 = arith.maximumf %167, %166 : vector<8x4xf32>
    %169 = arith.subf %164, %168 : vector<8x4xf32>
    %170 = math.exp %169 : vector<8x4xf32>
    %171 = arith.subf %165, %168 : vector<8x4xf32>
    %172 = math.exp %171 : vector<8x4xf32>
    %173 = arith.subf %166, %168 : vector<8x4xf32>
    %174 = math.exp %173 : vector<8x4xf32>
    %175 = arith.addf %170, %172 : vector<8x4xf32>
    %176 = arith.addf %175, %174 : vector<8x4xf32>
    %177 = tpu.reciprocal %176 {approx = true} : vector<8x4xf32> -> vector<8x4xf32>
    %178 = tpu.concatenate %170, %172, %174, %177 in 0 : vector<8x4xf32>, vector<8x4xf32>, vector<8x4xf32>, vector<8x4xf32> -> vector<32x4xf32>
    %c480 = arith.constant 480 : index
    %c0_62 = arith.constant 0 : index
    %179 = vector.load %arg2[%c480, %c0_62] : memref<648x128xf32, #tpu.memory_space<vmem>>, vector<4x32xf32>
    %cst_63 = arith.constant dense<0.000000e+00> : vector<32x32xf32>
    %180 = tpu.matmul %178, %179, %cst_63 {dimension_numbers = #tpu.dot_dimension_numbers<[1], [0], [0], [1], [0, 0, 1, 1], [], []>} : vector<32x4xf32>, vector<4x32xf32>, vector<32x32xf32> -> vector<32x32xf32>
    %181 = vector.extract_strided_slice %180 {offsets = [0, 0], sizes = [8, 32], strides = [1, 1]} : vector<32x32xf32> to vector<8x32xf32>
    %182 = arith.mulf %181, %35 : vector<8x32xf32>
    %183 = vector.extract_strided_slice %180 {offsets = [8, 0], sizes = [8, 32], strides = [1, 1]} : vector<32x32xf32> to vector<8x32xf32>
    %184 = arith.mulf %183, %154 : vector<8x32xf32>
    %185 = arith.addf %182, %184 : vector<8x32xf32>
    %186 = vector.extract_strided_slice %180 {offsets = [16, 0], sizes = [8, 32], strides = [1, 1]} : vector<32x32xf32> to vector<8x32xf32>
    %187 = arith.mulf %186, %14 : vector<8x32xf32>
    %188 = arith.addf %185, %187 : vector<8x32xf32>
    %189 = vector.extract_strided_slice %180 {offsets = [24, 0], sizes = [8, 32], strides = [1, 1]} : vector<32x32xf32> to vector<8x32xf32>
    %190 = arith.mulf %188, %189 : vector<8x32xf32>
    %c256 = arith.constant 256 : index
    %c0_64 = arith.constant 0 : index
    %191 = vector.load %arg2[%c256, %c0_64] : memref<648x128xf32, #tpu.memory_space<vmem>>, vector<32x32xf32>
    %cst_65 = arith.constant dense<0.000000e+00> : vector<8x32xf32>
    %192 = tpu.matmul %190, %191, %cst_65 {dimension_numbers = #tpu.dot_dimension_numbers<[1], [0], [0], [1], [0, 0, 1, 1], [], []>} : vector<8x32xf32>, vector<32x32xf32>, vector<8x32xf32> -> vector<8x32xf32>
    %c584 = arith.constant 584 : index
    %c0_66 = arith.constant 0 : index
    %193 = vector.load %arg2[%c584, %c0_66] : memref<648x128xf32, #tpu.memory_space<vmem>>, vector<1x32xf32>
    %194 = vector.broadcast %193 : vector<1x32xf32> to vector<8x32xf32>
    %195 = arith.addf %192, %194 : vector<8x32xf32>
    %196 = arith.addf %0, %195 : vector<8x32xf32>
    %c592 = arith.constant 592 : index
    %c0_67 = arith.constant 0 : index
    %197 = vector.load %arg2[%c592, %c0_67] : memref<648x128xf32, #tpu.memory_space<vmem>>, vector<1x32xf32>
    %c600 = arith.constant 600 : index
    %c0_68 = arith.constant 0 : index
    %198 = vector.load %arg2[%c600, %c0_68] : memref<648x128xf32, #tpu.memory_space<vmem>>, vector<1x32xf32>
    %cst_69 = arith.constant dense<0.000000e+00> : vector<8xf32>
    %199 = vector.multi_reduction <add>, %196, %cst_69 [1] : vector<8x32xf32> to vector<8xf32>
    %200 = vector.shape_cast %199 : vector<8xf32> to vector<8x1xf32>
    %cst_70 = arith.constant 3.200000e+01 : f32
    %201 = vector.broadcast %cst_70 : f32 to vector<8x1xf32>
    %202 = arith.divf %200, %201 : vector<8x1xf32>
    %203 = vector.broadcast %202 : vector<8x1xf32> to vector<8x32xf32>
    %204 = arith.subf %196, %203 : vector<8x32xf32>
    %205 = arith.mulf %204, %204 : vector<8x32xf32>
    %cst_71 = arith.constant dense<0.000000e+00> : vector<8xf32>
    %206 = vector.multi_reduction <add>, %205, %cst_71 [1] : vector<8x32xf32> to vector<8xf32>
    %207 = vector.shape_cast %206 : vector<8xf32> to vector<8x1xf32>
    %cst_72 = arith.constant 3.200000e+01 : f32
    %208 = vector.broadcast %cst_72 : f32 to vector<8x1xf32>
    %209 = arith.divf %207, %208 : vector<8x1xf32>
    %210 = vector.broadcast %202 : vector<8x1xf32> to vector<8x32xf32>
    %211 = arith.subf %196, %210 : vector<8x32xf32>
    %cst_73 = arith.constant 9.99999974E-6 : f32
    %212 = vector.broadcast %cst_73 : f32 to vector<8x1xf32>
    %213 = arith.addf %209, %212 : vector<8x1xf32>
    %214 = math.rsqrt %213 : vector<8x1xf32>
    %215 = vector.broadcast %214 : vector<8x1xf32> to vector<8x32xf32>
    %216 = arith.mulf %211, %215 : vector<8x32xf32>
    %217 = vector.broadcast %197 : vector<1x32xf32> to vector<8x32xf32>
    %218 = arith.mulf %216, %217 : vector<8x32xf32>
    %219 = vector.broadcast %198 : vector<1x32xf32> to vector<8x32xf32>
    %220 = arith.addf %218, %219 : vector<8x32xf32>
    %c288 = arith.constant 288 : index
    %c0_74 = arith.constant 0 : index
    %221 = vector.load %arg2[%c288, %c0_74] : memref<648x128xf32, #tpu.memory_space<vmem>>, vector<32x64xf32>
    %cst_75 = arith.constant dense<0.000000e+00> : vector<8x64xf32>
    %222 = tpu.matmul %220, %221, %cst_75 {dimension_numbers = #tpu.dot_dimension_numbers<[1], [0], [0], [1], [0, 0, 1, 1], [], []>} : vector<8x32xf32>, vector<32x64xf32>, vector<8x64xf32> -> vector<8x64xf32>
    %c608 = arith.constant 608 : index
    %c0_76 = arith.constant 0 : index
    %223 = vector.load %arg2[%c608, %c0_76] : memref<648x128xf32, #tpu.memory_space<vmem>>, vector<1x64xf32>
    %224 = vector.broadcast %223 : vector<1x64xf32> to vector<8x64xf32>
    %225 = arith.addf %222, %224 : vector<8x64xf32>
    %226 = arith.mulf %225, %225 : vector<8x64xf32>
    %227 = arith.mulf %225, %226 : vector<8x64xf32>
    %cst_77 = arith.constant 4.471500e-02 : f32
    %228 = vector.broadcast %cst_77 : f32 to vector<8x64xf32>
    %229 = arith.mulf %228, %227 : vector<8x64xf32>
    %230 = arith.addf %225, %229 : vector<8x64xf32>
    %cst_78 = arith.constant 0.797884583 : f32
    %231 = vector.broadcast %cst_78 : f32 to vector<8x64xf32>
    %232 = arith.mulf %231, %230 : vector<8x64xf32>
    %233 = math.tanh %232 : vector<8x64xf32>
    %cst_79 = arith.constant 1.000000e+00 : f32
    %234 = vector.broadcast %cst_79 : f32 to vector<8x64xf32>
    %235 = arith.addf %234, %233 : vector<8x64xf32>
    %cst_80 = arith.constant 5.000000e-01 : f32
    %236 = vector.broadcast %cst_80 : f32 to vector<8x64xf32>
    %237 = arith.mulf %236, %235 : vector<8x64xf32>
    %238 = arith.mulf %225, %237 : vector<8x64xf32>
    %c320 = arith.constant 320 : index
    %c0_81 = arith.constant 0 : index
    %239 = vector.load %arg2[%c320, %c0_81] : memref<648x128xf32, #tpu.memory_space<vmem>>, vector<64x32xf32>
    %cst_82 = arith.constant dense<0.000000e+00> : vector<8x32xf32>
    %240 = tpu.matmul %238, %239, %cst_82 {dimension_numbers = #tpu.dot_dimension_numbers<[1], [0], [0], [1], [0, 0, 1, 1], [], []>} : vector<8x64xf32>, vector<64x32xf32>, vector<8x32xf32> -> vector<8x32xf32>
    %c616 = arith.constant 616 : index
    %c0_83 = arith.constant 0 : index
    %241 = vector.load %arg2[%c616, %c0_83] : memref<648x128xf32, #tpu.memory_space<vmem>>, vector<1x32xf32>
    %242 = vector.broadcast %241 : vector<1x32xf32> to vector<8x32xf32>
    %243 = arith.addf %240, %242 : vector<8x32xf32>
    %244 = arith.addf %220, %243 : vector<8x32xf32>
    %c624 = arith.constant 624 : index
    %c0_84 = arith.constant 0 : index
    %245 = vector.load %arg2[%c624, %c0_84] : memref<648x128xf32, #tpu.memory_space<vmem>>, vector<1x32xf32>
    %c632 = arith.constant 632 : index
    %c0_85 = arith.constant 0 : index
    %246 = vector.load %arg2[%c632, %c0_85] : memref<648x128xf32, #tpu.memory_space<vmem>>, vector<1x32xf32>
    %cst_86 = arith.constant dense<0.000000e+00> : vector<8xf32>
    %247 = vector.multi_reduction <add>, %244, %cst_86 [1] : vector<8x32xf32> to vector<8xf32>
    %248 = vector.shape_cast %247 : vector<8xf32> to vector<8x1xf32>
    %cst_87 = arith.constant 3.200000e+01 : f32
    %249 = vector.broadcast %cst_87 : f32 to vector<8x1xf32>
    %250 = arith.divf %248, %249 : vector<8x1xf32>
    %251 = vector.broadcast %250 : vector<8x1xf32> to vector<8x32xf32>
    %252 = arith.subf %244, %251 : vector<8x32xf32>
    %253 = arith.mulf %252, %252 : vector<8x32xf32>
    %cst_88 = arith.constant dense<0.000000e+00> : vector<8xf32>
    %254 = vector.multi_reduction <add>, %253, %cst_88 [1] : vector<8x32xf32> to vector<8xf32>
    %255 = vector.shape_cast %254 : vector<8xf32> to vector<8x1xf32>
    %cst_89 = arith.constant 3.200000e+01 : f32
    %256 = vector.broadcast %cst_89 : f32 to vector<8x1xf32>
    %257 = arith.divf %255, %256 : vector<8x1xf32>
    %258 = vector.broadcast %250 : vector<8x1xf32> to vector<8x32xf32>
    %259 = arith.subf %244, %258 : vector<8x32xf32>
    %cst_90 = arith.constant 9.99999974E-6 : f32
    %260 = vector.broadcast %cst_90 : f32 to vector<8x1xf32>
    %261 = arith.addf %257, %260 : vector<8x1xf32>
    %262 = math.rsqrt %261 : vector<8x1xf32>
    %263 = vector.broadcast %262 : vector<8x1xf32> to vector<8x32xf32>
    %264 = arith.mulf %259, %263 : vector<8x32xf32>
    %265 = vector.broadcast %245 : vector<1x32xf32> to vector<8x32xf32>
    %266 = arith.mulf %264, %265 : vector<8x32xf32>
    %267 = vector.broadcast %246 : vector<1x32xf32> to vector<8x32xf32>
    %268 = arith.addf %266, %267 : vector<8x32xf32>
    %269 = arith.addf %42, %155 : vector<8x32xf32>
    %c384 = arith.constant 384 : index
    %c0_91 = arith.constant 0 : index
    %270 = vector.load %arg2[%c384, %c0_91] : memref<648x128xf32, #tpu.memory_space<vmem>>, vector<32x32xf32>
    %cst_92 = arith.constant dense<0.000000e+00> : vector<8x32xf32>
    %271 = tpu.matmul %268, %270, %cst_92 {dimension_numbers = #tpu.dot_dimension_numbers<[1], [0], [0], [1], [0, 0, 1, 1], [], []>} : vector<8x32xf32>, vector<32x32xf32>, vector<8x32xf32> -> vector<8x32xf32>
    %272 = arith.addf %269, %271 : vector<8x32xf32>
    %273 = arith.mulf %272, %272 : vector<8x32xf32>
    %274 = arith.mulf %272, %273 : vector<8x32xf32>
    %cst_93 = arith.constant 4.471500e-02 : f32
    %275 = vector.broadcast %cst_93 : f32 to vector<8x32xf32>
    %276 = arith.mulf %275, %274 : vector<8x32xf32>
    %277 = arith.addf %272, %276 : vector<8x32xf32>
    %cst_94 = arith.constant 0.797884583 : f32
    %278 = vector.broadcast %cst_94 : f32 to vector<8x32xf32>
    %279 = arith.mulf %278, %277 : vector<8x32xf32>
    %280 = math.tanh %279 : vector<8x32xf32>
    %cst_95 = arith.constant 1.000000e+00 : f32
    %281 = vector.broadcast %cst_95 : f32 to vector<8x32xf32>
    %282 = arith.addf %281, %280 : vector<8x32xf32>
    %cst_96 = arith.constant 5.000000e-01 : f32
    %283 = vector.broadcast %cst_96 : f32 to vector<8x32xf32>
    %284 = arith.mulf %283, %282 : vector<8x32xf32>
    %285 = arith.mulf %272, %284 : vector<8x32xf32>
    %c416 = arith.constant 416 : index
    %c0_97 = arith.constant 0 : index
    %286 = vector.load %arg2[%c416, %c0_97] : memref<648x128xf32, #tpu.memory_space<vmem>>, vector<32x1xf32>
    %cst_98 = arith.constant dense<0.000000e+00> : vector<8x1xf32>
    %287 = tpu.matmul %285, %286, %cst_98 {dimension_numbers = #tpu.dot_dimension_numbers<[1], [0], [0], [1], [0, 0, 1, 1], [], []>} : vector<8x32xf32>, vector<32x1xf32>, vector<8x1xf32> -> vector<8x1xf32>
    %c640 = arith.constant 640 : index
    %c0_99 = arith.constant 0 : index
    %288 = vector.load %arg2[%c640, %c0_99] : memref<648x128xf32, #tpu.memory_space<vmem>>, vector<1x1xf32>
    %289 = vector.broadcast %288 : vector<1x1xf32> to vector<8x1xf32>
    %290 = arith.addf %287, %289 : vector<8x1xf32>
    %291 = arith.negf %290 : vector<8x1xf32>
    %292 = math.exp %291 : vector<8x1xf32>
    %cst_100 = arith.constant 1.000000e+00 : f32
    %293 = vector.broadcast %cst_100 : f32 to vector<8x1xf32>
    %294 = arith.addf %293, %292 : vector<8x1xf32>
    %295 = arith.divf %293, %294 : vector<8x1xf32>
    %296 = arith.subf %268, %0 : vector<8x32xf32>
    %297 = vector.broadcast %76 : vector<1x1xf32> to vector<8x32xf32>
    %298 = arith.mulf %297, %296 : vector<8x32xf32>
    %299 = arith.addf %0, %298 : vector<8x32xf32>
    %cst_101 = arith.constant 1.000000e+00 : f32
    %300 = vector.broadcast %cst_101 : f32 to vector<8x1xf32>
    %301 = arith.subf %295, %300 : vector<8x1xf32>
    %302 = vector.broadcast %76 : vector<1x1xf32> to vector<8x1xf32>
    %303 = arith.mulf %302, %301 : vector<8x1xf32>
    %cst_102 = arith.constant 1.000000e+00 : f32
    %304 = vector.broadcast %cst_102 : f32 to vector<8x1xf32>
    %305 = arith.addf %304, %303 : vector<8x1xf32>
    %306 = arith.mulf %24, %305 : vector<8x1xf32>
    %307 = arith.addf %26, %76 : vector<1x1xf32>
    %c1 = arith.constant 1 : index
    %c0_103 = arith.constant 0 : index
    %c0_104 = arith.constant 0 : index
    %308 = vector.load %arg3[%c1, %c0_103, %c0_104] : memref<5x8x32xf32, #tpu.memory_space<vmem>>, vector<1x8x32xf32>
    %309 = vector.shape_cast %308 : vector<1x8x32xf32> to vector<8x32xf32>
    %310 = vector.shape_cast %299 : vector<8x32xf32> to vector<1x8x32xf32>
    tpu.vector_store %arg3[%c1, %c0_103, %c0_104], %310 {strides = array<i32>} : memref<5x8x32xf32, #tpu.memory_space<vmem>>, vector<1x8x32xf32>,
    %c0_105 = arith.constant 0 : index
    %c0_106 = arith.constant 0 : index
    %311 = vector.load %arg2[%c0_105, %c0_106] : memref<648x128xf32, #tpu.memory_space<vmem>>, vector<32x128xf32>
    %cst_107 = arith.constant dense<0.000000e+00> : vector<8x128xf32>
    %312 = tpu.matmul %299, %311, %cst_107 {dimension_numbers = #tpu.dot_dimension_numbers<[1], [0], [0], [1], [0, 0, 1, 1], [], []>} : vector<8x32xf32>, vector<32x128xf32>, vector<8x128xf32> -> vector<8x128xf32>
    %c504_108 = arith.constant 504 : index
    %c0_109 = arith.constant 0 : index
    %313 = vector.load %arg2[%c504_108, %c0_109] : memref<648x128xf32, #tpu.memory_space<vmem>>, vector<1x128xf32>
    %314 = vector.broadcast %313 : vector<1x128xf32> to vector<8x128xf32>
    %315 = arith.addf %312, %314 : vector<8x128xf32>
    %316 = vector.extract_strided_slice %315 {offsets = [0, 0], sizes = [8, 32], strides = [1, 1]} : vector<8x128xf32> to vector<8x32xf32>
    %317 = vector.extract_strided_slice %315 {offsets = [0, 32], sizes = [8, 32], strides = [1, 1]} : vector<8x128xf32> to vector<8x32xf32>
    %318 = vector.extract_strided_slice %315 {offsets = [0, 64], sizes = [8, 32], strides = [1, 1]} : vector<8x128xf32> to vector<8x32xf32>
    %319 = vector.extract_strided_slice %315 {offsets = [0, 96], sizes = [8, 32], strides = [1, 1]} : vector<8x128xf32> to vector<8x32xf32>
    %c32_110 = arith.constant 32 : index
    %c0_111 = arith.constant 0 : index
    %320 = vector.load %arg2[%c32_110, %c0_111] : memref<648x128xf32, #tpu.memory_space<vmem>>, vector<32x64xf32>
    %cst_112 = arith.constant dense<0.000000e+00> : vector<8x64xf32>
    %321 = tpu.matmul %299, %320, %cst_112 {dimension_numbers = #tpu.dot_dimension_numbers<[1], [0], [0], [1], [0, 0, 1, 1], [], []>} : vector<8x32xf32>, vector<32x64xf32>, vector<8x64xf32> -> vector<8x64xf32>
    %c512_113 = arith.constant 512 : index
    %c0_114 = arith.constant 0 : index
    %322 = vector.load %arg2[%c512_113, %c0_114] : memref<648x128xf32, #tpu.memory_space<vmem>>, vector<1x64xf32>
    %323 = vector.broadcast %322 : vector<1x64xf32> to vector<8x64xf32>
    %324 = arith.addf %321, %323 : vector<8x64xf32>
    %325 = vector.extract_strided_slice %324 {offsets = [0, 0], sizes = [8, 32], strides = [1, 1]} : vector<8x64xf32> to vector<8x32xf32>
    %326 = vector.extract_strided_slice %324 {offsets = [0, 32], sizes = [8, 32], strides = [1, 1]} : vector<8x64xf32> to vector<8x32xf32>
    %327 = arith.addf %325, %12 : vector<8x32xf32>
    %328 = arith.mulf %327, %327 : vector<8x32xf32>
    %329 = arith.mulf %327, %328 : vector<8x32xf32>
    %cst_115 = arith.constant 4.471500e-02 : f32
    %330 = vector.broadcast %cst_115 : f32 to vector<8x32xf32>
    %331 = arith.mulf %330, %329 : vector<8x32xf32>
    %332 = arith.addf %327, %331 : vector<8x32xf32>
    %cst_116 = arith.constant 0.797884583 : f32
    %333 = vector.broadcast %cst_116 : f32 to vector<8x32xf32>
    %334 = arith.mulf %333, %332 : vector<8x32xf32>
    %335 = math.tanh %334 : vector<8x32xf32>
    %cst_117 = arith.constant 1.000000e+00 : f32
    %336 = vector.broadcast %cst_117 : f32 to vector<8x32xf32>
    %337 = arith.addf %336, %335 : vector<8x32xf32>
    %cst_118 = arith.constant 5.000000e-01 : f32
    %338 = vector.broadcast %cst_118 : f32 to vector<8x32xf32>
    %339 = arith.mulf %338, %337 : vector<8x32xf32>
    %340 = arith.mulf %327, %339 : vector<8x32xf32>
    %c224_119 = arith.constant 224 : index
    %c0_120 = arith.constant 0 : index
    %341 = vector.load %arg2[%c224_119, %c0_120] : memref<648x128xf32, #tpu.memory_space<vmem>>, vector<32x1xf32>
    %cst_121 = arith.constant dense<0.000000e+00> : vector<8x1xf32>
    %342 = tpu.matmul %340, %341, %cst_121 {dimension_numbers = #tpu.dot_dimension_numbers<[1], [0], [0], [1], [0, 0, 1, 1], [], []>} : vector<8x32xf32>, vector<32x1xf32>, vector<8x1xf32> -> vector<8x1xf32>
    %c576_122 = arith.constant 576 : index
    %c0_123 = arith.constant 0 : index
    %343 = vector.load %arg2[%c576_122, %c0_123] : memref<648x128xf32, #tpu.memory_space<vmem>>, vector<1x1xf32>
    %344 = vector.broadcast %343 : vector<1x1xf32> to vector<8x1xf32>
    %345 = arith.addf %342, %344 : vector<8x1xf32>
    %346 = arith.negf %345 : vector<8x1xf32>
    %347 = math.exp %346 : vector<8x1xf32>
    %cst_124 = arith.constant 1.000000e+00 : f32
    %348 = vector.broadcast %cst_124 : f32 to vector<8x1xf32>
    %349 = arith.addf %348, %347 : vector<8x1xf32>
    %350 = arith.divf %348, %349 : vector<8x1xf32>
    %cst_125 = arith.constant 0.899999976 : f32
    %351 = vector.broadcast %cst_125 : f32 to vector<8x1xf32>
    %352 = arith.cmpf ogt, %350, %351 : vector<8x1xf32>
    %353 = arith.extui %352 : vector<8x1xi1> to vector<8x1xi32>
    %354 = arith.sitofp %353 : vector<8x1xi32> to vector<8x1xf32>
    %355 = arith.maximumf %354, %5 : vector<8x1xf32>
    %cst_126 = arith.constant dense<0x7F800000> : vector<1xf32>
    %356 = vector.multi_reduction <minimumf>, %355, %cst_126 [0] : vector<8x1xf32> to vector<1xf32>
    %357 = vector.shape_cast %356 : vector<1xf32> to vector<1x1xf32>
    %358 = arith.maximumf %74, %357 : vector<1x1xf32>
    %cst_127 = arith.constant 1.000000e+00 : f32
    %359 = vector.broadcast %cst_127 : f32 to vector<1x1xf32>
    %360 = arith.subf %359, %358 : vector<1x1xf32>
    %361 = vector.shape_cast %316 : vector<8x32xf32> to vector<8x1x32xf32>
    %362 = vector.shape_cast %20 : vector<16x32xf32> to vector<1x16x32xf32>
    %363 = vector.broadcast %361 : vector<8x1x32xf32> to vector<8x16x32xf32>
    %364 = vector.broadcast %362 : vector<1x16x32xf32> to vector<8x16x32xf32>
    %365 = arith.addf %363, %364 : vector<8x16x32xf32>
    %366 = arith.mulf %365, %365 : vector<8x16x32xf32>
    %367 = arith.mulf %365, %366 : vector<8x16x32xf32>
    %cst_128 = arith.constant 4.471500e-02 : f32
    %368 = vector.broadcast %cst_128 : f32 to vector<8x16x32xf32>
    %369 = arith.mulf %368, %367 : vector<8x16x32xf32>
    %370 = arith.addf %365, %369 : vector<8x16x32xf32>
    %cst_129 = arith.constant 0.797884583 : f32
    %371 = vector.broadcast %cst_129 : f32 to vector<8x16x32xf32>
    %372 = arith.mulf %371, %370 : vector<8x16x32xf32>
    %373 = math.tanh %372 : vector<8x16x32xf32>
    %cst_130 = arith.constant 1.000000e+00 : f32
    %374 = vector.broadcast %cst_130 : f32 to vector<8x16x32xf32>
    %375 = arith.addf %374, %373 : vector<8x16x32xf32>
    %cst_131 = arith.constant 5.000000e-01 : f32
    %376 = vector.broadcast %cst_131 : f32 to vector<8x16x32xf32>
    %377 = arith.mulf %376, %375 : vector<8x16x32xf32>
    %378 = arith.mulf %365, %377 : vector<8x16x32xf32>
    %c544_132 = arith.constant 544 : index
    %c0_133 = arith.constant 0 : index
    %379 = vector.load %arg2[%c544_132, %c0_133] : memref<648x128xf32, #tpu.memory_space<vmem>>, vector<1x32xf32>
    %380 = vector.shape_cast %379 : vector<1x32xf32> to vector<1x1x32xf32>
    %381 = vector.broadcast %380 : vector<1x1x32xf32> to vector<8x16x32xf32>
    %382 = arith.mulf %378, %381 : vector<8x16x32xf32>
    %cst_134 = arith.constant dense<0.000000e+00> : vector<8x16xf32>
    %383 = vector.multi_reduction <add>, %382, %cst_134 [2] : vector<8x16x32xf32> to vector<8x16xf32>
    %c552_135 = arith.constant 552 : index
    %c0_136 = arith.constant 0 : index
    %384 = vector.load %arg2[%c552_135, %c0_136] : memref<648x128xf32, #tpu.memory_space<vmem>>, vector<1x1xf32>
    %385 = vector.broadcast %384 : vector<1x1xf32> to vector<8x16xf32>
    %386 = arith.addf %383, %385 : vector<8x16xf32>
    %387 = tpu.iota {dimensions = array<i32: 1>} : vector<8x16xi32>
    %cst_137 = arith.constant dense<0xFF800000> : vector<8xf32>
    %388 = vector.multi_reduction <maximumf>, %386, %cst_137 [1] : vector<8x16xf32> to vector<8xf32>
    %389 = vector.shape_cast %388 : vector<8xf32> to vector<8x1xf32>
    %390 = vector.broadcast %389 : vector<8x1xf32> to vector<8x16xf32>
    %391 = arith.cmpf oeq, %386, %390 : vector<8x16xf32>
    %c16_i32_138 = arith.constant 16 : i32
    %392 = vector.broadcast %c16_i32_138 : i32 to vector<8x16xi32>
    %393 = arith.select %391, %387, %392 : vector<8x16xi1>, vector<8x16xi32>
    %cst_139 = arith.constant dense<2147483647> : vector<8xi32>
    %394 = vector.multi_reduction <minsi>, %393, %cst_139 [1] : vector<8x16xi32> to vector<8xi32>
    %395 = vector.shape_cast %394 : vector<8xi32> to vector<8x1xi32>
    %396 = vector.broadcast %395 : vector<8x1xi32> to vector<8x16xi32>
    %397 = arith.cmpi eq, %387, %396 : vector<8x16xi32>
    %398 = arith.extui %397 : vector<8x16xi1> to vector<8x16xi32>
    %399 = arith.sitofp %398 : vector<8x16xi32> to vector<8x16xf32>
    %c488_140 = arith.constant 488 : index
    %c0_141 = arith.constant 0 : index
    %400 = vector.load %arg2[%c488_140, %c0_141] : memref<648x128xf32, #tpu.memory_space<vmem>>, vector<16x32xf32>
    %cst_142 = arith.constant dense<0.000000e+00> : vector<8x32xf32>
    %401 = tpu.matmul %399, %400, %cst_142 {dimension_numbers = #tpu.dot_dimension_numbers<[1], [0], [0], [1], [0, 0, 1, 1], [], []>} : vector<8x16xf32>, vector<16x32xf32>, vector<8x32xf32> -> vector<8x32xf32>
    %402 = arith.negf %389 : vector<8x1xf32>
    %403 = math.exp %402 : vector<8x1xf32>
    %cst_143 = arith.constant 1.000000e+00 : f32
    %404 = vector.broadcast %cst_143 : f32 to vector<8x1xf32>
    %405 = arith.addf %404, %403 : vector<8x1xf32>
    %406 = arith.divf %404, %405 : vector<8x1xf32>
    %407 = vector.broadcast %406 : vector<8x1xf32> to vector<8x32xf32>
    %408 = arith.mulf %401, %407 : vector<8x32xf32>
    %c160_144 = arith.constant 160 : index
    %c0_145 = arith.constant 0 : index
    %409 = vector.load %arg2[%c160_144, %c0_145] : memref<648x128xf32, #tpu.memory_space<vmem>>, vector<32x32xf32>
    %cst_146 = arith.constant dense<0.000000e+00> : vector<8x32xf32>
    %410 = tpu.matmul %408, %409, %cst_146 {dimension_numbers = #tpu.dot_dimension_numbers<[1], [0], [0], [1], [0, 0, 1, 1], [], []>} : vector<8x32xf32>, vector<32x32xf32>, vector<8x32xf32> -> vector<8x32xf32>
    %c560_147 = arith.constant 560 : index
    %c0_148 = arith.constant 0 : index
    %411 = vector.load %arg2[%c560_147, %c0_148] : memref<648x128xf32, #tpu.memory_space<vmem>>, vector<1x32xf32>
    %412 = vector.broadcast %411 : vector<1x32xf32> to vector<8x32xf32>
    %413 = arith.addf %410, %412 : vector<8x32xf32>
    %414 = arith.mulf %413, %413 : vector<8x32xf32>
    %415 = arith.mulf %413, %414 : vector<8x32xf32>
    %cst_149 = arith.constant 4.471500e-02 : f32
    %416 = vector.broadcast %cst_149 : f32 to vector<8x32xf32>
    %417 = arith.mulf %416, %415 : vector<8x32xf32>
    %418 = arith.addf %413, %417 : vector<8x32xf32>
    %cst_150 = arith.constant 0.797884583 : f32
    %419 = vector.broadcast %cst_150 : f32 to vector<8x32xf32>
    %420 = arith.mulf %419, %418 : vector<8x32xf32>
    %421 = math.tanh %420 : vector<8x32xf32>
    %cst_151 = arith.constant 1.000000e+00 : f32
    %422 = vector.broadcast %cst_151 : f32 to vector<8x32xf32>
    %423 = arith.addf %422, %421 : vector<8x32xf32>
    %cst_152 = arith.constant 5.000000e-01 : f32
    %424 = vector.broadcast %cst_152 : f32 to vector<8x32xf32>
    %425 = arith.mulf %424, %423 : vector<8x32xf32>
    %426 = arith.mulf %413, %425 : vector<8x32xf32>
    %c192_153 = arith.constant 192 : index
    %c0_154 = arith.constant 0 : index
    %427 = vector.load %arg2[%c192_153, %c0_154] : memref<648x128xf32, #tpu.memory_space<vmem>>, vector<32x32xf32>
    %cst_155 = arith.constant dense<0.000000e+00> : vector<8x32xf32>
    %428 = tpu.matmul %426, %427, %cst_155 {dimension_numbers = #tpu.dot_dimension_numbers<[1], [0], [0], [1], [0, 0, 1, 1], [], []>} : vector<8x32xf32>, vector<32x32xf32>, vector<8x32xf32> -> vector<8x32xf32>
    %c568_156 = arith.constant 568 : index
    %c0_157 = arith.constant 0 : index
    %429 = vector.load %arg2[%c568_156, %c0_157] : memref<648x128xf32, #tpu.memory_space<vmem>>, vector<1x32xf32>
    %430 = vector.broadcast %429 : vector<1x32xf32> to vector<8x32xf32>
    %431 = arith.addf %428, %430 : vector<8x32xf32>
    %c64_158 = arith.constant 64 : index
    %c0_159 = arith.constant 0 : index
    %432 = vector.load %arg2[%c64_158, %c0_159] : memref<648x128xf32, #tpu.memory_space<vmem>>, vector<32x96xf32>
    %cst_160 = arith.constant dense<0.000000e+00> : vector<8x96xf32>
    %433 = tpu.matmul %431, %432, %cst_160 {dimension_numbers = #tpu.dot_dimension_numbers<[1], [0], [0], [1], [0, 0, 1, 1], [], []>} : vector<8x32xf32>, vector<32x96xf32>, vector<8x96xf32> -> vector<8x96xf32>
    %c520_161 = arith.constant 520 : index
    %c0_162 = arith.constant 0 : index
    %434 = vector.load %arg2[%c520_161, %c0_162] : memref<648x128xf32, #tpu.memory_space<vmem>>, vector<1x96xf32>
    %435 = vector.broadcast %434 : vector<1x96xf32> to vector<8x96xf32>
    %436 = arith.addf %433, %435 : vector<8x96xf32>
    %437 = vector.extract_strided_slice %436 {offsets = [0, 0], sizes = [8, 32], strides = [1, 1]} : vector<8x96xf32> to vector<8x32xf32>
    %438 = vector.extract_strided_slice %436 {offsets = [0, 32], sizes = [8, 32], strides = [1, 1]} : vector<8x96xf32> to vector<8x32xf32>
    %439 = vector.extract_strided_slice %436 {offsets = [0, 64], sizes = [8, 32], strides = [1, 1]} : vector<8x96xf32> to vector<8x32xf32>
    %440 = arith.mulf %317, %318 : vector<8x32xf32>
    %441 = arith.mulf %317, %437 : vector<8x32xf32>
    %442 = arith.mulf %317, %13 : vector<8x32xf32>
    %443 = tpu.concatenate %440, %441, %442 in 0 : vector<8x32xf32>, vector<8x32xf32>, vector<8x32xf32> -> vector<24x32xf32>
    %c448_163 = arith.constant 448 : index
    %c0_164 = arith.constant 0 : index
    %444 = vector.load %arg2[%c448_163, %c0_164] : memref<648x128xf32, #tpu.memory_space<vmem>>, vector<32x4xf32>
    %cst_165 = arith.constant dense<0.000000e+00> : vector<24x4xf32>
    %445 = tpu.matmul %443, %444, %cst_165 {dimension_numbers = #tpu.dot_dimension_numbers<[1], [0], [0], [1], [0, 0, 1, 1], [], []>} : vector<24x32xf32>, vector<32x4xf32>, vector<24x4xf32> -> vector<24x4xf32>
    %cst_166 = arith.constant 0.353553385 : f32
    %446 = vector.broadcast %cst_166 : f32 to vector<24x4xf32>
    %447 = arith.mulf %445, %446 : vector<24x4xf32>
    %448 = vector.extract_strided_slice %447 {offsets = [0, 0], sizes = [8, 4], strides = [1, 1]} : vector<24x4xf32> to vector<8x4xf32>
    %449 = vector.extract_strided_slice %447 {offsets = [8, 0], sizes = [8, 4], strides = [1, 1]} : vector<24x4xf32> to vector<8x4xf32>
    %450 = vector.extract_strided_slice %447 {offsets = [16, 0], sizes = [8, 4], strides = [1, 1]} : vector<24x4xf32> to vector<8x4xf32>
    %451 = arith.maximumf %448, %449 : vector<8x4xf32>
    %452 = arith.maximumf %451, %450 : vector<8x4xf32>
    %453 = arith.subf %448, %452 : vector<8x4xf32>
    %454 = math.exp %453 : vector<8x4xf32>
    %455 = arith.subf %449, %452 : vector<8x4xf32>
    %456 = math.exp %455 : vector<8x4xf32>
    %457 = arith.subf %450, %452 : vector<8x4xf32>
    %458 = math.exp %457 : vector<8x4xf32>
    %459 = arith.addf %454, %456 : vector<8x4xf32>
    %460 = arith.addf %459, %458 : vector<8x4xf32>
    %461 = tpu.reciprocal %460 {approx = true} : vector<8x4xf32> -> vector<8x4xf32>
    %462 = tpu.concatenate %454, %456, %458, %461 in 0 : vector<8x4xf32>, vector<8x4xf32>, vector<8x4xf32>, vector<8x4xf32> -> vector<32x4xf32>
    %c480_167 = arith.constant 480 : index
    %c0_168 = arith.constant 0 : index
    %463 = vector.load %arg2[%c480_167, %c0_168] : memref<648x128xf32, #tpu.memory_space<vmem>>, vector<4x32xf32>
    %cst_169 = arith.constant dense<0.000000e+00> : vector<32x32xf32>
    %464 = tpu.matmul %462, %463, %cst_169 {dimension_numbers = #tpu.dot_dimension_numbers<[1], [0], [0], [1], [0, 0, 1, 1], [], []>} : vector<32x4xf32>, vector<4x32xf32>, vector<32x32xf32> -> vector<32x32xf32>
    %465 = vector.extract_strided_slice %464 {offsets = [0, 0], sizes = [8, 32], strides = [1, 1]} : vector<32x32xf32> to vector<8x32xf32>
    %466 = arith.mulf %465, %319 : vector<8x32xf32>
    %467 = vector.extract_strided_slice %464 {offsets = [8, 0], sizes = [8, 32], strides = [1, 1]} : vector<32x32xf32> to vector<8x32xf32>
    %468 = arith.mulf %467, %438 : vector<8x32xf32>
    %469 = arith.addf %466, %468 : vector<8x32xf32>
    %470 = vector.extract_strided_slice %464 {offsets = [16, 0], sizes = [8, 32], strides = [1, 1]} : vector<32x32xf32> to vector<8x32xf32>
    %471 = arith.mulf %470, %14 : vector<8x32xf32>
    %472 = arith.addf %469, %471 : vector<8x32xf32>
    %473 = vector.extract_strided_slice %464 {offsets = [24, 0], sizes = [8, 32], strides = [1, 1]} : vector<32x32xf32> to vector<8x32xf32>
    %474 = arith.mulf %472, %473 : vector<8x32xf32>
    %c256_170 = arith.constant 256 : index
    %c0_171 = arith.constant 0 : index
    %475 = vector.load %arg2[%c256_170, %c0_171] : memref<648x128xf32, #tpu.memory_space<vmem>>, vector<32x32xf32>
    %cst_172 = arith.constant dense<0.000000e+00> : vector<8x32xf32>
    %476 = tpu.matmul %474, %475, %cst_172 {dimension_numbers = #tpu.dot_dimension_numbers<[1], [0], [0], [1], [0, 0, 1, 1], [], []>} : vector<8x32xf32>, vector<32x32xf32>, vector<8x32xf32> -> vector<8x32xf32>
    %c584_173 = arith.constant 584 : index
    %c0_174 = arith.constant 0 : index
    %477 = vector.load %arg2[%c584_173, %c0_174] : memref<648x128xf32, #tpu.memory_space<vmem>>, vector<1x32xf32>
    %478 = vector.broadcast %477 : vector<1x32xf32> to vector<8x32xf32>
    %479 = arith.addf %476, %478 : vector<8x32xf32>
    %480 = arith.addf %299, %479 : vector<8x32xf32>
    %c592_175 = arith.constant 592 : index
    %c0_176 = arith.constant 0 : index
    %481 = vector.load %arg2[%c592_175, %c0_176] : memref<648x128xf32, #tpu.memory_space<vmem>>, vector<1x32xf32>
    %c600_177 = arith.constant 600 : index
    %c0_178 = arith.constant 0 : index
    %482 = vector.load %arg2[%c600_177, %c0_178] : memref<648x128xf32, #tpu.memory_space<vmem>>, vector<1x32xf32>
    %cst_179 = arith.constant dense<0.000000e+00> : vector<8xf32>
    %483 = vector.multi_reduction <add>, %480, %cst_179 [1] : vector<8x32xf32> to vector<8xf32>
    %484 = vector.shape_cast %483 : vector<8xf32> to vector<8x1xf32>
    %cst_180 = arith.constant 3.200000e+01 : f32
    %485 = vector.broadcast %cst_180 : f32 to vector<8x1xf32>
    %486 = arith.divf %484, %485 : vector<8x1xf32>
    %487 = vector.broadcast %486 : vector<8x1xf32> to vector<8x32xf32>
    %488 = arith.subf %480, %487 : vector<8x32xf32>
    %489 = arith.mulf %488, %488 : vector<8x32xf32>
    %cst_181 = arith.constant dense<0.000000e+00> : vector<8xf32>
    %490 = vector.multi_reduction <add>, %489, %cst_181 [1] : vector<8x32xf32> to vector<8xf32>
    %491 = vector.shape_cast %490 : vector<8xf32> to vector<8x1xf32>
    %cst_182 = arith.constant 3.200000e+01 : f32
    %492 = vector.broadcast %cst_182 : f32 to vector<8x1xf32>
    %493 = arith.divf %491, %492 : vector<8x1xf32>
    %494 = vector.broadcast %486 : vector<8x1xf32> to vector<8x32xf32>
    %495 = arith.subf %480, %494 : vector<8x32xf32>
    %cst_183 = arith.constant 9.99999974E-6 : f32
    %496 = vector.broadcast %cst_183 : f32 to vector<8x1xf32>
    %497 = arith.addf %493, %496 : vector<8x1xf32>
    %498 = math.rsqrt %497 : vector<8x1xf32>
    %499 = vector.broadcast %498 : vector<8x1xf32> to vector<8x32xf32>
    %500 = arith.mulf %495, %499 : vector<8x32xf32>
    %501 = vector.broadcast %481 : vector<1x32xf32> to vector<8x32xf32>
    %502 = arith.mulf %500, %501 : vector<8x32xf32>
    %503 = vector.broadcast %482 : vector<1x32xf32> to vector<8x32xf32>
    %504 = arith.addf %502, %503 : vector<8x32xf32>
    %c288_184 = arith.constant 288 : index
    %c0_185 = arith.constant 0 : index
    %505 = vector.load %arg2[%c288_184, %c0_185] : memref<648x128xf32, #tpu.memory_space<vmem>>, vector<32x64xf32>
    %cst_186 = arith.constant dense<0.000000e+00> : vector<8x64xf32>
    %506 = tpu.matmul %504, %505, %cst_186 {dimension_numbers = #tpu.dot_dimension_numbers<[1], [0], [0], [1], [0, 0, 1, 1], [], []>} : vector<8x32xf32>, vector<32x64xf32>, vector<8x64xf32> -> vector<8x64xf32>
    %c608_187 = arith.constant 608 : index
    %c0_188 = arith.constant 0 : index
    %507 = vector.load %arg2[%c608_187, %c0_188] : memref<648x128xf32, #tpu.memory_space<vmem>>, vector<1x64xf32>
    %508 = vector.broadcast %507 : vector<1x64xf32> to vector<8x64xf32>
    %509 = arith.addf %506, %508 : vector<8x64xf32>
    %510 = arith.mulf %509, %509 : vector<8x64xf32>
    %511 = arith.mulf %509, %510 : vector<8x64xf32>
    %cst_189 = arith.constant 4.471500e-02 : f32
    %512 = vector.broadcast %cst_189 : f32 to vector<8x64xf32>
    %513 = arith.mulf %512, %511 : vector<8x64xf32>
    %514 = arith.addf %509, %513 : vector<8x64xf32>
    %cst_190 = arith.constant 0.797884583 : f32
    %515 = vector.broadcast %cst_190 : f32 to vector<8x64xf32>
    %516 = arith.mulf %515, %514 : vector<8x64xf32>
    %517 = math.tanh %516 : vector<8x64xf32>
    %cst_191 = arith.constant 1.000000e+00 : f32
    %518 = vector.broadcast %cst_191 : f32 to vector<8x64xf32>
    %519 = arith.addf %518, %517 : vector<8x64xf32>
    %cst_192 = arith.constant 5.000000e-01 : f32
    %520 = vector.broadcast %cst_192 : f32 to vector<8x64xf32>
    %521 = arith.mulf %520, %519 : vector<8x64xf32>
    %522 = arith.mulf %509, %521 : vector<8x64xf32>
    %c320_193 = arith.constant 320 : index
    %c0_194 = arith.constant 0 : index
    %523 = vector.load %arg2[%c320_193, %c0_194] : memref<648x128xf32, #tpu.memory_space<vmem>>, vector<64x32xf32>
    %cst_195 = arith.constant dense<0.000000e+00> : vector<8x32xf32>
    %524 = tpu.matmul %522, %523, %cst_195 {dimension_numbers = #tpu.dot_dimension_numbers<[1], [0], [0], [1], [0, 0, 1, 1], [], []>} : vector<8x64xf32>, vector<64x32xf32>, vector<8x32xf32> -> vector<8x32xf32>
    %c616_196 = arith.constant 616 : index
    %c0_197 = arith.constant 0 : index
    %525 = vector.load %arg2[%c616_196, %c0_197] : memref<648x128xf32, #tpu.memory_space<vmem>>, vector<1x32xf32>
    %526 = vector.broadcast %525 : vector<1x32xf32> to vector<8x32xf32>
    %527 = arith.addf %524, %526 : vector<8x32xf32>
    %528 = arith.addf %504, %527 : vector<8x32xf32>
    %c624_198 = arith.constant 624 : index
    %c0_199 = arith.constant 0 : index
    %529 = vector.load %arg2[%c624_198, %c0_199] : memref<648x128xf32, #tpu.memory_space<vmem>>, vector<1x32xf32>
    %c632_200 = arith.constant 632 : index
    %c0_201 = arith.constant 0 : index
    %530 = vector.load %arg2[%c632_200, %c0_201] : memref<648x128xf32, #tpu.memory_space<vmem>>, vector<1x32xf32>
    %cst_202 = arith.constant dense<0.000000e+00> : vector<8xf32>
    %531 = vector.multi_reduction <add>, %528, %cst_202 [1] : vector<8x32xf32> to vector<8xf32>
    %532 = vector.shape_cast %531 : vector<8xf32> to vector<8x1xf32>
    %cst_203 = arith.constant 3.200000e+01 : f32
    %533 = vector.broadcast %cst_203 : f32 to vector<8x1xf32>
    %534 = arith.divf %532, %533 : vector<8x1xf32>
    %535 = vector.broadcast %534 : vector<8x1xf32> to vector<8x32xf32>
    %536 = arith.subf %528, %535 : vector<8x32xf32>
    %537 = arith.mulf %536, %536 : vector<8x32xf32>
    %cst_204 = arith.constant dense<0.000000e+00> : vector<8xf32>
    %538 = vector.multi_reduction <add>, %537, %cst_204 [1] : vector<8x32xf32> to vector<8xf32>
    %539 = vector.shape_cast %538 : vector<8xf32> to vector<8x1xf32>
    %cst_205 = arith.constant 3.200000e+01 : f32
    %540 = vector.broadcast %cst_205 : f32 to vector<8x1xf32>
    %541 = arith.divf %539, %540 : vector<8x1xf32>
    %542 = vector.broadcast %534 : vector<8x1xf32> to vector<8x32xf32>
    %543 = arith.subf %528, %542 : vector<8x32xf32>
    %cst_206 = arith.constant 9.99999974E-6 : f32
    %544 = vector.broadcast %cst_206 : f32 to vector<8x1xf32>
    %545 = arith.addf %541, %544 : vector<8x1xf32>
    %546 = math.rsqrt %545 : vector<8x1xf32>
    %547 = vector.broadcast %546 : vector<8x1xf32> to vector<8x32xf32>
    %548 = arith.mulf %543, %547 : vector<8x32xf32>
    %549 = vector.broadcast %529 : vector<1x32xf32> to vector<8x32xf32>
    %550 = arith.mulf %548, %549 : vector<8x32xf32>
    %551 = vector.broadcast %530 : vector<1x32xf32> to vector<8x32xf32>
    %552 = arith.addf %550, %551 : vector<8x32xf32>
    %553 = arith.addf %326, %439 : vector<8x32xf32>
    %c384_207 = arith.constant 384 : index
    %c0_208 = arith.constant 0 : index
    %554 = vector.load %arg2[%c384_207, %c0_208] : memref<648x128xf32, #tpu.memory_space<vmem>>, vector<32x32xf32>
    %cst_209 = arith.constant dense<0.000000e+00> : vector<8x32xf32>
    %555 = tpu.matmul %552, %554, %cst_209 {dimension_numbers = #tpu.dot_dimension_numbers<[1], [0], [0], [1], [0, 0, 1, 1], [], []>} : vector<8x32xf32>, vector<32x32xf32>, vector<8x32xf32> -> vector<8x32xf32>
    %556 = arith.addf %553, %555 : vector<8x32xf32>
    %557 = arith.mulf %556, %556 : vector<8x32xf32>
    %558 = arith.mulf %556, %557 : vector<8x32xf32>
    %cst_210 = arith.constant 4.471500e-02 : f32
    %559 = vector.broadcast %cst_210 : f32 to vector<8x32xf32>
    %560 = arith.mulf %559, %558 : vector<8x32xf32>
    %561 = arith.addf %556, %560 : vector<8x32xf32>
    %cst_211 = arith.constant 0.797884583 : f32
    %562 = vector.broadcast %cst_211 : f32 to vector<8x32xf32>
    %563 = arith.mulf %562, %561 : vector<8x32xf32>
    %564 = math.tanh %563 : vector<8x32xf32>
    %cst_212 = arith.constant 1.000000e+00 : f32
    %565 = vector.broadcast %cst_212 : f32 to vector<8x32xf32>
    %566 = arith.addf %565, %564 : vector<8x32xf32>
    %cst_213 = arith.constant 5.000000e-01 : f32
    %567 = vector.broadcast %cst_213 : f32 to vector<8x32xf32>
    %568 = arith.mulf %567, %566 : vector<8x32xf32>
    %569 = arith.mulf %556, %568 : vector<8x32xf32>
    %c416_214 = arith.constant 416 : index
    %c0_215 = arith.constant 0 : index
    %570 = vector.load %arg2[%c416_214, %c0_215] : memref<648x128xf32, #tpu.memory_space<vmem>>, vector<32x1xf32>
    %cst_216 = arith.constant dense<0.000000e+00> : vector<8x1xf32>
    %571 = tpu.matmul %569, %570, %cst_216 {dimension_numbers = #tpu.dot_dimension_numbers<[1], [0], [0], [1], [0, 0, 1, 1], [], []>} : vector<8x32xf32>, vector<32x1xf32>, vector<8x1xf32> -> vector<8x1xf32>
    %c640_217 = arith.constant 640 : index
    %c0_218 = arith.constant 0 : index
    %572 = vector.load %arg2[%c640_217, %c0_218] : memref<648x128xf32, #tpu.memory_space<vmem>>, vector<1x1xf32>
    %573 = vector.broadcast %572 : vector<1x1xf32> to vector<8x1xf32>
    %574 = arith.addf %571, %573 : vector<8x1xf32>
    %575 = arith.negf %574 : vector<8x1xf32>
    %576 = math.exp %575 : vector<8x1xf32>
    %cst_219 = arith.constant 1.000000e+00 : f32
    %577 = vector.broadcast %cst_219 : f32 to vector<8x1xf32>
    %578 = arith.addf %577, %576 : vector<8x1xf32>
    %579 = arith.divf %577, %578 : vector<8x1xf32>
    %580 = arith.subf %552, %299 : vector<8x32xf32>
    %581 = vector.broadcast %360 : vector<1x1xf32> to vector<8x32xf32>
    %582 = arith.mulf %581, %580 : vector<8x32xf32>
    %583 = arith.addf %299, %582 : vector<8x32xf32>
    %cst_220 = arith.constant 1.000000e+00 : f32
    %584 = vector.broadcast %cst_220 : f32 to vector<8x1xf32>
    %585 = arith.subf %579, %584 : vector<8x1xf32>
    %586 = vector.broadcast %360 : vector<1x1xf32> to vector<8x1xf32>
    %587 = arith.mulf %586, %585 : vector<8x1xf32>
    %cst_221 = arith.constant 1.000000e+00 : f32
    %588 = vector.broadcast %cst_221 : f32 to vector<8x1xf32>
    %589 = arith.addf %588, %587 : vector<8x1xf32>
    %590 = arith.mulf %306, %589 : vector<8x1xf32>
    %591 = arith.addf %307, %360 : vector<1x1xf32>
    %c2 = arith.constant 2 : index
    %c0_222 = arith.constant 0 : index
    %c0_223 = arith.constant 0 : index
    %592 = vector.load %arg3[%c2, %c0_222, %c0_223] : memref<5x8x32xf32, #tpu.memory_space<vmem>>, vector<1x8x32xf32>
    %593 = vector.shape_cast %592 : vector<1x8x32xf32> to vector<8x32xf32>
    %594 = vector.shape_cast %583 : vector<8x32xf32> to vector<1x8x32xf32>
    tpu.vector_store %arg3[%c2, %c0_222, %c0_223], %594 {strides = array<i32>} : memref<5x8x32xf32, #tpu.memory_space<vmem>>, vector<1x8x32xf32>,
    %c0_224 = arith.constant 0 : index
    %c0_225 = arith.constant 0 : index
    %595 = vector.load %arg2[%c0_224, %c0_225] : memref<648x128xf32, #tpu.memory_space<vmem>>, vector<32x128xf32>
    %cst_226 = arith.constant dense<0.000000e+00> : vector<8x128xf32>
    %596 = tpu.matmul %583, %595, %cst_226 {dimension_numbers = #tpu.dot_dimension_numbers<[1], [0], [0], [1], [0, 0, 1, 1], [], []>} : vector<8x32xf32>, vector<32x128xf32>, vector<8x128xf32> -> vector<8x128xf32>
    %c504_227 = arith.constant 504 : index
    %c0_228 = arith.constant 0 : index
    %597 = vector.load %arg2[%c504_227, %c0_228] : memref<648x128xf32, #tpu.memory_space<vmem>>, vector<1x128xf32>
    %598 = vector.broadcast %597 : vector<1x128xf32> to vector<8x128xf32>
    %599 = arith.addf %596, %598 : vector<8x128xf32>
    %600 = vector.extract_strided_slice %599 {offsets = [0, 0], sizes = [8, 32], strides = [1, 1]} : vector<8x128xf32> to vector<8x32xf32>
    %601 = vector.extract_strided_slice %599 {offsets = [0, 32], sizes = [8, 32], strides = [1, 1]} : vector<8x128xf32> to vector<8x32xf32>
    %602 = vector.extract_strided_slice %599 {offsets = [0, 64], sizes = [8, 32], strides = [1, 1]} : vector<8x128xf32> to vector<8x32xf32>
    %603 = vector.extract_strided_slice %599 {offsets = [0, 96], sizes = [8, 32], strides = [1, 1]} : vector<8x128xf32> to vector<8x32xf32>
    %c32_229 = arith.constant 32 : index
    %c0_230 = arith.constant 0 : index
    %604 = vector.load %arg2[%c32_229, %c0_230] : memref<648x128xf32, #tpu.memory_space<vmem>>, vector<32x64xf32>
    %cst_231 = arith.constant dense<0.000000e+00> : vector<8x64xf32>
    %605 = tpu.matmul %583, %604, %cst_231 {dimension_numbers = #tpu.dot_dimension_numbers<[1], [0], [0], [1], [0, 0, 1, 1], [], []>} : vector<8x32xf32>, vector<32x64xf32>, vector<8x64xf32> -> vector<8x64xf32>
    %c512_232 = arith.constant 512 : index
    %c0_233 = arith.constant 0 : index
    %606 = vector.load %arg2[%c512_232, %c0_233] : memref<648x128xf32, #tpu.memory_space<vmem>>, vector<1x64xf32>
    %607 = vector.broadcast %606 : vector<1x64xf32> to vector<8x64xf32>
    %608 = arith.addf %605, %607 : vector<8x64xf32>
    %609 = vector.extract_strided_slice %608 {offsets = [0, 0], sizes = [8, 32], strides = [1, 1]} : vector<8x64xf32> to vector<8x32xf32>
    %610 = vector.extract_strided_slice %608 {offsets = [0, 32], sizes = [8, 32], strides = [1, 1]} : vector<8x64xf32> to vector<8x32xf32>
    %611 = arith.addf %609, %12 : vector<8x32xf32>
    %612 = arith.mulf %611, %611 : vector<8x32xf32>
    %613 = arith.mulf %611, %612 : vector<8x32xf32>
    %cst_234 = arith.constant 4.471500e-02 : f32
    %614 = vector.broadcast %cst_234 : f32 to vector<8x32xf32>
    %615 = arith.mulf %614, %613 : vector<8x32xf32>
    %616 = arith.addf %611, %615 : vector<8x32xf32>
    %cst_235 = arith.constant 0.797884583 : f32
    %617 = vector.broadcast %cst_235 : f32 to vector<8x32xf32>
    %618 = arith.mulf %617, %616 : vector<8x32xf32>
    %619 = math.tanh %618 : vector<8x32xf32>
    %cst_236 = arith.constant 1.000000e+00 : f32
    %620 = vector.broadcast %cst_236 : f32 to vector<8x32xf32>
    %621 = arith.addf %620, %619 : vector<8x32xf32>
    %cst_237 = arith.constant 5.000000e-01 : f32
    %622 = vector.broadcast %cst_237 : f32 to vector<8x32xf32>
    %623 = arith.mulf %622, %621 : vector<8x32xf32>
    %624 = arith.mulf %611, %623 : vector<8x32xf32>
    %c224_238 = arith.constant 224 : index
    %c0_239 = arith.constant 0 : index
    %625 = vector.load %arg2[%c224_238, %c0_239] : memref<648x128xf32, #tpu.memory_space<vmem>>, vector<32x1xf32>
    %cst_240 = arith.constant dense<0.000000e+00> : vector<8x1xf32>
    %626 = tpu.matmul %624, %625, %cst_240 {dimension_numbers = #tpu.dot_dimension_numbers<[1], [0], [0], [1], [0, 0, 1, 1], [], []>} : vector<8x32xf32>, vector<32x1xf32>, vector<8x1xf32> -> vector<8x1xf32>
    %c576_241 = arith.constant 576 : index
    %c0_242 = arith.constant 0 : index
    %627 = vector.load %arg2[%c576_241, %c0_242] : memref<648x128xf32, #tpu.memory_space<vmem>>, vector<1x1xf32>
    %628 = vector.broadcast %627 : vector<1x1xf32> to vector<8x1xf32>
    %629 = arith.addf %626, %628 : vector<8x1xf32>
    %630 = arith.negf %629 : vector<8x1xf32>
    %631 = math.exp %630 : vector<8x1xf32>
    %cst_243 = arith.constant 1.000000e+00 : f32
    %632 = vector.broadcast %cst_243 : f32 to vector<8x1xf32>
    %633 = arith.addf %632, %631 : vector<8x1xf32>
    %634 = arith.divf %632, %633 : vector<8x1xf32>
    %cst_244 = arith.constant 0.899999976 : f32
    %635 = vector.broadcast %cst_244 : f32 to vector<8x1xf32>
    %636 = arith.cmpf ogt, %634, %635 : vector<8x1xf32>
    %637 = arith.extui %636 : vector<8x1xi1> to vector<8x1xi32>
    %638 = arith.sitofp %637 : vector<8x1xi32> to vector<8x1xf32>
    %639 = arith.maximumf %638, %5 : vector<8x1xf32>
    %cst_245 = arith.constant dense<0x7F800000> : vector<1xf32>
    %640 = vector.multi_reduction <minimumf>, %639, %cst_245 [0] : vector<8x1xf32> to vector<1xf32>
    %641 = vector.shape_cast %640 : vector<1xf32> to vector<1x1xf32>
    %642 = arith.maximumf %358, %641 : vector<1x1xf32>
    %cst_246 = arith.constant 1.000000e+00 : f32
    %643 = vector.broadcast %cst_246 : f32 to vector<1x1xf32>
    %644 = arith.subf %643, %642 : vector<1x1xf32>
    %645 = vector.shape_cast %600 : vector<8x32xf32> to vector<8x1x32xf32>
    %646 = vector.shape_cast %20 : vector<16x32xf32> to vector<1x16x32xf32>
    %647 = vector.broadcast %645 : vector<8x1x32xf32> to vector<8x16x32xf32>
    %648 = vector.broadcast %646 : vector<1x16x32xf32> to vector<8x16x32xf32>
    %649 = arith.addf %647, %648 : vector<8x16x32xf32>
    %650 = arith.mulf %649, %649 : vector<8x16x32xf32>
    %651 = arith.mulf %649, %650 : vector<8x16x32xf32>
    %cst_247 = arith.constant 4.471500e-02 : f32
    %652 = vector.broadcast %cst_247 : f32 to vector<8x16x32xf32>
    %653 = arith.mulf %652, %651 : vector<8x16x32xf32>
    %654 = arith.addf %649, %653 : vector<8x16x32xf32>
    %cst_248 = arith.constant 0.797884583 : f32
    %655 = vector.broadcast %cst_248 : f32 to vector<8x16x32xf32>
    %656 = arith.mulf %655, %654 : vector<8x16x32xf32>
    %657 = math.tanh %656 : vector<8x16x32xf32>
    %cst_249 = arith.constant 1.000000e+00 : f32
    %658 = vector.broadcast %cst_249 : f32 to vector<8x16x32xf32>
    %659 = arith.addf %658, %657 : vector<8x16x32xf32>
    %cst_250 = arith.constant 5.000000e-01 : f32
    %660 = vector.broadcast %cst_250 : f32 to vector<8x16x32xf32>
    %661 = arith.mulf %660, %659 : vector<8x16x32xf32>
    %662 = arith.mulf %649, %661 : vector<8x16x32xf32>
    %c544_251 = arith.constant 544 : index
    %c0_252 = arith.constant 0 : index
    %663 = vector.load %arg2[%c544_251, %c0_252] : memref<648x128xf32, #tpu.memory_space<vmem>>, vector<1x32xf32>
    %664 = vector.shape_cast %663 : vector<1x32xf32> to vector<1x1x32xf32>
    %665 = vector.broadcast %664 : vector<1x1x32xf32> to vector<8x16x32xf32>
    %666 = arith.mulf %662, %665 : vector<8x16x32xf32>
    %cst_253 = arith.constant dense<0.000000e+00> : vector<8x16xf32>
    %667 = vector.multi_reduction <add>, %666, %cst_253 [2] : vector<8x16x32xf32> to vector<8x16xf32>
    %c552_254 = arith.constant 552 : index
    %c0_255 = arith.constant 0 : index
    %668 = vector.load %arg2[%c552_254, %c0_255] : memref<648x128xf32, #tpu.memory_space<vmem>>, vector<1x1xf32>
    %669 = vector.broadcast %668 : vector<1x1xf32> to vector<8x16xf32>
    %670 = arith.addf %667, %669 : vector<8x16xf32>
    %671 = tpu.iota {dimensions = array<i32: 1>} : vector<8x16xi32>
    %cst_256 = arith.constant dense<0xFF800000> : vector<8xf32>
    %672 = vector.multi_reduction <maximumf>, %670, %cst_256 [1] : vector<8x16xf32> to vector<8xf32>
    %673 = vector.shape_cast %672 : vector<8xf32> to vector<8x1xf32>
    %674 = vector.broadcast %673 : vector<8x1xf32> to vector<8x16xf32>
    %675 = arith.cmpf oeq, %670, %674 : vector<8x16xf32>
    %c16_i32_257 = arith.constant 16 : i32
    %676 = vector.broadcast %c16_i32_257 : i32 to vector<8x16xi32>
    %677 = arith.select %675, %671, %676 : vector<8x16xi1>, vector<8x16xi32>
    %cst_258 = arith.constant dense<2147483647> : vector<8xi32>
    %678 = vector.multi_reduction <minsi>, %677, %cst_258 [1] : vector<8x16xi32> to vector<8xi32>
    %679 = vector.shape_cast %678 : vector<8xi32> to vector<8x1xi32>
    %680 = vector.broadcast %679 : vector<8x1xi32> to vector<8x16xi32>
    %681 = arith.cmpi eq, %671, %680 : vector<8x16xi32>
    %682 = arith.extui %681 : vector<8x16xi1> to vector<8x16xi32>
    %683 = arith.sitofp %682 : vector<8x16xi32> to vector<8x16xf32>
    %c488_259 = arith.constant 488 : index
    %c0_260 = arith.constant 0 : index
    %684 = vector.load %arg2[%c488_259, %c0_260] : memref<648x128xf32, #tpu.memory_space<vmem>>, vector<16x32xf32>
    %cst_261 = arith.constant dense<0.000000e+00> : vector<8x32xf32>
    %685 = tpu.matmul %683, %684, %cst_261 {dimension_numbers = #tpu.dot_dimension_numbers<[1], [0], [0], [1], [0, 0, 1, 1], [], []>} : vector<8x16xf32>, vector<16x32xf32>, vector<8x32xf32> -> vector<8x32xf32>
    %686 = arith.negf %673 : vector<8x1xf32>
    %687 = math.exp %686 : vector<8x1xf32>
    %cst_262 = arith.constant 1.000000e+00 : f32
    %688 = vector.broadcast %cst_262 : f32 to vector<8x1xf32>
    %689 = arith.addf %688, %687 : vector<8x1xf32>
    %690 = arith.divf %688, %689 : vector<8x1xf32>
    %691 = vector.broadcast %690 : vector<8x1xf32> to vector<8x32xf32>
    %692 = arith.mulf %685, %691 : vector<8x32xf32>
    %c160_263 = arith.constant 160 : index
    %c0_264 = arith.constant 0 : index
    %693 = vector.load %arg2[%c160_263, %c0_264] : memref<648x128xf32, #tpu.memory_space<vmem>>, vector<32x32xf32>
    %cst_265 = arith.constant dense<0.000000e+00> : vector<8x32xf32>
    %694 = tpu.matmul %692, %693, %cst_265 {dimension_numbers = #tpu.dot_dimension_numbers<[1], [0], [0], [1], [0, 0, 1, 1], [], []>} : vector<8x32xf32>, vector<32x32xf32>, vector<8x32xf32> -> vector<8x32xf32>
    %c560_266 = arith.constant 560 : index
    %c0_267 = arith.constant 0 : index
    %695 = vector.load %arg2[%c560_266, %c0_267] : memref<648x128xf32, #tpu.memory_space<vmem>>, vector<1x32xf32>
    %696 = vector.broadcast %695 : vector<1x32xf32> to vector<8x32xf32>
    %697 = arith.addf %694, %696 : vector<8x32xf32>
    %698 = arith.mulf %697, %697 : vector<8x32xf32>
    %699 = arith.mulf %697, %698 : vector<8x32xf32>
    %cst_268 = arith.constant 4.471500e-02 : f32
    %700 = vector.broadcast %cst_268 : f32 to vector<8x32xf32>
    %701 = arith.mulf %700, %699 : vector<8x32xf32>
    %702 = arith.addf %697, %701 : vector<8x32xf32>
    %cst_269 = arith.constant 0.797884583 : f32
    %703 = vector.broadcast %cst_269 : f32 to vector<8x32xf32>
    %704 = arith.mulf %703, %702 : vector<8x32xf32>
    %705 = math.tanh %704 : vector<8x32xf32>
    %cst_270 = arith.constant 1.000000e+00 : f32
    %706 = vector.broadcast %cst_270 : f32 to vector<8x32xf32>
    %707 = arith.addf %706, %705 : vector<8x32xf32>
    %cst_271 = arith.constant 5.000000e-01 : f32
    %708 = vector.broadcast %cst_271 : f32 to vector<8x32xf32>
    %709 = arith.mulf %708, %707 : vector<8x32xf32>
    %710 = arith.mulf %697, %709 : vector<8x32xf32>
    %c192_272 = arith.constant 192 : index
    %c0_273 = arith.constant 0 : index
    %711 = vector.load %arg2[%c192_272, %c0_273] : memref<648x128xf32, #tpu.memory_space<vmem>>, vector<32x32xf32>
    %cst_274 = arith.constant dense<0.000000e+00> : vector<8x32xf32>
    %712 = tpu.matmul %710, %711, %cst_274 {dimension_numbers = #tpu.dot_dimension_numbers<[1], [0], [0], [1], [0, 0, 1, 1], [], []>} : vector<8x32xf32>, vector<32x32xf32>, vector<8x32xf32> -> vector<8x32xf32>
    %c568_275 = arith.constant 568 : index
    %c0_276 = arith.constant 0 : index
    %713 = vector.load %arg2[%c568_275, %c0_276] : memref<648x128xf32, #tpu.memory_space<vmem>>, vector<1x32xf32>
    %714 = vector.broadcast %713 : vector<1x32xf32> to vector<8x32xf32>
    %715 = arith.addf %712, %714 : vector<8x32xf32>
    %c64_277 = arith.constant 64 : index
    %c0_278 = arith.constant 0 : index
    %716 = vector.load %arg2[%c64_277, %c0_278] : memref<648x128xf32, #tpu.memory_space<vmem>>, vector<32x96xf32>
    %cst_279 = arith.constant dense<0.000000e+00> : vector<8x96xf32>
    %717 = tpu.matmul %715, %716, %cst_279 {dimension_numbers = #tpu.dot_dimension_numbers<[1], [0], [0], [1], [0, 0, 1, 1], [], []>} : vector<8x32xf32>, vector<32x96xf32>, vector<8x96xf32> -> vector<8x96xf32>
    %c520_280 = arith.constant 520 : index
    %c0_281 = arith.constant 0 : index
    %718 = vector.load %arg2[%c520_280, %c0_281] : memref<648x128xf32, #tpu.memory_space<vmem>>, vector<1x96xf32>
    %719 = vector.broadcast %718 : vector<1x96xf32> to vector<8x96xf32>
    %720 = arith.addf %717, %719 : vector<8x96xf32>
    %721 = vector.extract_strided_slice %720 {offsets = [0, 0], sizes = [8, 32], strides = [1, 1]} : vector<8x96xf32> to vector<8x32xf32>
    %722 = vector.extract_strided_slice %720 {offsets = [0, 32], sizes = [8, 32], strides = [1, 1]} : vector<8x96xf32> to vector<8x32xf32>
    %723 = vector.extract_strided_slice %720 {offsets = [0, 64], sizes = [8, 32], strides = [1, 1]} : vector<8x96xf32> to vector<8x32xf32>
    %724 = arith.mulf %601, %602 : vector<8x32xf32>
    %725 = arith.mulf %601, %721 : vector<8x32xf32>
    %726 = arith.mulf %601, %13 : vector<8x32xf32>
    %727 = tpu.concatenate %724, %725, %726 in 0 : vector<8x32xf32>, vector<8x32xf32>, vector<8x32xf32> -> vector<24x32xf32>
    %c448_282 = arith.constant 448 : index
    %c0_283 = arith.constant 0 : index
    %728 = vector.load %arg2[%c448_282, %c0_283] : memref<648x128xf32, #tpu.memory_space<vmem>>, vector<32x4xf32>
    %cst_284 = arith.constant dense<0.000000e+00> : vector<24x4xf32>
    %729 = tpu.matmul %727, %728, %cst_284 {dimension_numbers = #tpu.dot_dimension_numbers<[1], [0], [0], [1], [0, 0, 1, 1], [], []>} : vector<24x32xf32>, vector<32x4xf32>, vector<24x4xf32> -> vector<24x4xf32>
    %cst_285 = arith.constant 0.353553385 : f32
    %730 = vector.broadcast %cst_285 : f32 to vector<24x4xf32>
    %731 = arith.mulf %729, %730 : vector<24x4xf32>
    %732 = vector.extract_strided_slice %731 {offsets = [0, 0], sizes = [8, 4], strides = [1, 1]} : vector<24x4xf32> to vector<8x4xf32>
    %733 = vector.extract_strided_slice %731 {offsets = [8, 0], sizes = [8, 4], strides = [1, 1]} : vector<24x4xf32> to vector<8x4xf32>
    %734 = vector.extract_strided_slice %731 {offsets = [16, 0], sizes = [8, 4], strides = [1, 1]} : vector<24x4xf32> to vector<8x4xf32>
    %735 = arith.maximumf %732, %733 : vector<8x4xf32>
    %736 = arith.maximumf %735, %734 : vector<8x4xf32>
    %737 = arith.subf %732, %736 : vector<8x4xf32>
    %738 = math.exp %737 : vector<8x4xf32>
    %739 = arith.subf %733, %736 : vector<8x4xf32>
    %740 = math.exp %739 : vector<8x4xf32>
    %741 = arith.subf %734, %736 : vector<8x4xf32>
    %742 = math.exp %741 : vector<8x4xf32>
    %743 = arith.addf %738, %740 : vector<8x4xf32>
    %744 = arith.addf %743, %742 : vector<8x4xf32>
    %745 = tpu.reciprocal %744 {approx = true} : vector<8x4xf32> -> vector<8x4xf32>
    %746 = tpu.concatenate %738, %740, %742, %745 in 0 : vector<8x4xf32>, vector<8x4xf32>, vector<8x4xf32>, vector<8x4xf32> -> vector<32x4xf32>
    %c480_286 = arith.constant 480 : index
    %c0_287 = arith.constant 0 : index
    %747 = vector.load %arg2[%c480_286, %c0_287] : memref<648x128xf32, #tpu.memory_space<vmem>>, vector<4x32xf32>
    %cst_288 = arith.constant dense<0.000000e+00> : vector<32x32xf32>
    %748 = tpu.matmul %746, %747, %cst_288 {dimension_numbers = #tpu.dot_dimension_numbers<[1], [0], [0], [1], [0, 0, 1, 1], [], []>} : vector<32x4xf32>, vector<4x32xf32>, vector<32x32xf32> -> vector<32x32xf32>
    %749 = vector.extract_strided_slice %748 {offsets = [0, 0], sizes = [8, 32], strides = [1, 1]} : vector<32x32xf32> to vector<8x32xf32>
    %750 = arith.mulf %749, %603 : vector<8x32xf32>
    %751 = vector.extract_strided_slice %748 {offsets = [8, 0], sizes = [8, 32], strides = [1, 1]} : vector<32x32xf32> to vector<8x32xf32>
    %752 = arith.mulf %751, %722 : vector<8x32xf32>
    %753 = arith.addf %750, %752 : vector<8x32xf32>
    %754 = vector.extract_strided_slice %748 {offsets = [16, 0], sizes = [8, 32], strides = [1, 1]} : vector<32x32xf32> to vector<8x32xf32>
    %755 = arith.mulf %754, %14 : vector<8x32xf32>
    %756 = arith.addf %753, %755 : vector<8x32xf32>
    %757 = vector.extract_strided_slice %748 {offsets = [24, 0], sizes = [8, 32], strides = [1, 1]} : vector<32x32xf32> to vector<8x32xf32>
    %758 = arith.mulf %756, %757 : vector<8x32xf32>
    %c256_289 = arith.constant 256 : index
    %c0_290 = arith.constant 0 : index
    %759 = vector.load %arg2[%c256_289, %c0_290] : memref<648x128xf32, #tpu.memory_space<vmem>>, vector<32x32xf32>
    %cst_291 = arith.constant dense<0.000000e+00> : vector<8x32xf32>
    %760 = tpu.matmul %758, %759, %cst_291 {dimension_numbers = #tpu.dot_dimension_numbers<[1], [0], [0], [1], [0, 0, 1, 1], [], []>} : vector<8x32xf32>, vector<32x32xf32>, vector<8x32xf32> -> vector<8x32xf32>
    %c584_292 = arith.constant 584 : index
    %c0_293 = arith.constant 0 : index
    %761 = vector.load %arg2[%c584_292, %c0_293] : memref<648x128xf32, #tpu.memory_space<vmem>>, vector<1x32xf32>
    %762 = vector.broadcast %761 : vector<1x32xf32> to vector<8x32xf32>
    %763 = arith.addf %760, %762 : vector<8x32xf32>
    %764 = arith.addf %583, %763 : vector<8x32xf32>
    %c592_294 = arith.constant 592 : index
    %c0_295 = arith.constant 0 : index
    %765 = vector.load %arg2[%c592_294, %c0_295] : memref<648x128xf32, #tpu.memory_space<vmem>>, vector<1x32xf32>
    %c600_296 = arith.constant 600 : index
    %c0_297 = arith.constant 0 : index
    %766 = vector.load %arg2[%c600_296, %c0_297] : memref<648x128xf32, #tpu.memory_space<vmem>>, vector<1x32xf32>
    %cst_298 = arith.constant dense<0.000000e+00> : vector<8xf32>
    %767 = vector.multi_reduction <add>, %764, %cst_298 [1] : vector<8x32xf32> to vector<8xf32>
    %768 = vector.shape_cast %767 : vector<8xf32> to vector<8x1xf32>
    %cst_299 = arith.constant 3.200000e+01 : f32
    %769 = vector.broadcast %cst_299 : f32 to vector<8x1xf32>
    %770 = arith.divf %768, %769 : vector<8x1xf32>
    %771 = vector.broadcast %770 : vector<8x1xf32> to vector<8x32xf32>
    %772 = arith.subf %764, %771 : vector<8x32xf32>
    %773 = arith.mulf %772, %772 : vector<8x32xf32>
    %cst_300 = arith.constant dense<0.000000e+00> : vector<8xf32>
    %774 = vector.multi_reduction <add>, %773, %cst_300 [1] : vector<8x32xf32> to vector<8xf32>
    %775 = vector.shape_cast %774 : vector<8xf32> to vector<8x1xf32>
    %cst_301 = arith.constant 3.200000e+01 : f32
    %776 = vector.broadcast %cst_301 : f32 to vector<8x1xf32>
    %777 = arith.divf %775, %776 : vector<8x1xf32>
    %778 = vector.broadcast %770 : vector<8x1xf32> to vector<8x32xf32>
    %779 = arith.subf %764, %778 : vector<8x32xf32>
    %cst_302 = arith.constant 9.99999974E-6 : f32
    %780 = vector.broadcast %cst_302 : f32 to vector<8x1xf32>
    %781 = arith.addf %777, %780 : vector<8x1xf32>
    %782 = math.rsqrt %781 : vector<8x1xf32>
    %783 = vector.broadcast %782 : vector<8x1xf32> to vector<8x32xf32>
    %784 = arith.mulf %779, %783 : vector<8x32xf32>
    %785 = vector.broadcast %765 : vector<1x32xf32> to vector<8x32xf32>
    %786 = arith.mulf %784, %785 : vector<8x32xf32>
    %787 = vector.broadcast %766 : vector<1x32xf32> to vector<8x32xf32>
    %788 = arith.addf %786, %787 : vector<8x32xf32>
    %c288_303 = arith.constant 288 : index
    %c0_304 = arith.constant 0 : index
    %789 = vector.load %arg2[%c288_303, %c0_304] : memref<648x128xf32, #tpu.memory_space<vmem>>, vector<32x64xf32>
    %cst_305 = arith.constant dense<0.000000e+00> : vector<8x64xf32>
    %790 = tpu.matmul %788, %789, %cst_305 {dimension_numbers = #tpu.dot_dimension_numbers<[1], [0], [0], [1], [0, 0, 1, 1], [], []>} : vector<8x32xf32>, vector<32x64xf32>, vector<8x64xf32> -> vector<8x64xf32>
    %c608_306 = arith.constant 608 : index
    %c0_307 = arith.constant 0 : index
    %791 = vector.load %arg2[%c608_306, %c0_307] : memref<648x128xf32, #tpu.memory_space<vmem>>, vector<1x64xf32>
    %792 = vector.broadcast %791 : vector<1x64xf32> to vector<8x64xf32>
    %793 = arith.addf %790, %792 : vector<8x64xf32>
    %794 = arith.mulf %793, %793 : vector<8x64xf32>
    %795 = arith.mulf %793, %794 : vector<8x64xf32>
    %cst_308 = arith.constant 4.471500e-02 : f32
    %796 = vector.broadcast %cst_308 : f32 to vector<8x64xf32>
    %797 = arith.mulf %796, %795 : vector<8x64xf32>
    %798 = arith.addf %793, %797 : vector<8x64xf32>
    %cst_309 = arith.constant 0.797884583 : f32
    %799 = vector.broadcast %cst_309 : f32 to vector<8x64xf32>
    %800 = arith.mulf %799, %798 : vector<8x64xf32>
    %801 = math.tanh %800 : vector<8x64xf32>
    %cst_310 = arith.constant 1.000000e+00 : f32
    %802 = vector.broadcast %cst_310 : f32 to vector<8x64xf32>
    %803 = arith.addf %802, %801 : vector<8x64xf32>
    %cst_311 = arith.constant 5.000000e-01 : f32
    %804 = vector.broadcast %cst_311 : f32 to vector<8x64xf32>
    %805 = arith.mulf %804, %803 : vector<8x64xf32>
    %806 = arith.mulf %793, %805 : vector<8x64xf32>
    %c320_312 = arith.constant 320 : index
    %c0_313 = arith.constant 0 : index
    %807 = vector.load %arg2[%c320_312, %c0_313] : memref<648x128xf32, #tpu.memory_space<vmem>>, vector<64x32xf32>
    %cst_314 = arith.constant dense<0.000000e+00> : vector<8x32xf32>
    %808 = tpu.matmul %806, %807, %cst_314 {dimension_numbers = #tpu.dot_dimension_numbers<[1], [0], [0], [1], [0, 0, 1, 1], [], []>} : vector<8x64xf32>, vector<64x32xf32>, vector<8x32xf32> -> vector<8x32xf32>
    %c616_315 = arith.constant 616 : index
    %c0_316 = arith.constant 0 : index
    %809 = vector.load %arg2[%c616_315, %c0_316] : memref<648x128xf32, #tpu.memory_space<vmem>>, vector<1x32xf32>
    %810 = vector.broadcast %809 : vector<1x32xf32> to vector<8x32xf32>
    %811 = arith.addf %808, %810 : vector<8x32xf32>
    %812 = arith.addf %788, %811 : vector<8x32xf32>
    %c624_317 = arith.constant 624 : index
    %c0_318 = arith.constant 0 : index
    %813 = vector.load %arg2[%c624_317, %c0_318] : memref<648x128xf32, #tpu.memory_space<vmem>>, vector<1x32xf32>
    %c632_319 = arith.constant 632 : index
    %c0_320 = arith.constant 0 : index
    %814 = vector.load %arg2[%c632_319, %c0_320] : memref<648x128xf32, #tpu.memory_space<vmem>>, vector<1x32xf32>
    %cst_321 = arith.constant dense<0.000000e+00> : vector<8xf32>
    %815 = vector.multi_reduction <add>, %812, %cst_321 [1] : vector<8x32xf32> to vector<8xf32>
    %816 = vector.shape_cast %815 : vector<8xf32> to vector<8x1xf32>
    %cst_322 = arith.constant 3.200000e+01 : f32
    %817 = vector.broadcast %cst_322 : f32 to vector<8x1xf32>
    %818 = arith.divf %816, %817 : vector<8x1xf32>
    %819 = vector.broadcast %818 : vector<8x1xf32> to vector<8x32xf32>
    %820 = arith.subf %812, %819 : vector<8x32xf32>
    %821 = arith.mulf %820, %820 : vector<8x32xf32>
    %cst_323 = arith.constant dense<0.000000e+00> : vector<8xf32>
    %822 = vector.multi_reduction <add>, %821, %cst_323 [1] : vector<8x32xf32> to vector<8xf32>
    %823 = vector.shape_cast %822 : vector<8xf32> to vector<8x1xf32>
    %cst_324 = arith.constant 3.200000e+01 : f32
    %824 = vector.broadcast %cst_324 : f32 to vector<8x1xf32>
    %825 = arith.divf %823, %824 : vector<8x1xf32>
    %826 = vector.broadcast %818 : vector<8x1xf32> to vector<8x32xf32>
    %827 = arith.subf %812, %826 : vector<8x32xf32>
    %cst_325 = arith.constant 9.99999974E-6 : f32
    %828 = vector.broadcast %cst_325 : f32 to vector<8x1xf32>
    %829 = arith.addf %825, %828 : vector<8x1xf32>
    %830 = math.rsqrt %829 : vector<8x1xf32>
    %831 = vector.broadcast %830 : vector<8x1xf32> to vector<8x32xf32>
    %832 = arith.mulf %827, %831 : vector<8x32xf32>
    %833 = vector.broadcast %813 : vector<1x32xf32> to vector<8x32xf32>
    %834 = arith.mulf %832, %833 : vector<8x32xf32>
    %835 = vector.broadcast %814 : vector<1x32xf32> to vector<8x32xf32>
    %836 = arith.addf %834, %835 : vector<8x32xf32>
    %837 = arith.addf %610, %723 : vector<8x32xf32>
    %c384_326 = arith.constant 384 : index
    %c0_327 = arith.constant 0 : index
    %838 = vector.load %arg2[%c384_326, %c0_327] : memref<648x128xf32, #tpu.memory_space<vmem>>, vector<32x32xf32>
    %cst_328 = arith.constant dense<0.000000e+00> : vector<8x32xf32>
    %839 = tpu.matmul %836, %838, %cst_328 {dimension_numbers = #tpu.dot_dimension_numbers<[1], [0], [0], [1], [0, 0, 1, 1], [], []>} : vector<8x32xf32>, vector<32x32xf32>, vector<8x32xf32> -> vector<8x32xf32>
    %840 = arith.addf %837, %839 : vector<8x32xf32>
    %841 = arith.mulf %840, %840 : vector<8x32xf32>
    %842 = arith.mulf %840, %841 : vector<8x32xf32>
    %cst_329 = arith.constant 4.471500e-02 : f32
    %843 = vector.broadcast %cst_329 : f32 to vector<8x32xf32>
    %844 = arith.mulf %843, %842 : vector<8x32xf32>
    %845 = arith.addf %840, %844 : vector<8x32xf32>
    %cst_330 = arith.constant 0.797884583 : f32
    %846 = vector.broadcast %cst_330 : f32 to vector<8x32xf32>
    %847 = arith.mulf %846, %845 : vector<8x32xf32>
    %848 = math.tanh %847 : vector<8x32xf32>
    %cst_331 = arith.constant 1.000000e+00 : f32
    %849 = vector.broadcast %cst_331 : f32 to vector<8x32xf32>
    %850 = arith.addf %849, %848 : vector<8x32xf32>
    %cst_332 = arith.constant 5.000000e-01 : f32
    %851 = vector.broadcast %cst_332 : f32 to vector<8x32xf32>
    %852 = arith.mulf %851, %850 : vector<8x32xf32>
    %853 = arith.mulf %840, %852 : vector<8x32xf32>
    %c416_333 = arith.constant 416 : index
    %c0_334 = arith.constant 0 : index
    %854 = vector.load %arg2[%c416_333, %c0_334] : memref<648x128xf32, #tpu.memory_space<vmem>>, vector<32x1xf32>
    %cst_335 = arith.constant dense<0.000000e+00> : vector<8x1xf32>
    %855 = tpu.matmul %853, %854, %cst_335 {dimension_numbers = #tpu.dot_dimension_numbers<[1], [0], [0], [1], [0, 0, 1, 1], [], []>} : vector<8x32xf32>, vector<32x1xf32>, vector<8x1xf32> -> vector<8x1xf32>
    %c640_336 = arith.constant 640 : index
    %c0_337 = arith.constant 0 : index
    %856 = vector.load %arg2[%c640_336, %c0_337] : memref<648x128xf32, #tpu.memory_space<vmem>>, vector<1x1xf32>
    %857 = vector.broadcast %856 : vector<1x1xf32> to vector<8x1xf32>
    %858 = arith.addf %855, %857 : vector<8x1xf32>
    %859 = arith.negf %858 : vector<8x1xf32>
    %860 = math.exp %859 : vector<8x1xf32>
    %cst_338 = arith.constant 1.000000e+00 : f32
    %861 = vector.broadcast %cst_338 : f32 to vector<8x1xf32>
    %862 = arith.addf %861, %860 : vector<8x1xf32>
    %863 = arith.divf %861, %862 : vector<8x1xf32>
    %864 = arith.subf %836, %583 : vector<8x32xf32>
    %865 = vector.broadcast %644 : vector<1x1xf32> to vector<8x32xf32>
    %866 = arith.mulf %865, %864 : vector<8x32xf32>
    %867 = arith.addf %583, %866 : vector<8x32xf32>
    %cst_339 = arith.constant 1.000000e+00 : f32
    %868 = vector.broadcast %cst_339 : f32 to vector<8x1xf32>
    %869 = arith.subf %863, %868 : vector<8x1xf32>
    %870 = vector.broadcast %644 : vector<1x1xf32> to vector<8x1xf32>
    %871 = arith.mulf %870, %869 : vector<8x1xf32>
    %cst_340 = arith.constant 1.000000e+00 : f32
    %872 = vector.broadcast %cst_340 : f32 to vector<8x1xf32>
    %873 = arith.addf %872, %871 : vector<8x1xf32>
    %874 = arith.mulf %590, %873 : vector<8x1xf32>
    %875 = arith.addf %591, %644 : vector<1x1xf32>
    %c3 = arith.constant 3 : index
    %c0_341 = arith.constant 0 : index
    %c0_342 = arith.constant 0 : index
    %876 = vector.load %arg3[%c3, %c0_341, %c0_342] : memref<5x8x32xf32, #tpu.memory_space<vmem>>, vector<1x8x32xf32>
    %877 = vector.shape_cast %876 : vector<1x8x32xf32> to vector<8x32xf32>
    %878 = vector.shape_cast %867 : vector<8x32xf32> to vector<1x8x32xf32>
    tpu.vector_store %arg3[%c3, %c0_341, %c0_342], %878 {strides = array<i32>} : memref<5x8x32xf32, #tpu.memory_space<vmem>>, vector<1x8x32xf32>,
    %c0_343 = arith.constant 0 : index
    %c0_344 = arith.constant 0 : index
    %879 = vector.load %arg2[%c0_343, %c0_344] : memref<648x128xf32, #tpu.memory_space<vmem>>, vector<32x128xf32>
    %cst_345 = arith.constant dense<0.000000e+00> : vector<8x128xf32>
    %880 = tpu.matmul %867, %879, %cst_345 {dimension_numbers = #tpu.dot_dimension_numbers<[1], [0], [0], [1], [0, 0, 1, 1], [], []>} : vector<8x32xf32>, vector<32x128xf32>, vector<8x128xf32> -> vector<8x128xf32>
    %c504_346 = arith.constant 504 : index
    %c0_347 = arith.constant 0 : index
    %881 = vector.load %arg2[%c504_346, %c0_347] : memref<648x128xf32, #tpu.memory_space<vmem>>, vector<1x128xf32>
    %882 = vector.broadcast %881 : vector<1x128xf32> to vector<8x128xf32>
    %883 = arith.addf %880, %882 : vector<8x128xf32>
    %884 = vector.extract_strided_slice %883 {offsets = [0, 0], sizes = [8, 32], strides = [1, 1]} : vector<8x128xf32> to vector<8x32xf32>
    %885 = vector.extract_strided_slice %883 {offsets = [0, 32], sizes = [8, 32], strides = [1, 1]} : vector<8x128xf32> to vector<8x32xf32>
    %886 = vector.extract_strided_slice %883 {offsets = [0, 64], sizes = [8, 32], strides = [1, 1]} : vector<8x128xf32> to vector<8x32xf32>
    %887 = vector.extract_strided_slice %883 {offsets = [0, 96], sizes = [8, 32], strides = [1, 1]} : vector<8x128xf32> to vector<8x32xf32>
    %c32_348 = arith.constant 32 : index
    %c0_349 = arith.constant 0 : index
    %888 = vector.load %arg2[%c32_348, %c0_349] : memref<648x128xf32, #tpu.memory_space<vmem>>, vector<32x64xf32>
    %cst_350 = arith.constant dense<0.000000e+00> : vector<8x64xf32>
    %889 = tpu.matmul %867, %888, %cst_350 {dimension_numbers = #tpu.dot_dimension_numbers<[1], [0], [0], [1], [0, 0, 1, 1], [], []>} : vector<8x32xf32>, vector<32x64xf32>, vector<8x64xf32> -> vector<8x64xf32>
    %c512_351 = arith.constant 512 : index
    %c0_352 = arith.constant 0 : index
    %890 = vector.load %arg2[%c512_351, %c0_352] : memref<648x128xf32, #tpu.memory_space<vmem>>, vector<1x64xf32>
    %891 = vector.broadcast %890 : vector<1x64xf32> to vector<8x64xf32>
    %892 = arith.addf %889, %891 : vector<8x64xf32>
    %893 = vector.extract_strided_slice %892 {offsets = [0, 0], sizes = [8, 32], strides = [1, 1]} : vector<8x64xf32> to vector<8x32xf32>
    %894 = vector.extract_strided_slice %892 {offsets = [0, 32], sizes = [8, 32], strides = [1, 1]} : vector<8x64xf32> to vector<8x32xf32>
    %895 = arith.addf %893, %12 : vector<8x32xf32>
    %896 = arith.mulf %895, %895 : vector<8x32xf32>
    %897 = arith.mulf %895, %896 : vector<8x32xf32>
    %cst_353 = arith.constant 4.471500e-02 : f32
    %898 = vector.broadcast %cst_353 : f32 to vector<8x32xf32>
    %899 = arith.mulf %898, %897 : vector<8x32xf32>
    %900 = arith.addf %895, %899 : vector<8x32xf32>
    %cst_354 = arith.constant 0.797884583 : f32
    %901 = vector.broadcast %cst_354 : f32 to vector<8x32xf32>
    %902 = arith.mulf %901, %900 : vector<8x32xf32>
    %903 = math.tanh %902 : vector<8x32xf32>
    %cst_355 = arith.constant 1.000000e+00 : f32
    %904 = vector.broadcast %cst_355 : f32 to vector<8x32xf32>
    %905 = arith.addf %904, %903 : vector<8x32xf32>
    %cst_356 = arith.constant 5.000000e-01 : f32
    %906 = vector.broadcast %cst_356 : f32 to vector<8x32xf32>
    %907 = arith.mulf %906, %905 : vector<8x32xf32>
    %908 = arith.mulf %895, %907 : vector<8x32xf32>
    %c224_357 = arith.constant 224 : index
    %c0_358 = arith.constant 0 : index
    %909 = vector.load %arg2[%c224_357, %c0_358] : memref<648x128xf32, #tpu.memory_space<vmem>>, vector<32x1xf32>
    %cst_359 = arith.constant dense<0.000000e+00> : vector<8x1xf32>
    %910 = tpu.matmul %908, %909, %cst_359 {dimension_numbers = #tpu.dot_dimension_numbers<[1], [0], [0], [1], [0, 0, 1, 1], [], []>} : vector<8x32xf32>, vector<32x1xf32>, vector<8x1xf32> -> vector<8x1xf32>
    %c576_360 = arith.constant 576 : index
    %c0_361 = arith.constant 0 : index
    %911 = vector.load %arg2[%c576_360, %c0_361] : memref<648x128xf32, #tpu.memory_space<vmem>>, vector<1x1xf32>
    %912 = vector.broadcast %911 : vector<1x1xf32> to vector<8x1xf32>
    %913 = arith.addf %910, %912 : vector<8x1xf32>
    %914 = arith.negf %913 : vector<8x1xf32>
    %915 = math.exp %914 : vector<8x1xf32>
    %cst_362 = arith.constant 1.000000e+00 : f32
    %916 = vector.broadcast %cst_362 : f32 to vector<8x1xf32>
    %917 = arith.addf %916, %915 : vector<8x1xf32>
    %918 = arith.divf %916, %917 : vector<8x1xf32>
    %cst_363 = arith.constant 0.899999976 : f32
    %919 = vector.broadcast %cst_363 : f32 to vector<8x1xf32>
    %920 = arith.cmpf ogt, %918, %919 : vector<8x1xf32>
    %921 = arith.extui %920 : vector<8x1xi1> to vector<8x1xi32>
    %922 = arith.sitofp %921 : vector<8x1xi32> to vector<8x1xf32>
    %923 = arith.maximumf %922, %5 : vector<8x1xf32>
    %cst_364 = arith.constant dense<0x7F800000> : vector<1xf32>
    %924 = vector.multi_reduction <minimumf>, %923, %cst_364 [0] : vector<8x1xf32> to vector<1xf32>
    %925 = vector.shape_cast %924 : vector<1xf32> to vector<1x1xf32>
    %926 = arith.maximumf %642, %925 : vector<1x1xf32>
    %cst_365 = arith.constant 1.000000e+00 : f32
    %927 = vector.broadcast %cst_365 : f32 to vector<1x1xf32>
    %928 = arith.subf %927, %926 : vector<1x1xf32>
    %929 = vector.shape_cast %884 : vector<8x32xf32> to vector<8x1x32xf32>
    %930 = vector.shape_cast %20 : vector<16x32xf32> to vector<1x16x32xf32>
    %931 = vector.broadcast %929 : vector<8x1x32xf32> to vector<8x16x32xf32>
    %932 = vector.broadcast %930 : vector<1x16x32xf32> to vector<8x16x32xf32>
    %933 = arith.addf %931, %932 : vector<8x16x32xf32>
    %934 = arith.mulf %933, %933 : vector<8x16x32xf32>
    %935 = arith.mulf %933, %934 : vector<8x16x32xf32>
    %cst_366 = arith.constant 4.471500e-02 : f32
    %936 = vector.broadcast %cst_366 : f32 to vector<8x16x32xf32>
    %937 = arith.mulf %936, %935 : vector<8x16x32xf32>
    %938 = arith.addf %933, %937 : vector<8x16x32xf32>
    %cst_367 = arith.constant 0.797884583 : f32
    %939 = vector.broadcast %cst_367 : f32 to vector<8x16x32xf32>
    %940 = arith.mulf %939, %938 : vector<8x16x32xf32>
    %941 = math.tanh %940 : vector<8x16x32xf32>
    %cst_368 = arith.constant 1.000000e+00 : f32
    %942 = vector.broadcast %cst_368 : f32 to vector<8x16x32xf32>
    %943 = arith.addf %942, %941 : vector<8x16x32xf32>
    %cst_369 = arith.constant 5.000000e-01 : f32
    %944 = vector.broadcast %cst_369 : f32 to vector<8x16x32xf32>
    %945 = arith.mulf %944, %943 : vector<8x16x32xf32>
    %946 = arith.mulf %933, %945 : vector<8x16x32xf32>
    %c544_370 = arith.constant 544 : index
    %c0_371 = arith.constant 0 : index
    %947 = vector.load %arg2[%c544_370, %c0_371] : memref<648x128xf32, #tpu.memory_space<vmem>>, vector<1x32xf32>
    %948 = vector.shape_cast %947 : vector<1x32xf32> to vector<1x1x32xf32>
    %949 = vector.broadcast %948 : vector<1x1x32xf32> to vector<8x16x32xf32>
    %950 = arith.mulf %946, %949 : vector<8x16x32xf32>
    %cst_372 = arith.constant dense<0.000000e+00> : vector<8x16xf32>
    %951 = vector.multi_reduction <add>, %950, %cst_372 [2] : vector<8x16x32xf32> to vector<8x16xf32>
    %c552_373 = arith.constant 552 : index
    %c0_374 = arith.constant 0 : index
    %952 = vector.load %arg2[%c552_373, %c0_374] : memref<648x128xf32, #tpu.memory_space<vmem>>, vector<1x1xf32>
    %953 = vector.broadcast %952 : vector<1x1xf32> to vector<8x16xf32>
    %954 = arith.addf %951, %953 : vector<8x16xf32>
    %955 = tpu.iota {dimensions = array<i32: 1>} : vector<8x16xi32>
    %cst_375 = arith.constant dense<0xFF800000> : vector<8xf32>
    %956 = vector.multi_reduction <maximumf>, %954, %cst_375 [1] : vector<8x16xf32> to vector<8xf32>
    %957 = vector.shape_cast %956 : vector<8xf32> to vector<8x1xf32>
    %958 = vector.broadcast %957 : vector<8x1xf32> to vector<8x16xf32>
    %959 = arith.cmpf oeq, %954, %958 : vector<8x16xf32>
    %c16_i32_376 = arith.constant 16 : i32
    %960 = vector.broadcast %c16_i32_376 : i32 to vector<8x16xi32>
    %961 = arith.select %959, %955, %960 : vector<8x16xi1>, vector<8x16xi32>
    %cst_377 = arith.constant dense<2147483647> : vector<8xi32>
    %962 = vector.multi_reduction <minsi>, %961, %cst_377 [1] : vector<8x16xi32> to vector<8xi32>
    %963 = vector.shape_cast %962 : vector<8xi32> to vector<8x1xi32>
    %964 = vector.broadcast %963 : vector<8x1xi32> to vector<8x16xi32>
    %965 = arith.cmpi eq, %955, %964 : vector<8x16xi32>
    %966 = arith.extui %965 : vector<8x16xi1> to vector<8x16xi32>
    %967 = arith.sitofp %966 : vector<8x16xi32> to vector<8x16xf32>
    %c488_378 = arith.constant 488 : index
    %c0_379 = arith.constant 0 : index
    %968 = vector.load %arg2[%c488_378, %c0_379] : memref<648x128xf32, #tpu.memory_space<vmem>>, vector<16x32xf32>
    %cst_380 = arith.constant dense<0.000000e+00> : vector<8x32xf32>
    %969 = tpu.matmul %967, %968, %cst_380 {dimension_numbers = #tpu.dot_dimension_numbers<[1], [0], [0], [1], [0, 0, 1, 1], [], []>} : vector<8x16xf32>, vector<16x32xf32>, vector<8x32xf32> -> vector<8x32xf32>
    %970 = arith.negf %957 : vector<8x1xf32>
    %971 = math.exp %970 : vector<8x1xf32>
    %cst_381 = arith.constant 1.000000e+00 : f32
    %972 = vector.broadcast %cst_381 : f32 to vector<8x1xf32>
    %973 = arith.addf %972, %971 : vector<8x1xf32>
    %974 = arith.divf %972, %973 : vector<8x1xf32>
    %975 = vector.broadcast %974 : vector<8x1xf32> to vector<8x32xf32>
    %976 = arith.mulf %969, %975 : vector<8x32xf32>
    %c160_382 = arith.constant 160 : index
    %c0_383 = arith.constant 0 : index
    %977 = vector.load %arg2[%c160_382, %c0_383] : memref<648x128xf32, #tpu.memory_space<vmem>>, vector<32x32xf32>
    %cst_384 = arith.constant dense<0.000000e+00> : vector<8x32xf32>
    %978 = tpu.matmul %976, %977, %cst_384 {dimension_numbers = #tpu.dot_dimension_numbers<[1], [0], [0], [1], [0, 0, 1, 1], [], []>} : vector<8x32xf32>, vector<32x32xf32>, vector<8x32xf32> -> vector<8x32xf32>
    %c560_385 = arith.constant 560 : index
    %c0_386 = arith.constant 0 : index
    %979 = vector.load %arg2[%c560_385, %c0_386] : memref<648x128xf32, #tpu.memory_space<vmem>>, vector<1x32xf32>
    %980 = vector.broadcast %979 : vector<1x32xf32> to vector<8x32xf32>
    %981 = arith.addf %978, %980 : vector<8x32xf32>
    %982 = arith.mulf %981, %981 : vector<8x32xf32>
    %983 = arith.mulf %981, %982 : vector<8x32xf32>
    %cst_387 = arith.constant 4.471500e-02 : f32
    %984 = vector.broadcast %cst_387 : f32 to vector<8x32xf32>
    %985 = arith.mulf %984, %983 : vector<8x32xf32>
    %986 = arith.addf %981, %985 : vector<8x32xf32>
    %cst_388 = arith.constant 0.797884583 : f32
    %987 = vector.broadcast %cst_388 : f32 to vector<8x32xf32>
    %988 = arith.mulf %987, %986 : vector<8x32xf32>
    %989 = math.tanh %988 : vector<8x32xf32>
    %cst_389 = arith.constant 1.000000e+00 : f32
    %990 = vector.broadcast %cst_389 : f32 to vector<8x32xf32>
    %991 = arith.addf %990, %989 : vector<8x32xf32>
    %cst_390 = arith.constant 5.000000e-01 : f32
    %992 = vector.broadcast %cst_390 : f32 to vector<8x32xf32>
    %993 = arith.mulf %992, %991 : vector<8x32xf32>
    %994 = arith.mulf %981, %993 : vector<8x32xf32>
    %c192_391 = arith.constant 192 : index
    %c0_392 = arith.constant 0 : index
    %995 = vector.load %arg2[%c192_391, %c0_392] : memref<648x128xf32, #tpu.memory_space<vmem>>, vector<32x32xf32>
    %cst_393 = arith.constant dense<0.000000e+00> : vector<8x32xf32>
    %996 = tpu.matmul %994, %995, %cst_393 {dimension_numbers = #tpu.dot_dimension_numbers<[1], [0], [0], [1], [0, 0, 1, 1], [], []>} : vector<8x32xf32>, vector<32x32xf32>, vector<8x32xf32> -> vector<8x32xf32>
    %c568_394 = arith.constant 568 : index
    %c0_395 = arith.constant 0 : index
    %997 = vector.load %arg2[%c568_394, %c0_395] : memref<648x128xf32, #tpu.memory_space<vmem>>, vector<1x32xf32>
    %998 = vector.broadcast %997 : vector<1x32xf32> to vector<8x32xf32>
    %999 = arith.addf %996, %998 : vector<8x32xf32>
    %c64_396 = arith.constant 64 : index
    %c0_397 = arith.constant 0 : index
    %1000 = vector.load %arg2[%c64_396, %c0_397] : memref<648x128xf32, #tpu.memory_space<vmem>>, vector<32x96xf32>
    %cst_398 = arith.constant dense<0.000000e+00> : vector<8x96xf32>
    %1001 = tpu.matmul %999, %1000, %cst_398 {dimension_numbers = #tpu.dot_dimension_numbers<[1], [0], [0], [1], [0, 0, 1, 1], [], []>} : vector<8x32xf32>, vector<32x96xf32>, vector<8x96xf32> -> vector<8x96xf32>
    %c520_399 = arith.constant 520 : index
    %c0_400 = arith.constant 0 : index
    %1002 = vector.load %arg2[%c520_399, %c0_400] : memref<648x128xf32, #tpu.memory_space<vmem>>, vector<1x96xf32>
    %1003 = vector.broadcast %1002 : vector<1x96xf32> to vector<8x96xf32>
    %1004 = arith.addf %1001, %1003 : vector<8x96xf32>
    %1005 = vector.extract_strided_slice %1004 {offsets = [0, 0], sizes = [8, 32], strides = [1, 1]} : vector<8x96xf32> to vector<8x32xf32>
    %1006 = vector.extract_strided_slice %1004 {offsets = [0, 32], sizes = [8, 32], strides = [1, 1]} : vector<8x96xf32> to vector<8x32xf32>
    %1007 = vector.extract_strided_slice %1004 {offsets = [0, 64], sizes = [8, 32], strides = [1, 1]} : vector<8x96xf32> to vector<8x32xf32>
    %1008 = arith.mulf %885, %886 : vector<8x32xf32>
    %1009 = arith.mulf %885, %1005 : vector<8x32xf32>
    %1010 = arith.mulf %885, %13 : vector<8x32xf32>
    %1011 = tpu.concatenate %1008, %1009, %1010 in 0 : vector<8x32xf32>, vector<8x32xf32>, vector<8x32xf32> -> vector<24x32xf32>
    %c448_401 = arith.constant 448 : index
    %c0_402 = arith.constant 0 : index
    %1012 = vector.load %arg2[%c448_401, %c0_402] : memref<648x128xf32, #tpu.memory_space<vmem>>, vector<32x4xf32>
    %cst_403 = arith.constant dense<0.000000e+00> : vector<24x4xf32>
    %1013 = tpu.matmul %1011, %1012, %cst_403 {dimension_numbers = #tpu.dot_dimension_numbers<[1], [0], [0], [1], [0, 0, 1, 1], [], []>} : vector<24x32xf32>, vector<32x4xf32>, vector<24x4xf32> -> vector<24x4xf32>
    %cst_404 = arith.constant 0.353553385 : f32
    %1014 = vector.broadcast %cst_404 : f32 to vector<24x4xf32>
    %1015 = arith.mulf %1013, %1014 : vector<24x4xf32>
    %1016 = vector.extract_strided_slice %1015 {offsets = [0, 0], sizes = [8, 4], strides = [1, 1]} : vector<24x4xf32> to vector<8x4xf32>
    %1017 = vector.extract_strided_slice %1015 {offsets = [8, 0], sizes = [8, 4], strides = [1, 1]} : vector<24x4xf32> to vector<8x4xf32>
    %1018 = vector.extract_strided_slice %1015 {offsets = [16, 0], sizes = [8, 4], strides = [1, 1]} : vector<24x4xf32> to vector<8x4xf32>
    %1019 = arith.maximumf %1016, %1017 : vector<8x4xf32>
    %1020 = arith.maximumf %1019, %1018 : vector<8x4xf32>
    %1021 = arith.subf %1016, %1020 : vector<8x4xf32>
    %1022 = math.exp %1021 : vector<8x4xf32>
    %1023 = arith.subf %1017, %1020 : vector<8x4xf32>
    %1024 = math.exp %1023 : vector<8x4xf32>
    %1025 = arith.subf %1018, %1020 : vector<8x4xf32>
    %1026 = math.exp %1025 : vector<8x4xf32>
    %1027 = arith.addf %1022, %1024 : vector<8x4xf32>
    %1028 = arith.addf %1027, %1026 : vector<8x4xf32>
    %1029 = tpu.reciprocal %1028 {approx = true} : vector<8x4xf32> -> vector<8x4xf32>
    %1030 = tpu.concatenate %1022, %1024, %1026, %1029 in 0 : vector<8x4xf32>, vector<8x4xf32>, vector<8x4xf32>, vector<8x4xf32> -> vector<32x4xf32>
    %c480_405 = arith.constant 480 : index
    %c0_406 = arith.constant 0 : index
    %1031 = vector.load %arg2[%c480_405, %c0_406] : memref<648x128xf32, #tpu.memory_space<vmem>>, vector<4x32xf32>
    %cst_407 = arith.constant dense<0.000000e+00> : vector<32x32xf32>
    %1032 = tpu.matmul %1030, %1031, %cst_407 {dimension_numbers = #tpu.dot_dimension_numbers<[1], [0], [0], [1], [0, 0, 1, 1], [], []>} : vector<32x4xf32>, vector<4x32xf32>, vector<32x32xf32> -> vector<32x32xf32>
    %1033 = vector.extract_strided_slice %1032 {offsets = [0, 0], sizes = [8, 32], strides = [1, 1]} : vector<32x32xf32> to vector<8x32xf32>
    %1034 = arith.mulf %1033, %887 : vector<8x32xf32>
    %1035 = vector.extract_strided_slice %1032 {offsets = [8, 0], sizes = [8, 32], strides = [1, 1]} : vector<32x32xf32> to vector<8x32xf32>
    %1036 = arith.mulf %1035, %1006 : vector<8x32xf32>
    %1037 = arith.addf %1034, %1036 : vector<8x32xf32>
    %1038 = vector.extract_strided_slice %1032 {offsets = [16, 0], sizes = [8, 32], strides = [1, 1]} : vector<32x32xf32> to vector<8x32xf32>
    %1039 = arith.mulf %1038, %14 : vector<8x32xf32>
    %1040 = arith.addf %1037, %1039 : vector<8x32xf32>
    %1041 = vector.extract_strided_slice %1032 {offsets = [24, 0], sizes = [8, 32], strides = [1, 1]} : vector<32x32xf32> to vector<8x32xf32>
    %1042 = arith.mulf %1040, %1041 : vector<8x32xf32>
    %c256_408 = arith.constant 256 : index
    %c0_409 = arith.constant 0 : index
    %1043 = vector.load %arg2[%c256_408, %c0_409] : memref<648x128xf32, #tpu.memory_space<vmem>>, vector<32x32xf32>
    %cst_410 = arith.constant dense<0.000000e+00> : vector<8x32xf32>
    %1044 = tpu.matmul %1042, %1043, %cst_410 {dimension_numbers = #tpu.dot_dimension_numbers<[1], [0], [0], [1], [0, 0, 1, 1], [], []>} : vector<8x32xf32>, vector<32x32xf32>, vector<8x32xf32> -> vector<8x32xf32>
    %c584_411 = arith.constant 584 : index
    %c0_412 = arith.constant 0 : index
    %1045 = vector.load %arg2[%c584_411, %c0_412] : memref<648x128xf32, #tpu.memory_space<vmem>>, vector<1x32xf32>
    %1046 = vector.broadcast %1045 : vector<1x32xf32> to vector<8x32xf32>
    %1047 = arith.addf %1044, %1046 : vector<8x32xf32>
    %1048 = arith.addf %867, %1047 : vector<8x32xf32>
    %c592_413 = arith.constant 592 : index
    %c0_414 = arith.constant 0 : index
    %1049 = vector.load %arg2[%c592_413, %c0_414] : memref<648x128xf32, #tpu.memory_space<vmem>>, vector<1x32xf32>
    %c600_415 = arith.constant 600 : index
    %c0_416 = arith.constant 0 : index
    %1050 = vector.load %arg2[%c600_415, %c0_416] : memref<648x128xf32, #tpu.memory_space<vmem>>, vector<1x32xf32>
    %cst_417 = arith.constant dense<0.000000e+00> : vector<8xf32>
    %1051 = vector.multi_reduction <add>, %1048, %cst_417 [1] : vector<8x32xf32> to vector<8xf32>
    %1052 = vector.shape_cast %1051 : vector<8xf32> to vector<8x1xf32>
    %cst_418 = arith.constant 3.200000e+01 : f32
    %1053 = vector.broadcast %cst_418 : f32 to vector<8x1xf32>
    %1054 = arith.divf %1052, %1053 : vector<8x1xf32>
    %1055 = vector.broadcast %1054 : vector<8x1xf32> to vector<8x32xf32>
    %1056 = arith.subf %1048, %1055 : vector<8x32xf32>
    %1057 = arith.mulf %1056, %1056 : vector<8x32xf32>
    %cst_419 = arith.constant dense<0.000000e+00> : vector<8xf32>
    %1058 = vector.multi_reduction <add>, %1057, %cst_419 [1] : vector<8x32xf32> to vector<8xf32>
    %1059 = vector.shape_cast %1058 : vector<8xf32> to vector<8x1xf32>
    %cst_420 = arith.constant 3.200000e+01 : f32
    %1060 = vector.broadcast %cst_420 : f32 to vector<8x1xf32>
    %1061 = arith.divf %1059, %1060 : vector<8x1xf32>
    %1062 = vector.broadcast %1054 : vector<8x1xf32> to vector<8x32xf32>
    %1063 = arith.subf %1048, %1062 : vector<8x32xf32>
    %cst_421 = arith.constant 9.99999974E-6 : f32
    %1064 = vector.broadcast %cst_421 : f32 to vector<8x1xf32>
    %1065 = arith.addf %1061, %1064 : vector<8x1xf32>
    %1066 = math.rsqrt %1065 : vector<8x1xf32>
    %1067 = vector.broadcast %1066 : vector<8x1xf32> to vector<8x32xf32>
    %1068 = arith.mulf %1063, %1067 : vector<8x32xf32>
    %1069 = vector.broadcast %1049 : vector<1x32xf32> to vector<8x32xf32>
    %1070 = arith.mulf %1068, %1069 : vector<8x32xf32>
    %1071 = vector.broadcast %1050 : vector<1x32xf32> to vector<8x32xf32>
    %1072 = arith.addf %1070, %1071 : vector<8x32xf32>
    %c288_422 = arith.constant 288 : index
    %c0_423 = arith.constant 0 : index
    %1073 = vector.load %arg2[%c288_422, %c0_423] : memref<648x128xf32, #tpu.memory_space<vmem>>, vector<32x64xf32>
    %cst_424 = arith.constant dense<0.000000e+00> : vector<8x64xf32>
    %1074 = tpu.matmul %1072, %1073, %cst_424 {dimension_numbers = #tpu.dot_dimension_numbers<[1], [0], [0], [1], [0, 0, 1, 1], [], []>} : vector<8x32xf32>, vector<32x64xf32>, vector<8x64xf32> -> vector<8x64xf32>
    %c608_425 = arith.constant 608 : index
    %c0_426 = arith.constant 0 : index
    %1075 = vector.load %arg2[%c608_425, %c0_426] : memref<648x128xf32, #tpu.memory_space<vmem>>, vector<1x64xf32>
    %1076 = vector.broadcast %1075 : vector<1x64xf32> to vector<8x64xf32>
    %1077 = arith.addf %1074, %1076 : vector<8x64xf32>
    %1078 = arith.mulf %1077, %1077 : vector<8x64xf32>
    %1079 = arith.mulf %1077, %1078 : vector<8x64xf32>
    %cst_427 = arith.constant 4.471500e-02 : f32
    %1080 = vector.broadcast %cst_427 : f32 to vector<8x64xf32>
    %1081 = arith.mulf %1080, %1079 : vector<8x64xf32>
    %1082 = arith.addf %1077, %1081 : vector<8x64xf32>
    %cst_428 = arith.constant 0.797884583 : f32
    %1083 = vector.broadcast %cst_428 : f32 to vector<8x64xf32>
    %1084 = arith.mulf %1083, %1082 : vector<8x64xf32>
    %1085 = math.tanh %1084 : vector<8x64xf32>
    %cst_429 = arith.constant 1.000000e+00 : f32
    %1086 = vector.broadcast %cst_429 : f32 to vector<8x64xf32>
    %1087 = arith.addf %1086, %1085 : vector<8x64xf32>
    %cst_430 = arith.constant 5.000000e-01 : f32
    %1088 = vector.broadcast %cst_430 : f32 to vector<8x64xf32>
    %1089 = arith.mulf %1088, %1087 : vector<8x64xf32>
    %1090 = arith.mulf %1077, %1089 : vector<8x64xf32>
    %c320_431 = arith.constant 320 : index
    %c0_432 = arith.constant 0 : index
    %1091 = vector.load %arg2[%c320_431, %c0_432] : memref<648x128xf32, #tpu.memory_space<vmem>>, vector<64x32xf32>
    %cst_433 = arith.constant dense<0.000000e+00> : vector<8x32xf32>
    %1092 = tpu.matmul %1090, %1091, %cst_433 {dimension_numbers = #tpu.dot_dimension_numbers<[1], [0], [0], [1], [0, 0, 1, 1], [], []>} : vector<8x64xf32>, vector<64x32xf32>, vector<8x32xf32> -> vector<8x32xf32>
    %c616_434 = arith.constant 616 : index
    %c0_435 = arith.constant 0 : index
    %1093 = vector.load %arg2[%c616_434, %c0_435] : memref<648x128xf32, #tpu.memory_space<vmem>>, vector<1x32xf32>
    %1094 = vector.broadcast %1093 : vector<1x32xf32> to vector<8x32xf32>
    %1095 = arith.addf %1092, %1094 : vector<8x32xf32>
    %1096 = arith.addf %1072, %1095 : vector<8x32xf32>
    %c624_436 = arith.constant 624 : index
    %c0_437 = arith.constant 0 : index
    %1097 = vector.load %arg2[%c624_436, %c0_437] : memref<648x128xf32, #tpu.memory_space<vmem>>, vector<1x32xf32>
    %c632_438 = arith.constant 632 : index
    %c0_439 = arith.constant 0 : index
    %1098 = vector.load %arg2[%c632_438, %c0_439] : memref<648x128xf32, #tpu.memory_space<vmem>>, vector<1x32xf32>
    %cst_440 = arith.constant dense<0.000000e+00> : vector<8xf32>
    %1099 = vector.multi_reduction <add>, %1096, %cst_440 [1] : vector<8x32xf32> to vector<8xf32>
    %1100 = vector.shape_cast %1099 : vector<8xf32> to vector<8x1xf32>
    %cst_441 = arith.constant 3.200000e+01 : f32
    %1101 = vector.broadcast %cst_441 : f32 to vector<8x1xf32>
    %1102 = arith.divf %1100, %1101 : vector<8x1xf32>
    %1103 = vector.broadcast %1102 : vector<8x1xf32> to vector<8x32xf32>
    %1104 = arith.subf %1096, %1103 : vector<8x32xf32>
    %1105 = arith.mulf %1104, %1104 : vector<8x32xf32>
    %cst_442 = arith.constant dense<0.000000e+00> : vector<8xf32>
    %1106 = vector.multi_reduction <add>, %1105, %cst_442 [1] : vector<8x32xf32> to vector<8xf32>
    %1107 = vector.shape_cast %1106 : vector<8xf32> to vector<8x1xf32>
    %cst_443 = arith.constant 3.200000e+01 : f32
    %1108 = vector.broadcast %cst_443 : f32 to vector<8x1xf32>
    %1109 = arith.divf %1107, %1108 : vector<8x1xf32>
    %1110 = vector.broadcast %1102 : vector<8x1xf32> to vector<8x32xf32>
    %1111 = arith.subf %1096, %1110 : vector<8x32xf32>
    %cst_444 = arith.constant 9.99999974E-6 : f32
    %1112 = vector.broadcast %cst_444 : f32 to vector<8x1xf32>
    %1113 = arith.addf %1109, %1112 : vector<8x1xf32>
    %1114 = math.rsqrt %1113 : vector<8x1xf32>
    %1115 = vector.broadcast %1114 : vector<8x1xf32> to vector<8x32xf32>
    %1116 = arith.mulf %1111, %1115 : vector<8x32xf32>
    %1117 = vector.broadcast %1097 : vector<1x32xf32> to vector<8x32xf32>
    %1118 = arith.mulf %1116, %1117 : vector<8x32xf32>
    %1119 = vector.broadcast %1098 : vector<1x32xf32> to vector<8x32xf32>
    %1120 = arith.addf %1118, %1119 : vector<8x32xf32>
    %1121 = arith.addf %894, %1007 : vector<8x32xf32>
    %c384_445 = arith.constant 384 : index
    %c0_446 = arith.constant 0 : index
    %1122 = vector.load %arg2[%c384_445, %c0_446] : memref<648x128xf32, #tpu.memory_space<vmem>>, vector<32x32xf32>
    %cst_447 = arith.constant dense<0.000000e+00> : vector<8x32xf32>
    %1123 = tpu.matmul %1120, %1122, %cst_447 {dimension_numbers = #tpu.dot_dimension_numbers<[1], [0], [0], [1], [0, 0, 1, 1], [], []>} : vector<8x32xf32>, vector<32x32xf32>, vector<8x32xf32> -> vector<8x32xf32>
    %1124 = arith.addf %1121, %1123 : vector<8x32xf32>
    %1125 = arith.mulf %1124, %1124 : vector<8x32xf32>
    %1126 = arith.mulf %1124, %1125 : vector<8x32xf32>
    %cst_448 = arith.constant 4.471500e-02 : f32
    %1127 = vector.broadcast %cst_448 : f32 to vector<8x32xf32>
    %1128 = arith.mulf %1127, %1126 : vector<8x32xf32>
    %1129 = arith.addf %1124, %1128 : vector<8x32xf32>
    %cst_449 = arith.constant 0.797884583 : f32
    %1130 = vector.broadcast %cst_449 : f32 to vector<8x32xf32>
    %1131 = arith.mulf %1130, %1129 : vector<8x32xf32>
    %1132 = math.tanh %1131 : vector<8x32xf32>
    %cst_450 = arith.constant 1.000000e+00 : f32
    %1133 = vector.broadcast %cst_450 : f32 to vector<8x32xf32>
    %1134 = arith.addf %1133, %1132 : vector<8x32xf32>
    %cst_451 = arith.constant 5.000000e-01 : f32
    %1135 = vector.broadcast %cst_451 : f32 to vector<8x32xf32>
    %1136 = arith.mulf %1135, %1134 : vector<8x32xf32>
    %1137 = arith.mulf %1124, %1136 : vector<8x32xf32>
    %c416_452 = arith.constant 416 : index
    %c0_453 = arith.constant 0 : index
    %1138 = vector.load %arg2[%c416_452, %c0_453] : memref<648x128xf32, #tpu.memory_space<vmem>>, vector<32x1xf32>
    %cst_454 = arith.constant dense<0.000000e+00> : vector<8x1xf32>
    %1139 = tpu.matmul %1137, %1138, %cst_454 {dimension_numbers = #tpu.dot_dimension_numbers<[1], [0], [0], [1], [0, 0, 1, 1], [], []>} : vector<8x32xf32>, vector<32x1xf32>, vector<8x1xf32> -> vector<8x1xf32>
    %c640_455 = arith.constant 640 : index
    %c0_456 = arith.constant 0 : index
    %1140 = vector.load %arg2[%c640_455, %c0_456] : memref<648x128xf32, #tpu.memory_space<vmem>>, vector<1x1xf32>
    %1141 = vector.broadcast %1140 : vector<1x1xf32> to vector<8x1xf32>
    %1142 = arith.addf %1139, %1141 : vector<8x1xf32>
    %1143 = arith.negf %1142 : vector<8x1xf32>
    %1144 = math.exp %1143 : vector<8x1xf32>
    %cst_457 = arith.constant 1.000000e+00 : f32
    %1145 = vector.broadcast %cst_457 : f32 to vector<8x1xf32>
    %1146 = arith.addf %1145, %1144 : vector<8x1xf32>
    %1147 = arith.divf %1145, %1146 : vector<8x1xf32>
    %1148 = arith.subf %1120, %867 : vector<8x32xf32>
    %1149 = vector.broadcast %928 : vector<1x1xf32> to vector<8x32xf32>
    %1150 = arith.mulf %1149, %1148 : vector<8x32xf32>
    %1151 = arith.addf %867, %1150 : vector<8x32xf32>
    %cst_458 = arith.constant 1.000000e+00 : f32
    %1152 = vector.broadcast %cst_458 : f32 to vector<8x1xf32>
    %1153 = arith.subf %1147, %1152 : vector<8x1xf32>
    %1154 = vector.broadcast %928 : vector<1x1xf32> to vector<8x1xf32>
    %1155 = arith.mulf %1154, %1153 : vector<8x1xf32>
    %cst_459 = arith.constant 1.000000e+00 : f32
    %1156 = vector.broadcast %cst_459 : f32 to vector<8x1xf32>
    %1157 = arith.addf %1156, %1155 : vector<8x1xf32>
    %1158 = arith.mulf %874, %1157 : vector<8x1xf32>
    %1159 = arith.addf %875, %928 : vector<1x1xf32>
    %c4 = arith.constant 4 : index
    %c0_460 = arith.constant 0 : index
    %c0_461 = arith.constant 0 : index
    %1160 = vector.load %arg3[%c4, %c0_460, %c0_461] : memref<5x8x32xf32, #tpu.memory_space<vmem>>, vector<1x8x32xf32>
    %1161 = vector.shape_cast %1160 : vector<1x8x32xf32> to vector<8x32xf32>
    %1162 = vector.shape_cast %1151 : vector<8x32xf32> to vector<1x8x32xf32>
    tpu.vector_store %arg3[%c4, %c0_460, %c0_461], %1162 {strides = array<i32>} : memref<5x8x32xf32, #tpu.memory_space<vmem>>, vector<1x8x32xf32>,
    %cst_462 = arith.constant 2.500000e-01 : f32
    %1163 = vector.broadcast %cst_462 : f32 to vector<1x1xf32>
    %1164 = arith.mulf %1159, %1163 : vector<1x1xf32>
    %cst_463 = arith.constant 1.000000e+00 : f32
    %1165 = vector.broadcast %cst_463 : f32 to vector<1x1xf32>
    %1166 = arith.minimumf %1165, %1164 : vector<1x1xf32>
    %1167 = tpu.iota {dimensions = array<i32: 1>} : vector<8x128xi32>
    %c0_i32 = arith.constant 0 : i32
    %1168 = vector.broadcast %c0_i32 : i32 to vector<8x128xi32>
    %1169 = arith.cmpi eq, %1167, %1168 : vector<8x128xi32>
    %cst_464 = arith.constant 0.000000e+00 : f32
    %1170 = vector.shape_cast %1158 : vector<8x1xf32> to vector<8x1xf32>
    %1171 = vector.broadcast %1170 : vector<8x1xf32> to vector<8x128xf32>
    %1172 = vector.broadcast %cst_464 : f32 to vector<8x128xf32>
    %1173 = arith.select %1169, %1171, %1172 : vector<8x128xi1>, vector<8x128xf32>
    %c1_i32 = arith.constant 1 : i32
    %1174 = vector.broadcast %c1_i32 : i32 to vector<8x128xi32>
    %1175 = arith.cmpi eq, %1167, %1174 : vector<8x128xi32>
    %cst_465 = arith.constant 1.000000e+00 : f32
    %1176 = vector.broadcast %cst_465 : f32 to vector<8x1xf32>
    %1177 = arith.subf %1176, %1158 : vector<8x1xf32>
    %cst_466 = arith.constant 5.000000e-01 : f32
    %1178 = vector.broadcast %cst_466 : f32 to vector<1x1xf32>
    %1179 = arith.mulf %1178, %1166 : vector<1x1xf32>
    %cst_467 = arith.constant 5.000000e-01 : f32
    %1180 = vector.broadcast %cst_467 : f32 to vector<1x1xf32>
    %1181 = arith.addf %1180, %1179 : vector<1x1xf32>
    %1182 = vector.broadcast %1181 : vector<1x1xf32> to vector<8x1xf32>
    %1183 = arith.mulf %1177, %1182 : vector<8x1xf32>
    %1184 = vector.shape_cast %1183 : vector<8x1xf32> to vector<8x1xf32>
    %1185 = vector.broadcast %1184 : vector<8x1xf32> to vector<8x128xf32>
    %1186 = arith.select %1175, %1185, %1173 : vector<8x128xi1>, vector<8x128xf32>
    %c2_i32 = arith.constant 2 : i32
    %1187 = vector.broadcast %c2_i32 : i32 to vector<8x128xi32>
    %1188 = arith.cmpi eq, %1167, %1187 : vector<8x128xi32>
    %1189 = vector.shape_cast %1159 : vector<1x1xf32> to vector<1x1xf32>
    %1190 = vector.broadcast %1189 : vector<1x1xf32> to vector<8x128xf32>
    %1191 = arith.select %1188, %1190, %1186 : vector<8x128xi1>, vector<8x128xf32>
    %c0_468 = arith.constant 0 : index
    %c0_469 = arith.constant 0 : index
    %1192 = vector.load %arg4[%c0_468, %c0_469] : memref<8x128xf32, #tpu.memory_space<vmem>>, vector<8x128xf32>
    tpu.vector_store %arg4[%c0_468, %c0_469], %1191 {strides = array<i32>} : memref<8x128xf32, #tpu.memory_space<vmem>>, vector<8x128xf32>,
    return
  }
}

</mosaic_0001>

<llo_original>
// kernel: _proof_search_device.1
$region0: #{_proof_search_device.1}
  #allocation0 [shape = 'u32[]', space=smem, size = 0x4, offset = 0x4, fixed_abs, tag = 'smem constant byte address 0x4 - core index']
  #allocation1 [shape = 'u32[144,128]{1,0:T(1,128)}', space=vmem, size = 0x12000, scoped, tag = 'internal scratch']
  %s0 = inlined_call_operand.vmem [shape: f32[8,32], index: 0, kind: input, shape index: {}]
  %s1 = inlined_call_operand.vmem [shape: f32[8,32], index: 1, kind: input, shape index: {}]
  %s2 = inlined_call_operand.hbm [shape: f32[648,128], index: 2, kind: input, shape index: {}]
  %s3 = inlined_call_operand.hbm [shape: f32[5,8,32], index: 3, kind: output, shape index: {0}]
  %s4 = inlined_call_operand.hbm [shape: f32[8,128], index: 4, kind: output, shape index: {1}]
  %5 = xla_tuple %s3, %s4
  %s6 = sld [smem:[#allocation0]]
  $region34: #{_proof_search_device.1} parent=0
    _
  %s8 = ssub.s32 1, %s6
  %s9 = scalar_select 0, %s8, %s6
  $region1: #{_proof_search_device.1} parent=0
    #allocation2 [shape = 'u8[331776]{0}', space=vmem, size = 0x51000, scoped, tag = 'input window, operand 2, single buffered']
    #allocation3 [shape = 's32[1]{0}', space=sflag, size = 0x4, scoped, tag = 'scoped memory for _proof_search_device.1']
    #allocation4 [shape = 's32[1]{0}', space=sflag, size = 0x4, scoped, tag = 'scoped memory for _proof_search_device.1']
    #allocation5 [shape = 'u8[20480]{0}', space=vmem, size = 0x5000, scoped, tag = 'output window, operand 0, single buffered']
    #allocation6 [shape = 'u8[4096]{0}', space=vmem, size = 0x1000, scoped, tag = 'output window, operand 1, single buffered']
    #allocation7 [shape = 's32[1]{0}', space=sflag, size = 0x4, scoped, tag = 'scoped memory for _proof_search_device.1']
    %10 = vsyncpa [#allocation3], 0
    %11 = vsyncpa [#allocation4], 0
    %12 = vsyncpa [#allocation7], 0
    // Predicated region
    $region2: #{_proof_search_device.1} parent=1 // pred_check
      _
    $region3: #{_proof_search_device.1} parent=1 // pred_check_branch
      %14 = sbr.rel (0) target = $region5
    $region4: #{_proof_search_device.1} parent=1 // pred_region
      _
    $region5: #{_proof_search_device.1} parent=1 // pred_fallthru
      _
    // Predicated region
    $region6: #{_proof_search_device.1} parent=1 // pred_check
      _
    $region7: #{_proof_search_device.1} parent=1 // pred_check_branch
      %16 = sbr.rel (0) target = $region9
    $region8: #{_proof_search_device.1} parent=1 // pred_region
      _
    $region9: #{_proof_search_device.1} parent=1 // pred_fallthru
      _
    // Predicated region
    $region10: #{_proof_search_device.1} parent=1 // pred_check
      _
    $region11: #{_proof_search_device.1} parent=1 // pred_check_branch
      %18 = sbr.rel (0) target = $region13
    $region12: #{_proof_search_device.1} parent=1 // pred_region
      %s20 = ssub.s32 10368, 10368
      %21 = vsyncadd [#allocation3], %s20
      %s22 = sshll.u32 [#allocation2], 4
      %s23 = int_to_ptr.vmem [resolvable:$true] %s22
      %28 = dma.hbm_to_vmem [thread:$0]  %s2, 10368, %s23, [#allocation3], 128, 128, 8
    $region13: #{_proof_search_device.1} parent=1 // pred_fallthru
      _
    // Predicated region
    $region14: #{_proof_search_device.1} parent=1 // pred_check
      _
    $region15: #{_proof_search_device.1} parent=1 // pred_check_branch
      %30 = sbr.rel (0) target = $region17
    $region16: #{_proof_search_device.1} parent=1 // pred_region
      %31 = dma.done [#allocation3], 10368
    $region17: #{_proof_search_device.1} parent=1 // pred_fallthru
      _
    %v32 = vld [vmem:[%s0] sm:$0xff]
    %v33 = vlaneseq
    %v34 = vshrl.u32 %v33, 7
    %vm35 = vcmp.ge.s32.totalorder %v34, 4
    %v36 = vsel %vm35, 1, 0
    %v37 = vcvt.s32.f32 %v36
    %v38 = vld [vmem:[%s1] sm:$0xff]
    %v39 = vld [vmem:[#allocation2 + $0x60] sm:$0xff]
    %v40 = vld [vmem:[#allocation2 + $0x68] sm:$0xff]
    %v41 = vld [vmem:[#allocation2 + $0x70] sm:$0xff]
    %v42 = vld [vmem:[#allocation2 + $0x78] sm:$0xff]
    %v43 = vld [vmem:[#allocation2 + $0x210] sm:$0x1]
    %v44 = vlaneseq
    %v45 = vshrl.u32 %v44, 7
    %v46 = vsub.s32 0, %v45
    %v47 = vrot.slane %v43, %v46
    %vm48 = vcmask 261120
    %v50 = vsel %vm48, %v38, 0
    %52 = vmatprep.subr.mxu0 0.0
    %53 = vmatpush1.msra.mxu0 %v39
    %54 = vmatprep.subr.mxu0 0.0
    %55 = vmatpush1.msra.mxu0 %v40
    %56 = vmatprep.subr.mxu0 0.0
    %57 = vmatpush1.msra.mxu0 %v41
    %58 = vmatprep.subr.mxu0 0.0
    %59 = vmatpush1.msra.mxu0 %v42
    %60 = vmatprep.subr.mxu0 0.0
    %61 = vmatpush1.msra.mxu0 0.0
    %62 = vmatprep.subr.mxu0 0.0
    %63 = vmatpush1.msra.mxu0 0.0
    %64 = vmatprep.subr.mxu0 0.0
    %65 = vmatpush1.msra.mxu0 0.0
    %66 = vmatprep.subr.mxu0 0.0
    %67 = vmatpush1.msra.mxu0 0.0
    %68 = vmatprep.subr.mxu0 0.0
    %69 = vmatpush1.msra.mxu0 0.0
    %70 = vmatprep.subr.mxu0 0.0
    %71 = vmatpush1.msra.mxu0 0.0
    %72 = vmatprep.subr.mxu0 0.0
    %73 = vmatpush1.msra.mxu0 0.0
    %74 = vmatprep.subr.mxu0 0.0
    %75 = vmatpush1.msra.mxu0 0.0
    %76 = vmatprep.subr.mxu0 0.0
    %77 = vmatpush1.msra.mxu0 0.0
    %78 = vmatprep.subr.mxu0 0.0
    %79 = vmatpush1.msra.mxu0 0.0
    %80 = vmatprep.subr.mxu0 0.0
    %81 = vmatpush1.msra.mxu0 0.0
    %82 = vmatprep.subr.mxu0 0.0
    %83 = vmatpush1.msra.mxu0 0.0
    %84 = vmatprep.subr.mxu0 0.0
    %85 = vmatpush1.msra.mxu0 0.0
    %86 = vmatprep.subr.mxu0 0.0
    %87 = vmatpush1.msra.mxu0 0.0
    %88 = vmatprep.subr.mxu0 0.0
    %89 = vmatpush1.msra.mxu0 0.0
    %90 = vmatprep.subr.mxu0 0.0
    %91 = vmatpush1.msra.mxu0 0.0
    %92 = vmatprep.subr.mxu0 0.0
    %93 = vmatpush1.msra.mxu0 0.0
    %94 = vmatprep.subr.mxu0 0.0
    %95 = vmatpush1.msra.mxu0 0.0
    %96 = vmatprep.subr.mxu0 0.0
    %97 = vmatpush1.msra.mxu0 0.0
    %98 = vmatprep.subr.mxu0 0.0
    %99 = vmatpush1.msra.mxu0 0.0
    %100 = vmatprep.subr.mxu0 0.0
    %101 = vmatpush1.msra.mxu0 0.0
    %102 = vmatprep.subr.mxu0 0.0
    %103 = vmatpush1.msra.mxu0 0.0
    %104 = vmatprep.subr.mxu0 0.0
    %105 = vmatpush1.msra.mxu0 0.0
    %106 = vmatprep.subr.mxu0 0.0
    %107 = vmatpush1.msra.mxu0 0.0
    %108 = vmatprep.subr.mxu0 0.0
    %109 = vmatpush1.msra.mxu0 0.0
    %110 = vmatprep.subr.mxu0 0.0
    %111 = vmatpush1.msra.mxu0 0.0
    %112 = vmatprep.subr.mxu0 0.0
    %113 = vmatpush1.msra.mxu0 0.0
    %114 = vmatprep.subr.mxu0 0.0
    %115 = vmatpush1.msra.mxu0 0.0
    %116 = vmatprep.mubr.f32.mxu0 0.0
    %117 = vmatmul.mubr.f32.gmra.mrb[0].mxu0 %v50
    %v118 = vpop.f32.mrb[0].mxu0
    %v119 = vadd.f32 %v47, %v118
    %v120 = vpop.f32.mrb[0].mxu0
    %121 = vdwg.mxu0
    %v122 = vld [vmem:[#allocation2 + $0x1e8] sm:$0xff]
    %v123 = vld [vmem:[#allocation2 + $0x1f0] sm:$0xff]
    %v124 = vld [vmem:[#allocation2 + $0x80] sm:$0xff]
    %v125 = vld [vmem:[#allocation2 + $0x88] sm:$0xff]
    %v126 = vld [vmem:[#allocation2 + $0x90] sm:$0xff]
    %v127 = vld [vmem:[#allocation2 + $0x98] sm:$0xff]
    %v128 = vld [vmem:[#allocation2 + $0x218] sm:$0x1]
    %v129 = vlaneseq
    %v130 = vshrl.u32 %v129, 7
    %v131 = vsub.s32 0, %v130
    %v132 = vrot.slane %v128, %v131
    %v134 = vsel %vm48, %v122, 0
    %v137 = vsel %vm48, %v123, 0
    %139 = vmatprep.subr.mxu0 0.0
    %140 = vmatpush1.msra.mxu0 %v124
    %141 = vmatprep.subr.mxu0 0.0
    %142 = vmatpush1.msra.mxu0 %v125
    %143 = vmatprep.subr.mxu0 0.0
    %144 = vmatpush1.msra.mxu0 %v126
    %145 = vmatprep.subr.mxu0 0.0
    %146 = vmatpush1.msra.mxu0 %v127
    %147 = vmatprep.subr.mxu0 0.0
    %148 = vmatpush1.msra.mxu0 0.0
    %149 = vmatprep.subr.mxu0 0.0
    %150 = vmatpush1.msra.mxu0 0.0
    %151 = vmatprep.subr.mxu0 0.0
    %152 = vmatpush1.msra.mxu0 0.0
    %153 = vmatprep.subr.mxu0 0.0
    %154 = vmatpush1.msra.mxu0 0.0
    %155 = vmatprep.subr.mxu0 0.0
    %156 = vmatpush1.msra.mxu0 0.0
    %157 = vmatprep.subr.mxu0 0.0
    %158 = vmatpush1.msra.mxu0 0.0
    %159 = vmatprep.subr.mxu0 0.0
    %160 = vmatpush1.msra.mxu0 0.0
    %161 = vmatprep.subr.mxu0 0.0
    %162 = vmatpush1.msra.mxu0 0.0
    %163 = vmatprep.subr.mxu0 0.0
    %164 = vmatpush1.msra.mxu0 0.0
    %165 = vmatprep.subr.mxu0 0.0
    %166 = vmatpush1.msra.mxu0 0.0
    %167 = vmatprep.subr.mxu0 0.0
    %168 = vmatpush1.msra.mxu0 0.0
    %169 = vmatprep.subr.mxu0 0.0
    %170 = vmatpush1.msra.mxu0 0.0
    %171 = vmatprep.subr.mxu0 0.0
    %172 = vmatpush1.msra.mxu0 0.0
    %173 = vmatprep.subr.mxu0 0.0
    %174 = vmatpush1.msra.mxu0 0.0
    %175 = vmatprep.subr.mxu0 0.0
    %176 = vmatpush1.msra.mxu0 0.0
    %177 = vmatprep.subr.mxu0 0.0
    %178 = vmatpush1.msra.mxu0 0.0
    %179 = vmatprep.subr.mxu0 0.0
    %180 = vmatpush1.msra.mxu0 0.0
    %181 = vmatprep.subr.mxu0 0.0
    %182 = vmatpush1.msra.mxu0 0.0
    %183 = vmatprep.subr.mxu0 0.0
    %184 = vmatpush1.msra.mxu0 0.0
    %185 = vmatprep.subr.mxu0 0.0
    %186 = vmatpush1.msra.mxu0 0.0
    %187 = vmatprep.subr.mxu0 0.0
    %188 = vmatpush1.msra.mxu0 0.0
    %189 = vmatprep.subr.mxu0 0.0
    %190 = vmatpush1.msra.mxu0 0.0
    %191 = vmatprep.subr.mxu0 0.0
    %192 = vmatpush1.msra.mxu0 0.0
    %193 = vmatprep.subr.mxu0 0.0
    %194 = vmatpush1.msra.mxu0 0.0
    %195 = vmatprep.subr.mxu0 0.0
    %196 = vmatpush1.msra.mxu0 0.0
    %197 = vmatprep.subr.mxu0 0.0
    %198 = vmatpush1.msra.mxu0 0.0
    %199 = vmatprep.subr.mxu0 0.0
    %200 = vmatpush1.msra.mxu0 0.0
    %201 = vmatprep.subr.mxu0 0.0
    %202 = vmatpush1.msra.mxu0 0.0
    %203 = vmatprep.mubr.f32.mxu0 0.0
    %204 = vmatmul.mubr.f32.gmra.mrb[0].mxu0 %v134
    %v205 = vpop.f32.mrb[0].mxu0
    %v206 = vadd.f32 %v132, %v205
    %v207 = vpop.f32.mrb[0].mxu0
    %208 = vmatprep.mubr.f32.mxu0 0.0
    %209 = vmatmul.mubr.f32.gmra.mrb[0].mxu0 %v137
    %v210 = vpop.f32.mrb[0].mxu0
    %v211 = vadd.f32 %v132, %v210
    %v212 = vpop.f32.mrb[0].mxu0
    %213 = vdwg.mxu0
    %214 = vst.msk [vmem:[#allocation5] sm:$0xff] %vm48, %v32
    %v215 = vld [vmem:[#allocation2] sm:$0xff]
    %v216 = vld [vmem:[#allocation2 + $0x8] sm:$0xff]
    %v217 = vld [vmem:[#allocation2 + $0x10] sm:$0xff]
    %v218 = vld [vmem:[#allocation2 + $0x18] sm:$0xff]
    %v219 = vld [vmem:[#allocation2 + $0x1f8] sm:$0x1]
    %v220 = vlaneseq
    %v221 = vshrl.u32 %v220, 7
    %v222 = vsub.s32 0, %v221
    %v223 = vrot.slane %v219, %v222
    %v225 = vsel %vm48, %v32, 0
    %227 = vmatprep.subr.mxu0 0.0
    %228 = vmatpush1.msra.mxu0 %v215
    %229 = vmatprep.subr.mxu0 0.0
    %230 = vmatpush1.msra.mxu0 %v216
    %231 = vmatprep.subr.mxu0 0.0
    %232 = vmatpush1.msra.mxu0 %v217
    %233 = vmatprep.subr.mxu0 0.0
    %234 = vmatpush1.msra.mxu0 %v218
    %235 = vmatprep.subr.mxu0 0.0
    %236 = vmatpush1.msra.mxu0 0.0
    %237 = vmatprep.subr.mxu0 0.0
    %238 = vmatpush1.msra.mxu0 0.0
    %239 = vmatprep.subr.mxu0 0.0
    %240 = vmatpush1.msra.mxu0 0.0
    %241 = vmatprep.subr.mxu0 0.0
    %242 = vmatpush1.msra.mxu0 0.0
    %243 = vmatprep.subr.mxu0 0.0
    %244 = vmatpush1.msra.mxu0 0.0
    %245 = vmatprep.subr.mxu0 0.0
    %246 = vmatpush1.msra.mxu0 0.0
    %247 = vmatprep.subr.mxu0 0.0
    %248 = vmatpush1.msra.mxu0 0.0
    %249 = vmatprep.subr.mxu0 0.0
    %250 = vmatpush1.msra.mxu0 0.0
    %251 = vmatprep.subr.mxu0 0.0
    %252 = vmatpush1.msra.mxu0 0.0
    %253 = vmatprep.subr.mxu0 0.0
    %254 = vmatpush1.msra.mxu0 0.0
    %255 = vmatprep.subr.mxu0 0.0
    %256 = vmatpush1.msra.mxu0 0.0
    %257 = vmatprep.subr.mxu0 0.0
    %258 = vmatpush1.msra.mxu0 0.0
    %259 = vmatprep.subr.mxu0 0.0
    %260 = vmatpush1.msra.mxu0 0.0
    %261 = vmatprep.subr.mxu0 0.0
    %262 = vmatpush1.msra.mxu0 0.0
    %263 = vmatprep.subr.mxu0 0.0
    %264 = vmatpush1.msra.mxu0 0.0
    %265 = vmatprep.subr.mxu0 0.0
    %266 = vmatpush1.msra.mxu0 0.0
    %267 = vmatprep.subr.mxu0 0.0
    %268 = vmatpush1.msra.mxu0 0.0
    %269 = vmatprep.subr.mxu0 0.0
    %270 = vmatpush1.msra.mxu0 0.0
    %271 = vmatprep.subr.mxu0 0.0
    %272 = vmatpush1.msra.mxu0 0.0
    %273 = vmatprep.subr.mxu0 0.0
    %274 = vmatpush1.msra.mxu0 0.0
    %275 = vmatprep.subr.mxu0 0.0
    %276 = vmatpush1.msra.mxu0 0.0
    %277 = vmatprep.subr.mxu0 0.0
    %278 = vmatpush1.msra.mxu0 0.0
    %279 = vmatprep.subr.mxu0 0.0
    %280 = vmatpush1.msra.mxu0 0.0
    %281 = vmatprep.subr.mxu0 0.0
    %282 = vmatpush1.msra.mxu0 0.0
    %283 = vmatprep.subr.mxu0 0.0
    %284 = vmatpush1.msra.mxu0 0.0
    %285 = vmatprep.subr.mxu0 0.0
    %286 = vmatpush1.msra.mxu0 0.0
    %287 = vmatprep.subr.mxu0 0.0
    %288 = vmatpush1.msra.mxu0 0.0
    %289 = vmatprep.subr.mxu0 0.0
    %290 = vmatpush1.msra.mxu0 0.0
    %291 = vmatprep.mubr.f32.mxu0 0.0
    %292 = vmatmul.mubr.f32.gmra.mrb[0].mxu0 %v225
    %v293 = vpop.f32.mrb[0].mxu0
    %v294 = vadd.f32 %v223, %v293
    %v295 = vpop.f32.mrb[0].mxu0
    %296 = vdwg.mxu0
    %v297 = vld [vmem:[#allocation2 + $0x20] sm:$0xff]
    %v298 = vld [vmem:[#allocation2 + $0x28] sm:$0xff]
    %v299 = vld [vmem:[#allocation2 + $0x30] sm:$0xff]
    %v300 = vld [vmem:[#allocation2 + $0x38] sm:$0xff]
    %v301 = vld [vmem:[#allocation2 + $0x200] sm:$0x1]
    %v302 = vlaneseq
    %v303 = vshrl.u32 %v302, 7
    %v304 = vsub.s32 0, %v303
    %v305 = vrot.slane %v301, %v304
    %306 = vmatprep.subr.mxu0 0.0
    %307 = vmatpush1.msra.mxu0 %v297
    %308 = vmatprep.subr.mxu0 0.0
    %309 = vmatpush1.msra.mxu0 %v298
    %310 = vmatprep.subr.mxu0 0.0
    %311 = vmatpush1.msra.mxu0 %v299
    %312 = vmatprep.subr.mxu0 0.0
    %313 = vmatpush1.msra.mxu0 %v300
    %314 = vmatprep.subr.mxu0 0.0
    %315 = vmatpush1.msra.mxu0 0.0
    %316 = vmatprep.subr.mxu0 0.0
    %317 = vmatpush1.msra.mxu0 0.0
    %318 = vmatprep.subr.mxu0 0.0
    %319 = vmatpush1.msra.mxu0 0.0
    %320 = vmatprep.subr.mxu0 0.0
    %321 = vmatpush1.msra.mxu0 0.0
    %322 = vmatprep.subr.mxu0 0.0
    %323 = vmatpush1.msra.mxu0 0.0
    %324 = vmatprep.subr.mxu0 0.0
    %325 = vmatpush1.msra.mxu0 0.0
    %326 = vmatprep.subr.mxu0 0.0
    %327 = vmatpush1.msra.mxu0 0.0
    %328 = vmatprep.subr.mxu0 0.0
    %329 = vmatpush1.msra.mxu0 0.0
    %330 = vmatprep.subr.mxu0 0.0
    %331 = vmatpush1.msra.mxu0 0.0
    %332 = vmatprep.subr.mxu0 0.0
    %333 = vmatpush1.msra.mxu0 0.0
    %334 = vmatprep.subr.mxu0 0.0
    %335 = vmatpush1.msra.mxu0 0.0
    %336 = vmatprep.subr.mxu0 0.0
    %337 = vmatpush1.msra.mxu0 0.0
    %338 = vmatprep.subr.mxu0 0.0
    %339 = vmatpush1.msra.mxu0 0.0
    %340 = vmatprep.subr.mxu0 0.0
    %341 = vmatpush1.msra.mxu0 0.0
    %342 = vmatprep.subr.mxu0 0.0
    %343 = vmatpush1.msra.mxu0 0.0
    %344 = vmatprep.subr.mxu0 0.0
    %345 = vmatpush1.msra.mxu0 0.0
    %346 = vmatprep.subr.mxu0 0.0
    %347 = vmatpush1.msra.mxu0 0.0
    %348 = vmatprep.subr.mxu0 0.0
    %349 = vmatpush1.msra.mxu0 0.0
    %350 = vmatprep.subr.mxu0 0.0
    %351 = vmatpush1.msra.mxu0 0.0
    %352 = vmatprep.subr.mxu0 0.0
    %353 = vmatpush1.msra.mxu0 0.0
    %354 = vmatprep.subr.mxu0 0.0
    %355 = vmatpush1.msra.mxu0 0.0
    %356 = vmatprep.subr.mxu0 0.0
    %357 = vmatpush1.msra.mxu0 0.0
    %358 = vmatprep.subr.mxu0 0.0
    %359 = vmatpush1.msra.mxu0 0.0
    %360 = vmatprep.subr.mxu0 0.0
    %361 = vmatpush1.msra.mxu0 0.0
    %362 = vmatprep.subr.mxu0 0.0
    %363 = vmatpush1.msra.mxu0 0.0
    %364 = vmatprep.subr.mxu0 0.0
    %365 = vmatpush1.msra.mxu0 0.0
    %366 = vmatprep.subr.mxu0 0.0
    %367 = vmatpush1.msra.mxu0 0.0
    %368 = vmatprep.subr.mxu0 0.0
    %369 = vmatpush1.msra.mxu0 0.0
    %370 = vmatprep.mubr.f32.mxu0 0.0
    %371 = vmatmul.mubr.f32.gmra.mrb[0].mxu0 %v225
    %v372 = vpop.f32.mrb[0].mxu0
    %v373 = vadd.f32 %v305, %v372
    %v374 = vpop.f32.mrb[0].mxu0
    %375 = vdwg.mxu0
    %v376 = vadd.f32 %v373, %v119
    %v377 = vmul.f32 %v376, %v376
    %v378 = vmul.f32 %v376, %v377
    %v379 = vmul.f32 %v378, 0.044715
    %v380 = vadd.f32 %v376, %v379
    %v381 = vmul.f32 %v380, 0.7978846
    %v382 = vtanh.pop %v381
    %v383 = vadd.f32 %v382, 1.0
    %v384 = vmul.f32 %v383, 0.5
    %v385 = vmul.f32 %v376, %v384
    %v386 = vld [vmem:[#allocation2 + $0xe0] sm:$0xff]
    %v387 = vld [vmem:[#allocation2 + $0xe8] sm:$0xff]
    %v388 = vld [vmem:[#allocation2 + $0xf0] sm:$0xff]
    %v389 = vld [vmem:[#allocation2 + $0xf8] sm:$0xff]
    %v390 = vld [vmem:[#allocation2 + $0x240] sm:$0x1]
    %v391 = vlaneseq
    %v392 = vshrl.u32 %v391, 7
    %v393 = vsub.s32 0, %v392
    %v394 = vrot.slane %v390, %v393
    %v396 = vsel %vm48, %v385, 0
    %398 = vmatprep.subr.mxu0 0.0
    %399 = vmatpush1.msra.mxu0 %v386
    %400 = vmatprep.subr.mxu0 0.0
    %401 = vmatpush1.msra.mxu0 %v387
    %402 = vmatprep.subr.mxu0 0.0
    %403 = vmatpush1.msra.mxu0 %v388
    %404 = vmatprep.subr.mxu0 0.0
    %405 = vmatpush1.msra.mxu0 %v389
    %406 = vmatprep.subr.mxu0 0.0
    %407 = vmatpush1.msra.mxu0 0.0
    %408 = vmatprep.subr.mxu0 0.0
    %409 = vmatpush1.msra.mxu0 0.0
    %410 = vmatprep.subr.mxu0 0.0
    %411 = vmatpush1.msra.mxu0 0.0
    %412 = vmatprep.subr.mxu0 0.0
    %413 = vmatpush1.msra.mxu0 0.0
    %414 = vmatprep.subr.mxu0 0.0
    %415 = vmatpush1.msra.mxu0 0.0
    %416 = vmatprep.subr.mxu0 0.0
    %417 = vmatpush1.msra.mxu0 0.0
    %418 = vmatprep.subr.mxu0 0.0
    %419 = vmatpush1.msra.mxu0 0.0
    %420 = vmatprep.subr.mxu0 0.0
    %421 = vmatpush1.msra.mxu0 0.0
    %422 = vmatprep.subr.mxu0 0.0
    %423 = vmatpush1.msra.mxu0 0.0
    %424 = vmatprep.subr.mxu0 0.0
    %425 = vmatpush1.msra.mxu0 0.0
    %426 = vmatprep.subr.mxu0 0.0
    %427 = vmatpush1.msra.mxu0 0.0
    %428 = vmatprep.subr.mxu0 0.0
    %429 = vmatpush1.msra.mxu0 0.0
    %430 = vmatprep.subr.mxu0 0.0
    %431 = vmatpush1.msra.mxu0 0.0
    %432 = vmatprep.subr.mxu0 0.0
    %433 = vmatpush1.msra.mxu0 0.0
    %434 = vmatprep.subr.mxu0 0.0
    %435 = vmatpush1.msra.mxu0 0.0
    %436 = vmatprep.subr.mxu0 0.0
    %437 = vmatpush1.msra.mxu0 0.0
    %438 = vmatprep.subr.mxu0 0.0
    %439 = vmatpush1.msra.mxu0 0.0
    %440 = vmatprep.subr.mxu0 0.0
    %441 = vmatpush1.msra.mxu0 0.0
    %442 = vmatprep.subr.mxu0 0.0
    %443 = vmatpush1.msra.mxu0 0.0
    %444 = vmatprep.subr.mxu0 0.0
    %445 = vmatpush1.msra.mxu0 0.0
    %446 = vmatprep.subr.mxu0 0.0
    %447 = vmatpush1.msra.mxu0 0.0
    %448 = vmatprep.subr.mxu0 0.0
    %449 = vmatpush1.msra.mxu0 0.0
    %450 = vmatprep.subr.mxu0 0.0
    %451 = vmatpush1.msra.mxu0 0.0
    %452 = vmatprep.subr.mxu0 0.0
    %453 = vmatpush1.msra.mxu0 0.0
    %454 = vmatprep.subr.mxu0 0.0
    %455 = vmatpush1.msra.mxu0 0.0
    %456 = vmatprep.subr.mxu0 0.0
    %457 = vmatpush1.msra.mxu0 0.0
    %458 = vmatprep.subr.mxu0 0.0
    %459 = vmatpush1.msra.mxu0 0.0
    %460 = vmatprep.subr.mxu0 0.0
    %461 = vmatpush1.msra.mxu0 0.0
    %462 = vmatprep.mubr.f32.mxu0 0.0
    %463 = vmatmul.mubr.f32.gmra.mrb[0].mxu0 %v396
    %v464 = vpop.f32.mrb[0].mxu0
    %v465 = vadd.f32 %v394, %v464
    %v466 = vpop.f32.mrb[0].mxu0
    %467 = vdwg.mxu0
    %v468 = vxor.u32 %v465, 2147483648
    %v469 = vmul.f32 %v468, 1.442695
    %v470 = vpow.pop %v469
    %v471 = vadd.f32 %v470, 1.0
    %v472 = vrcp.pop %v471
    %v473 = vmul.f32 1.0, %v472
    %vm474 = vcmp.gt.f32.partialorder %v473, 0.9
    %v475 = vsel %vm474, 1, 0
    %v476 = vcvt.s32.f32 %v475
    %v477 = vmax.f32 %v476, %v37
    %vm478 = vcmask 7168
    %v479 = vsel %vm478, %v477, inf
    %v480 = vrot.slane %v479, 4
    %v481 = vmin.f32 %v479, %v480
    %v482 = vrot.slane %v481, 2
    %v483 = vmin.f32 %v481, %v482
    %v484 = vrot.slane %v483, 1
    %v485 = vmin.f32 %v483, %v484
    %v486 = vmax.f32 %v485, 0.0
    %v487 = vsub.f32 1.0, %v486
    %v489 = vcombine.high %v294, %v294
    %v491 = vunpack.c.l.s4 1966171168
    %v492 = vunpack.c.0.s8 %v491
    %v493 = vlaneseq
    %v494 = vshrl.u32 %v493, 7
    %v495 = vsub.s32 %v492, %v494
    %v496 = vrot.slane %v294, %v495
    %v498 = vunpack.c.l.s4 1966171168
    %v499 = vunpack.c.0.s8 %v498
    %v500 = vlaneseq
    %v501 = vshrl.u32 %v500, 7
    %v502 = vsub.s32 %v499, %v501
    %v503 = vrot.slane %v489, %v502
    %v504 = vcombine.high %v496, %v496
    %v505 = vcombine.high %v503, %v503
    %v507 = vunpack.c.l.s4 1966171168
    %v508 = vunpack.c.0.s8 %v507
    %v509 = vlaneseq
    %v510 = vshrl.u32 %v509, 7
    %v511 = vsub.s32 %v508, %v510
    %v512 = vrot.slane %v496, %v511
    %v514 = vunpack.c.l.s4 1966171168
    %v515 = vunpack.c.0.s8 %v514
    %v516 = vlaneseq
    %v517 = vshrl.u32 %v516, 7
    %v518 = vsub.s32 %v515, %v517
    %v519 = vrot.slane %v503, %v518
    %v521 = vunpack.c.l.s4 1966171168
    %v522 = vunpack.c.0.s8 %v521
    %v523 = vlaneseq
    %v524 = vshrl.u32 %v523, 7
    %v525 = vsub.s32 %v522, %v524
    %v526 = vrot.slane %v504, %v525
    %v528 = vunpack.c.l.s4 1966171168
    %v529 = vunpack.c.0.s8 %v528
    %v530 = vlaneseq
    %v531 = vshrl.u32 %v530, 7
    %v532 = vsub.s32 %v529, %v531
    %v533 = vrot.slane %v505, %v532
    %v534 = vcombine.high %v512, %v512
    %v535 = vcombine.high %v519, %v519
    %v536 = vcombine.high %v526, %v526
    %v537 = vcombine.high %v533, %v533
    %v538 = vlaneseq
    %v539 = vshrl.u32 %v538, 7
    %v540 = vsub.s32 0, %v539
    %v541 = vrot.slane %v512, %v540
    %v542 = vlaneseq
    %v543 = vshrl.u32 %v542, 7
    %v544 = vsub.s32 0, %v543
    %v545 = vrot.slane %v526, %v544
    %v546 = vlaneseq
    %v547 = vshrl.u32 %v546, 7
    %v548 = vsub.s32 0, %v547
    %v549 = vrot.slane %v534, %v548
    %v550 = vlaneseq
    %v551 = vshrl.u32 %v550, 7
    %v552 = vsub.s32 0, %v551
    %v553 = vrot.slane %v536, %v552
    %v554 = vlaneseq
    %v555 = vshrl.u32 %v554, 7
    %v556 = vsub.s32 0, %v555
    %v557 = vrot.slane %v519, %v556
    %v558 = vlaneseq
    %v559 = vshrl.u32 %v558, 7
    %v560 = vsub.s32 0, %v559
    %v561 = vrot.slane %v533, %v560
    %v562 = vlaneseq
    %v563 = vshrl.u32 %v562, 7
    %v564 = vsub.s32 0, %v563
    %v565 = vrot.slane %v535, %v564
    %v566 = vlaneseq
    %v567 = vshrl.u32 %v566, 7
    %v568 = vsub.s32 0, %v567
    %v569 = vrot.slane %v537, %v568
    %v578 = vadd.f32 %v541, %v206
    %v579 = vadd.f32 %v541, %v211
    %v580 = vadd.f32 %v545, %v206
    %v581 = vadd.f32 %v545, %v211
    %v582 = vadd.f32 %v549, %v206
    %v583 = vadd.f32 %v549, %v211
    %v584 = vadd.f32 %v553, %v206
    %v585 = vadd.f32 %v553, %v211
    %v586 = vadd.f32 %v557, %v206
    %v587 = vadd.f32 %v557, %v211
    %v588 = vadd.f32 %v561, %v206
    %v589 = vadd.f32 %v561, %v211
    %v590 = vadd.f32 %v565, %v206
    %v591 = vadd.f32 %v565, %v211
    %v592 = vadd.f32 %v569, %v206
    %v593 = vadd.f32 %v569, %v211
    %v594 = vmul.f32 %v578, %v578
    %v595 = vmul.f32 %v579, %v579
    %v596 = vmul.f32 %v580, %v580
    %v597 = vmul.f32 %v581, %v581
    %v598 = vmul.f32 %v582, %v582
    %v599 = vmul.f32 %v583, %v583
    %v600 = vmul.f32 %v584, %v584
    %v601 = vmul.f32 %v585, %v585
    %v602 = vmul.f32 %v586, %v586
    %v603 = vmul.f32 %v587, %v587
    %v604 = vmul.f32 %v588, %v588
    %v605 = vmul.f32 %v589, %v589
    %v606 = vmul.f32 %v590, %v590
    %v607 = vmul.f32 %v591, %v591
    %v608 = vmul.f32 %v592, %v592
    %v609 = vmul.f32 %v593, %v593
    %v610 = vmul.f32 %v578, %v594
    %v611 = vmul.f32 %v579, %v595
    %v612 = vmul.f32 %v580, %v596
    %v613 = vmul.f32 %v581, %v597
    %v614 = vmul.f32 %v582, %v598
    %v615 = vmul.f32 %v583, %v599
    %v616 = vmul.f32 %v584, %v600
    %v617 = vmul.f32 %v585, %v601
    %v618 = vmul.f32 %v586, %v602
    %v619 = vmul.f32 %v587, %v603
    %v620 = vmul.f32 %v588, %v604
    %v621 = vmul.f32 %v589, %v605
    %v622 = vmul.f32 %v590, %v606
    %v623 = vmul.f32 %v591, %v607
    %v624 = vmul.f32 %v592, %v608
    %v625 = vmul.f32 %v593, %v609
    %v626 = vmul.f32 %v610, 0.044715
    %v627 = vmul.f32 %v611, 0.044715
    %v628 = vmul.f32 %v612, 0.044715
    %v629 = vmul.f32 %v613, 0.044715
    %v630 = vmul.f32 %v614, 0.044715
    %v631 = vmul.f32 %v615, 0.044715
    %v632 = vmul.f32 %v616, 0.044715
    %v633 = vmul.f32 %v617, 0.044715
    %v634 = vmul.f32 %v618, 0.044715
    %v635 = vmul.f32 %v619, 0.044715
    %v636 = vmul.f32 %v620, 0.044715
    %v637 = vmul.f32 %v621, 0.044715
    %v638 = vmul.f32 %v622, 0.044715
    %v639 = vmul.f32 %v623, 0.044715
    %v640 = vmul.f32 %v624, 0.044715
    %v641 = vmul.f32 %v625, 0.044715
    %v642 = vadd.f32 %v578, %v626
    %v643 = vadd.f32 %v579, %v627
    %v644 = vadd.f32 %v580, %v628
    %v645 = vadd.f32 %v581, %v629
    %v646 = vadd.f32 %v582, %v630
    %v647 = vadd.f32 %v583, %v631
    %v648 = vadd.f32 %v584, %v632
    %v649 = vadd.f32 %v585, %v633
    %v650 = vadd.f32 %v586, %v634
    %v651 = vadd.f32 %v587, %v635
    %v652 = vadd.f32 %v588, %v636
    %v653 = vadd.f32 %v589, %v637
    %v654 = vadd.f32 %v590, %v638
    %v655 = vadd.f32 %v591, %v639
    %v656 = vadd.f32 %v592, %v640
    %v657 = vadd.f32 %v593, %v641
    %v658 = vmul.f32 %v642, 0.7978846
    %v659 = vmul.f32 %v643, 0.7978846
    %v660 = vmul.f32 %v644, 0.7978846
    %v661 = vmul.f32 %v645, 0.7978846
    %v662 = vmul.f32 %v646, 0.7978846
    %v663 = vmul.f32 %v647, 0.7978846
    %v664 = vmul.f32 %v648, 0.7978846
    %v665 = vmul.f32 %v649, 0.7978846
    %v666 = vmul.f32 %v650, 0.7978846
    %v667 = vmul.f32 %v651, 0.7978846
    %v668 = vmul.f32 %v652, 0.7978846
    %v669 = vmul.f32 %v653, 0.7978846
    %v670 = vmul.f32 %v654, 0.7978846
    %v671 = vmul.f32 %v655, 0.7978846
    %v672 = vmul.f32 %v656, 0.7978846
    %v673 = vmul.f32 %v657, 0.7978846
    %v674 = vtanh.pop %v658
    %v675 = vtanh.pop %v659
    %v676 = vtanh.pop %v660
    %v677 = vtanh.pop %v661
    %v678 = vtanh.pop %v662
    %v679 = vtanh.pop %v663
    %v680 = vtanh.pop %v664
    %v681 = vtanh.pop %v665
    %v682 = vtanh.pop %v666
    %v683 = vtanh.pop %v667
    %v684 = vtanh.pop %v668
    %v685 = vtanh.pop %v669
    %v686 = vtanh.pop %v670
    %v687 = vtanh.pop %v671
    %v688 = vtanh.pop %v672
    %v689 = vtanh.pop %v673
    %v690 = vadd.f32 %v674, 1.0
    %v691 = vadd.f32 %v675, 1.0
    %v692 = vadd.f32 %v676, 1.0
    %v693 = vadd.f32 %v677, 1.0
    %v694 = vadd.f32 %v678, 1.0
    %v695 = vadd.f32 %v679, 1.0
    %v696 = vadd.f32 %v680, 1.0
    %v697 = vadd.f32 %v681, 1.0
    %v698 = vadd.f32 %v682, 1.0
    %v699 = vadd.f32 %v683, 1.0
    %v700 = vadd.f32 %v684, 1.0
    %v701 = vadd.f32 %v685, 1.0
    %v702 = vadd.f32 %v686, 1.0
    %v703 = vadd.f32 %v687, 1.0
    %v704 = vadd.f32 %v688, 1.0
    %v705 = vadd.f32 %v689, 1.0
    %v706 = vmul.f32 %v690, 0.5
    %v707 = vmul.f32 %v691, 0.5
    %v708 = vmul.f32 %v692, 0.5
    %v709 = vmul.f32 %v693, 0.5
    %v710 = vmul.f32 %v694, 0.5
    %v711 = vmul.f32 %v695, 0.5
    %v712 = vmul.f32 %v696, 0.5
    %v713 = vmul.f32 %v697, 0.5
    %v714 = vmul.f32 %v698, 0.5
    %v715 = vmul.f32 %v699, 0.5
    %v716 = vmul.f32 %v700, 0.5
    %v717 = vmul.f32 %v701, 0.5
    %v718 = vmul.f32 %v702, 0.5
    %v719 = vmul.f32 %v703, 0.5
    %v720 = vmul.f32 %v704, 0.5
    %v721 = vmul.f32 %v705, 0.5
    %v722 = vmul.f32 %v578, %v706
    %v723 = vmul.f32 %v579, %v707
    %v724 = vmul.f32 %v580, %v708
    %v725 = vmul.f32 %v581, %v709
    %v726 = vmul.f32 %v582, %v710
    %v727 = vmul.f32 %v583, %v711
    %v728 = vmul.f32 %v584, %v712
    %v729 = vmul.f32 %v585, %v713
    %v730 = vmul.f32 %v586, %v714
    %v731 = vmul.f32 %v587, %v715
    %v732 = vmul.f32 %v588, %v716
    %v733 = vmul.f32 %v589, %v717
    %v734 = vmul.f32 %v590, %v718
    %v735 = vmul.f32 %v591, %v719
    %v736 = vmul.f32 %v592, %v720
    %v737 = vmul.f32 %v593, %v721
    %v738 = vld [vmem:[#allocation2 + $0x220] sm:$0x1]
    %v739 = vlaneseq
    %v740 = vshrl.u32 %v739, 7
    %v741 = vsub.s32 0, %v740
    %v742 = vrot.slane %v738, %v741
    %v743 = vmul.f32 %v722, %v742
    %v744 = vmul.f32 %v723, %v742
    %v745 = vmul.f32 %v724, %v742
    %v746 = vmul.f32 %v725, %v742
    %v747 = vmul.f32 %v726, %v742
    %v748 = vmul.f32 %v727, %v742
    %v749 = vmul.f32 %v728, %v742
    %v750 = vmul.f32 %v729, %v742
    %v751 = vmul.f32 %v730, %v742
    %v752 = vmul.f32 %v731, %v742
    %v753 = vmul.f32 %v732, %v742
    %v754 = vmul.f32 %v733, %v742
    %v755 = vmul.f32 %v734, %v742
    %v756 = vmul.f32 %v735, %v742
    %v757 = vmul.f32 %v736, %v742
    %v758 = vmul.f32 %v737, %v742
    %v759 = vsel %vm48, %v743, 0.0
    %760 = vadd.xlane.f32.xlu0 %v759
    %v761 = vpop.xlane.xlu0 %760
    %v762 = vsel %vm48, %v744, 0.0
    %763 = vadd.xlane.f32.xlu0 %v762
    %v764 = vpop.xlane.xlu0 %763
    %v765 = vsel %vm48, %v745, 0.0
    %766 = vadd.xlane.f32.xlu0 %v765
    %v767 = vpop.xlane.xlu0 %766
    %v768 = vsel %vm48, %v746, 0.0
    %769 = vadd.xlane.f32.xlu0 %v768
    %v770 = vpop.xlane.xlu0 %769
    %v771 = vsel %vm48, %v747, 0.0
    %772 = vadd.xlane.f32.xlu0 %v771
    %v773 = vpop.xlane.xlu0 %772
    %v774 = vsel %vm48, %v748, 0.0
    %775 = vadd.xlane.f32.xlu0 %v774
    %v776 = vpop.xlane.xlu0 %775
    %v777 = vsel %vm48, %v749, 0.0
    %778 = vadd.xlane.f32.xlu0 %v777
    %v779 = vpop.xlane.xlu0 %778
    %v780 = vsel %vm48, %v750, 0.0
    %781 = vadd.xlane.f32.xlu0 %v780
    %v782 = vpop.xlane.xlu0 %781
    %v783 = vsel %vm48, %v751, 0.0
    %784 = vadd.xlane.f32.xlu0 %v783
    %v785 = vpop.xlane.xlu0 %784
    %v786 = vsel %vm48, %v752, 0.0
    %787 = vadd.xlane.f32.xlu0 %v786
    %v788 = vpop.xlane.xlu0 %787
    %v789 = vsel %vm48, %v753, 0.0
    %790 = vadd.xlane.f32.xlu0 %v789
    %v791 = vpop.xlane.xlu0 %790
    %v792 = vsel %vm48, %v754, 0.0
    %793 = vadd.xlane.f32.xlu0 %v792
    %v794 = vpop.xlane.xlu0 %793
    %v795 = vsel %vm48, %v755, 0.0
    %796 = vadd.xlane.f32.xlu0 %v795
    %v797 = vpop.xlane.xlu0 %796
    %v798 = vsel %vm48, %v756, 0.0
    %799 = vadd.xlane.f32.xlu0 %v798
    %v800 = vpop.xlane.xlu0 %799
    %v801 = vsel %vm48, %v757, 0.0
    %802 = vadd.xlane.f32.xlu0 %v801
    %v803 = vpop.xlane.xlu0 %802
    %v804 = vsel %vm48, %v758, 0.0
    %805 = vadd.xlane.f32.xlu0 %v804
    %v806 = vpop.xlane.xlu0 %805
    %v807 = vld [vmem:[#allocation2 + $0x228] sm:$0x1]
    %s809 = vtos %v807
    %v810 = vstv %s809
    %v812 = vadd.f32 %v761, %v810
    %v813 = vadd.f32 %v764, %v810
    %v814 = vadd.f32 %v767, %v810
    %v815 = vadd.f32 %v770, %v810
    %v816 = vadd.f32 %v773, %v810
    %v817 = vadd.f32 %v776, %v810
    %v818 = vadd.f32 %v779, %v810
    %v819 = vadd.f32 %v782, %v810
    %v820 = vadd.f32 %v785, %v810
    %v821 = vadd.f32 %v788, %v810
    %v822 = vadd.f32 %v791, %v810
    %v823 = vadd.f32 %v794, %v810
    %v824 = vadd.f32 %v797, %v810
    %v825 = vadd.f32 %v800, %v810
    %v826 = vadd.f32 %v803, %v810
    %v827 = vadd.f32 %v806, %v810
    %v828 = vlaneseq
    %v829 = vand.u32 %v828, 127
    %v846 = vlaneseq
    %v847 = vshrl.u32 %v846, 7
    %v848 = vsub.s32 %v829, %v847
    %v849 = vrot.slane %v812, %v848
    %v850 = vadd.s32 %v829, 4294967288
    %v851 = vlaneseq
    %v852 = vshrl.u32 %v851, 7
    %v853 = vsub.s32 %v850, %v852
    %v854 = vrot.slane %v813, %v853
    %vm855 = vcmask 130112
    %v856 = vsel %vm855, %v854, %v849
    %v857 = vlaneseq
    %v858 = vshrl.u32 %v857, 7
    %v859 = vsub.s32 %v829, %v858
    %v860 = vrot.slane %v814, %v859
    %v861 = vlaneseq
    %v862 = vshrl.u32 %v861, 7
    %v863 = vsub.s32 %v850, %v862
    %v864 = vrot.slane %v815, %v863
    %v865 = vsel %vm855, %v864, %v860
    %v866 = vlaneseq
    %v867 = vshrl.u32 %v866, 7
    %v868 = vsub.s32 %v829, %v867
    %v869 = vrot.slane %v816, %v868
    %v870 = vlaneseq
    %v871 = vshrl.u32 %v870, 7
    %v872 = vsub.s32 %v850, %v871
    %v873 = vrot.slane %v817, %v872
    %v874 = vsel %vm855, %v873, %v869
    %v875 = vlaneseq
    %v876 = vshrl.u32 %v875, 7
    %v877 = vsub.s32 %v829, %v876
    %v878 = vrot.slane %v818, %v877
    %v879 = vlaneseq
    %v880 = vshrl.u32 %v879, 7
    %v881 = vsub.s32 %v850, %v880
    %v882 = vrot.slane %v819, %v881
    %v883 = vsel %vm855, %v882, %v878
    %v884 = vlaneseq
    %v885 = vshrl.u32 %v884, 7
    %v886 = vsub.s32 %v829, %v885
    %v887 = vrot.slane %v820, %v886
    %v888 = vlaneseq
    %v889 = vshrl.u32 %v888, 7
    %v890 = vsub.s32 %v850, %v889
    %v891 = vrot.slane %v821, %v890
    %v892 = vsel %vm855, %v891, %v887
    %v893 = vlaneseq
    %v894 = vshrl.u32 %v893, 7
    %v895 = vsub.s32 %v829, %v894
    %v896 = vrot.slane %v822, %v895
    %v897 = vlaneseq
    %v898 = vshrl.u32 %v897, 7
    %v899 = vsub.s32 %v850, %v898
    %v900 = vrot.slane %v823, %v899
    %v901 = vsel %vm855, %v900, %v896
    %v902 = vlaneseq
    %v903 = vshrl.u32 %v902, 7
    %v904 = vsub.s32 %v829, %v903
    %v905 = vrot.slane %v824, %v904
    %v906 = vlaneseq
    %v907 = vshrl.u32 %v906, 7
    %v908 = vsub.s32 %v850, %v907
    %v909 = vrot.slane %v825, %v908
    %v910 = vsel %vm855, %v909, %v905
    %v911 = vlaneseq
    %v912 = vshrl.u32 %v911, 7
    %v913 = vsub.s32 %v829, %v912
    %v914 = vrot.slane %v826, %v913
    %v915 = vlaneseq
    %v916 = vshrl.u32 %v915, 7
    %v917 = vsub.s32 %v850, %v916
    %v918 = vrot.slane %v827, %v917
    %v919 = vsel %vm855, %v918, %v914
    %vm920 = vcmask 1041409
    %v921 = vsel %vm920, %v865, %v856
    %vm922 = vcmask 1042434
    %v923 = vsel %vm922, %v874, %v921
    %vm924 = vcmask 1043459
    %v925 = vsel %vm924, %v883, %v923
    %vm926 = vcmask 1044484
    %v927 = vsel %vm926, %v892, %v925
    %vm928 = vcmask 1045509
    %v929 = vsel %vm928, %v901, %v927
    %vm930 = vcmask 1046534
    %v931 = vsel %vm930, %v910, %v929
    %vm932 = vcmask 1047559
    %v933 = vsel %vm932, %v919, %v931
    %vm935 = vcmask 130048
    %v936 = vsel %vm935, %v933, -inf
    %937 = vmax.xlane.f32.xlu0 %v936
    %v938 = vpop.xlane.xlu0 %937
    %v940 = vlaneseq
    %v941 = vshrl.u32 %v940, 7
    %v942 = vsub.s32 0, %v941
    %v943 = vrot.slane %v938, %v942
    %v944 = vlaneseq
    %v945 = vshrl.u32 %v944, 7
    %v946 = vsub.s32 1, %v945
    %v947 = vrot.slane %v938, %v946
    %v948 = vlaneseq
    %v949 = vshrl.u32 %v948, 7
    %v950 = vsub.s32 2, %v949
    %v951 = vrot.slane %v938, %v950
    %v952 = vlaneseq
    %v953 = vshrl.u32 %v952, 7
    %v954 = vsub.s32 3, %v953
    %v955 = vrot.slane %v938, %v954
    %v956 = vlaneseq
    %v957 = vshrl.u32 %v956, 7
    %v958 = vsub.s32 4, %v957
    %v959 = vrot.slane %v938, %v958
    %v960 = vlaneseq
    %v961 = vshrl.u32 %v960, 7
    %v962 = vsub.s32 5, %v961
    %v963 = vrot.slane %v938, %v962
    %v964 = vlaneseq
    %v965 = vshrl.u32 %v964, 7
    %v966 = vsub.s32 6, %v965
    %v967 = vrot.slane %v938, %v966
    %v968 = vlaneseq
    %v969 = vshrl.u32 %v968, 7
    %v970 = vsub.s32 7, %v969
    %v971 = vrot.slane %v938, %v970
    %vm980 = vcmp.eq.f32.partialorder %v812, %v943
    %vm981 = vcmp.eq.f32.partialorder %v813, %v943
    %vm982 = vcmp.eq.f32.partialorder %v814, %v947
    %vm983 = vcmp.eq.f32.partialorder %v815, %v947
    %vm984 = vcmp.eq.f32.partialorder %v816, %v951
    %vm985 = vcmp.eq.f32.partialorder %v817, %v951
    %vm986 = vcmp.eq.f32.partialorder %v818, %v955
    %vm987 = vcmp.eq.f32.partialorder %v819, %v955
    %vm988 = vcmp.eq.f32.partialorder %v820, %v959
    %vm989 = vcmp.eq.f32.partialorder %v821, %v959
    %vm990 = vcmp.eq.f32.partialorder %v822, %v963
    %vm991 = vcmp.eq.f32.partialorder %v823, %v963
    %vm992 = vcmp.eq.f32.partialorder %v824, %v967
    %vm993 = vcmp.eq.f32.partialorder %v825, %v967
    %vm994 = vcmp.eq.f32.partialorder %v826, %v971
    %vm995 = vcmp.eq.f32.partialorder %v827, %v971
    %997 = vbcast.lane.b32.xlu0 %v829, 256
    %v998 = vpop.permute.xlu0 %997
    %s1000 = sor.u32 256, 8
    %1001 = vbcast.lane.b32.xlu0 %v829, %s1000
    %v1002 = vpop.permute.xlu0 %1001
    %v1003 = vsel %vm980, %v998, 16
    %v1004 = vsel %vm981, %v1002, 16
    %v1005 = vsel %vm982, %v998, 16
    %v1006 = vsel %vm983, %v1002, 16
    %v1007 = vsel %vm984, %v998, 16
    %v1008 = vsel %vm985, %v1002, 16
    %v1009 = vsel %vm986, %v998, 16
    %v1010 = vsel %vm987, %v1002, 16
    %v1011 = vsel %vm988, %v998, 16
    %v1012 = vsel %vm989, %v1002, 16
    %v1013 = vsel %vm990, %v998, 16
    %v1014 = vsel %vm991, %v1002, 16
    %v1015 = vsel %vm992, %v998, 16
    %v1016 = vsel %vm993, %v1002, 16
    %v1017 = vsel %vm994, %v998, 16
    %v1018 = vsel %vm995, %v1002, 16
    %1019 = vset.pattern.permute.xlu0 0
    %1020 = vperm.xlu0 %1019, %v1003
    %v1021 = vpop.permute.xlu0 %1020
    %1022 = vset.pattern.permute.xlu0 0
    %1023 = vperm.xlu0 %1022, %v1004
    %v1024 = vpop.permute.xlu0 %1023
    %1025 = vset.pattern.permute.xlu0 0
    %1026 = vperm.xlu0 %1025, %v1005
    %v1027 = vpop.permute.xlu0 %1026
    %1028 = vset.pattern.permute.xlu0 0
    %1029 = vperm.xlu0 %1028, %v1006
    %v1030 = vpop.permute.xlu0 %1029
    %1031 = vset.pattern.permute.xlu0 0
    %1032 = vperm.xlu0 %1031, %v1007
    %v1033 = vpop.permute.xlu0 %1032
    %1034 = vset.pattern.permute.xlu0 0
    %1035 = vperm.xlu0 %1034, %v1008
    %v1036 = vpop.permute.xlu0 %1035
    %1037 = vset.pattern.permute.xlu0 0
    %1038 = vperm.xlu0 %1037, %v1009
    %v1039 = vpop.permute.xlu0 %1038
    %1040 = vset.pattern.permute.xlu0 0
    %1041 = vperm.xlu0 %1040, %v1010
    %v1042 = vpop.permute.xlu0 %1041
    %1043 = vset.pattern.permute.xlu0 0
    %1044 = vperm.xlu0 %1043, %v1011
    %v1045 = vpop.permute.xlu0 %1044
    %1046 = vset.pattern.permute.xlu0 0
    %1047 = vperm.xlu0 %1046, %v1012
    %v1048 = vpop.permute.xlu0 %1047
    %1049 = vset.pattern.permute.xlu0 0
    %1050 = vperm.xlu0 %1049, %v1013
    %v1051 = vpop.permute.xlu0 %1050
    %1052 = vset.pattern.permute.xlu0 0
    %1053 = vperm.xlu0 %1052, %v1014
    %v1054 = vpop.permute.xlu0 %1053
    %1055 = vset.pattern.permute.xlu0 0
    %1056 = vperm.xlu0 %1055, %v1015
    %v1057 = vpop.permute.xlu0 %1056
    %1058 = vset.pattern.permute.xlu0 0
    %1059 = vperm.xlu0 %1058, %v1016
    %v1060 = vpop.permute.xlu0 %1059
    %1061 = vset.pattern.permute.xlu0 0
    %1062 = vperm.xlu0 %1061, %v1017
    %v1063 = vpop.permute.xlu0 %1062
    %1064 = vset.pattern.permute.xlu0 0
    %1065 = vperm.xlu0 %1064, %v1018
    %v1066 = vpop.permute.xlu0 %1065
    %v1067 = vlaneseq
    %v1068 = vshrl.u32 %v1067, 7
    %v1069 = vsub.s32 %v829, %v1068
    %v1070 = vrot.slane %v1021, %v1069
    %v1071 = vlaneseq
    %v1072 = vshrl.u32 %v1071, 7
    %v1073 = vsub.s32 %v850, %v1072
    %v1074 = vrot.slane %v1024, %v1073
    %v1075 = vsel %vm855, %v1074, %v1070
    %v1076 = vlaneseq
    %v1077 = vshrl.u32 %v1076, 7
    %v1078 = vsub.s32 %v829, %v1077
    %v1079 = vrot.slane %v1027, %v1078
    %v1080 = vlaneseq
    %v1081 = vshrl.u32 %v1080, 7
    %v1082 = vsub.s32 %v850, %v1081
    %v1083 = vrot.slane %v1030, %v1082
    %v1084 = vsel %vm855, %v1083, %v1079
    %v1085 = vlaneseq
    %v1086 = vshrl.u32 %v1085, 7
    %v1087 = vsub.s32 %v829, %v1086
    %v1088 = vrot.slane %v1033, %v1087
    %v1089 = vlaneseq
    %v1090 = vshrl.u32 %v1089, 7
    %v1091 = vsub.s32 %v850, %v1090
    %v1092 = vrot.slane %v1036, %v1091
    %v1093 = vsel %vm855, %v1092, %v1088
    %v1094 = vlaneseq
    %v1095 = vshrl.u32 %v1094, 7
    %v1096 = vsub.s32 %v829, %v1095
    %v1097 = vrot.slane %v1039, %v1096
    %v1098 = vlaneseq
    %v1099 = vshrl.u32 %v1098, 7
    %v1100 = vsub.s32 %v850, %v1099
    %v1101 = vrot.slane %v1042, %v1100
    %v1102 = vsel %vm855, %v1101, %v1097
    %v1103 = vlaneseq
    %v1104 = vshrl.u32 %v1103, 7
    %v1105 = vsub.s32 %v829, %v1104
    %v1106 = vrot.slane %v1045, %v1105
    %v1107 = vlaneseq
    %v1108 = vshrl.u32 %v1107, 7
    %v1109 = vsub.s32 %v850, %v1108
    %v1110 = vrot.slane %v1048, %v1109
    %v1111 = vsel %vm855, %v1110, %v1106
    %v1112 = vlaneseq
    %v1113 = vshrl.u32 %v1112, 7
    %v1114 = vsub.s32 %v829, %v1113
    %v1115 = vrot.slane %v1051, %v1114
    %v1116 = vlaneseq
    %v1117 = vshrl.u32 %v1116, 7
    %v1118 = vsub.s32 %v850, %v1117
    %v1119 = vrot.slane %v1054, %v1118
    %v1120 = vsel %vm855, %v1119, %v1115
    %v1121 = vlaneseq
    %v1122 = vshrl.u32 %v1121, 7
    %v1123 = vsub.s32 %v829, %v1122
    %v1124 = vrot.slane %v1057, %v1123
    %v1125 = vlaneseq
    %v1126 = vshrl.u32 %v1125, 7
    %v1127 = vsub.s32 %v850, %v1126
    %v1128 = vrot.slane %v1060, %v1127
    %v1129 = vsel %vm855, %v1128, %v1124
    %v1130 = vlaneseq
    %v1131 = vshrl.u32 %v1130, 7
    %v1132 = vsub.s32 %v829, %v1131
    %v1133 = vrot.slane %v1063, %v1132
    %v1134 = vlaneseq
    %v1135 = vshrl.u32 %v1134, 7
    %v1136 = vsub.s32 %v850, %v1135
    %v1137 = vrot.slane %v1066, %v1136
    %v1138 = vsel %vm855, %v1137, %v1133
    %v1139 = vsel %vm920, %v1084, %v1075
    %v1140 = vsel %vm922, %v1093, %v1139
    %v1141 = vsel %vm924, %v1102, %v1140
    %v1142 = vsel %vm926, %v1111, %v1141
    %v1143 = vsel %vm928, %v1120, %v1142
    %v1144 = vsel %vm930, %v1129, %v1143
    %v1145 = vsel %vm932, %v1138, %v1144
    %v1146 = vsel %vm935, %v1145, 2147483647
    %v1147 = vand.u32 %v1146, 65535
    %v1148 = vshra.s32 %v1146, 16
    %v1149 = vcvt.s32.f32 %v1147
    %v1150 = vcvt.s32.f32 %v1148
    %1151 = vmin.xlane.f32.xlu0 %v1150
    %v1152 = vpop.xlane.xlu0 %1151
    %vm1153 = vcmp.eq.f32.partialorder %v1150, %v1152
    %v1154 = vsel %vm1153, %v1149, inf
    %1155 = vmin.xlane.f32.xlu0 %v1154
    %v1156 = vpop.xlane.xlu0 %1155
    %v1157 = vcvt.f32.s32 %v1156
    %v1158 = vcvt.f32.s32 %v1152
    %v1159 = vshll.u32 %v1158, 16
    %v1160 = vadd.s32 %v1159, %v1157
    %vm1161 = vcmp.eq.s32.totalorder %v829, %v1160
    %v1162 = vsel %vm1161, 1, 0
    %v1163 = vcvt.s32.f32 %v1162
    %v1164 = vld [vmem:[#allocation2 + $0x1e8] sm:$0xff]
    %v1165 = vld [vmem:[#allocation2 + $0x1f0] sm:$0xff]
    %v1167 = vsel %vm935, %v1163, 0
    %1169 = vmatprep.subr.mxu0 0.0
    %1170 = vmatpush1.msra.mxu0 %v1164
    %1171 = vmatprep.subr.mxu0 0.0
    %1172 = vmatpush1.msra.mxu0 %v1165
    %1173 = vmatprep.subr.mxu0 0.0
    %1174 = vmatpush1.msra.mxu0 0.0
    %1175 = vmatprep.subr.mxu0 0.0
    %1176 = vmatpush1.msra.mxu0 0.0
    %1177 = vmatprep.subr.mxu0 0.0
    %1178 = vmatpush1.msra.mxu0 0.0
    %1179 = vmatprep.subr.mxu0 0.0
    %1180 = vmatpush1.msra.mxu0 0.0
    %1181 = vmatprep.subr.mxu0 0.0
    %1182 = vmatpush1.msra.mxu0 0.0
    %1183 = vmatprep.subr.mxu0 0.0
    %1184 = vmatpush1.msra.mxu0 0.0
    %1185 = vmatprep.subr.mxu0 0.0
    %1186 = vmatpush1.msra.mxu0 0.0
    %1187 = vmatprep.subr.mxu0 0.0
    %1188 = vmatpush1.msra.mxu0 0.0
    %1189 = vmatprep.subr.mxu0 0.0
    %1190 = vmatpush1.msra.mxu0 0.0
    %1191 = vmatprep.subr.mxu0 0.0
    %1192 = vmatpush1.msra.mxu0 0.0
    %1193 = vmatprep.subr.mxu0 0.0
    %1194 = vmatpush1.msra.mxu0 0.0
    %1195 = vmatprep.subr.mxu0 0.0
    %1196 = vmatpush1.msra.mxu0 0.0
    %1197 = vmatprep.subr.mxu0 0.0
    %1198 = vmatpush1.msra.mxu0 0.0
    %1199 = vmatprep.subr.mxu0 0.0
    %1200 = vmatpush1.msra.mxu0 0.0
    %1201 = vmatprep.subr.mxu0 0.0
    %1202 = vmatpush1.msra.mxu0 0.0
    %1203 = vmatprep.subr.mxu0 0.0
    %1204 = vmatpush1.msra.mxu0 0.0
    %1205 = vmatprep.subr.mxu0 0.0
    %1206 = vmatpush1.msra.mxu0 0.0
    %1207 = vmatprep.subr.mxu0 0.0
    %1208 = vmatpush1.msra.mxu0 0.0
    %1209 = vmatprep.subr.mxu0 0.0
    %1210 = vmatpush1.msra.mxu0 0.0
    %1211 = vmatprep.subr.mxu0 0.0
    %1212 = vmatpush1.msra.mxu0 0.0
    %1213 = vmatprep.subr.mxu0 0.0
    %1214 = vmatpush1.msra.mxu0 0.0
    %1215 = vmatprep.subr.mxu0 0.0
    %1216 = vmatpush1.msra.mxu0 0.0
    %1217 = vmatprep.subr.mxu0 0.0
    %1218 = vmatpush1.msra.mxu0 0.0
    %1219 = vmatprep.subr.mxu0 0.0
    %1220 = vmatpush1.msra.mxu0 0.0
    %1221 = vmatprep.subr.mxu0 0.0
    %1222 = vmatpush1.msra.mxu0 0.0
    %1223 = vmatprep.subr.mxu0 0.0
    %1224 = vmatpush1.msra.mxu0 0.0
    %1225 = vmatprep.subr.mxu0 0.0
    %1226 = vmatpush1.msra.mxu0 0.0
    %1227 = vmatprep.subr.mxu0 0.0
    %1228 = vmatpush1.msra.mxu0 0.0
    %1229 = vmatprep.subr.mxu0 0.0
    %1230 = vmatpush1.msra.mxu0 0.0
    %1231 = vmatprep.subr.mxu0 0.0
    %1232 = vmatpush1.msra.mxu0 0.0
    %1233 = vmatprep.mubr.f32.mxu0 0.0
    %1234 = vmatmul.mubr.f32.gmra.mrb[0].mxu0 %v1167
    %v1235 = vpop.f32.mrb[0].mxu0
    %v1236 = vadd.f32 0.0, %v1235
    %v1237 = vpop.f32.mrb[0].mxu0
    %1238 = vdwg.mxu0
    %v1239 = vxor.u32 %v938, 2147483648
    %v1240 = vmul.f32 %v1239, 1.442695
    %v1241 = vpow.pop %v1240
    %v1242 = vadd.f32 %v1241, 1.0
    %v1243 = vrcp.pop %v1242
    %v1244 = vmul.f32 1.0, %v1243
    %v1245 = vmul.f32 %v1236, %v1244
    %v1246 = vld [vmem:[#allocation2 + $0xa0] sm:$0xff]
    %v1247 = vld [vmem:[#allocation2 + $0xa8] sm:$0xff]
    %v1248 = vld [vmem:[#allocation2 + $0xb0] sm:$0xff]
    %v1249 = vld [vmem:[#allocation2 + $0xb8] sm:$0xff]
    %v1250 = vld [vmem:[#allocation2 + $0x230] sm:$0x1]
    %v1251 = vlaneseq
    %v1252 = vshrl.u32 %v1251, 7
    %v1253 = vsub.s32 0, %v1252
    %v1254 = vrot.slane %v1250, %v1253
    %v1256 = vsel %vm48, %v1245, 0
    %1258 = vmatprep.subr.mxu0 0.0
    %1259 = vmatpush1.msra.mxu0 %v1246
    %1260 = vmatprep.subr.mxu0 0.0
    %1261 = vmatpush1.msra.mxu0 %v1247
    %1262 = vmatprep.subr.mxu0 0.0
    %1263 = vmatpush1.msra.mxu0 %v1248
    %1264 = vmatprep.subr.mxu0 0.0
    %1265 = vmatpush1.msra.mxu0 %v1249
    %1266 = vmatprep.subr.mxu0 0.0
    %1267 = vmatpush1.msra.mxu0 0.0
    %1268 = vmatprep.subr.mxu0 0.0
    %1269 = vmatpush1.msra.mxu0 0.0
    %1270 = vmatprep.subr.mxu0 0.0
    %1271 = vmatpush1.msra.mxu0 0.0
    %1272 = vmatprep.subr.mxu0 0.0
    %1273 = vmatpush1.msra.mxu0 0.0
    %1274 = vmatprep.subr.mxu0 0.0
    %1275 = vmatpush1.msra.mxu0 0.0
    %1276 = vmatprep.subr.mxu0 0.0
    %1277 = vmatpush1.msra.mxu0 0.0
    %1278 = vmatprep.subr.mxu0 0.0
    %1279 = vmatpush1.msra.mxu0 0.0
    %1280 = vmatprep.subr.mxu0 0.0
    %1281 = vmatpush1.msra.mxu0 0.0
    %1282 = vmatprep.subr.mxu0 0.0
    %1283 = vmatpush1.msra.mxu0 0.0
    %1284 = vmatprep.subr.mxu0 0.0
    %1285 = vmatpush1.msra.mxu0 0.0
    %1286 = vmatprep.subr.mxu0 0.0
    %1287 = vmatpush1.msra.mxu0 0.0
    %1288 = vmatprep.subr.mxu0 0.0
    %1289 = vmatpush1.msra.mxu0 0.0
    %1290 = vmatprep.subr.mxu0 0.0
    %1291 = vmatpush1.msra.mxu0 0.0
    %1292 = vmatprep.subr.mxu0 0.0
    %1293 = vmatpush1.msra.mxu0 0.0
    %1294 = vmatprep.subr.mxu0 0.0
    %1295 = vmatpush1.msra.mxu0 0.0
    %1296 = vmatprep.subr.mxu0 0.0
    %1297 = vmatpush1.msra.mxu0 0.0
    %1298 = vmatprep.subr.mxu0 0.0
    %1299 = vmatpush1.msra.mxu0 0.0
    %1300 = vmatprep.subr.mxu0 0.0
    %1301 = vmatpush1.msra.mxu0 0.0
    %1302 = vmatprep.subr.mxu0 0.0
    %1303 = vmatpush1.msra.mxu0 0.0
    %1304 = vmatprep.subr.mxu0 0.0
    %1305 = vmatpush1.msra.mxu0 0.0
    %1306 = vmatprep.subr.mxu0 0.0
    %1307 = vmatpush1.msra.mxu0 0.0
    %1308 = vmatprep.subr.mxu0 0.0
    %1309 = vmatpush1.msra.mxu0 0.0
    %1310 = vmatprep.subr.mxu0 0.0
    %1311 = vmatpush1.msra.mxu0 0.0
    %1312 = vmatprep.subr.mxu0 0.0
    %1313 = vmatpush1.msra.mxu0 0.0
    %1314 = vmatprep.subr.mxu0 0.0
    %1315 = vmatpush1.msra.mxu0 0.0
    %1316 = vmatprep.subr.mxu0 0.0
    %1317 = vmatpush1.msra.mxu0 0.0
    %1318 = vmatprep.subr.mxu0 0.0
    %1319 = vmatpush1.msra.mxu0 0.0
    %1320 = vmatprep.subr.mxu0 0.0
    %1321 = vmatpush1.msra.mxu0 0.0
    %1322 = vmatprep.mubr.f32.mxu0 0.0
    %1323 = vmatmul.mubr.f32.gmra.mrb[0].mxu0 %v1256
    %v1324 = vpop.f32.mrb[0].mxu0
    %v1325 = vadd.f32 %v1254, %v1324
    %v1326 = vpop.f32.mrb[0].mxu0
    %1327 = vdwg.mxu0
    %v1328 = vmul.f32 %v1325, %v1325
    %v1329 = vmul.f32 %v1325, %v1328
    %v1330 = vmul.f32 %v1329, 0.044715
    %v1331 = vadd.f32 %v1325, %v1330
    %v1332 = vmul.f32 %v1331, 0.7978846
    %v1333 = vtanh.pop %v1332
    %v1334 = vadd.f32 %v1333, 1.0
    %v1335 = vmul.f32 %v1334, 0.5
    %v1336 = vmul.f32 %v1325, %v1335
    %v1337 = vld [vmem:[#allocation2 + $0xc0] sm:$0xff]
    %v1338 = vld [vmem:[#allocation2 + $0xc8] sm:$0xff]
    %v1339 = vld [vmem:[#allocation2 + $0xd0] sm:$0xff]
    %v1340 = vld [vmem:[#allocation2 + $0xd8] sm:$0xff]
    %v1341 = vld [vmem:[#allocation2 + $0x238] sm:$0x1]
    %v1342 = vlaneseq
    %v1343 = vshrl.u32 %v1342, 7
    %v1344 = vsub.s32 0, %v1343
    %v1345 = vrot.slane %v1341, %v1344
    %v1347 = vsel %vm48, %v1336, 0
    %1349 = vmatprep.subr.mxu0 0.0
    %1350 = vmatpush1.msra.mxu0 %v1337
    %1351 = vmatprep.subr.mxu0 0.0
    %1352 = vmatpush1.msra.mxu0 %v1338
    %1353 = vmatprep.subr.mxu0 0.0
    %1354 = vmatpush1.msra.mxu0 %v1339
    %1355 = vmatprep.subr.mxu0 0.0
    %1356 = vmatpush1.msra.mxu0 %v1340
    %1357 = vmatprep.subr.mxu0 0.0
    %1358 = vmatpush1.msra.mxu0 0.0
    %1359 = vmatprep.subr.mxu0 0.0
    %1360 = vmatpush1.msra.mxu0 0.0
    %1361 = vmatprep.subr.mxu0 0.0
    %1362 = vmatpush1.msra.mxu0 0.0
    %1363 = vmatprep.subr.mxu0 0.0
    %1364 = vmatpush1.msra.mxu0 0.0
    %1365 = vmatprep.subr.mxu0 0.0
    %1366 = vmatpush1.msra.mxu0 0.0
    %1367 = vmatprep.subr.mxu0 0.0
    %1368 = vmatpush1.msra.mxu0 0.0
    %1369 = vmatprep.subr.mxu0 0.0
    %1370 = vmatpush1.msra.mxu0 0.0
    %1371 = vmatprep.subr.mxu0 0.0
    %1372 = vmatpush1.msra.mxu0 0.0
    %1373 = vmatprep.subr.mxu0 0.0
    %1374 = vmatpush1.msra.mxu0 0.0
    %1375 = vmatprep.subr.mxu0 0.0
    %1376 = vmatpush1.msra.mxu0 0.0
    %1377 = vmatprep.subr.mxu0 0.0
    %1378 = vmatpush1.msra.mxu0 0.0
    %1379 = vmatprep.subr.mxu0 0.0
    %1380 = vmatpush1.msra.mxu0 0.0
    %1381 = vmatprep.subr.mxu0 0.0
    %1382 = vmatpush1.msra.mxu0 0.0
    %1383 = vmatprep.subr.mxu0 0.0
    %1384 = vmatpush1.msra.mxu0 0.0
    %1385 = vmatprep.subr.mxu0 0.0
    %1386 = vmatpush1.msra.mxu0 0.0
    %1387 = vmatprep.subr.mxu0 0.0
    %1388 = vmatpush1.msra.mxu0 0.0
    %1389 = vmatprep.subr.mxu0 0.0
    %1390 = vmatpush1.msra.mxu0 0.0
    %1391 = vmatprep.subr.mxu0 0.0
    %1392 = vmatpush1.msra.mxu0 0.0
    %1393 = vmatprep.subr.mxu0 0.0
    %1394 = vmatpush1.msra.mxu0 0.0
    %1395 = vmatprep.subr.mxu0 0.0
    %1396 = vmatpush1.msra.mxu0 0.0
    %1397 = vmatprep.subr.mxu0 0.0
    %1398 = vmatpush1.msra.mxu0 0.0
    %1399 = vmatprep.subr.mxu0 0.0
    %1400 = vmatpush1.msra.mxu0 0.0
    %1401 = vmatprep.subr.mxu0 0.0
    %1402 = vmatpush1.msra.mxu0 0.0
    %1403 = vmatprep.subr.mxu0 0.0
    %1404 = vmatpush1.msra.mxu0 0.0
    %1405 = vmatprep.subr.mxu0 0.0
    %1406 = vmatpush1.msra.mxu0 0.0
    %1407 = vmatprep.subr.mxu0 0.0
    %1408 = vmatpush1.msra.mxu0 0.0
    %1409 = vmatprep.subr.mxu0 0.0
    %1410 = vmatpush1.msra.mxu0 0.0
    %1411 = vmatprep.subr.mxu0 0.0
    %1412 = vmatpush1.msra.mxu0 0.0
    %1413 = vmatprep.mubr.f32.mxu0 0.0
    %1414 = vmatmul.mubr.f32.gmra.mrb[0].mxu0 %v1347
    %v1415 = vpop.f32.mrb[0].mxu0
    %v1416 = vadd.f32 %v1345, %v1415
    %v1417 = vpop.f32.mrb[0].mxu0
    %1418 = vdwg.mxu0
    %v1419 = vld [vmem:[#allocation2 + $0x40] sm:$0xff]
    %v1420 = vld [vmem:[#allocation2 + $0x48] sm:$0xff]
    %v1421 = vld [vmem:[#allocation2 + $0x50] sm:$0xff]
    %v1422 = vld [vmem:[#allocation2 + $0x58] sm:$0xff]
    %v1423 = vld [vmem:[#allocation2 + $0x208] sm:$0x1]
    %v1424 = vlaneseq
    %v1425 = vshrl.u32 %v1424, 7
    %v1426 = vsub.s32 0, %v1425
    %v1427 = vrot.slane %v1423, %v1426
    %v1429 = vsel %vm48, %v1416, 0
    %1431 = vmatprep.subr.mxu0 0.0
    %1432 = vmatpush1.msra.mxu0 %v1419
    %1433 = vmatprep.subr.mxu0 0.0
    %1434 = vmatpush1.msra.mxu0 %v1420
    %1435 = vmatprep.subr.mxu0 0.0
    %1436 = vmatpush1.msra.mxu0 %v1421
    %1437 = vmatprep.subr.mxu0 0.0
    %1438 = vmatpush1.msra.mxu0 %v1422
    %1439 = vmatprep.subr.mxu0 0.0
    %1440 = vmatpush1.msra.mxu0 0.0
    %1441 = vmatprep.subr.mxu0 0.0
    %1442 = vmatpush1.msra.mxu0 0.0
    %1443 = vmatprep.subr.mxu0 0.0
    %1444 = vmatpush1.msra.mxu0 0.0
    %1445 = vmatprep.subr.mxu0 0.0
    %1446 = vmatpush1.msra.mxu0 0.0
    %1447 = vmatprep.subr.mxu0 0.0
    %1448 = vmatpush1.msra.mxu0 0.0
    %1449 = vmatprep.subr.mxu0 0.0
    %1450 = vmatpush1.msra.mxu0 0.0
    %1451 = vmatprep.subr.mxu0 0.0
    %1452 = vmatpush1.msra.mxu0 0.0
    %1453 = vmatprep.subr.mxu0 0.0
    %1454 = vmatpush1.msra.mxu0 0.0
    %1455 = vmatprep.subr.mxu0 0.0
    %1456 = vmatpush1.msra.mxu0 0.0
    %1457 = vmatprep.subr.mxu0 0.0
    %1458 = vmatpush1.msra.mxu0 0.0
    %1459 = vmatprep.subr.mxu0 0.0
    %1460 = vmatpush1.msra.mxu0 0.0
    %1461 = vmatprep.subr.mxu0 0.0
    %1462 = vmatpush1.msra.mxu0 0.0
    %1463 = vmatprep.subr.mxu0 0.0
    %1464 = vmatpush1.msra.mxu0 0.0
    %1465 = vmatprep.subr.mxu0 0.0
    %1466 = vmatpush1.msra.mxu0 0.0
    %1467 = vmatprep.subr.mxu0 0.0
    %1468 = vmatpush1.msra.mxu0 0.0
    %1469 = vmatprep.subr.mxu0 0.0
    %1470 = vmatpush1.msra.mxu0 0.0
    %1471 = vmatprep.subr.mxu0 0.0
    %1472 = vmatpush1.msra.mxu0 0.0
    %1473 = vmatprep.subr.mxu0 0.0
    %1474 = vmatpush1.msra.mxu0 0.0
    %1475 = vmatprep.subr.mxu0 0.0
    %1476 = vmatpush1.msra.mxu0 0.0
    %1477 = vmatprep.subr.mxu0 0.0
    %1478 = vmatpush1.msra.mxu0 0.0
    %1479 = vmatprep.subr.mxu0 0.0
    %1480 = vmatpush1.msra.mxu0 0.0
    %1481 = vmatprep.subr.mxu0 0.0
    %1482 = vmatpush1.msra.mxu0 0.0
    %1483 = vmatprep.subr.mxu0 0.0
    %1484 = vmatpush1.msra.mxu0 0.0
    %1485 = vmatprep.subr.mxu0 0.0
    %1486 = vmatpush1.msra.mxu0 0.0
    %1487 = vmatprep.subr.mxu0 0.0
    %1488 = vmatpush1.msra.mxu0 0.0
    %1489 = vmatprep.subr.mxu0 0.0
    %1490 = vmatpush1.msra.mxu0 0.0
    %1491 = vmatprep.subr.mxu0 0.0
    %1492 = vmatpush1.msra.mxu0 0.0
    %1493 = vmatprep.subr.mxu0 0.0
    %1494 = vmatpush1.msra.mxu0 0.0
    %1495 = vmatprep.mubr.f32.mxu0 0.0
    %1496 = vmatmul.mubr.f32.gmra.mrb[0].mxu0 %v1429
    %v1497 = vpop.f32.mrb[0].mxu0
    %v1498 = vadd.f32 %v1427, %v1497
    %v1499 = vpop.f32.mrb[0].mxu0
    %1500 = vdwg.mxu0
    %1501 = vrot.lane.b32.xlu0 %v294, 96
    %v1502 = vpop.permute.xlu0 %1501
    %v1504 = vmul.f32 %v294, %v1502
    %1506 = vrot.lane.b32.xlu0 %v1498, 32
    %v1507 = vpop.permute.xlu0 %1506
    %v1509 = vmul.f32 %v294, %v1507
    %v1510 = vmul.f32 %v294, %v119
    %v1511 = vld [vmem:[#allocation2 + $0x1c0] sm:$0xff]
    %v1512 = vld [vmem:[#allocation2 + $0x1c8] sm:$0xff]
    %v1513 = vld [vmem:[#allocation2 + $0x1d0] sm:$0xff]
    %v1514 = vld [vmem:[#allocation2 + $0x1d8] sm:$0xff]
    %1518 = vrot.lane.b32.xlu0 %v1504, 96
    %v1519 = vpop.permute.xlu0 %1518
    %1520 = vrot.lane.b32.xlu0 %v1509, 96
    %v1521 = vpop.permute.xlu0 %1520
    %1522 = vrot.lane.b32.xlu0 %v1510, 96
    %v1523 = vpop.permute.xlu0 %1522
    %v1524 = vsel %vm48, %v1519, 0
    %v1526 = vsel %vm48, %v1521, 0
    %v1528 = vsel %vm48, %v1523, 0
    %1530 = vmatprep.subr.mxu0 0.0
    %1531 = vmatpush1.msra.mxu0 %v1511
    %1532 = vmatprep.subr.mxu0 0.0
    %1533 = vmatpush1.msra.mxu0 %v1512
    %1534 = vmatprep.subr.mxu0 0.0
    %1535 = vmatpush1.msra.mxu0 %v1513
    %1536 = vmatprep.subr.mxu0 0.0
    %1537 = vmatpush1.msra.mxu0 %v1514
    %1538 = vmatprep.subr.mxu0 0.0
    %1539 = vmatpush1.msra.mxu0 0.0
    %1540 = vmatprep.subr.mxu0 0.0
    %1541 = vmatpush1.msra.mxu0 0.0
    %1542 = vmatprep.subr.mxu0 0.0
    %1543 = vmatpush1.msra.mxu0 0.0
    %1544 = vmatprep.subr.mxu0 0.0
    %1545 = vmatpush1.msra.mxu0 0.0
    %1546 = vmatprep.subr.mxu0 0.0
    %1547 = vmatpush1.msra.mxu0 0.0
    %1548 = vmatprep.subr.mxu0 0.0
    %1549 = vmatpush1.msra.mxu0 0.0
    %1550 = vmatprep.subr.mxu0 0.0
    %1551 = vmatpush1.msra.mxu0 0.0
    %1552 = vmatprep.subr.mxu0 0.0
    %1553 = vmatpush1.msra.mxu0 0.0
    %1554 = vmatprep.subr.mxu0 0.0
    %1555 = vmatpush1.msra.mxu0 0.0
    %1556 = vmatprep.subr.mxu0 0.0
    %1557 = vmatpush1.msra.mxu0 0.0
    %1558 = vmatprep.subr.mxu0 0.0
    %1559 = vmatpush1.msra.mxu0 0.0
    %1560 = vmatprep.subr.mxu0 0.0
    %1561 = vmatpush1.msra.mxu0 0.0
    %1562 = vmatprep.subr.mxu0 0.0
    %1563 = vmatpush1.msra.mxu0 0.0
    %1564 = vmatprep.subr.mxu0 0.0
    %1565 = vmatpush1.msra.mxu0 0.0
    %1566 = vmatprep.subr.mxu0 0.0
    %1567 = vmatpush1.msra.mxu0 0.0
    %1568 = vmatprep.subr.mxu0 0.0
    %1569 = vmatpush1.msra.mxu0 0.0
    %1570 = vmatprep.subr.mxu0 0.0
    %1571 = vmatpush1.msra.mxu0 0.0
    %1572 = vmatprep.subr.mxu0 0.0
    %1573 = vmatpush1.msra.mxu0 0.0
    %1574 = vmatprep.subr.mxu0 0.0
    %1575 = vmatpush1.msra.mxu0 0.0
    %1576 = vmatprep.subr.mxu0 0.0
    %1577 = vmatpush1.msra.mxu0 0.0
    %1578 = vmatprep.subr.mxu0 0.0
    %1579 = vmatpush1.msra.mxu0 0.0
    %1580 = vmatprep.subr.mxu0 0.0
    %1581 = vmatpush1.msra.mxu0 0.0
    %1582 = vmatprep.subr.mxu0 0.0
    %1583 = vmatpush1.msra.mxu0 0.0
    %1584 = vmatprep.subr.mxu0 0.0
    %1585 = vmatpush1.msra.mxu0 0.0
    %1586 = vmatprep.subr.mxu0 0.0
    %1587 = vmatpush1.msra.mxu0 0.0
    %1588 = vmatprep.subr.mxu0 0.0
    %1589 = vmatpush1.msra.mxu0 0.0
    %1590 = vmatprep.subr.mxu0 0.0
    %1591 = vmatpush1.msra.mxu0 0.0
    %1592 = vmatprep.subr.mxu0 0.0
    %1593 = vmatpush1.msra.mxu0 0.0
    %1594 = vmatprep.mubr.f32.mxu0 0.0
    %1595 = vmatmul.mubr.f32.gmra.mrb[0].mxu0 %v1524
    %v1596 = vpop.f32.mrb[0].mxu0
    %v1597 = vadd.f32 0.0, %v1596
    %v1598 = vpop.f32.mrb[0].mxu0
    %1599 = vmatprep.mubr.f32.mxu0 0.0
    %1600 = vmatmul.mubr.f32.gmra.mrb[0].mxu0 %v1526
    %v1601 = vpop.f32.mrb[0].mxu0
    %v1602 = vadd.f32 0.0, %v1601
    %v1603 = vpop.f32.mrb[0].mxu0
    %1604 = vmatprep.mubr.f32.mxu0 0.0
    %1605 = vmatmul.mubr.f32.gmra.mrb[0].mxu0 %v1528
    %v1606 = vpop.f32.mrb[0].mxu0
    %v1607 = vadd.f32 0.0, %v1606
    %v1608 = vpop.f32.mrb[0].mxu0
    %1609 = vdwg.mxu0
    %v1610 = vmul.f32 %v1597, 0.35355338
    %v1611 = vmul.f32 %v1602, 0.35355338
    %v1612 = vmul.f32 %v1607, 0.35355338
    %v1613 = vmax.f32 %v1610, %v1611
    %v1614 = vmax.f32 %v1613, %v1612
    %v1615 = vsub.f32 %v1610, %v1614
    %v1616 = vmul.f32 %v1615, 1.442695
    %v1617 = vpow.pop %v1616
    %v1618 = vsub.f32 %v1611, %v1614
    %v1619 = vmul.f32 %v1618, 1.442695
    %v1620 = vpow.pop %v1619
    %v1621 = vsub.f32 %v1612, %v1614
    %v1622 = vmul.f32 %v1621, 1.442695
    %v1623 = vpow.pop %v1622
    %v1624 = vadd.f32 %v1617, %v1620
    %v1625 = vadd.f32 %v1624, %v1623
    %v1626 = vrcp.pop %v1625
    %v1627 = vld [vmem:[#allocation2 + $0x1e0] sm:$0xf]
    %vm1628 = vcmask 31744
    %v1630 = vsel %vm1628, %v1617, 0
    %v1633 = vsel %vm1628, %v1620, 0
    %v1636 = vsel %vm1628, %v1623, 0
    %v1639 = vsel %vm1628, %v1626, 0
    %vm1641 = vcmask 1043456
    %v1643 = vsel %vm1641, %v1627, 0
    %1645 = vmatprep.subr.mxu0 0.0
    %1646 = vmatpush1.msra.mxu0 %v1643
    %1647 = vmatprep.subr.mxu0 0.0
    %1648 = vmatpush1.msra.mxu0 0.0
    %1649 = vmatprep.subr.mxu0 0.0
    %1650 = vmatpush1.msra.mxu0 0.0
    %1651 = vmatprep.subr.mxu0 0.0
    %1652 = vmatpush1.msra.mxu0 0.0
    %1653 = vmatprep.subr.mxu0 0.0
    %1654 = vmatpush1.msra.mxu0 0.0
    %1655 = vmatprep.subr.mxu0 0.0
    %1656 = vmatpush1.msra.mxu0 0.0
    %1657 = vmatprep.subr.mxu0 0.0
    %1658 = vmatpush1.msra.mxu0 0.0
    %1659 = vmatprep.subr.mxu0 0.0
    %1660 = vmatpush1.msra.mxu0 0.0
    %1661 = vmatprep.subr.mxu0 0.0
    %1662 = vmatpush1.msra.mxu0 0.0
    %1663 = vmatprep.subr.mxu0 0.0
    %1664 = vmatpush1.msra.mxu0 0.0
    %1665 = vmatprep.subr.mxu0 0.0
    %1666 = vmatpush1.msra.mxu0 0.0
    %1667 = vmatprep.subr.mxu0 0.0
    %1668 = vmatpush1.msra.mxu0 0.0
    %1669 = vmatprep.subr.mxu0 0.0
    %1670 = vmatpush1.msra.mxu0 0.0
    %1671 = vmatprep.subr.mxu0 0.0
    %1672 = vmatpush1.msra.mxu0 0.0
    %1673 = vmatprep.subr.mxu0 0.0
    %1674 = vmatpush1.msra.mxu0 0.0
    %1675 = vmatprep.subr.mxu0 0.0
    %1676 = vmatpush1.msra.mxu0 0.0
    %1677 = vmatprep.subr.mxu0 0.0
    %1678 = vmatpush1.msra.mxu0 0.0
    %1679 = vmatprep.subr.mxu0 0.0
    %1680 = vmatpush1.msra.mxu0 0.0
    %1681 = vmatprep.subr.mxu0 0.0
    %1682 = vmatpush1.msra.mxu0 0.0
    %1683 = vmatprep.subr.mxu0 0.0
    %1684 = vmatpush1.msra.mxu0 0.0
    %1685 = vmatprep.subr.mxu0 0.0
    %1686 = vmatpush1.msra.mxu0 0.0
    %1687 = vmatprep.subr.mxu0 0.0
    %1688 = vmatpush1.msra.mxu0 0.0
    %1689 = vmatprep.subr.mxu0 0.0
    %1690 = vmatpush1.msra.mxu0 0.0
    %1691 = vmatprep.subr.mxu0 0.0
    %1692 = vmatpush1.msra.mxu0 0.0
    %1693 = vmatprep.subr.mxu0 0.0
    %1694 = vmatpush1.msra.mxu0 0.0
    %1695 = vmatprep.subr.mxu0 0.0
    %1696 = vmatpush1.msra.mxu0 0.0
    %1697 = vmatprep.subr.mxu0 0.0
    %1698 = vmatpush1.msra.mxu0 0.0
    %1699 = vmatprep.subr.mxu0 0.0
    %1700 = vmatpush1.msra.mxu0 0.0
    %1701 = vmatprep.subr.mxu0 0.0
    %1702 = vmatpush1.msra.mxu0 0.0
    %1703 = vmatprep.subr.mxu0 0.0
    %1704 = vmatpush1.msra.mxu0 0.0
    %1705 = vmatprep.subr.mxu0 0.0
    %1706 = vmatpush1.msra.mxu0 0.0
    %1707 = vmatprep.subr.mxu0 0.0
    %1708 = vmatpush1.msra.mxu0 0.0
    %1709 = vmatprep.mubr.f32.mxu0 0.0
    %1710 = vmatmul.mubr.f32.gmra.mrb[0].mxu0 %v1630
    %v1711 = vpop.f32.mrb[0].mxu0
    %v1712 = vadd.f32 0.0, %v1711
    %v1713 = vpop.f32.mrb[0].mxu0
    %1714 = vmatprep.mubr.f32.mxu0 0.0
    %1715 = vmatmul.mubr.f32.gmra.mrb[0].mxu0 %v1633
    %v1716 = vpop.f32.mrb[0].mxu0
    %v1717 = vadd.f32 0.0, %v1716
    %v1718 = vpop.f32.mrb[0].mxu0
    %1719 = vmatprep.mubr.f32.mxu0 0.0
    %1720 = vmatmul.mubr.f32.gmra.mrb[0].mxu0 %v1636
    %v1721 = vpop.f32.mrb[0].mxu0
    %v1722 = vadd.f32 0.0, %v1721
    %v1723 = vpop.f32.mrb[0].mxu0
    %1724 = vmatprep.mubr.f32.mxu0 0.0
    %1725 = vmatmul.mubr.f32.gmra.mrb[0].mxu0 %v1639
    %v1726 = vpop.f32.mrb[0].mxu0
    %v1727 = vadd.f32 0.0, %v1726
    %v1728 = vpop.f32.mrb[0].mxu0
    %1729 = vdwg.mxu0
    %1730 = vrot.lane.b32.xlu0 %v294, 32
    %v1731 = vpop.permute.xlu0 %1730
    %v1733 = vmul.f32 %v1712, %v1731
    %1734 = vrot.lane.b32.xlu0 %v1498, 96
    %v1735 = vpop.permute.xlu0 %1734
    %v1737 = vmul.f32 %v1717, %v1735
    %v1738 = vadd.f32 %v1733, %v1737
    %1740 = vrot.lane.b32.xlu0 %v119, 64
    %v1741 = vpop.permute.xlu0 %1740
    %v1743 = vmul.f32 %v1722, %v1741
    %v1744 = vadd.f32 %v1738, %v1743
    %v1745 = vmul.f32 %v1744, %v1727
    %v1746 = vld [vmem:[#allocation2 + $0x100] sm:$0xff]
    %v1747 = vld [vmem:[#allocation2 + $0x108] sm:$0xff]
    %v1748 = vld [vmem:[#allocation2 + $0x110] sm:$0xff]
    %v1749 = vld [vmem:[#allocation2 + $0x118] sm:$0xff]
    %v1750 = vld [vmem:[#allocation2 + $0x248] sm:$0x1]
    %v1751 = vlaneseq
    %v1752 = vshrl.u32 %v1751, 7
    %v1753 = vsub.s32 0, %v1752
    %v1754 = vrot.slane %v1750, %v1753
    %v1756 = vsel %vm48, %v1745, 0
    %1758 = vmatprep.subr.mxu0 0.0
    %1759 = vmatpush1.msra.mxu0 %v1746
    %1760 = vmatprep.subr.mxu0 0.0
    %1761 = vmatpush1.msra.mxu0 %v1747
    %1762 = vmatprep.subr.mxu0 0.0
    %1763 = vmatpush1.msra.mxu0 %v1748
    %1764 = vmatprep.subr.mxu0 0.0
    %1765 = vmatpush1.msra.mxu0 %v1749
    %1766 = vmatprep.subr.mxu0 0.0
    %1767 = vmatpush1.msra.mxu0 0.0
    %1768 = vmatprep.subr.mxu0 0.0
    %1769 = vmatpush1.msra.mxu0 0.0
    %1770 = vmatprep.subr.mxu0 0.0
    %1771 = vmatpush1.msra.mxu0 0.0
    %1772 = vmatprep.subr.mxu0 0.0
    %1773 = vmatpush1.msra.mxu0 0.0
    %1774 = vmatprep.subr.mxu0 0.0
    %1775 = vmatpush1.msra.mxu0 0.0
    %1776 = vmatprep.subr.mxu0 0.0
    %1777 = vmatpush1.msra.mxu0 0.0
    %1778 = vmatprep.subr.mxu0 0.0
    %1779 = vmatpush1.msra.mxu0 0.0
    %1780 = vmatprep.subr.mxu0 0.0
    %1781 = vmatpush1.msra.mxu0 0.0
    %1782 = vmatprep.subr.mxu0 0.0
    %1783 = vmatpush1.msra.mxu0 0.0
    %1784 = vmatprep.subr.mxu0 0.0
    %1785 = vmatpush1.msra.mxu0 0.0
    %1786 = vmatprep.subr.mxu0 0.0
    %1787 = vmatpush1.msra.mxu0 0.0
    %1788 = vmatprep.subr.mxu0 0.0
    %1789 = vmatpush1.msra.mxu0 0.0
    %1790 = vmatprep.subr.mxu0 0.0
    %1791 = vmatpush1.msra.mxu0 0.0
    %1792 = vmatprep.subr.mxu0 0.0
    %1793 = vmatpush1.msra.mxu0 0.0
    %1794 = vmatprep.subr.mxu0 0.0
    %1795 = vmatpush1.msra.mxu0 0.0
    %1796 = vmatprep.subr.mxu0 0.0
    %1797 = vmatpush1.msra.mxu0 0.0
    %1798 = vmatprep.subr.mxu0 0.0
    %1799 = vmatpush1.msra.mxu0 0.0
    %1800 = vmatprep.subr.mxu0 0.0
    %1801 = vmatpush1.msra.mxu0 0.0
    %1802 = vmatprep.subr.mxu0 0.0
    %1803 = vmatpush1.msra.mxu0 0.0
    %1804 = vmatprep.subr.mxu0 0.0
    %1805 = vmatpush1.msra.mxu0 0.0
    %1806 = vmatprep.subr.mxu0 0.0
    %1807 = vmatpush1.msra.mxu0 0.0
    %1808 = vmatprep.subr.mxu0 0.0
    %1809 = vmatpush1.msra.mxu0 0.0
    %1810 = vmatprep.subr.mxu0 0.0
    %1811 = vmatpush1.msra.mxu0 0.0
    %1812 = vmatprep.subr.mxu0 0.0
    %1813 = vmatpush1.msra.mxu0 0.0
    %1814 = vmatprep.subr.mxu0 0.0
    %1815 = vmatpush1.msra.mxu0 0.0
    %1816 = vmatprep.subr.mxu0 0.0
    %1817 = vmatpush1.msra.mxu0 0.0
    %1818 = vmatprep.subr.mxu0 0.0
    %1819 = vmatpush1.msra.mxu0 0.0
    %1820 = vmatprep.subr.mxu0 0.0
    %1821 = vmatpush1.msra.mxu0 0.0
    %1822 = vmatprep.mubr.f32.mxu0 0.0
    %1823 = vmatmul.mubr.f32.gmra.mrb[0].mxu0 %v1756
    %v1824 = vpop.f32.mrb[0].mxu0
    %v1825 = vadd.f32 %v1754, %v1824
    %v1826 = vpop.f32.mrb[0].mxu0
    %1827 = vdwg.mxu0
    %v1828 = vadd.f32 %v32, %v1825
    %v1829 = vld [vmem:[#allocation2 + $0x250] sm:$0x1]
    %v1830 = vld [vmem:[#allocation2 + $0x258] sm:$0x1]
    %v1831 = vsel %vm48, %v1828, 0.0
    %1832 = vadd.xlane.f32.xlu0 %v1831
    %v1833 = vpop.xlane.xlu0 %1832
    %v1834 = vrcp.pop 32.0
    %v1835 = vmul.f32 %v1833, %v1834
    %v1836 = vsub.f32 %v1828, %v1835
    %v1837 = vmul.f32 %v1836, %v1836
    %v1838 = vsel %vm48, %v1837, 0.0
    %1839 = vadd.xlane.f32.xlu0 %v1838
    %v1840 = vpop.xlane.xlu0 %1839
    %v1841 = vmul.f32 %v1840, %v1834
    %v1842 = vadd.f32 %v1841, 1e-05
    %v1843 = vrsqrt.pop %v1842
    %v1844 = vmul.f32 %v1836, %v1843
    %v1845 = vlaneseq
    %v1846 = vshrl.u32 %v1845, 7
    %v1847 = vsub.s32 0, %v1846
    %v1848 = vrot.slane %v1829, %v1847
    %v1849 = vmul.f32 %v1844, %v1848
    %v1850 = vlaneseq
    %v1851 = vshrl.u32 %v1850, 7
    %v1852 = vsub.s32 0, %v1851
    %v1853 = vrot.slane %v1830, %v1852
    %v1854 = vadd.f32 %v1849, %v1853
    %v1855 = vld [vmem:[#allocation2 + $0x120] sm:$0xff]
    %v1856 = vld [vmem:[#allocation2 + $0x128] sm:$0xff]
    %v1857 = vld [vmem:[#allocation2 + $0x130] sm:$0xff]
    %v1858 = vld [vmem:[#allocation2 + $0x138] sm:$0xff]
    %v1859 = vld [vmem:[#allocation2 + $0x260] sm:$0x1]
    %v1860 = vlaneseq
    %v1861 = vshrl.u32 %v1860, 7
    %v1862 = vsub.s32 0, %v1861
    %v1863 = vrot.slane %v1859, %v1862
    %v1865 = vsel %vm48, %v1854, 0
    %1867 = vmatprep.subr.mxu0 0.0
    %1868 = vmatpush1.msra.mxu0 %v1855
    %1869 = vmatprep.subr.mxu0 0.0
    %1870 = vmatpush1.msra.mxu0 %v1856
    %1871 = vmatprep.subr.mxu0 0.0
    %1872 = vmatpush1.msra.mxu0 %v1857
    %1873 = vmatprep.subr.mxu0 0.0
    %1874 = vmatpush1.msra.mxu0 %v1858
    %1875 = vmatprep.subr.mxu0 0.0
    %1876 = vmatpush1.msra.mxu0 0.0
    %1877 = vmatprep.subr.mxu0 0.0
    %1878 = vmatpush1.msra.mxu0 0.0
    %1879 = vmatprep.subr.mxu0 0.0
    %1880 = vmatpush1.msra.mxu0 0.0
    %1881 = vmatprep.subr.mxu0 0.0
    %1882 = vmatpush1.msra.mxu0 0.0
    %1883 = vmatprep.subr.mxu0 0.0
    %1884 = vmatpush1.msra.mxu0 0.0
    %1885 = vmatprep.subr.mxu0 0.0
    %1886 = vmatpush1.msra.mxu0 0.0
    %1887 = vmatprep.subr.mxu0 0.0
    %1888 = vmatpush1.msra.mxu0 0.0
    %1889 = vmatprep.subr.mxu0 0.0
    %1890 = vmatpush1.msra.mxu0 0.0
    %1891 = vmatprep.subr.mxu0 0.0
    %1892 = vmatpush1.msra.mxu0 0.0
    %1893 = vmatprep.subr.mxu0 0.0
    %1894 = vmatpush1.msra.mxu0 0.0
    %1895 = vmatprep.subr.mxu0 0.0
    %1896 = vmatpush1.msra.mxu0 0.0
    %1897 = vmatprep.subr.mxu0 0.0
    %1898 = vmatpush1.msra.mxu0 0.0
    %1899 = vmatprep.subr.mxu0 0.0
    %1900 = vmatpush1.msra.mxu0 0.0
    %1901 = vmatprep.subr.mxu0 0.0
    %1902 = vmatpush1.msra.mxu0 0.0
    %1903 = vmatprep.subr.mxu0 0.0
    %1904 = vmatpush1.msra.mxu0 0.0
    %1905 = vmatprep.subr.mxu0 0.0
    %1906 = vmatpush1.msra.mxu0 0.0
    %1907 = vmatprep.subr.mxu0 0.0
    %1908 = vmatpush1.msra.mxu0 0.0
    %1909 = vmatprep.subr.mxu0 0.0
    %1910 = vmatpush1.msra.mxu0 0.0
    %1911 = vmatprep.subr.mxu0 0.0
    %1912 = vmatpush1.msra.mxu0 0.0
    %1913 = vmatprep.subr.mxu0 0.0
    %1914 = vmatpush1.msra.mxu0 0.0
    %1915 = vmatprep.subr.mxu0 0.0
    %1916 = vmatpush1.msra.mxu0 0.0
    %1917 = vmatprep.subr.mxu0 0.0
    %1918 = vmatpush1.msra.mxu0 0.0
    %1919 = vmatprep.subr.mxu0 0.0
    %1920 = vmatpush1.msra.mxu0 0.0
    %1921 = vmatprep.subr.mxu0 0.0
    %1922 = vmatpush1.msra.mxu0 0.0
    %1923 = vmatprep.subr.mxu0 0.0
    %1924 = vmatpush1.msra.mxu0 0.0
    %1925 = vmatprep.subr.mxu0 0.0
    %1926 = vmatpush1.msra.mxu0 0.0
    %1927 = vmatprep.subr.mxu0 0.0
    %1928 = vmatpush1.msra.mxu0 0.0
    %1929 = vmatprep.subr.mxu0 0.0
    %1930 = vmatpush1.msra.mxu0 0.0
    %1931 = vmatprep.mubr.f32.mxu0 0.0
    %1932 = vmatmul.mubr.f32.gmra.mrb[0].mxu0 %v1865
    %v1933 = vpop.f32.mrb[0].mxu0
    %v1934 = vadd.f32 %v1863, %v1933
    %v1935 = vpop.f32.mrb[0].mxu0
    %1936 = vdwg.mxu0
    %v1937 = vmul.f32 %v1934, %v1934
    %v1938 = vmul.f32 %v1934, %v1937
    %v1939 = vmul.f32 %v1938, 0.044715
    %v1940 = vadd.f32 %v1934, %v1939
    %v1941 = vmul.f32 %v1940, 0.7978846
    %v1942 = vtanh.pop %v1941
    %v1943 = vadd.f32 %v1942, 1.0
    %v1944 = vmul.f32 %v1943, 0.5
    %v1945 = vmul.f32 %v1934, %v1944
    %v1946 = vld [vmem:[#allocation2 + $0x140] sm:$0xff]
    %v1947 = vld [vmem:[#allocation2 + $0x148] sm:$0xff]
    %v1948 = vld [vmem:[#allocation2 + $0x150] sm:$0xff]
    %v1949 = vld [vmem:[#allocation2 + $0x158] sm:$0xff]
    %v1950 = vld [vmem:[#allocation2 + $0x160] sm:$0xff]
    %v1951 = vld [vmem:[#allocation2 + $0x168] sm:$0xff]
    %v1952 = vld [vmem:[#allocation2 + $0x170] sm:$0xff]
    %v1953 = vld [vmem:[#allocation2 + $0x178] sm:$0xff]
    %v1954 = vld [vmem:[#allocation2 + $0x268] sm:$0x1]
    %v1955 = vlaneseq
    %v1956 = vshrl.u32 %v1955, 7
    %v1957 = vsub.s32 0, %v1956
    %v1958 = vrot.slane %v1954, %v1957
    %vm1959 = vcmask 523264
    %v1961 = vsel %vm1959, %v1945, 0
    %1963 = vmatprep.subr.mxu0 0.0
    %1964 = vmatpush1.msra.mxu0 %v1946
    %1965 = vmatprep.subr.mxu0 0.0
    %1966 = vmatpush1.msra.mxu0 %v1947
    %1967 = vmatprep.subr.mxu0 0.0
    %1968 = vmatpush1.msra.mxu0 %v1948
    %1969 = vmatprep.subr.mxu0 0.0
    %1970 = vmatpush1.msra.mxu0 %v1949
    %1971 = vmatprep.subr.mxu0 0.0
    %1972 = vmatpush1.msra.mxu0 %v1950
    %1973 = vmatprep.subr.mxu0 0.0
    %1974 = vmatpush1.msra.mxu0 %v1951
    %1975 = vmatprep.subr.mxu0 0.0
    %1976 = vmatpush1.msra.mxu0 %v1952
    %1977 = vmatprep.subr.mxu0 0.0
    %1978 = vmatpush1.msra.mxu0 %v1953
    %1979 = vmatprep.subr.mxu0 0.0
    %1980 = vmatpush1.msra.mxu0 0.0
    %1981 = vmatprep.subr.mxu0 0.0
    %1982 = vmatpush1.msra.mxu0 0.0
    %1983 = vmatprep.subr.mxu0 0.0
    %1984 = vmatpush1.msra.mxu0 0.0
    %1985 = vmatprep.subr.mxu0 0.0
    %1986 = vmatpush1.msra.mxu0 0.0
    %1987 = vmatprep.subr.mxu0 0.0
    %1988 = vmatpush1.msra.mxu0 0.0
    %1989 = vmatprep.subr.mxu0 0.0
    %1990 = vmatpush1.msra.mxu0 0.0
    %1991 = vmatprep.subr.mxu0 0.0
    %1992 = vmatpush1.msra.mxu0 0.0
    %1993 = vmatprep.subr.mxu0 0.0
    %1994 = vmatpush1.msra.mxu0 0.0
    %1995 = vmatprep.subr.mxu0 0.0
    %1996 = vmatpush1.msra.mxu0 0.0
    %1997 = vmatprep.subr.mxu0 0.0
    %1998 = vmatpush1.msra.mxu0 0.0
    %1999 = vmatprep.subr.mxu0 0.0
    %2000 = vmatpush1.msra.mxu0 0.0
    %2001 = vmatprep.subr.mxu0 0.0
    %2002 = vmatpush1.msra.mxu0 0.0
    %2003 = vmatprep.subr.mxu0 0.0
    %2004 = vmatpush1.msra.mxu0 0.0
    %2005 = vmatprep.subr.mxu0 0.0
    %2006 = vmatpush1.msra.mxu0 0.0
    %2007 = vmatprep.subr.mxu0 0.0
    %2008 = vmatpush1.msra.mxu0 0.0
    %2009 = vmatprep.subr.mxu0 0.0
    %2010 = vmatpush1.msra.mxu0 0.0
    %2011 = vmatprep.subr.mxu0 0.0
    %2012 = vmatpush1.msra.mxu0 0.0
    %2013 = vmatprep.subr.mxu0 0.0
    %2014 = vmatpush1.msra.mxu0 0.0
    %2015 = vmatprep.subr.mxu0 0.0
    %2016 = vmatpush1.msra.mxu0 0.0
    %2017 = vmatprep.subr.mxu0 0.0
    %2018 = vmatpush1.msra.mxu0 0.0
    %2019 = vmatprep.subr.mxu0 0.0
    %2020 = vmatpush1.msra.mxu0 0.0
    %2021 = vmatprep.subr.mxu0 0.0
    %2022 = vmatpush1.msra.mxu0 0.0
    %2023 = vmatprep.subr.mxu0 0.0
    %2024 = vmatpush1.msra.mxu0 0.0
    %2025 = vmatprep.subr.mxu0 0.0
    %2026 = vmatpush1.msra.mxu0 0.0
    %2027 = vmatprep.mubr.f32.mxu0 0.0
    %2028 = vmatmul.mubr.f32.gmra.mrb[0].mxu0 %v1961
    %v2029 = vpop.f32.mrb[0].mxu0
    %v2030 = vadd.f32 %v1958, %v2029
    %v2031 = vpop.f32.mrb[0].mxu0
    %2032 = vdwg.mxu0
    %v2033 = vadd.f32 %v1854, %v2030
    %v2034 = vld [vmem:[#allocation2 + $0x270] sm:$0x1]
    %v2035 = vld [vmem:[#allocation2 + $0x278] sm:$0x1]
    %v2036 = vsel %vm48, %v2033, 0.0
    %2037 = vadd.xlane.f32.xlu0 %v2036
    %v2038 = vpop.xlane.xlu0 %2037
    %v2039 = vmul.f32 %v2038, %v1834
    %v2040 = vsub.f32 %v2033, %v2039
    %v2041 = vmul.f32 %v2040, %v2040
    %v2042 = vsel %vm48, %v2041, 0.0
    %2043 = vadd.xlane.f32.xlu0 %v2042
    %v2044 = vpop.xlane.xlu0 %2043
    %v2045 = vmul.f32 %v2044, %v1834
    %v2046 = vadd.f32 %v2045, 1e-05
    %v2047 = vrsqrt.pop %v2046
    %v2048 = vmul.f32 %v2040, %v2047
    %v2049 = vlaneseq
    %v2050 = vshrl.u32 %v2049, 7
    %v2051 = vsub.s32 0, %v2050
    %v2052 = vrot.slane %v2034, %v2051
    %v2053 = vmul.f32 %v2048, %v2052
    %v2054 = vlaneseq
    %v2055 = vshrl.u32 %v2054, 7
    %v2056 = vsub.s32 0, %v2055
    %v2057 = vrot.slane %v2035, %v2056
    %v2058 = vadd.f32 %v2053, %v2057
    %v2059 = vadd.f32 %v373, %v1735
    %v2060 = vld [vmem:[#allocation2 + $0x180] sm:$0xff]
    %v2061 = vld [vmem:[#allocation2 + $0x188] sm:$0xff]
    %v2062 = vld [vmem:[#allocation2 + $0x190] sm:$0xff]
    %v2063 = vld [vmem:[#allocation2 + $0x198] sm:$0xff]
    %v2065 = vsel %vm48, %v2058, 0
    %2067 = vmatprep.subr.mxu0 0.0
    %2068 = vmatpush1.msra.mxu0 %v2060
    %2069 = vmatprep.subr.mxu0 0.0
    %2070 = vmatpush1.msra.mxu0 %v2061
    %2071 = vmatprep.subr.mxu0 0.0
    %2072 = vmatpush1.msra.mxu0 %v2062
    %2073 = vmatprep.subr.mxu0 0.0
    %2074 = vmatpush1.msra.mxu0 %v2063
    %2075 = vmatprep.subr.mxu0 0.0
    %2076 = vmatpush1.msra.mxu0 0.0
    %2077 = vmatprep.subr.mxu0 0.0
    %2078 = vmatpush1.msra.mxu0 0.0
    %2079 = vmatprep.subr.mxu0 0.0
    %2080 = vmatpush1.msra.mxu0 0.0
    %2081 = vmatprep.subr.mxu0 0.0
    %2082 = vmatpush1.msra.mxu0 0.0
    %2083 = vmatprep.subr.mxu0 0.0
    %2084 = vmatpush1.msra.mxu0 0.0
    %2085 = vmatprep.subr.mxu0 0.0
    %2086 = vmatpush1.msra.mxu0 0.0
    %2087 = vmatprep.subr.mxu0 0.0
    %2088 = vmatpush1.msra.mxu0 0.0
    %2089 = vmatprep.subr.mxu0 0.0
    %2090 = vmatpush1.msra.mxu0 0.0
    %2091 = vmatprep.subr.mxu0 0.0
    %2092 = vmatpush1.msra.mxu0 0.0
    %2093 = vmatprep.subr.mxu0 0.0
    %2094 = vmatpush1.msra.mxu0 0.0
    %2095 = vmatprep.subr.mxu0 0.0
    %2096 = vmatpush1.msra.mxu0 0.0
    %2097 = vmatprep.subr.mxu0 0.0
    %2098 = vmatpush1.msra.mxu0 0.0
    %2099 = vmatprep.subr.mxu0 0.0
    %2100 = vmatpush1.msra.mxu0 0.0
    %2101 = vmatprep.subr.mxu0 0.0
    %2102 = vmatpush1.msra.mxu0 0.0
    %2103 = vmatprep.subr.mxu0 0.0
    %2104 = vmatpush1.msra.mxu0 0.0
    %2105 = vmatprep.subr.mxu0 0.0
    %2106 = vmatpush1.msra.mxu0 0.0
    %2107 = vmatprep.subr.mxu0 0.0
    %2108 = vmatpush1.msra.mxu0 0.0
    %2109 = vmatprep.subr.mxu0 0.0
    %2110 = vmatpush1.msra.mxu0 0.0
    %2111 = vmatprep.subr.mxu0 0.0
    %2112 = vmatpush1.msra.mxu0 0.0
    %2113 = vmatprep.subr.mxu0 0.0
    %2114 = vmatpush1.msra.mxu0 0.0
    %2115 = vmatprep.subr.mxu0 0.0
    %2116 = vmatpush1.msra.mxu0 0.0
    %2117 = vmatprep.subr.mxu0 0.0
    %2118 = vmatpush1.msra.mxu0 0.0
    %2119 = vmatprep.subr.mxu0 0.0
    %2120 = vmatpush1.msra.mxu0 0.0
    %2121 = vmatprep.subr.mxu0 0.0
    %2122 = vmatpush1.msra.mxu0 0.0
    %2123 = vmatprep.subr.mxu0 0.0
    %2124 = vmatpush1.msra.mxu0 0.0
    %2125 = vmatprep.subr.mxu0 0.0
    %2126 = vmatpush1.msra.mxu0 0.0
    %2127 = vmatprep.subr.mxu0 0.0
    %2128 = vmatpush1.msra.mxu0 0.0
    %2129 = vmatprep.subr.mxu0 0.0
    %2130 = vmatpush1.msra.mxu0 0.0
    %2131 = vmatprep.mubr.f32.mxu0 0.0
    %2132 = vmatmul.mubr.f32.gmra.mrb[0].mxu0 %v2065
    %v2133 = vpop.f32.mrb[0].mxu0
    %v2134 = vadd.f32 0.0, %v2133
    %v2135 = vpop.f32.mrb[0].mxu0
    %2136 = vdwg.mxu0
    %2138 = vrot.lane.b32.xlu0 %v2134, 32
    %v2139 = vpop.permute.xlu0 %2138
    %v2141 = vadd.f32 %v2059, %v2139
    %v2142 = vmul.f32 %v2141, %v2141
    %v2143 = vmul.f32 %v2141, %v2142
    %v2144 = vmul.f32 %v2143, 0.044715
    %v2145 = vadd.f32 %v2141, %v2144
    %v2146 = vmul.f32 %v2145, 0.7978846
    %v2147 = vtanh.pop %v2146
    %v2148 = vadd.f32 %v2147, 1.0
    %v2149 = vmul.f32 %v2148, 0.5
    %v2150 = vmul.f32 %v2141, %v2149
    %v2151 = vld [vmem:[#allocation2 + $0x1a0] sm:$0xff]
    %v2152 = vld [vmem:[#allocation2 + $0x1a8] sm:$0xff]
    %v2153 = vld [vmem:[#allocation2 + $0x1b0] sm:$0xff]
    %v2154 = vld [vmem:[#allocation2 + $0x1b8] sm:$0xff]
    %v2155 = vld [vmem:[#allocation2 + $0x280] sm:$0x1]
    %v2156 = vlaneseq
    %v2157 = vshrl.u32 %v2156, 7
    %v2158 = vsub.s32 0, %v2157
    %v2159 = vrot.slane %v2155, %v2158
    %2161 = vrot.lane.b32.xlu0 %v2150, 96
    %v2162 = vpop.permute.xlu0 %2161
    %v2163 = vsel %vm48, %v2162, 0
    %2165 = vmatprep.subr.mxu0 0.0
    %2166 = vmatpush1.msra.mxu0 %v2151
    %2167 = vmatprep.subr.mxu0 0.0
    %2168 = vmatpush1.msra.mxu0 %v2152
    %2169 = vmatprep.subr.mxu0 0.0
    %2170 = vmatpush1.msra.mxu0 %v2153
    %2171 = vmatprep.subr.mxu0 0.0
    %2172 = vmatpush1.msra.mxu0 %v2154
    %2173 = vmatprep.subr.mxu0 0.0
    %2174 = vmatpush1.msra.mxu0 0.0
    %2175 = vmatprep.subr.mxu0 0.0
    %2176 = vmatpush1.msra.mxu0 0.0
    %2177 = vmatprep.subr.mxu0 0.0
    %2178 = vmatpush1.msra.mxu0 0.0
    %2179 = vmatprep.subr.mxu0 0.0
    %2180 = vmatpush1.msra.mxu0 0.0
    %2181 = vmatprep.subr.mxu0 0.0
    %2182 = vmatpush1.msra.mxu0 0.0
    %2183 = vmatprep.subr.mxu0 0.0
    %2184 = vmatpush1.msra.mxu0 0.0
    %2185 = vmatprep.subr.mxu0 0.0
    %2186 = vmatpush1.msra.mxu0 0.0
    %2187 = vmatprep.subr.mxu0 0.0
    %2188 = vmatpush1.msra.mxu0 0.0
    %2189 = vmatprep.subr.mxu0 0.0
    %2190 = vmatpush1.msra.mxu0 0.0
    %2191 = vmatprep.subr.mxu0 0.0
    %2192 = vmatpush1.msra.mxu0 0.0
    %2193 = vmatprep.subr.mxu0 0.0
    %2194 = vmatpush1.msra.mxu0 0.0
    %2195 = vmatprep.subr.mxu0 0.0
    %2196 = vmatpush1.msra.mxu0 0.0
    %2197 = vmatprep.subr.mxu0 0.0
    %2198 = vmatpush1.msra.mxu0 0.0
    %2199 = vmatprep.subr.mxu0 0.0
    %2200 = vmatpush1.msra.mxu0 0.0
    %2201 = vmatprep.subr.mxu0 0.0
    %2202 = vmatpush1.msra.mxu0 0.0
    %2203 = vmatprep.subr.mxu0 0.0
    %2204 = vmatpush1.msra.mxu0 0.0
    %2205 = vmatprep.subr.mxu0 0.0
    %2206 = vmatpush1.msra.mxu0 0.0
    %2207 = vmatprep.subr.mxu0 0.0
    %2208 = vmatpush1.msra.mxu0 0.0
    %2209 = vmatprep.subr.mxu0 0.0
    %2210 = vmatpush1.msra.mxu0 0.0
    %2211 = vmatprep.subr.mxu0 0.0
    %2212 = vmatpush1.msra.mxu0 0.0
    %2213 = vmatprep.subr.mxu0 0.0
    %2214 = vmatpush1.msra.mxu0 0.0
    %2215 = vmatprep.subr.mxu0 0.0
    %2216 = vmatpush1.msra.mxu0 0.0
    %2217 = vmatprep.subr.mxu0 0.0
    %2218 = vmatpush1.msra.mxu0 0.0
    %2219 = vmatprep.subr.mxu0 0.0
    %2220 = vmatpush1.msra.mxu0 0.0
    %2221 = vmatprep.subr.mxu0 0.0
    %2222 = vmatpush1.msra.mxu0 0.0
    %2223 = vmatprep.subr.mxu0 0.0
    %2224 = vmatpush1.msra.mxu0 0.0
    %2225 = vmatprep.subr.mxu0 0.0
    %2226 = vmatpush1.msra.mxu0 0.0
    %2227 = vmatprep.subr.mxu0 0.0
    %2228 = vmatpush1.msra.mxu0 0.0
    %2229 = vmatprep.mubr.f32.mxu0 0.0
    %2230 = vmatmul.mubr.f32.gmra.mrb[0].mxu0 %v2163
    %v2231 = vpop.f32.mrb[0].mxu0
    %v2232 = vadd.f32 %v2159, %v2231
    %v2233 = vpop.f32.mrb[0].mxu0
    %2234 = vdwg.mxu0
    %v2235 = vxor.u32 %v2232, 2147483648
    %v2236 = vmul.f32 %v2235, 1.442695
    %v2237 = vpow.pop %v2236
    %v2238 = vadd.f32 %v2237, 1.0
    %v2239 = vrcp.pop %v2238
    %v2240 = vmul.f32 1.0, %v2239
    %v2241 = vsub.f32 %v2058, %v32
    %2243 = vset.pattern.permute.xlu0 0
    %2244 = vperm.xlu0 %2243, %v487
    %v2245 = vpop.permute.xlu0 %2244
    %v2247 = vmul.f32 %v2245, %v2241
    %v2248 = vadd.f32 %v32, %v2247
    %v2249 = vsub.f32 %v2240, 1.0
    %v2250 = vmul.f32 %v487, %v2249
    %v2251 = vadd.f32 %v2250, 1.0
    %v2252 = vadd.f32 %v487, 0.0
    %s2253 = scalar_lea.vmem [#allocation5], 8
    %2254 = vst.msk [vmem:[%s2253] sm:$0xff] %vm48, %v2248
    %v2255 = vld [vmem:[#allocation2] sm:$0xff]
    %v2256 = vld [vmem:[#allocation2 + $0x8] sm:$0xff]
    %v2257 = vld [vmem:[#allocation2 + $0x10] sm:$0xff]
    %v2258 = vld [vmem:[#allocation2 + $0x18] sm:$0xff]
    %v2259 = vld [vmem:[#allocation2 + $0x1f8] sm:$0x1]
    %v2260 = vlaneseq
    %v2261 = vshrl.u32 %v2260, 7
    %v2262 = vsub.s32 0, %v2261
    %v2263 = vrot.slane %v2259, %v2262
    %v2265 = vsel %vm48, %v2248, 0
    %2267 = vmatprep.subr.mxu0 0.0
    %2268 = vmatpush1.msra.mxu0 %v2255
    %2269 = vmatprep.subr.mxu0 0.0
    %2270 = vmatpush1.msra.mxu0 %v2256
    %2271 = vmatprep.subr.mxu0 0.0
    %2272 = vmatpush1.msra.mxu0 %v2257
    %2273 = vmatprep.subr.mxu0 0.0
    %2274 = vmatpush1.msra.mxu0 %v2258
    %2275 = vmatprep.subr.mxu0 0.0
    %2276 = vmatpush1.msra.mxu0 0.0
    %2277 = vmatprep.subr.mxu0 0.0
    %2278 = vmatpush1.msra.mxu0 0.0
    %2279 = vmatprep.subr.mxu0 0.0
    %2280 = vmatpush1.msra.mxu0 0.0
    %2281 = vmatprep.subr.mxu0 0.0
    %2282 = vmatpush1.msra.mxu0 0.0
    %2283 = vmatprep.subr.mxu0 0.0
    %2284 = vmatpush1.msra.mxu0 0.0
    %2285 = vmatprep.subr.mxu0 0.0
    %2286 = vmatpush1.msra.mxu0 0.0
    %2287 = vmatprep.subr.mxu0 0.0
    %2288 = vmatpush1.msra.mxu0 0.0
    %2289 = vmatprep.subr.mxu0 0.0
    %2290 = vmatpush1.msra.mxu0 0.0
    %2291 = vmatprep.subr.mxu0 0.0
    %2292 = vmatpush1.msra.mxu0 0.0
    %2293 = vmatprep.subr.mxu0 0.0
    %2294 = vmatpush1.msra.mxu0 0.0
    %2295 = vmatprep.subr.mxu0 0.0
    %2296 = vmatpush1.msra.mxu0 0.0
    %2297 = vmatprep.subr.mxu0 0.0
    %2298 = vmatpush1.msra.mxu0 0.0
    %2299 = vmatprep.subr.mxu0 0.0
    %2300 = vmatpush1.msra.mxu0 0.0
    %2301 = vmatprep.subr.mxu0 0.0
    %2302 = vmatpush1.msra.mxu0 0.0
    %2303 = vmatprep.subr.mxu0 0.0
    %2304 = vmatpush1.msra.mxu0 0.0
    %2305 = vmatprep.subr.mxu0 0.0
    %2306 = vmatpush1.msra.mxu0 0.0
    %2307 = vmatprep.subr.mxu0 0.0
    %2308 = vmatpush1.msra.mxu0 0.0
    %2309 = vmatprep.subr.mxu0 0.0
    %2310 = vmatpush1.msra.mxu0 0.0
    %2311 = vmatprep.subr.mxu0 0.0
    %2312 = vmatpush1.msra.mxu0 0.0
    %2313 = vmatprep.subr.mxu0 0.0
    %2314 = vmatpush1.msra.mxu0 0.0
    %2315 = vmatprep.subr.mxu0 0.0
    %2316 = vmatpush1.msra.mxu0 0.0
    %2317 = vmatprep.subr.mxu0 0.0
    %2318 = vmatpush1.msra.mxu0 0.0
    %2319 = vmatprep.subr.mxu0 0.0
    %2320 = vmatpush1.msra.mxu0 0.0
    %2321 = vmatprep.subr.mxu0 0.0
    %2322 = vmatpush1.msra.mxu0 0.0
    %2323 = vmatprep.subr.mxu0 0.0
    %2324 = vmatpush1.msra.mxu0 0.0
    %2325 = vmatprep.subr.mxu0 0.0
    %2326 = vmatpush1.msra.mxu0 0.0
    %2327 = vmatprep.subr.mxu0 0.0
    %2328 = vmatpush1.msra.mxu0 0.0
    %2329 = vmatprep.subr.mxu0 0.0
    %2330 = vmatpush1.msra.mxu0 0.0
    %2331 = vmatprep.mubr.f32.mxu0 0.0
    %2332 = vmatmul.mubr.f32.gmra.mrb[0].mxu0 %v2265
    %v2333 = vpop.f32.mrb[0].mxu0
    %v2334 = vadd.f32 %v2263, %v2333
    %v2335 = vpop.f32.mrb[0].mxu0
    %2336 = vdwg.mxu0
    %v2337 = vld [vmem:[#allocation2 + $0x20] sm:$0xff]
    %v2338 = vld [vmem:[#allocation2 + $0x28] sm:$0xff]
    %v2339 = vld [vmem:[#allocation2 + $0x30] sm:$0xff]
    %v2340 = vld [vmem:[#allocation2 + $0x38] sm:$0xff]
    %v2341 = vld [vmem:[#allocation2 + $0x200] sm:$0x1]
    %v2342 = vlaneseq
    %v2343 = vshrl.u32 %v2342, 7
    %v2344 = vsub.s32 0, %v2343
    %v2345 = vrot.slane %v2341, %v2344
    %2346 = vmatprep.subr.mxu0 0.0
    %2347 = vmatpush1.msra.mxu0 %v2337
    %2348 = vmatprep.subr.mxu0 0.0
    %2349 = vmatpush1.msra.mxu0 %v2338
    %2350 = vmatprep.subr.mxu0 0.0
    %2351 = vmatpush1.msra.mxu0 %v2339
    %2352 = vmatprep.subr.mxu0 0.0
    %2353 = vmatpush1.msra.mxu0 %v2340
    %2354 = vmatprep.subr.mxu0 0.0
    %2355 = vmatpush1.msra.mxu0 0.0
    %2356 = vmatprep.subr.mxu0 0.0
    %2357 = vmatpush1.msra.mxu0 0.0
    %2358 = vmatprep.subr.mxu0 0.0
    %2359 = vmatpush1.msra.mxu0 0.0
    %2360 = vmatprep.subr.mxu0 0.0
    %2361 = vmatpush1.msra.mxu0 0.0
    %2362 = vmatprep.subr.mxu0 0.0
    %2363 = vmatpush1.msra.mxu0 0.0
    %2364 = vmatprep.subr.mxu0 0.0
    %2365 = vmatpush1.msra.mxu0 0.0
    %2366 = vmatprep.subr.mxu0 0.0
    %2367 = vmatpush1.msra.mxu0 0.0
    %2368 = vmatprep.subr.mxu0 0.0
    %2369 = vmatpush1.msra.mxu0 0.0
    %2370 = vmatprep.subr.mxu0 0.0
    %2371 = vmatpush1.msra.mxu0 0.0
    %2372 = vmatprep.subr.mxu0 0.0
    %2373 = vmatpush1.msra.mxu0 0.0
    %2374 = vmatprep.subr.mxu0 0.0
    %2375 = vmatpush1.msra.mxu0 0.0
    %2376 = vmatprep.subr.mxu0 0.0
    %2377 = vmatpush1.msra.mxu0 0.0
    %2378 = vmatprep.subr.mxu0 0.0
    %2379 = vmatpush1.msra.mxu0 0.0
    %2380 = vmatprep.subr.mxu0 0.0
    %2381 = vmatpush1.msra.mxu0 0.0
    %2382 = vmatprep.subr.mxu0 0.0
    %2383 = vmatpush1.msra.mxu0 0.0
    %2384 = vmatprep.subr.mxu0 0.0
    %2385 = vmatpush1.msra.mxu0 0.0
    %2386 = vmatprep.subr.mxu0 0.0
    %2387 = vmatpush1.msra.mxu0 0.0
    %2388 = vmatprep.subr.mxu0 0.0
    %2389 = vmatpush1.msra.mxu0 0.0
    %2390 = vmatprep.subr.mxu0 0.0
    %2391 = vmatpush1.msra.mxu0 0.0
    %2392 = vmatprep.subr.mxu0 0.0
    %2393 = vmatpush1.msra.mxu0 0.0
    %2394 = vmatprep.subr.mxu0 0.0
    %2395 = vmatpush1.msra.mxu0 0.0
    %2396 = vmatprep.subr.mxu0 0.0
    %2397 = vmatpush1.msra.mxu0 0.0
    %2398 = vmatprep.subr.mxu0 0.0
    %2399 = vmatpush1.msra.mxu0 0.0
    %2400 = vmatprep.subr.mxu0 0.0
    %2401 = vmatpush1.msra.mxu0 0.0
    %2402 = vmatprep.subr.mxu0 0.0
    %2403 = vmatpush1.msra.mxu0 0.0
    %2404 = vmatprep.subr.mxu0 0.0
    %2405 = vmatpush1.msra.mxu0 0.0
    %2406 = vmatprep.subr.mxu0 0.0
    %2407 = vmatpush1.msra.mxu0 0.0
    %2408 = vmatprep.subr.mxu0 0.0
    %2409 = vmatpush1.msra.mxu0 0.0
    %2410 = vmatprep.mubr.f32.mxu0 0.0
    %2411 = vmatmul.mubr.f32.gmra.mrb[0].mxu0 %v2265
    %v2412 = vpop.f32.mrb[0].mxu0
    %v2413 = vadd.f32 %v2345, %v2412
    %v2414 = vpop.f32.mrb[0].mxu0
    %2415 = vdwg.mxu0
    %v2416 = vadd.f32 %v2413, %v119
    %v2417 = vmul.f32 %v2416, %v2416
    %v2418 = vmul.f32 %v2416, %v2417
    %v2419 = vmul.f32 %v2418, 0.044715
    %v2420 = vadd.f32 %v2416, %v2419
    %v2421 = vmul.f32 %v2420, 0.7978846
    %v2422 = vtanh.pop %v2421
    %v2423 = vadd.f32 %v2422, 1.0
    %v2424 = vmul.f32 %v2423, 0.5
    %v2425 = vmul.f32 %v2416, %v2424
    %v2426 = vld [vmem:[#allocation2 + $0xe0] sm:$0xff]
    %v2427 = vld [vmem:[#allocation2 + $0xe8] sm:$0xff]
    %v2428 = vld [vmem:[#allocation2 + $0xf0] sm:$0xff]
    %v2429 = vld [vmem:[#allocation2 + $0xf8] sm:$0xff]
    %v2430 = vld [vmem:[#allocation2 + $0x240] sm:$0x1]
    %v2431 = vlaneseq
    %v2432 = vshrl.u32 %v2431, 7
    %v2433 = vsub.s32 0, %v2432
    %v2434 = vrot.slane %v2430, %v2433
    %v2436 = vsel %vm48, %v2425, 0
    %2438 = vmatprep.subr.mxu0 0.0
    %2439 = vmatpush1.msra.mxu0 %v2426
    %2440 = vmatprep.subr.mxu0 0.0
    %2441 = vmatpush1.msra.mxu0 %v2427
    %2442 = vmatprep.subr.mxu0 0.0
    %2443 = vmatpush1.msra.mxu0 %v2428
    %2444 = vmatprep.subr.mxu0 0.0
    %2445 = vmatpush1.msra.mxu0 %v2429
    %2446 = vmatprep.subr.mxu0 0.0
    %2447 = vmatpush1.msra.mxu0 0.0
    %2448 = vmatprep.subr.mxu0 0.0
    %2449 = vmatpush1.msra.mxu0 0.0
    %2450 = vmatprep.subr.mxu0 0.0
    %2451 = vmatpush1.msra.mxu0 0.0
    %2452 = vmatprep.subr.mxu0 0.0
    %2453 = vmatpush1.msra.mxu0 0.0
    %2454 = vmatprep.subr.mxu0 0.0
    %2455 = vmatpush1.msra.mxu0 0.0
    %2456 = vmatprep.subr.mxu0 0.0
    %2457 = vmatpush1.msra.mxu0 0.0
    %2458 = vmatprep.subr.mxu0 0.0
    %2459 = vmatpush1.msra.mxu0 0.0
    %2460 = vmatprep.subr.mxu0 0.0
    %2461 = vmatpush1.msra.mxu0 0.0
    %2462 = vmatprep.subr.mxu0 0.0
    %2463 = vmatpush1.msra.mxu0 0.0
    %2464 = vmatprep.subr.mxu0 0.0
    %2465 = vmatpush1.msra.mxu0 0.0
    %2466 = vmatprep.subr.mxu0 0.0
    %2467 = vmatpush1.msra.mxu0 0.0
    %2468 = vmatprep.subr.mxu0 0.0
    %2469 = vmatpush1.msra.mxu0 0.0
    %2470 = vmatprep.subr.mxu0 0.0
    %2471 = vmatpush1.msra.mxu0 0.0
    %2472 = vmatprep.subr.mxu0 0.0
    %2473 = vmatpush1.msra.mxu0 0.0
    %2474 = vmatprep.subr.mxu0 0.0
    %2475 = vmatpush1.msra.mxu0 0.0
    %2476 = vmatprep.subr.mxu0 0.0
    %2477 = vmatpush1.msra.mxu0 0.0
    %2478 = vmatprep.subr.mxu0 0.0
    %2479 = vmatpush1.msra.mxu0 0.0
    %2480 = vmatprep.subr.mxu0 0.0
    %2481 = vmatpush1.msra.mxu0 0.0
    %2482 = vmatprep.subr.mxu0 0.0
    %2483 = vmatpush1.msra.mxu0 0.0
    %2484 = vmatprep.subr.mxu0 0.0
    %2485 = vmatpush1.msra.mxu0 0.0
    %2486 = vmatprep.subr.mxu0 0.0
    %2487 = vmatpush1.msra.mxu0 0.0
    %2488 = vmatprep.subr.mxu0 0.0
    %2489 = vmatpush1.msra.mxu0 0.0
    %2490 = vmatprep.subr.mxu0 0.0
    %2491 = vmatpush1.msra.mxu0 0.0
    %2492 = vmatprep.subr.mxu0 0.0
    %2493 = vmatpush1.msra.mxu0 0.0
    %2494 = vmatprep.subr.mxu0 0.0
    %2495 = vmatpush1.msra.mxu0 0.0
    %2496 = vmatprep.subr.mxu0 0.0
    %2497 = vmatpush1.msra.mxu0 0.0
    %2498 = vmatprep.subr.mxu0 0.0
    %2499 = vmatpush1.msra.mxu0 0.0
    %2500 = vmatprep.subr.mxu0 0.0
    %2501 = vmatpush1.msra.mxu0 0.0
    %2502 = vmatprep.mubr.f32.mxu0 0.0
    %2503 = vmatmul.mubr.f32.gmra.mrb[0].mxu0 %v2436
    %v2504 = vpop.f32.mrb[0].mxu0
    %v2505 = vadd.f32 %v2434, %v2504
    %v2506 = vpop.f32.mrb[0].mxu0
    %2507 = vdwg.mxu0
    %v2508 = vxor.u32 %v2505, 2147483648
    %v2509 = vmul.f32 %v2508, 1.442695
    %v2510 = vpow.pop %v2509
    %v2511 = vadd.f32 %v2510, 1.0
    %v2512 = vrcp.pop %v2511
    %v2513 = vmul.f32 1.0, %v2512
    %vm2514 = vcmp.gt.f32.partialorder %v2513, 0.9
    %v2515 = vsel %vm2514, 1, 0
    %v2516 = vcvt.s32.f32 %v2515
    %v2517 = vmax.f32 %v2516, %v37
    %v2518 = vsel %vm478, %v2517, inf
    %v2519 = vrot.slane %v2518, 4
    %v2520 = vmin.f32 %v2518, %v2519
    %v2521 = vrot.slane %v2520, 2
    %v2522 = vmin.f32 %v2520, %v2521
    %v2523 = vrot.slane %v2522, 1
    %v2524 = vmin.f32 %v2522, %v2523
    %v2525 = vmax.f32 %v486, %v2524
    %v2526 = vsub.f32 1.0, %v2525
    %v2528 = vcombine.high %v2334, %v2334
    %v2530 = vunpack.c.l.s4 1966171168
    %v2531 = vunpack.c.0.s8 %v2530
    %v2532 = vlaneseq
    %v2533 = vshrl.u32 %v2532, 7
    %v2534 = vsub.s32 %v2531, %v2533
    %v2535 = vrot.slane %v2334, %v2534
    %v2537 = vunpack.c.l.s4 1966171168
    %v2538 = vunpack.c.0.s8 %v2537
    %v2539 = vlaneseq
    %v2540 = vshrl.u32 %v2539, 7
    %v2541 = vsub.s32 %v2538, %v2540
    %v2542 = vrot.slane %v2528, %v2541
    %v2543 = vcombine.high %v2535, %v2535
    %v2544 = vcombine.high %v2542, %v2542
    %v2546 = vunpack.c.l.s4 1966171168
    %v2547 = vunpack.c.0.s8 %v2546
    %v2548 = vlaneseq
    %v2549 = vshrl.u32 %v2548, 7
    %v2550 = vsub.s32 %v2547, %v2549
    %v2551 = vrot.slane %v2535, %v2550
    %v2553 = vunpack.c.l.s4 1966171168
    %v2554 = vunpack.c.0.s8 %v2553
    %v2555 = vlaneseq
    %v2556 = vshrl.u32 %v2555, 7
    %v2557 = vsub.s32 %v2554, %v2556
    %v2558 = vrot.slane %v2542, %v2557
    %v2560 = vunpack.c.l.s4 1966171168
    %v2561 = vunpack.c.0.s8 %v2560
    %v2562 = vlaneseq
    %v2563 = vshrl.u32 %v2562, 7
    %v2564 = vsub.s32 %v2561, %v2563
    %v2565 = vrot.slane %v2543, %v2564
    %v2567 = vunpack.c.l.s4 1966171168
    %v2568 = vunpack.c.0.s8 %v2567
    %v2569 = vlaneseq
    %v2570 = vshrl.u32 %v2569, 7
    %v2571 = vsub.s32 %v2568, %v2570
    %v2572 = vrot.slane %v2544, %v2571
    %v2573 = vcombine.high %v2551, %v2551
    %v2574 = vcombine.high %v2558, %v2558
    %v2575 = vcombine.high %v2565, %v2565
    %v2576 = vcombine.high %v2572, %v2572
    %v2577 = vlaneseq
    %v2578 = vshrl.u32 %v2577, 7
    %v2579 = vsub.s32 0, %v2578
    %v2580 = vrot.slane %v2551, %v2579
    %v2581 = vlaneseq
    %v2582 = vshrl.u32 %v2581, 7
    %v2583 = vsub.s32 0, %v2582
    %v2584 = vrot.slane %v2565, %v2583
    %v2585 = vlaneseq
    %v2586 = vshrl.u32 %v2585, 7
    %v2587 = vsub.s32 0, %v2586
    %v2588 = vrot.slane %v2573, %v2587
    %v2589 = vlaneseq
    %v2590 = vshrl.u32 %v2589, 7
    %v2591 = vsub.s32 0, %v2590
    %v2592 = vrot.slane %v2575, %v2591
    %v2593 = vlaneseq
    %v2594 = vshrl.u32 %v2593, 7
    %v2595 = vsub.s32 0, %v2594
    %v2596 = vrot.slane %v2558, %v2595
    %v2597 = vlaneseq
    %v2598 = vshrl.u32 %v2597, 7
    %v2599 = vsub.s32 0, %v2598
    %v2600 = vrot.slane %v2572, %v2599
    %v2601 = vlaneseq
    %v2602 = vshrl.u32 %v2601, 7
    %v2603 = vsub.s32 0, %v2602
    %v2604 = vrot.slane %v2574, %v2603
    %v2605 = vlaneseq
    %v2606 = vshrl.u32 %v2605, 7
    %v2607 = vsub.s32 0, %v2606
    %v2608 = vrot.slane %v2576, %v2607
    %v2617 = vadd.f32 %v2580, %v206
    %v2618 = vadd.f32 %v2580, %v211
    %v2619 = vadd.f32 %v2584, %v206
    %v2620 = vadd.f32 %v2584, %v211
    %v2621 = vadd.f32 %v2588, %v206
    %v2622 = vadd.f32 %v2588, %v211
    %v2623 = vadd.f32 %v2592, %v206
    %v2624 = vadd.f32 %v2592, %v211
    %v2625 = vadd.f32 %v2596, %v206
    %v2626 = vadd.f32 %v2596, %v211
    %v2627 = vadd.f32 %v2600, %v206
    %v2628 = vadd.f32 %v2600, %v211
    %v2629 = vadd.f32 %v2604, %v206
    %v2630 = vadd.f32 %v2604, %v211
    %v2631 = vadd.f32 %v2608, %v206
    %v2632 = vadd.f32 %v2608, %v211
    %v2633 = vmul.f32 %v2617, %v2617
    %v2634 = vmul.f32 %v2618, %v2618
    %v2635 = vmul.f32 %v2619, %v2619
    %v2636 = vmul.f32 %v2620, %v2620
    %v2637 = vmul.f32 %v2621, %v2621
    %v2638 = vmul.f32 %v2622, %v2622
    %v2639 = vmul.f32 %v2623, %v2623
    %v2640 = vmul.f32 %v2624, %v2624
    %v2641 = vmul.f32 %v2625, %v2625
    %v2642 = vmul.f32 %v2626, %v2626
    %v2643 = vmul.f32 %v2627, %v2627
    %v2644 = vmul.f32 %v2628, %v2628
    %v2645 = vmul.f32 %v2629, %v2629
    %v2646 = vmul.f32 %v2630, %v2630
    %v2647 = vmul.f32 %v2631, %v2631
    %v2648 = vmul.f32 %v2632, %v2632
    %v2649 = vmul.f32 %v2617, %v2633
    %v2650 = vmul.f32 %v2618, %v2634
    %v2651 = vmul.f32 %v2619, %v2635
    %v2652 = vmul.f32 %v2620, %v2636
    %v2653 = vmul.f32 %v2621, %v2637
    %v2654 = vmul.f32 %v2622, %v2638
    %v2655 = vmul.f32 %v2623, %v2639
    %v2656 = vmul.f32 %v2624, %v2640
    %v2657 = vmul.f32 %v2625, %v2641
    %v2658 = vmul.f32 %v2626, %v2642
    %v2659 = vmul.f32 %v2627, %v2643
    %v2660 = vmul.f32 %v2628, %v2644
    %v2661 = vmul.f32 %v2629, %v2645
    %v2662 = vmul.f32 %v2630, %v2646
    %v2663 = vmul.f32 %v2631, %v2647
    %v2664 = vmul.f32 %v2632, %v2648
    %v2665 = vmul.f32 %v2649, 0.044715
    %v2666 = vmul.f32 %v2650, 0.044715
    %v2667 = vmul.f32 %v2651, 0.044715
    %v2668 = vmul.f32 %v2652, 0.044715
    %v2669 = vmul.f32 %v2653, 0.044715
    %v2670 = vmul.f32 %v2654, 0.044715
    %v2671 = vmul.f32 %v2655, 0.044715
    %v2672 = vmul.f32 %v2656, 0.044715
    %v2673 = vmul.f32 %v2657, 0.044715
    %v2674 = vmul.f32 %v2658, 0.044715
    %v2675 = vmul.f32 %v2659, 0.044715
    %v2676 = vmul.f32 %v2660, 0.044715
    %v2677 = vmul.f32 %v2661, 0.044715
    %v2678 = vmul.f32 %v2662, 0.044715
    %v2679 = vmul.f32 %v2663, 0.044715
    %v2680 = vmul.f32 %v2664, 0.044715
    %v2681 = vadd.f32 %v2617, %v2665
    %v2682 = vadd.f32 %v2618, %v2666
    %v2683 = vadd.f32 %v2619, %v2667
    %v2684 = vadd.f32 %v2620, %v2668
    %v2685 = vadd.f32 %v2621, %v2669
    %v2686 = vadd.f32 %v2622, %v2670
    %v2687 = vadd.f32 %v2623, %v2671
    %v2688 = vadd.f32 %v2624, %v2672
    %v2689 = vadd.f32 %v2625, %v2673
    %v2690 = vadd.f32 %v2626, %v2674
    %v2691 = vadd.f32 %v2627, %v2675
    %v2692 = vadd.f32 %v2628, %v2676
    %v2693 = vadd.f32 %v2629, %v2677
    %v2694 = vadd.f32 %v2630, %v2678
    %v2695 = vadd.f32 %v2631, %v2679
    %v2696 = vadd.f32 %v2632, %v2680
    %v2697 = vmul.f32 %v2681, 0.7978846
    %v2698 = vmul.f32 %v2682, 0.7978846
    %v2699 = vmul.f32 %v2683, 0.7978846
    %v2700 = vmul.f32 %v2684, 0.7978846
    %v2701 = vmul.f32 %v2685, 0.7978846
    %v2702 = vmul.f32 %v2686, 0.7978846
    %v2703 = vmul.f32 %v2687, 0.7978846
    %v2704 = vmul.f32 %v2688, 0.7978846
    %v2705 = vmul.f32 %v2689, 0.7978846
    %v2706 = vmul.f32 %v2690, 0.7978846
    %v2707 = vmul.f32 %v2691, 0.7978846
    %v2708 = vmul.f32 %v2692, 0.7978846
    %v2709 = vmul.f32 %v2693, 0.7978846
    %v2710 = vmul.f32 %v2694, 0.7978846
    %v2711 = vmul.f32 %v2695, 0.7978846
    %v2712 = vmul.f32 %v2696, 0.7978846
    %v2713 = vtanh.pop %v2697
    %v2714 = vtanh.pop %v2698
    %v2715 = vtanh.pop %v2699
    %v2716 = vtanh.pop %v2700
    %v2717 = vtanh.pop %v2701
    %v2718 = vtanh.pop %v2702
    %v2719 = vtanh.pop %v2703
    %v2720 = vtanh.pop %v2704
    %v2721 = vtanh.pop %v2705
    %v2722 = vtanh.pop %v2706
    %v2723 = vtanh.pop %v2707
    %v2724 = vtanh.pop %v2708
    %v2725 = vtanh.pop %v2709
    %v2726 = vtanh.pop %v2710
    %v2727 = vtanh.pop %v2711
    %v2728 = vtanh.pop %v2712
    %v2729 = vadd.f32 %v2713, 1.0
    %v2730 = vadd.f32 %v2714, 1.0
    %v2731 = vadd.f32 %v2715, 1.0
    %v2732 = vadd.f32 %v2716, 1.0
    %v2733 = vadd.f32 %v2717, 1.0
    %v2734 = vadd.f32 %v2718, 1.0
    %v2735 = vadd.f32 %v2719, 1.0
    %v2736 = vadd.f32 %v2720, 1.0
    %v2737 = vadd.f32 %v2721, 1.0
    %v2738 = vadd.f32 %v2722, 1.0
    %v2739 = vadd.f32 %v2723, 1.0
    %v2740 = vadd.f32 %v2724, 1.0
    %v2741 = vadd.f32 %v2725, 1.0
    %v2742 = vadd.f32 %v2726, 1.0
    %v2743 = vadd.f32 %v2727, 1.0
    %v2744 = vadd.f32 %v2728, 1.0
    %v2745 = vmul.f32 %v2729, 0.5
    %v2746 = vmul.f32 %v2730, 0.5
    %v2747 = vmul.f32 %v2731, 0.5
    %v2748 = vmul.f32 %v2732, 0.5
    %v2749 = vmul.f32 %v2733, 0.5
    %v2750 = vmul.f32 %v2734, 0.5
    %v2751 = vmul.f32 %v2735, 0.5
    %v2752 = vmul.f32 %v2736, 0.5
    %v2753 = vmul.f32 %v2737, 0.5
    %v2754 = vmul.f32 %v2738, 0.5
    %v2755 = vmul.f32 %v2739, 0.5
    %v2756 = vmul.f32 %v2740, 0.5
    %v2757 = vmul.f32 %v2741, 0.5
    %v2758 = vmul.f32 %v2742, 0.5
    %v2759 = vmul.f32 %v2743, 0.5
    %v2760 = vmul.f32 %v2744, 0.5
    %v2761 = vmul.f32 %v2617, %v2745
    %v2762 = vmul.f32 %v2618, %v2746
    %v2763 = vmul.f32 %v2619, %v2747
    %v2764 = vmul.f32 %v2620, %v2748
    %v2765 = vmul.f32 %v2621, %v2749
    %v2766 = vmul.f32 %v2622, %v2750
    %v2767 = vmul.f32 %v2623, %v2751
    %v2768 = vmul.f32 %v2624, %v2752
    %v2769 = vmul.f32 %v2625, %v2753
    %v2770 = vmul.f32 %v2626, %v2754
    %v2771 = vmul.f32 %v2627, %v2755
    %v2772 = vmul.f32 %v2628, %v2756
    %v2773 = vmul.f32 %v2629, %v2757
    %v2774 = vmul.f32 %v2630, %v2758
    %v2775 = vmul.f32 %v2631, %v2759
    %v2776 = vmul.f32 %v2632, %v2760
    %v2777 = vld [vmem:[#allocation2 + $0x220] sm:$0x1]
    %v2778 = vlaneseq
    %v2779 = vshrl.u32 %v2778, 7
    %v2780 = vsub.s32 0, %v2779
    %v2781 = vrot.slane %v2777, %v2780
    %v2782 = vmul.f32 %v2761, %v2781
    %v2783 = vmul.f32 %v2762, %v2781
    %v2784 = vmul.f32 %v2763, %v2781
    %v2785 = vmul.f32 %v2764, %v2781
    %v2786 = vmul.f32 %v2765, %v2781
    %v2787 = vmul.f32 %v2766, %v2781
    %v2788 = vmul.f32 %v2767, %v2781
    %v2789 = vmul.f32 %v2768, %v2781
    %v2790 = vmul.f32 %v2769, %v2781
    %v2791 = vmul.f32 %v2770, %v2781
    %v2792 = vmul.f32 %v2771, %v2781
    %v2793 = vmul.f32 %v2772, %v2781
    %v2794 = vmul.f32 %v2773, %v2781
    %v2795 = vmul.f32 %v2774, %v2781
    %v2796 = vmul.f32 %v2775, %v2781
    %v2797 = vmul.f32 %v2776, %v2781
    %v2798 = vsel %vm48, %v2782, 0.0
    %2799 = vadd.xlane.f32.xlu0 %v2798
    %v2800 = vpop.xlane.xlu0 %2799
    %v2801 = vsel %vm48, %v2783, 0.0
    %2802 = vadd.xlane.f32.xlu0 %v2801
    %v2803 = vpop.xlane.xlu0 %2802
    %v2804 = vsel %vm48, %v2784, 0.0
    %2805 = vadd.xlane.f32.xlu0 %v2804
    %v2806 = vpop.xlane.xlu0 %2805
    %v2807 = vsel %vm48, %v2785, 0.0
    %2808 = vadd.xlane.f32.xlu0 %v2807
    %v2809 = vpop.xlane.xlu0 %2808
    %v2810 = vsel %vm48, %v2786, 0.0
    %2811 = vadd.xlane.f32.xlu0 %v2810
    %v2812 = vpop.xlane.xlu0 %2811
    %v2813 = vsel %vm48, %v2787, 0.0
    %2814 = vadd.xlane.f32.xlu0 %v2813
    %v2815 = vpop.xlane.xlu0 %2814
    %v2816 = vsel %vm48, %v2788, 0.0
    %2817 = vadd.xlane.f32.xlu0 %v2816
    %v2818 = vpop.xlane.xlu0 %2817
    %v2819 = vsel %vm48, %v2789, 0.0
    %2820 = vadd.xlane.f32.xlu0 %v2819
    %v2821 = vpop.xlane.xlu0 %2820
    %v2822 = vsel %vm48, %v2790, 0.0
    %2823 = vadd.xlane.f32.xlu0 %v2822
    %v2824 = vpop.xlane.xlu0 %2823
    %v2825 = vsel %vm48, %v2791, 0.0
    %2826 = vadd.xlane.f32.xlu0 %v2825
    %v2827 = vpop.xlane.xlu0 %2826
    %v2828 = vsel %vm48, %v2792, 0.0
    %2829 = vadd.xlane.f32.xlu0 %v2828
    %v2830 = vpop.xlane.xlu0 %2829
    %v2831 = vsel %vm48, %v2793, 0.0
    %2832 = vadd.xlane.f32.xlu0 %v2831
    %v2833 = vpop.xlane.xlu0 %2832
    %v2834 = vsel %vm48, %v2794, 0.0
    %2835 = vadd.xlane.f32.xlu0 %v2834
    %v2836 = vpop.xlane.xlu0 %2835
    %v2837 = vsel %vm48, %v2795, 0.0
    %2838 = vadd.xlane.f32.xlu0 %v2837
    %v2839 = vpop.xlane.xlu0 %2838
    %v2840 = vsel %vm48, %v2796, 0.0
    %2841 = vadd.xlane.f32.xlu0 %v2840
    %v2842 = vpop.xlane.xlu0 %2841
    %v2843 = vsel %vm48, %v2797, 0.0
    %2844 = vadd.xlane.f32.xlu0 %v2843
    %v2845 = vpop.xlane.xlu0 %2844
    %v2846 = vld [vmem:[#allocation2 + $0x228] sm:$0x1]
    %s2848 = vtos %v2846
    %v2849 = vstv %s2848
    %v2851 = vadd.f32 %v2800, %v2849
    %v2852 = vadd.f32 %v2803, %v2849
    %v2853 = vadd.f32 %v2806, %v2849
    %v2854 = vadd.f32 %v2809, %v2849
    %v2855 = vadd.f32 %v2812, %v2849
    %v2856 = vadd.f32 %v2815, %v2849
    %v2857 = vadd.f32 %v2818, %v2849
    %v2858 = vadd.f32 %v2821, %v2849
    %v2859 = vadd.f32 %v2824, %v2849
    %v2860 = vadd.f32 %v2827, %v2849
    %v2861 = vadd.f32 %v2830, %v2849
    %v2862 = vadd.f32 %v2833, %v2849
    %v2863 = vadd.f32 %v2836, %v2849
    %v2864 = vadd.f32 %v2839, %v2849
    %v2865 = vadd.f32 %v2842, %v2849
    %v2866 = vadd.f32 %v2845, %v2849
    %v2883 = vlaneseq
    %v2884 = vshrl.u32 %v2883, 7
    %v2885 = vsub.s32 %v829, %v2884
    %v2886 = vrot.slane %v2851, %v2885
    %v2887 = vlaneseq
    %v2888 = vshrl.u32 %v2887, 7
    %v2889 = vsub.s32 %v850, %v2888
    %v2890 = vrot.slane %v2852, %v2889
    %v2891 = vsel %vm855, %v2890, %v2886
    %v2892 = vlaneseq
    %v2893 = vshrl.u32 %v2892, 7
    %v2894 = vsub.s32 %v829, %v2893
    %v2895 = vrot.slane %v2853, %v2894
    %v2896 = vlaneseq
    %v2897 = vshrl.u32 %v2896, 7
    %v2898 = vsub.s32 %v850, %v2897
    %v2899 = vrot.slane %v2854, %v2898
    %v2900 = vsel %vm855, %v2899, %v2895
    %v2901 = vlaneseq
    %v2902 = vshrl.u32 %v2901, 7
    %v2903 = vsub.s32 %v829, %v2902
    %v2904 = vrot.slane %v2855, %v2903
    %v2905 = vlaneseq
    %v2906 = vshrl.u32 %v2905, 7
    %v2907 = vsub.s32 %v850, %v2906
    %v2908 = vrot.slane %v2856, %v2907
    %v2909 = vsel %vm855, %v2908, %v2904
    %v2910 = vlaneseq
    %v2911 = vshrl.u32 %v2910, 7
    %v2912 = vsub.s32 %v829, %v2911
    %v2913 = vrot.slane %v2857, %v2912
    %v2914 = vlaneseq
    %v2915 = vshrl.u32 %v2914, 7
    %v2916 = vsub.s32 %v850, %v2915
    %v2917 = vrot.slane %v2858, %v2916
    %v2918 = vsel %vm855, %v2917, %v2913
    %v2919 = vlaneseq
    %v2920 = vshrl.u32 %v2919, 7
    %v2921 = vsub.s32 %v829, %v2920
    %v2922 = vrot.slane %v2859, %v2921
    %v2923 = vlaneseq
    %v2924 = vshrl.u32 %v2923, 7
    %v2925 = vsub.s32 %v850, %v2924
    %v2926 = vrot.slane %v2860, %v2925
    %v2927 = vsel %vm855, %v2926, %v2922
    %v2928 = vlaneseq
    %v2929 = vshrl.u32 %v2928, 7
    %v2930 = vsub.s32 %v829, %v2929
    %v2931 = vrot.slane %v2861, %v2930
    %v2932 = vlaneseq
    %v2933 = vshrl.u32 %v2932, 7
    %v2934 = vsub.s32 %v850, %v2933
    %v2935 = vrot.slane %v2862, %v2934
    %v2936 = vsel %vm855, %v2935, %v2931
    %v2937 = vlaneseq
    %v2938 = vshrl.u32 %v2937, 7
    %v2939 = vsub.s32 %v829, %v2938
    %v2940 = vrot.slane %v2863, %v2939
    %v2941 = vlaneseq
    %v2942 = vshrl.u32 %v2941, 7
    %v2943 = vsub.s32 %v850, %v2942
    %v2944 = vrot.slane %v2864, %v2943
    %v2945 = vsel %vm855, %v2944, %v2940
    %v2946 = vlaneseq
    %v2947 = vshrl.u32 %v2946, 7
    %v2948 = vsub.s32 %v829, %v2947
    %v2949 = vrot.slane %v2865, %v2948
    %v2950 = vlaneseq
    %v2951 = vshrl.u32 %v2950, 7
    %v2952 = vsub.s32 %v850, %v2951
    %v2953 = vrot.slane %v2866, %v2952
    %v2954 = vsel %vm855, %v2953, %v2949
    %v2955 = vsel %vm920, %v2900, %v2891
    %v2956 = vsel %vm922, %v2909, %v2955
    %v2957 = vsel %vm924, %v2918, %v2956
    %v2958 = vsel %vm926, %v2927, %v2957
    %v2959 = vsel %vm928, %v2936, %v2958
    %v2960 = vsel %vm930, %v2945, %v2959
    %v2961 = vsel %vm932, %v2954, %v2960
    %v2963 = vsel %vm935, %v2961, -inf
    %2964 = vmax.xlane.f32.xlu0 %v2963
    %v2965 = vpop.xlane.xlu0 %2964
    %v2967 = vlaneseq
    %v2968 = vshrl.u32 %v2967, 7
    %v2969 = vsub.s32 0, %v2968
    %v2970 = vrot.slane %v2965, %v2969
    %v2971 = vlaneseq
    %v2972 = vshrl.u32 %v2971, 7
    %v2973 = vsub.s32 1, %v2972
    %v2974 = vrot.slane %v2965, %v2973
    %v2975 = vlaneseq
    %v2976 = vshrl.u32 %v2975, 7
    %v2977 = vsub.s32 2, %v2976
    %v2978 = vrot.slane %v2965, %v2977
    %v2979 = vlaneseq
    %v2980 = vshrl.u32 %v2979, 7
    %v2981 = vsub.s32 3, %v2980
    %v2982 = vrot.slane %v2965, %v2981
    %v2983 = vlaneseq
    %v2984 = vshrl.u32 %v2983, 7
    %v2985 = vsub.s32 4, %v2984
    %v2986 = vrot.slane %v2965, %v2985
    %v2987 = vlaneseq
    %v2988 = vshrl.u32 %v2987, 7
    %v2989 = vsub.s32 5, %v2988
    %v2990 = vrot.slane %v2965, %v2989
    %v2991 = vlaneseq
    %v2992 = vshrl.u32 %v2991, 7
    %v2993 = vsub.s32 6, %v2992
    %v2994 = vrot.slane %v2965, %v2993
    %v2995 = vlaneseq
    %v2996 = vshrl.u32 %v2995, 7
    %v2997 = vsub.s32 7, %v2996
    %v2998 = vrot.slane %v2965, %v2997
    %vm3007 = vcmp.eq.f32.partialorder %v2851, %v2970
    %vm3008 = vcmp.eq.f32.partialorder %v2852, %v2970
    %vm3009 = vcmp.eq.f32.partialorder %v2853, %v2974
    %vm3010 = vcmp.eq.f32.partialorder %v2854, %v2974
    %vm3011 = vcmp.eq.f32.partialorder %v2855, %v2978
    %vm3012 = vcmp.eq.f32.partialorder %v2856, %v2978
    %vm3013 = vcmp.eq.f32.partialorder %v2857, %v2982
    %vm3014 = vcmp.eq.f32.partialorder %v2858, %v2982
    %vm3015 = vcmp.eq.f32.partialorder %v2859, %v2986
    %vm3016 = vcmp.eq.f32.partialorder %v2860, %v2986
    %vm3017 = vcmp.eq.f32.partialorder %v2861, %v2990
    %vm3018 = vcmp.eq.f32.partialorder %v2862, %v2990
    %vm3019 = vcmp.eq.f32.partialorder %v2863, %v2994
    %vm3020 = vcmp.eq.f32.partialorder %v2864, %v2994
    %vm3021 = vcmp.eq.f32.partialorder %v2865, %v2998
    %vm3022 = vcmp.eq.f32.partialorder %v2866, %v2998
    %v3023 = vsel %vm3007, %v998, 16
    %v3024 = vsel %vm3008, %v1002, 16
    %v3025 = vsel %vm3009, %v998, 16
    %v3026 = vsel %vm3010, %v1002, 16
    %v3027 = vsel %vm3011, %v998, 16
    %v3028 = vsel %vm3012, %v1002, 16
    %v3029 = vsel %vm3013, %v998, 16
    %v3030 = vsel %vm3014, %v1002, 16
    %v3031 = vsel %vm3015, %v998, 16
    %v3032 = vsel %vm3016, %v1002, 16
    %v3033 = vsel %vm3017, %v998, 16
    %v3034 = vsel %vm3018, %v1002, 16
    %v3035 = vsel %vm3019, %v998, 16
    %v3036 = vsel %vm3020, %v1002, 16
    %v3037 = vsel %vm3021, %v998, 16
    %v3038 = vsel %vm3022, %v1002, 16
    %3039 = vset.pattern.permute.xlu0 0
    %3040 = vperm.xlu0 %3039, %v3023
    %v3041 = vpop.permute.xlu0 %3040
    %3042 = vset.pattern.permute.xlu0 0
    %3043 = vperm.xlu0 %3042, %v3024
    %v3044 = vpop.permute.xlu0 %3043
    %3045 = vset.pattern.permute.xlu0 0
    %3046 = vperm.xlu0 %3045, %v3025
    %v3047 = vpop.permute.xlu0 %3046
    %3048 = vset.pattern.permute.xlu0 0
    %3049 = vperm.xlu0 %3048, %v3026
    %v3050 = vpop.permute.xlu0 %3049
    %3051 = vset.pattern.permute.xlu0 0
    %3052 = vperm.xlu0 %3051, %v3027
    %v3053 = vpop.permute.xlu0 %3052
    %3054 = vset.pattern.permute.xlu0 0
    %3055 = vperm.xlu0 %3054, %v3028
    %v3056 = vpop.permute.xlu0 %3055
    %3057 = vset.pattern.permute.xlu0 0
    %3058 = vperm.xlu0 %3057, %v3029
    %v3059 = vpop.permute.xlu0 %3058
    %3060 = vset.pattern.permute.xlu0 0
    %3061 = vperm.xlu0 %3060, %v3030
    %v3062 = vpop.permute.xlu0 %3061
    %3063 = vset.pattern.permute.xlu0 0
    %3064 = vperm.xlu0 %3063, %v3031
    %v3065 = vpop.permute.xlu0 %3064
    %3066 = vset.pattern.permute.xlu0 0
    %3067 = vperm.xlu0 %3066, %v3032
    %v3068 = vpop.permute.xlu0 %3067
    %3069 = vset.pattern.permute.xlu0 0
    %3070 = vperm.xlu0 %3069, %v3033
    %v3071 = vpop.permute.xlu0 %3070
    %3072 = vset.pattern.permute.xlu0 0
    %3073 = vperm.xlu0 %3072, %v3034
    %v3074 = vpop.permute.xlu0 %3073
    %3075 = vset.pattern.permute.xlu0 0
    %3076 = vperm.xlu0 %3075, %v3035
    %v3077 = vpop.permute.xlu0 %3076
    %3078 = vset.pattern.permute.xlu0 0
    %3079 = vperm.xlu0 %3078, %v3036
    %v3080 = vpop.permute.xlu0 %3079
    %3081 = vset.pattern.permute.xlu0 0
    %3082 = vperm.xlu0 %3081, %v3037
    %v3083 = vpop.permute.xlu0 %3082
    %3084 = vset.pattern.permute.xlu0 0
    %3085 = vperm.xlu0 %3084, %v3038
    %v3086 = vpop.permute.xlu0 %3085
    %v3087 = vlaneseq
    %v3088 = vshrl.u32 %v3087, 7
    %v3089 = vsub.s32 %v829, %v3088
    %v3090 = vrot.slane %v3041, %v3089
    %v3091 = vlaneseq
    %v3092 = vshrl.u32 %v3091, 7
    %v3093 = vsub.s32 %v850, %v3092
    %v3094 = vrot.slane %v3044, %v3093
    %v3095 = vsel %vm855, %v3094, %v3090
    %v3096 = vlaneseq
    %v3097 = vshrl.u32 %v3096, 7
    %v3098 = vsub.s32 %v829, %v3097
    %v3099 = vrot.slane %v3047, %v3098
    %v3100 = vlaneseq
    %v3101 = vshrl.u32 %v3100, 7
    %v3102 = vsub.s32 %v850, %v3101
    %v3103 = vrot.slane %v3050, %v3102
    %v3104 = vsel %vm855, %v3103, %v3099
    %v3105 = vlaneseq
    %v3106 = vshrl.u32 %v3105, 7
    %v3107 = vsub.s32 %v829, %v3106
    %v3108 = vrot.slane %v3053, %v3107
    %v3109 = vlaneseq
    %v3110 = vshrl.u32 %v3109, 7
    %v3111 = vsub.s32 %v850, %v3110
    %v3112 = vrot.slane %v3056, %v3111
    %v3113 = vsel %vm855, %v3112, %v3108
    %v3114 = vlaneseq
    %v3115 = vshrl.u32 %v3114, 7
    %v3116 = vsub.s32 %v829, %v3115
    %v3117 = vrot.slane %v3059, %v3116
    %v3118 = vlaneseq
    %v3119 = vshrl.u32 %v3118, 7
    %v3120 = vsub.s32 %v850, %v3119
    %v3121 = vrot.slane %v3062, %v3120
    %v3122 = vsel %vm855, %v3121, %v3117
    %v3123 = vlaneseq
    %v3124 = vshrl.u32 %v3123, 7
    %v3125 = vsub.s32 %v829, %v3124
    %v3126 = vrot.slane %v3065, %v3125
    %v3127 = vlaneseq
    %v3128 = vshrl.u32 %v3127, 7
    %v3129 = vsub.s32 %v850, %v3128
    %v3130 = vrot.slane %v3068, %v3129
    %v3131 = vsel %vm855, %v3130, %v3126
    %v3132 = vlaneseq
    %v3133 = vshrl.u32 %v3132, 7
    %v3134 = vsub.s32 %v829, %v3133
    %v3135 = vrot.slane %v3071, %v3134
    %v3136 = vlaneseq
    %v3137 = vshrl.u32 %v3136, 7
    %v3138 = vsub.s32 %v850, %v3137
    %v3139 = vrot.slane %v3074, %v3138
    %v3140 = vsel %vm855, %v3139, %v3135
    %v3141 = vlaneseq
    %v3142 = vshrl.u32 %v3141, 7
    %v3143 = vsub.s32 %v829, %v3142
    %v3144 = vrot.slane %v3077, %v3143
    %v3145 = vlaneseq
    %v3146 = vshrl.u32 %v3145, 7
    %v3147 = vsub.s32 %v850, %v3146
    %v3148 = vrot.slane %v3080, %v3147
    %v3149 = vsel %vm855, %v3148, %v3144
    %v3150 = vlaneseq
    %v3151 = vshrl.u32 %v3150, 7
    %v3152 = vsub.s32 %v829, %v3151
    %v3153 = vrot.slane %v3083, %v3152
    %v3154 = vlaneseq
    %v3155 = vshrl.u32 %v3154, 7
    %v3156 = vsub.s32 %v850, %v3155
    %v3157 = vrot.slane %v3086, %v3156
    %v3158 = vsel %vm855, %v3157, %v3153
    %v3159 = vsel %vm920, %v3104, %v3095
    %v3160 = vsel %vm922, %v3113, %v3159
    %v3161 = vsel %vm924, %v3122, %v3160
    %v3162 = vsel %vm926, %v3131, %v3161
    %v3163 = vsel %vm928, %v3140, %v3162
    %v3164 = vsel %vm930, %v3149, %v3163
    %v3165 = vsel %vm932, %v3158, %v3164
    %v3166 = vsel %vm935, %v3165, 2147483647
    %v3167 = vand.u32 %v3166, 65535
    %v3168 = vshra.s32 %v3166, 16
    %v3169 = vcvt.s32.f32 %v3167
    %v3170 = vcvt.s32.f32 %v3168
    %3171 = vmin.xlane.f32.xlu0 %v3170
    %v3172 = vpop.xlane.xlu0 %3171
    %vm3173 = vcmp.eq.f32.partialorder %v3170, %v3172
    %v3174 = vsel %vm3173, %v3169, inf
    %3175 = vmin.xlane.f32.xlu0 %v3174
    %v3176 = vpop.xlane.xlu0 %3175
    %v3177 = vcvt.f32.s32 %v3176
    %v3178 = vcvt.f32.s32 %v3172
    %v3179 = vshll.u32 %v3178, 16
    %v3180 = vadd.s32 %v3179, %v3177
    %vm3181 = vcmp.eq.s32.totalorder %v829, %v3180
    %v3182 = vsel %vm3181, 1, 0
    %v3183 = vcvt.s32.f32 %v3182
    %v3184 = vld [vmem:[#allocation2 + $0x1e8] sm:$0xff]
    %v3185 = vld [vmem:[#allocation2 + $0x1f0] sm:$0xff]
    %v3187 = vsel %vm935, %v3183, 0
    %3189 = vmatprep.subr.mxu0 0.0
    %3190 = vmatpush1.msra.mxu0 %v3184
    %3191 = vmatprep.subr.mxu0 0.0
    %3192 = vmatpush1.msra.mxu0 %v3185
    %3193 = vmatprep.subr.mxu0 0.0
    %3194 = vmatpush1.msra.mxu0 0.0
    %3195 = vmatprep.subr.mxu0 0.0
    %3196 = vmatpush1.msra.mxu0 0.0
    %3197 = vmatprep.subr.mxu0 0.0
    %3198 = vmatpush1.msra.mxu0 0.0
    %3199 = vmatprep.subr.mxu0 0.0
    %3200 = vmatpush1.msra.mxu0 0.0
    %3201 = vmatprep.subr.mxu0 0.0
    %3202 = vmatpush1.msra.mxu0 0.0
    %3203 = vmatprep.subr.mxu0 0.0
    %3204 = vmatpush1.msra.mxu0 0.0
    %3205 = vmatprep.subr.mxu0 0.0
    %3206 = vmatpush1.msra.mxu0 0.0
    %3207 = vmatprep.subr.mxu0 0.0
    %3208 = vmatpush1.msra.mxu0 0.0
    %3209 = vmatprep.subr.mxu0 0.0
    %3210 = vmatpush1.msra.mxu0 0.0
    %3211 = vmatprep.subr.mxu0 0.0
    %3212 = vmatpush1.msra.mxu0 0.0
    %3213 = vmatprep.subr.mxu0 0.0
    %3214 = vmatpush1.msra.mxu0 0.0
    %3215 = vmatprep.subr.mxu0 0.0
    %3216 = vmatpush1.msra.mxu0 0.0
    %3217 = vmatprep.subr.mxu0 0.0
    %3218 = vmatpush1.msra.mxu0 0.0
    %3219 = vmatprep.subr.mxu0 0.0
    %3220 = vmatpush1.msra.mxu0 0.0
    %3221 = vmatprep.subr.mxu0 0.0
    %3222 = vmatpush1.msra.mxu0 0.0
    %3223 = vmatprep.subr.mxu0 0.0
    %3224 = vmatpush1.msra.mxu0 0.0
    %3225 = vmatprep.subr.mxu0 0.0
    %3226 = vmatpush1.msra.mxu0 0.0
    %3227 = vmatprep.subr.mxu0 0.0
    %3228 = vmatpush1.msra.mxu0 0.0
    %3229 = vmatprep.subr.mxu0 0.0
    %3230 = vmatpush1.msra.mxu0 0.0
    %3231 = vmatprep.subr.mxu0 0.0
    %3232 = vmatpush1.msra.mxu0 0.0
    %3233 = vmatprep.subr.mxu0 0.0
    %3234 = vmatpush1.msra.mxu0 0.0
    %3235 = vmatprep.subr.mxu0 0.0
    %3236 = vmatpush1.msra.mxu0 0.0
    %3237 = vmatprep.subr.mxu0 0.0
    %3238 = vmatpush1.msra.mxu0 0.0
    %3239 = vmatprep.subr.mxu0 0.0
    %3240 = vmatpush1.msra.mxu0 0.0
    %3241 = vmatprep.subr.mxu0 0.0
    %3242 = vmatpush1.msra.mxu0 0.0
    %3243 = vmatprep.subr.mxu0 0.0
    %3244 = vmatpush1.msra.mxu0 0.0
    %3245 = vmatprep.subr.mxu0 0.0
    %3246 = vmatpush1.msra.mxu0 0.0
    %3247 = vmatprep.subr.mxu0 0.0
    %3248 = vmatpush1.msra.mxu0 0.0
    %3249 = vmatprep.subr.mxu0 0.0
    %3250 = vmatpush1.msra.mxu0 0.0
    %3251 = vmatprep.subr.mxu0 0.0
    %3252 = vmatpush1.msra.mxu0 0.0
    %3253 = vmatprep.mubr.f32.mxu0 0.0
    %3254 = vmatmul.mubr.f32.gmra.mrb[0].mxu0 %v3187
    %v3255 = vpop.f32.mrb[0].mxu0
    %v3256 = vadd.f32 0.0, %v3255
    %v3257 = vpop.f32.mrb[0].mxu0
    %3258 = vdwg.mxu0
    %v3259 = vxor.u32 %v2965, 2147483648
    %v3260 = vmul.f32 %v3259, 1.442695
    %v3261 = vpow.pop %v3260
    %v3262 = vadd.f32 %v3261, 1.0
    %v3263 = vrcp.pop %v3262
    %v3264 = vmul.f32 1.0, %v3263
    %v3265 = vmul.f32 %v3256, %v3264
    %v3266 = vld [vmem:[#allocation2 + $0xa0] sm:$0xff]
    %v3267 = vld [vmem:[#allocation2 + $0xa8] sm:$0xff]
    %v3268 = vld [vmem:[#allocation2 + $0xb0] sm:$0xff]
    %v3269 = vld [vmem:[#allocation2 + $0xb8] sm:$0xff]
    %v3270 = vld [vmem:[#allocation2 + $0x230] sm:$0x1]
    %v3271 = vlaneseq
    %v3272 = vshrl.u32 %v3271, 7
    %v3273 = vsub.s32 0, %v3272
    %v3274 = vrot.slane %v3270, %v3273
    %v3276 = vsel %vm48, %v3265, 0
    %3278 = vmatprep.subr.mxu0 0.0
    %3279 = vmatpush1.msra.mxu0 %v3266
    %3280 = vmatprep.subr.mxu0 0.0
    %3281 = vmatpush1.msra.mxu0 %v3267
    %3282 = vmatprep.subr.mxu0 0.0
    %3283 = vmatpush1.msra.mxu0 %v3268
    %3284 = vmatprep.subr.mxu0 0.0
    %3285 = vmatpush1.msra.mxu0 %v3269
    %3286 = vmatprep.subr.mxu0 0.0
    %3287 = vmatpush1.msra.mxu0 0.0
    %3288 = vmatprep.subr.mxu0 0.0
    %3289 = vmatpush1.msra.mxu0 0.0
    %3290 = vmatprep.subr.mxu0 0.0
    %3291 = vmatpush1.msra.mxu0 0.0
    %3292 = vmatprep.subr.mxu0 0.0
    %3293 = vmatpush1.msra.mxu0 0.0
    %3294 = vmatprep.subr.mxu0 0.0
    %3295 = vmatpush1.msra.mxu0 0.0
    %3296 = vmatprep.subr.mxu0 0.0
    %3297 = vmatpush1.msra.mxu0 0.0
    %3298 = vmatprep.subr.mxu0 0.0
    %3299 = vmatpush1.msra.mxu0 0.0
    %3300 = vmatprep.subr.mxu0 0.0
    %3301 = vmatpush1.msra.mxu0 0.0
    %3302 = vmatprep.subr.mxu0 0.0
    %3303 = vmatpush1.msra.mxu0 0.0
    %3304 = vmatprep.subr.mxu0 0.0
    %3305 = vmatpush1.msra.mxu0 0.0
    %3306 = vmatprep.subr.mxu0 0.0
    %3307 = vmatpush1.msra.mxu0 0.0
    %3308 = vmatprep.subr.mxu0 0.0
    %3309 = vmatpush1.msra.mxu0 0.0
    %3310 = vmatprep.subr.mxu0 0.0
    %3311 = vmatpush1.msra.mxu0 0.0
    %3312 = vmatprep.subr.mxu0 0.0
    %3313 = vmatpush1.msra.mxu0 0.0
    %3314 = vmatprep.subr.mxu0 0.0
    %3315 = vmatpush1.msra.mxu0 0.0
    %3316 = vmatprep.subr.mxu0 0.0
    %3317 = vmatpush1.msra.mxu0 0.0
    %3318 = vmatprep.subr.mxu0 0.0
    %3319 = vmatpush1.msra.mxu0 0.0
    %3320 = vmatprep.subr.mxu0 0.0
    %3321 = vmatpush1.msra.mxu0 0.0
    %3322 = vmatprep.subr.mxu0 0.0
    %3323 = vmatpush1.msra.mxu0 0.0
    %3324 = vmatprep.subr.mxu0 0.0
    %3325 = vmatpush1.msra.mxu0 0.0
    %3326 = vmatprep.subr.mxu0 0.0
    %3327 = vmatpush1.msra.mxu0 0.0
    %3328 = vmatprep.subr.mxu0 0.0
    %3329 = vmatpush1.msra.mxu0 0.0
    %3330 = vmatprep.subr.mxu0 0.0
    %3331 = vmatpush1.msra.mxu0 0.0
    %3332 = vmatprep.subr.mxu0 0.0
    %3333 = vmatpush1.msra.mxu0 0.0
    %3334 = vmatprep.subr.mxu0 0.0
    %3335 = vmatpush1.msra.mxu0 0.0
    %3336 = vmatprep.subr.mxu0 0.0
    %3337 = vmatpush1.msra.mxu0 0.0
    %3338 = vmatprep.subr.mxu0 0.0
    %3339 = vmatpush1.msra.mxu0 0.0
    %3340 = vmatprep.subr.mxu0 0.0
    %3341 = vmatpush1.msra.mxu0 0.0
    %3342 = vmatprep.mubr.f32.mxu0 0.0
    %3343 = vmatmul.mubr.f32.gmra.mrb[0].mxu0 %v3276
    %v3344 = vpop.f32.mrb[0].mxu0
    %v3345 = vadd.f32 %v3274, %v3344
    %v3346 = vpop.f32.mrb[0].mxu0
    %3347 = vdwg.mxu0
    %v3348 = vmul.f32 %v3345, %v3345
    %v3349 = vmul.f32 %v3345, %v3348
    %v3350 = vmul.f32 %v3349, 0.044715
    %v3351 = vadd.f32 %v3345, %v3350
    %v3352 = vmul.f32 %v3351, 0.7978846
    %v3353 = vtanh.pop %v3352
    %v3354 = vadd.f32 %v3353, 1.0
    %v3355 = vmul.f32 %v3354, 0.5
    %v3356 = vmul.f32 %v3345, %v3355
    %v3357 = vld [vmem:[#allocation2 + $0xc0] sm:$0xff]
    %v3358 = vld [vmem:[#allocation2 + $0xc8] sm:$0xff]
    %v3359 = vld [vmem:[#allocation2 + $0xd0] sm:$0xff]
    %v3360 = vld [vmem:[#allocation2 + $0xd8] sm:$0xff]
    %v3361 = vld [vmem:[#allocation2 + $0x238] sm:$0x1]
    %v3362 = vlaneseq
    %v3363 = vshrl.u32 %v3362, 7
    %v3364 = vsub.s32 0, %v3363
    %v3365 = vrot.slane %v3361, %v3364
    %v3367 = vsel %vm48, %v3356, 0
    %3369 = vmatprep.subr.mxu0 0.0
    %3370 = vmatpush1.msra.mxu0 %v3357
    %3371 = vmatprep.subr.mxu0 0.0
    %3372 = vmatpush1.msra.mxu0 %v3358
    %3373 = vmatprep.subr.mxu0 0.0
    %3374 = vmatpush1.msra.mxu0 %v3359
    %3375 = vmatprep.subr.mxu0 0.0
    %3376 = vmatpush1.msra.mxu0 %v3360
    %3377 = vmatprep.subr.mxu0 0.0
    %3378 = vmatpush1.msra.mxu0 0.0
    %3379 = vmatprep.subr.mxu0 0.0
    %3380 = vmatpush1.msra.mxu0 0.0
    %3381 = vmatprep.subr.mxu0 0.0
    %3382 = vmatpush1.msra.mxu0 0.0
    %3383 = vmatprep.subr.mxu0 0.0
    %3384 = vmatpush1.msra.mxu0 0.0
    %3385 = vmatprep.subr.mxu0 0.0
    %3386 = vmatpush1.msra.mxu0 0.0
    %3387 = vmatprep.subr.mxu0 0.0
    %3388 = vmatpush1.msra.mxu0 0.0
    %3389 = vmatprep.subr.mxu0 0.0
    %3390 = vmatpush1.msra.mxu0 0.0
    %3391 = vmatprep.subr.mxu0 0.0
    %3392 = vmatpush1.msra.mxu0 0.0
    %3393 = vmatprep.subr.mxu0 0.0
    %3394 = vmatpush1.msra.mxu0 0.0
    %3395 = vmatprep.subr.mxu0 0.0
    %3396 = vmatpush1.msra.mxu0 0.0
    %3397 = vmatprep.subr.mxu0 0.0
    %3398 = vmatpush1.msra.mxu0 0.0
    %3399 = vmatprep.subr.mxu0 0.0
    %3400 = vmatpush1.msra.mxu0 0.0
    %3401 = vmatprep.subr.mxu0 0.0
    %3402 = vmatpush1.msra.mxu0 0.0
    %3403 = vmatprep.subr.mxu0 0.0
    %3404 = vmatpush1.msra.mxu0 0.0
    %3405 = vmatprep.subr.mxu0 0.0
    %3406 = vmatpush1.msra.mxu0 0.0
    %3407 = vmatprep.subr.mxu0 0.0
    %3408 = vmatpush1.msra.mxu0 0.0
    %3409 = vmatprep.subr.mxu0 0.0
    %3410 = vmatpush1.msra.mxu0 0.0
    %3411 = vmatprep.subr.mxu0 0.0
    %3412 = vmatpush1.msra.mxu0 0.0
    %3413 = vmatprep.subr.mxu0 0.0
    %3414 = vmatpush1.msra.mxu0 0.0
    %3415 = vmatprep.subr.mxu0 0.0
    %3416 = vmatpush1.msra.mxu0 0.0
    %3417 = vmatprep.subr.mxu0 0.0
    %3418 = vmatpush1.msra.mxu0 0.0
    %3419 = vmatprep.subr.mxu0 0.0
    %3420 = vmatpush1.msra.mxu0 0.0
    %3421 = vmatprep.subr.mxu0 0.0
    %3422 = vmatpush1.msra.mxu0 0.0
    %3423 = vmatprep.subr.mxu0 0.0
    %3424 = vmatpush1.msra.mxu0 0.0
    %3425 = vmatprep.subr.mxu0 0.0
    %3426 = vmatpush1.msra.mxu0 0.0
    %3427 = vmatprep.subr.mxu0 0.0
    %3428 = vmatpush1.msra.mxu0 0.0
    %3429 = vmatprep.subr.mxu0 0.0
    %3430 = vmatpush1.msra.mxu0 0.0
    %3431 = vmatprep.subr.mxu0 0.0
    %3432 = vmatpush1.msra.mxu0 0.0
    %3433 = vmatprep.mubr.f32.mxu0 0.0
    %3434 = vmatmul.mubr.f32.gmra.mrb[0].mxu0 %v3367
    %v3435 = vpop.f32.mrb[0].mxu0
    %v3436 = vadd.f32 %v3365, %v3435
    %v3437 = vpop.f32.mrb[0].mxu0
    %3438 = vdwg.mxu0
    %v3439 = vld [vmem:[#allocation2 + $0x40] sm:$0xff]
    %v3440 = vld [vmem:[#allocation2 + $0x48] sm:$0xff]
    %v3441 = vld [vmem:[#allocation2 + $0x50] sm:$0xff]
    %v3442 = vld [vmem:[#allocation2 + $0x58] sm:$0xff]
    %v3443 = vld [vmem:[#allocation2 + $0x208] sm:$0x1]
    %v3444 = vlaneseq
    %v3445 = vshrl.u32 %v3444, 7
    %v3446 = vsub.s32 0, %v3445
    %v3447 = vrot.slane %v3443, %v3446
    %v3449 = vsel %vm48, %v3436, 0
    %3451 = vmatprep.subr.mxu0 0.0
    %3452 = vmatpush1.msra.mxu0 %v3439
    %3453 = vmatprep.subr.mxu0 0.0
    %3454 = vmatpush1.msra.mxu0 %v3440
    %3455 = vmatprep.subr.mxu0 0.0
    %3456 = vmatpush1.msra.mxu0 %v3441
    %3457 = vmatprep.subr.mxu0 0.0
    %3458 = vmatpush1.msra.mxu0 %v3442
    %3459 = vmatprep.subr.mxu0 0.0
    %3460 = vmatpush1.msra.mxu0 0.0
    %3461 = vmatprep.subr.mxu0 0.0
    %3462 = vmatpush1.msra.mxu0 0.0
    %3463 = vmatprep.subr.mxu0 0.0
    %3464 = vmatpush1.msra.mxu0 0.0
    %3465 = vmatprep.subr.mxu0 0.0
    %3466 = vmatpush1.msra.mxu0 0.0
    %3467 = vmatprep.subr.mxu0 0.0
    %3468 = vmatpush1.msra.mxu0 0.0
    %3469 = vmatprep.subr.mxu0 0.0
    %3470 = vmatpush1.msra.mxu0 0.0
    %3471 = vmatprep.subr.mxu0 0.0
    %3472 = vmatpush1.msra.mxu0 0.0
    %3473 = vmatprep.subr.mxu0 0.0
    %3474 = vmatpush1.msra.mxu0 0.0
    %3475 = vmatprep.subr.mxu0 0.0
    %3476 = vmatpush1.msra.mxu0 0.0
    %3477 = vmatprep.subr.mxu0 0.0
    %3478 = vmatpush1.msra.mxu0 0.0
    %3479 = vmatprep.subr.mxu0 0.0
    %3480 = vmatpush1.msra.mxu0 0.0
    %3481 = vmatprep.subr.mxu0 0.0
    %3482 = vmatpush1.msra.mxu0 0.0
    %3483 = vmatprep.subr.mxu0 0.0
    %3484 = vmatpush1.msra.mxu0 0.0
    %3485 = vmatprep.subr.mxu0 0.0
    %3486 = vmatpush1.msra.mxu0 0.0
    %3487 = vmatprep.subr.mxu0 0.0
    %3488 = vmatpush1.msra.mxu0 0.0
    %3489 = vmatprep.subr.mxu0 0.0
    %3490 = vmatpush1.msra.mxu0 0.0
    %3491 = vmatprep.subr.mxu0 0.0
    %3492 = vmatpush1.msra.mxu0 0.0
    %3493 = vmatprep.subr.mxu0 0.0
    %3494 = vmatpush1.msra.mxu0 0.0
    %3495 = vmatprep.subr.mxu0 0.0
    %3496 = vmatpush1.msra.mxu0 0.0
    %3497 = vmatprep.subr.mxu0 0.0
    %3498 = vmatpush1.msra.mxu0 0.0
    %3499 = vmatprep.subr.mxu0 0.0
    %3500 = vmatpush1.msra.mxu0 0.0
    %3501 = vmatprep.subr.mxu0 0.0
    %3502 = vmatpush1.msra.mxu0 0.0
    %3503 = vmatprep.subr.mxu0 0.0
    %3504 = vmatpush1.msra.mxu0 0.0
    %3505 = vmatprep.subr.mxu0 0.0
    %3506 = vmatpush1.msra.mxu0 0.0
    %3507 = vmatprep.subr.mxu0 0.0
    %3508 = vmatpush1.msra.mxu0 0.0
    %3509 = vmatprep.subr.mxu0 0.0
    %3510 = vmatpush1.msra.mxu0 0.0
    %3511 = vmatprep.subr.mxu0 0.0
    %3512 = vmatpush1.msra.mxu0 0.0
    %3513 = vmatprep.subr.mxu0 0.0
    %3514 = vmatpush1.msra.mxu0 0.0
    %3515 = vmatprep.mubr.f32.mxu0 0.0
    %3516 = vmatmul.mubr.f32.gmra.mrb[0].mxu0 %v3449
    %v3517 = vpop.f32.mrb[0].mxu0
    %v3518 = vadd.f32 %v3447, %v3517
    %v3519 = vpop.f32.mrb[0].mxu0
    %3520 = vdwg.mxu0
    %3521 = vrot.lane.b32.xlu0 %v2334, 96
    %v3522 = vpop.permute.xlu0 %3521
    %v3524 = vmul.f32 %v2334, %v3522
    %3526 = vrot.lane.b32.xlu0 %v3518, 32
    %v3527 = vpop.permute.xlu0 %3526
    %v3529 = vmul.f32 %v2334, %v3527
    %v3530 = vmul.f32 %v2334, %v119
    %v3531 = vld [vmem:[#allocation2 + $0x1c0] sm:$0xff]
    %v3532 = vld [vmem:[#allocation2 + $0x1c8] sm:$0xff]
    %v3533 = vld [vmem:[#allocation2 + $0x1d0] sm:$0xff]
    %v3534 = vld [vmem:[#allocation2 + $0x1d8] sm:$0xff]
    %3538 = vrot.lane.b32.xlu0 %v3524, 96
    %v3539 = vpop.permute.xlu0 %3538
    %3540 = vrot.lane.b32.xlu0 %v3529, 96
    %v3541 = vpop.permute.xlu0 %3540
    %3542 = vrot.lane.b32.xlu0 %v3530, 96
    %v3543 = vpop.permute.xlu0 %3542
    %v3544 = vsel %vm48, %v3539, 0
    %v3546 = vsel %vm48, %v3541, 0
    %v3548 = vsel %vm48, %v3543, 0
    %3550 = vmatprep.subr.mxu0 0.0
    %3551 = vmatpush1.msra.mxu0 %v3531
    %3552 = vmatprep.subr.mxu0 0.0
    %3553 = vmatpush1.msra.mxu0 %v3532
    %3554 = vmatprep.subr.mxu0 0.0
    %3555 = vmatpush1.msra.mxu0 %v3533
    %3556 = vmatprep.subr.mxu0 0.0
    %3557 = vmatpush1.msra.mxu0 %v3534
    %3558 = vmatprep.subr.mxu0 0.0
    %3559 = vmatpush1.msra.mxu0 0.0
    %3560 = vmatprep.subr.mxu0 0.0
    %3561 = vmatpush1.msra.mxu0 0.0
    %3562 = vmatprep.subr.mxu0 0.0
    %3563 = vmatpush1.msra.mxu0 0.0
    %3564 = vmatprep.subr.mxu0 0.0
    %3565 = vmatpush1.msra.mxu0 0.0
    %3566 = vmatprep.subr.mxu0 0.0
    %3567 = vmatpush1.msra.mxu0 0.0
    %3568 = vmatprep.subr.mxu0 0.0
    %3569 = vmatpush1.msra.mxu0 0.0
    %3570 = vmatprep.subr.mxu0 0.0
    %3571 = vmatpush1.msra.mxu0 0.0
    %3572 = vmatprep.subr.mxu0 0.0
    %3573 = vmatpush1.msra.mxu0 0.0
    %3574 = vmatprep.subr.mxu0 0.0
    %3575 = vmatpush1.msra.mxu0 0.0
    %3576 = vmatprep.subr.mxu0 0.0
    %3577 = vmatpush1.msra.mxu0 0.0
    %3578 = vmatprep.subr.mxu0 0.0
    %3579 = vmatpush1.msra.mxu0 0.0
    %3580 = vmatprep.subr.mxu0 0.0
    %3581 = vmatpush1.msra.mxu0 0.0
    %3582 = vmatprep.subr.mxu0 0.0
    %3583 = vmatpush1.msra.mxu0 0.0
    %3584 = vmatprep.subr.mxu0 0.0
    %3585 = vmatpush1.msra.mxu0 0.0
    %3586 = vmatprep.subr.mxu0 0.0
    %3587 = vmatpush1.msra.mxu0 0.0
    %3588 = vmatprep.subr.mxu0 0.0
    %3589 = vmatpush1.msra.mxu0 0.0
    %3590 = vmatprep.subr.mxu0 0.0
    %3591 = vmatpush1.msra.mxu0 0.0
    %3592 = vmatprep.subr.mxu0 0.0
    %3593 = vmatpush1.msra.mxu0 0.0
    %3594 = vmatprep.subr.mxu0 0.0
    %3595 = vmatpush1.msra.mxu0 0.0
    %3596 = vmatprep.subr.mxu0 0.0
    %3597 = vmatpush1.msra.mxu0 0.0
    %3598 = vmatprep.subr.mxu0 0.0
    %3599 = vmatpush1.msra.mxu0 0.0
    %3600 = vmatprep.subr.mxu0 0.0
    %3601 = vmatpush1.msra.mxu0 0.0
    %3602 = vmatprep.subr.mxu0 0.0
    %3603 = vmatpush1.msra.mxu0 0.0
    %3604 = vmatprep.subr.mxu0 0.0
    %3605 = vmatpush1.msra.mxu0 0.0
    %3606 = vmatprep.subr.mxu0 0.0
    %3607 = vmatpush1.msra.mxu0 0.0
    %3608 = vmatprep.subr.mxu0 0.0
    %3609 = vmatpush1.msra.mxu0 0.0
    %3610 = vmatprep.subr.mxu0 0.0
    %3611 = vmatpush1.msra.mxu0 0.0
    %3612 = vmatprep.subr.mxu0 0.0
    %3613 = vmatpush1.msra.mxu0 0.0
    %3614 = vmatprep.mubr.f32.mxu0 0.0
    %3615 = vmatmul.mubr.f32.gmra.mrb[0].mxu0 %v3544
    %v3616 = vpop.f32.mrb[0].mxu0
    %v3617 = vadd.f32 0.0, %v3616
    %v3618 = vpop.f32.mrb[0].mxu0
    %3619 = vmatprep.mubr.f32.mxu0 0.0
    %3620 = vmatmul.mubr.f32.gmra.mrb[0].mxu0 %v3546
    %v3621 = vpop.f32.mrb[0].mxu0
    %v3622 = vadd.f32 0.0, %v3621
    %v3623 = vpop.f32.mrb[0].mxu0
    %3624 = vmatprep.mubr.f32.mxu0 0.0
    %3625 = vmatmul.mubr.f32.gmra.mrb[0].mxu0 %v3548
    %v3626 = vpop.f32.mrb[0].mxu0
    %v3627 = vadd.f32 0.0, %v3626
    %v3628 = vpop.f32.mrb[0].mxu0
    %3629 = vdwg.mxu0
    %v3630 = vmul.f32 %v3617, 0.35355338
    %v3631 = vmul.f32 %v3622, 0.35355338
    %v3632 = vmul.f32 %v3627, 0.35355338
    %v3633 = vmax.f32 %v3630, %v3631
    %v3634 = vmax.f32 %v3633, %v3632
    %v3635 = vsub.f32 %v3630, %v3634
    %v3636 = vmul.f32 %v3635, 1.442695
    %v3637 = vpow.pop %v3636
    %v3638 = vsub.f32 %v3631, %v3634
    %v3639 = vmul.f32 %v3638, 1.442695
    %v3640 = vpow.pop %v3639
    %v3641 = vsub.f32 %v3632, %v3634
    %v3642 = vmul.f32 %v3641, 1.442695
    %v3643 = vpow.pop %v3642
    %v3644 = vadd.f32 %v3637, %v3640
    %v3645 = vadd.f32 %v3644, %v3643
    %v3646 = vrcp.pop %v3645
    %v3647 = vld [vmem:[#allocation2 + $0x1e0] sm:$0xf]
    %v3649 = vsel %vm1628, %v3637, 0
    %v3652 = vsel %vm1628, %v3640, 0
    %v3655 = vsel %vm1628, %v3643, 0
    %v3658 = vsel %vm1628, %v3646, 0
    %v3661 = vsel %vm1641, %v3647, 0
    %3663 = vmatprep.subr.mxu0 0.0
    %3664 = vmatpush1.msra.mxu0 %v3661
    %3665 = vmatprep.subr.mxu0 0.0
    %3666 = vmatpush1.msra.mxu0 0.0
    %3667 = vmatprep.subr.mxu0 0.0
    %3668 = vmatpush1.msra.mxu0 0.0
    %3669 = vmatprep.subr.mxu0 0.0
    %3670 = vmatpush1.msra.mxu0 0.0
    %3671 = vmatprep.subr.mxu0 0.0
    %3672 = vmatpush1.msra.mxu0 0.0
    %3673 = vmatprep.subr.mxu0 0.0
    %3674 = vmatpush1.msra.mxu0 0.0
    %3675 = vmatprep.subr.mxu0 0.0
    %3676 = vmatpush1.msra.mxu0 0.0
    %3677 = vmatprep.subr.mxu0 0.0
    %3678 = vmatpush1.msra.mxu0 0.0
    %3679 = vmatprep.subr.mxu0 0.0
    %3680 = vmatpush1.msra.mxu0 0.0
    %3681 = vmatprep.subr.mxu0 0.0
    %3682 = vmatpush1.msra.mxu0 0.0
    %3683 = vmatprep.subr.mxu0 0.0
    %3684 = vmatpush1.msra.mxu0 0.0
    %3685 = vmatprep.subr.mxu0 0.0
    %3686 = vmatpush1.msra.mxu0 0.0
    %3687 = vmatprep.subr.mxu0 0.0
    %3688 = vmatpush1.msra.mxu0 0.0
    %3689 = vmatprep.subr.mxu0 0.0
    %3690 = vmatpush1.msra.mxu0 0.0
    %3691 = vmatprep.subr.mxu0 0.0
    %3692 = vmatpush1.msra.mxu0 0.0
    %3693 = vmatprep.subr.mxu0 0.0
    %3694 = vmatpush1.msra.mxu0 0.0
    %3695 = vmatprep.subr.mxu0 0.0
    %3696 = vmatpush1.msra.mxu0 0.0
    %3697 = vmatprep.subr.mxu0 0.0
    %3698 = vmatpush1.msra.mxu0 0.0
    %3699 = vmatprep.subr.mxu0 0.0
    %3700 = vmatpush1.msra.mxu0 0.0
    %3701 = vmatprep.subr.mxu0 0.0
    %3702 = vmatpush1.msra.mxu0 0.0
    %3703 = vmatprep.subr.mxu0 0.0
    %3704 = vmatpush1.msra.mxu0 0.0
    %3705 = vmatprep.subr.mxu0 0.0
    %3706 = vmatpush1.msra.mxu0 0.0
    %3707 = vmatprep.subr.mxu0 0.0
    %3708 = vmatpush1.msra.mxu0 0.0
    %3709 = vmatprep.subr.mxu0 0.0
    %3710 = vmatpush1.msra.mxu0 0.0
    %3711 = vmatprep.subr.mxu0 0.0
    %3712 = vmatpush1.msra.mxu0 0.0
    %3713 = vmatprep.subr.mxu0 0.0
    %3714 = vmatpush1.msra.mxu0 0.0
    %3715 = vmatprep.subr.mxu0 0.0
    %3716 = vmatpush1.msra.mxu0 0.0
    %3717 = vmatprep.subr.mxu0 0.0
    %3718 = vmatpush1.msra.mxu0 0.0
    %3719 = vmatprep.subr.mxu0 0.0
    %3720 = vmatpush1.msra.mxu0 0.0
    %3721 = vmatprep.subr.mxu0 0.0
    %3722 = vmatpush1.msra.mxu0 0.0
    %3723 = vmatprep.subr.mxu0 0.0
    %3724 = vmatpush1.msra.mxu0 0.0
    %3725 = vmatprep.subr.mxu0 0.0
    %3726 = vmatpush1.msra.mxu0 0.0
    %3727 = vmatprep.mubr.f32.mxu0 0.0
    %3728 = vmatmul.mubr.f32.gmra.mrb[0].mxu0 %v3649
    %v3729 = vpop.f32.mrb[0].mxu0
    %v3730 = vadd.f32 0.0, %v3729
    %v3731 = vpop.f32.mrb[0].mxu0
    %3732 = vmatprep.mubr.f32.mxu0 0.0
    %3733 = vmatmul.mubr.f32.gmra.mrb[0].mxu0 %v3652
    %v3734 = vpop.f32.mrb[0].mxu0
    %v3735 = vadd.f32 0.0, %v3734
    %v3736 = vpop.f32.mrb[0].mxu0
    %3737 = vmatprep.mubr.f32.mxu0 0.0
    %3738 = vmatmul.mubr.f32.gmra.mrb[0].mxu0 %v3655
    %v3739 = vpop.f32.mrb[0].mxu0
    %v3740 = vadd.f32 0.0, %v3739
    %v3741 = vpop.f32.mrb[0].mxu0
    %3742 = vmatprep.mubr.f32.mxu0 0.0
    %3743 = vmatmul.mubr.f32.gmra.mrb[0].mxu0 %v3658
    %v3744 = vpop.f32.mrb[0].mxu0
    %v3745 = vadd.f32 0.0, %v3744
    %v3746 = vpop.f32.mrb[0].mxu0
    %3747 = vdwg.mxu0
    %3748 = vrot.lane.b32.xlu0 %v2334, 32
    %v3749 = vpop.permute.xlu0 %3748
    %v3751 = vmul.f32 %v3730, %v3749
    %3752 = vrot.lane.b32.xlu0 %v3518, 96
    %v3753 = vpop.permute.xlu0 %3752
    %v3755 = vmul.f32 %v3735, %v3753
    %v3756 = vadd.f32 %v3751, %v3755
    %v3757 = vmul.f32 %v3740, %v1741
    %v3758 = vadd.f32 %v3756, %v3757
    %v3759 = vmul.f32 %v3758, %v3745
    %v3760 = vld [vmem:[#allocation2 + $0x100] sm:$0xff]
    %v3761 = vld [vmem:[#allocation2 + $0x108] sm:$0xff]
    %v3762 = vld [vmem:[#allocation2 + $0x110] sm:$0xff]
    %v3763 = vld [vmem:[#allocation2 + $0x118] sm:$0xff]
    %v3764 = vld [vmem:[#allocation2 + $0x248] sm:$0x1]
    %v3765 = vlaneseq
    %v3766 = vshrl.u32 %v3765, 7
    %v3767 = vsub.s32 0, %v3766
    %v3768 = vrot.slane %v3764, %v3767
    %v3770 = vsel %vm48, %v3759, 0
    %3772 = vmatprep.subr.mxu0 0.0
    %3773 = vmatpush1.msra.mxu0 %v3760
    %3774 = vmatprep.subr.mxu0 0.0
    %3775 = vmatpush1.msra.mxu0 %v3761
    %3776 = vmatprep.subr.mxu0 0.0
    %3777 = vmatpush1.msra.mxu0 %v3762
    %3778 = vmatprep.subr.mxu0 0.0
    %3779 = vmatpush1.msra.mxu0 %v3763
    %3780 = vmatprep.subr.mxu0 0.0
    %3781 = vmatpush1.msra.mxu0 0.0
    %3782 = vmatprep.subr.mxu0 0.0
    %3783 = vmatpush1.msra.mxu0 0.0
    %3784 = vmatprep.subr.mxu0 0.0
    %3785 = vmatpush1.msra.mxu0 0.0
    %3786 = vmatprep.subr.mxu0 0.0
    %3787 = vmatpush1.msra.mxu0 0.0
    %3788 = vmatprep.subr.mxu0 0.0
    %3789 = vmatpush1.msra.mxu0 0.0
    %3790 = vmatprep.subr.mxu0 0.0
    %3791 = vmatpush1.msra.mxu0 0.0
    %3792 = vmatprep.subr.mxu0 0.0
    %3793 = vmatpush1.msra.mxu0 0.0
    %3794 = vmatprep.subr.mxu0 0.0
    %3795 = vmatpush1.msra.mxu0 0.0
    %3796 = vmatprep.subr.mxu0 0.0
    %3797 = vmatpush1.msra.mxu0 0.0
    %3798 = vmatprep.subr.mxu0 0.0
    %3799 = vmatpush1.msra.mxu0 0.0
    %3800 = vmatprep.subr.mxu0 0.0
    %3801 = vmatpush1.msra.mxu0 0.0
    %3802 = vmatprep.subr.mxu0 0.0
    %3803 = vmatpush1.msra.mxu0 0.0
    %3804 = vmatprep.subr.mxu0 0.0
    %3805 = vmatpush1.msra.mxu0 0.0
    %3806 = vmatprep.subr.mxu0 0.0
    %3807 = vmatpush1.msra.mxu0 0.0
    %3808 = vmatprep.subr.mxu0 0.0
    %3809 = vmatpush1.msra.mxu0 0.0
    %3810 = vmatprep.subr.mxu0 0.0
    %3811 = vmatpush1.msra.mxu0 0.0
    %3812 = vmatprep.subr.mxu0 0.0
    %3813 = vmatpush1.msra.mxu0 0.0
    %3814 = vmatprep.subr.mxu0 0.0
    %3815 = vmatpush1.msra.mxu0 0.0
    %3816 = vmatprep.subr.mxu0 0.0
    %3817 = vmatpush1.msra.mxu0 0.0
    %3818 = vmatprep.subr.mxu0 0.0
    %3819 = vmatpush1.msra.mxu0 0.0
    %3820 = vmatprep.subr.mxu0 0.0
    %3821 = vmatpush1.msra.mxu0 0.0
    %3822 = vmatprep.subr.mxu0 0.0
    %3823 = vmatpush1.msra.mxu0 0.0
    %3824 = vmatprep.subr.mxu0 0.0
    %3825 = vmatpush1.msra.mxu0 0.0
    %3826 = vmatprep.subr.mxu0 0.0
    %3827 = vmatpush1.msra.mxu0 0.0
    %3828 = vmatprep.subr.mxu0 0.0
    %3829 = vmatpush1.msra.mxu0 0.0
    %3830 = vmatprep.subr.mxu0 0.0
    %3831 = vmatpush1.msra.mxu0 0.0
    %3832 = vmatprep.subr.mxu0 0.0
    %3833 = vmatpush1.msra.mxu0 0.0
    %3834 = vmatprep.subr.mxu0 0.0
    %3835 = vmatpush1.msra.mxu0 0.0
    %3836 = vmatprep.mubr.f32.mxu0 0.0
    %3837 = vmatmul.mubr.f32.gmra.mrb[0].mxu0 %v3770
    %v3838 = vpop.f32.mrb[0].mxu0
    %v3839 = vadd.f32 %v3768, %v3838
    %v3840 = vpop.f32.mrb[0].mxu0
    %3841 = vdwg.mxu0
    %v3842 = vadd.f32 %v2248, %v3839
    %v3843 = vld [vmem:[#allocation2 + $0x250] sm:$0x1]
    %v3844 = vld [vmem:[#allocation2 + $0x258] sm:$0x1]
    %v3845 = vsel %vm48, %v3842, 0.0
    %3846 = vadd.xlane.f32.xlu0 %v3845
    %v3847 = vpop.xlane.xlu0 %3846
    %v3848 = vmul.f32 %v3847, %v1834
    %v3849 = vsub.f32 %v3842, %v3848
    %v3850 = vmul.f32 %v3849, %v3849
    %v3851 = vsel %vm48, %v3850, 0.0
    %3852 = vadd.xlane.f32.xlu0 %v3851
    %v3853 = vpop.xlane.xlu0 %3852
    %v3854 = vmul.f32 %v3853, %v1834
    %v3855 = vadd.f32 %v3854, 1e-05
    %v3856 = vrsqrt.pop %v3855
    %v3857 = vmul.f32 %v3849, %v3856
    %v3858 = vlaneseq
    %v3859 = vshrl.u32 %v3858, 7
    %v3860 = vsub.s32 0, %v3859
    %v3861 = vrot.slane %v3843, %v3860
    %v3862 = vmul.f32 %v3857, %v3861
    %v3863 = vlaneseq
    %v3864 = vshrl.u32 %v3863, 7
    %v3865 = vsub.s32 0, %v3864
    %v3866 = vrot.slane %v3844, %v3865
    %v3867 = vadd.f32 %v3862, %v3866
    %v3868 = vld [vmem:[#allocation2 + $0x120] sm:$0xff]
    %v3869 = vld [vmem:[#allocation2 + $0x128] sm:$0xff]
    %v3870 = vld [vmem:[#allocation2 + $0x130] sm:$0xff]
    %v3871 = vld [vmem:[#allocation2 + $0x138] sm:$0xff]
    %v3872 = vld [vmem:[#allocation2 + $0x260] sm:$0x1]
    %v3873 = vlaneseq
    %v3874 = vshrl.u32 %v3873, 7
    %v3875 = vsub.s32 0, %v3874
    %v3876 = vrot.slane %v3872, %v3875
    %v3878 = vsel %vm48, %v3867, 0
    %3880 = vmatprep.subr.mxu0 0.0
    %3881 = vmatpush1.msra.mxu0 %v3868
    %3882 = vmatprep.subr.mxu0 0.0
    %3883 = vmatpush1.msra.mxu0 %v3869
    %3884 = vmatprep.subr.mxu0 0.0
    %3885 = vmatpush1.msra.mxu0 %v3870
    %3886 = vmatprep.subr.mxu0 0.0
    %3887 = vmatpush1.msra.mxu0 %v3871
    %3888 = vmatprep.subr.mxu0 0.0
    %3889 = vmatpush1.msra.mxu0 0.0
    %3890 = vmatprep.subr.mxu0 0.0
    %3891 = vmatpush1.msra.mxu0 0.0
    %3892 = vmatprep.subr.mxu0 0.0
    %3893 = vmatpush1.msra.mxu0 0.0
    %3894 = vmatprep.subr.mxu0 0.0
    %3895 = vmatpush1.msra.mxu0 0.0
    %3896 = vmatprep.subr.mxu0 0.0
    %3897 = vmatpush1.msra.mxu0 0.0
    %3898 = vmatprep.subr.mxu0 0.0
    %3899 = vmatpush1.msra.mxu0 0.0
    %3900 = vmatprep.subr.mxu0 0.0
    %3901 = vmatpush1.msra.mxu0 0.0
    %3902 = vmatprep.subr.mxu0 0.0
    %3903 = vmatpush1.msra.mxu0 0.0
    %3904 = vmatprep.subr.mxu0 0.0
    %3905 = vmatpush1.msra.mxu0 0.0
    %3906 = vmatprep.subr.mxu0 0.0
    %3907 = vmatpush1.msra.mxu0 0.0
    %3908 = vmatprep.subr.mxu0 0.0
    %3909 = vmatpush1.msra.mxu0 0.0
    %3910 = vmatprep.subr.mxu0 0.0
    %3911 = vmatpush1.msra.mxu0 0.0
    %3912 = vmatprep.subr.mxu0 0.0
    %3913 = vmatpush1.msra.mxu0 0.0
    %3914 = vmatprep.subr.mxu0 0.0
    %3915 = vmatpush1.msra.mxu0 0.0
    %3916 = vmatprep.subr.mxu0 0.0
    %3917 = vmatpush1.msra.mxu0 0.0
    %3918 = vmatprep.subr.mxu0 0.0
    %3919 = vmatpush1.msra.mxu0 0.0
    %3920 = vmatprep.subr.mxu0 0.0
    %3921 = vmatpush1.msra.mxu0 0.0
    %3922 = vmatprep.subr.mxu0 0.0
    %3923 = vmatpush1.msra.mxu0 0.0
    %3924 = vmatprep.subr.mxu0 0.0
    %3925 = vmatpush1.msra.mxu0 0.0
    %3926 = vmatprep.subr.mxu0 0.0
    %3927 = vmatpush1.msra.mxu0 0.0
    %3928 = vmatprep.subr.mxu0 0.0
    %3929 = vmatpush1.msra.mxu0 0.0
    %3930 = vmatprep.subr.mxu0 0.0
    %3931 = vmatpush1.msra.mxu0 0.0
    %3932 = vmatprep.subr.mxu0 0.0
    %3933 = vmatpush1.msra.mxu0 0.0
    %3934 = vmatprep.subr.mxu0 0.0
    %3935 = vmatpush1.msra.mxu0 0.0
    %3936 = vmatprep.subr.mxu0 0.0
    %3937 = vmatpush1.msra.mxu0 0.0
    %3938 = vmatprep.subr.mxu0 0.0
    %3939 = vmatpush1.msra.mxu0 0.0
    %3940 = vmatprep.subr.mxu0 0.0
    %3941 = vmatpush1.msra.mxu0 0.0
    %3942 = vmatprep.subr.mxu0 0.0
    %3943 = vmatpush1.msra.mxu0 0.0
    %3944 = vmatprep.mubr.f32.mxu0 0.0
    %3945 = vmatmul.mubr.f32.gmra.mrb[0].mxu0 %v3878
    %v3946 = vpop.f32.mrb[0].mxu0
    %v3947 = vadd.f32 %v3876, %v3946
    %v3948 = vpop.f32.mrb[0].mxu0
    %3949 = vdwg.mxu0
    %v3950 = vmul.f32 %v3947, %v3947
    %v3951 = vmul.f32 %v3947, %v3950
    %v3952 = vmul.f32 %v3951, 0.044715
    %v3953 = vadd.f32 %v3947, %v3952
    %v3954 = vmul.f32 %v3953, 0.7978846
    %v3955 = vtanh.pop %v3954
    %v3956 = vadd.f32 %v3955, 1.0
    %v3957 = vmul.f32 %v3956, 0.5
    %v3958 = vmul.f32 %v3947, %v3957
    %v3959 = vld [vmem:[#allocation2 + $0x140] sm:$0xff]
    %v3960 = vld [vmem:[#allocation2 + $0x148] sm:$0xff]
    %v3961 = vld [vmem:[#allocation2 + $0x150] sm:$0xff]
    %v3962 = vld [vmem:[#allocation2 + $0x158] sm:$0xff]
    %v3963 = vld [vmem:[#allocation2 + $0x160] sm:$0xff]
    %v3964 = vld [vmem:[#allocation2 + $0x168] sm:$0xff]
    %v3965 = vld [vmem:[#allocation2 + $0x170] sm:$0xff]
    %v3966 = vld [vmem:[#allocation2 + $0x178] sm:$0xff]
    %v3967 = vld [vmem:[#allocation2 + $0x268] sm:$0x1]
    %v3968 = vlaneseq
    %v3969 = vshrl.u32 %v3968, 7
    %v3970 = vsub.s32 0, %v3969
    %v3971 = vrot.slane %v3967, %v3970
    %v3973 = vsel %vm1959, %v3958, 0
    %3975 = vmatprep.subr.mxu0 0.0
    %3976 = vmatpush1.msra.mxu0 %v3959
    %3977 = vmatprep.subr.mxu0 0.0
    %3978 = vmatpush1.msra.mxu0 %v3960
    %3979 = vmatprep.subr.mxu0 0.0
    %3980 = vmatpush1.msra.mxu0 %v3961
    %3981 = vmatprep.subr.mxu0 0.0
    %3982 = vmatpush1.msra.mxu0 %v3962
    %3983 = vmatprep.subr.mxu0 0.0
    %3984 = vmatpush1.msra.mxu0 %v3963
    %3985 = vmatprep.subr.mxu0 0.0
    %3986 = vmatpush1.msra.mxu0 %v3964
    %3987 = vmatprep.subr.mxu0 0.0
    %3988 = vmatpush1.msra.mxu0 %v3965
    %3989 = vmatprep.subr.mxu0 0.0
    %3990 = vmatpush1.msra.mxu0 %v3966
    %3991 = vmatprep.subr.mxu0 0.0
    %3992 = vmatpush1.msra.mxu0 0.0
    %3993 = vmatprep.subr.mxu0 0.0
    %3994 = vmatpush1.msra.mxu0 0.0
    %3995 = vmatprep.subr.mxu0 0.0
    %3996 = vmatpush1.msra.mxu0 0.0
    %3997 = vmatprep.subr.mxu0 0.0
    %3998 = vmatpush1.msra.mxu0 0.0
    %3999 = vmatprep.subr.mxu0 0.0
    %4000 = vmatpush1.msra.mxu0 0.0
    %4001 = vmatprep.subr.mxu0 0.0
    %4002 = vmatpush1.msra.mxu0 0.0
    %4003 = vmatprep.subr.mxu0 0.0
    %4004 = vmatpush1.msra.mxu0 0.0
    %4005 = vmatprep.subr.mxu0 0.0
    %4006 = vmatpush1.msra.mxu0 0.0
    %4007 = vmatprep.subr.mxu0 0.0
    %4008 = vmatpush1.msra.mxu0 0.0
    %4009 = vmatprep.subr.mxu0 0.0
    %4010 = vmatpush1.msra.mxu0 0.0
    %4011 = vmatprep.subr.mxu0 0.0
    %4012 = vmatpush1.msra.mxu0 0.0
    %4013 = vmatprep.subr.mxu0 0.0
    %4014 = vmatpush1.msra.mxu0 0.0
    %4015 = vmatprep.subr.mxu0 0.0
    %4016 = vmatpush1.msra.mxu0 0.0
    %4017 = vmatprep.subr.mxu0 0.0
    %4018 = vmatpush1.msra.mxu0 0.0
    %4019 = vmatprep.subr.mxu0 0.0
    %4020 = vmatpush1.msra.mxu0 0.0
    %4021 = vmatprep.subr.mxu0 0.0
    %4022 = vmatpush1.msra.mxu0 0.0
    %4023 = vmatprep.subr.mxu0 0.0
    %4024 = vmatpush1.msra.mxu0 0.0
    %4025 = vmatprep.subr.mxu0 0.0
    %4026 = vmatpush1.msra.mxu0 0.0
    %4027 = vmatprep.subr.mxu0 0.0
    %4028 = vmatpush1.msra.mxu0 0.0
    %4029 = vmatprep.subr.mxu0 0.0
    %4030 = vmatpush1.msra.mxu0 0.0
    %4031 = vmatprep.subr.mxu0 0.0
    %4032 = vmatpush1.msra.mxu0 0.0
    %4033 = vmatprep.subr.mxu0 0.0
    %4034 = vmatpush1.msra.mxu0 0.0
    %4035 = vmatprep.subr.mxu0 0.0
    %4036 = vmatpush1.msra.mxu0 0.0
    %4037 = vmatprep.subr.mxu0 0.0
    %4038 = vmatpush1.msra.mxu0 0.0
    %4039 = vmatprep.mubr.f32.mxu0 0.0
    %4040 = vmatmul.mubr.f32.gmra.mrb[0].mxu0 %v3973
    %v4041 = vpop.f32.mrb[0].mxu0
    %v4042 = vadd.f32 %v3971, %v4041
    %v4043 = vpop.f32.mrb[0].mxu0
    %4044 = vdwg.mxu0
    %v4045 = vadd.f32 %v3867, %v4042
    %v4046 = vld [vmem:[#allocation2 + $0x270] sm:$0x1]
    %v4047 = vld [vmem:[#allocation2 + $0x278] sm:$0x1]
    %v4048 = vsel %vm48, %v4045, 0.0
    %4049 = vadd.xlane.f32.xlu0 %v4048
    %v4050 = vpop.xlane.xlu0 %4049
    %v4051 = vmul.f32 %v4050, %v1834
    %v4052 = vsub.f32 %v4045, %v4051
    %v4053 = vmul.f32 %v4052, %v4052
    %v4054 = vsel %vm48, %v4053, 0.0
    %4055 = vadd.xlane.f32.xlu0 %v4054
    %v4056 = vpop.xlane.xlu0 %4055
    %v4057 = vmul.f32 %v4056, %v1834
    %v4058 = vadd.f32 %v4057, 1e-05
    %v4059 = vrsqrt.pop %v4058
    %v4060 = vmul.f32 %v4052, %v4059
    %v4061 = vlaneseq
    %v4062 = vshrl.u32 %v4061, 7
    %v4063 = vsub.s32 0, %v4062
    %v4064 = vrot.slane %v4046, %v4063
    %v4065 = vmul.f32 %v4060, %v4064
    %v4066 = vlaneseq
    %v4067 = vshrl.u32 %v4066, 7
    %v4068 = vsub.s32 0, %v4067
    %v4069 = vrot.slane %v4047, %v4068
    %v4070 = vadd.f32 %v4065, %v4069
    %v4071 = vadd.f32 %v2413, %v3753
    %v4072 = vld [vmem:[#allocation2 + $0x180] sm:$0xff]
    %v4073 = vld [vmem:[#allocation2 + $0x188] sm:$0xff]
    %v4074 = vld [vmem:[#allocation2 + $0x190] sm:$0xff]
    %v4075 = vld [vmem:[#allocation2 + $0x198] sm:$0xff]
    %v4077 = vsel %vm48, %v4070, 0
    %4079 = vmatprep.subr.mxu0 0.0
    %4080 = vmatpush1.msra.mxu0 %v4072
    %4081 = vmatprep.subr.mxu0 0.0
    %4082 = vmatpush1.msra.mxu0 %v4073
    %4083 = vmatprep.subr.mxu0 0.0
    %4084 = vmatpush1.msra.mxu0 %v4074
    %4085 = vmatprep.subr.mxu0 0.0
    %4086 = vmatpush1.msra.mxu0 %v4075
    %4087 = vmatprep.subr.mxu0 0.0
    %4088 = vmatpush1.msra.mxu0 0.0
    %4089 = vmatprep.subr.mxu0 0.0
    %4090 = vmatpush1.msra.mxu0 0.0
    %4091 = vmatprep.subr.mxu0 0.0
    %4092 = vmatpush1.msra.mxu0 0.0
    %4093 = vmatprep.subr.mxu0 0.0
    %4094 = vmatpush1.msra.mxu0 0.0
    %4095 = vmatprep.subr.mxu0 0.0
    %4096 = vmatpush1.msra.mxu0 0.0
    %4097 = vmatprep.subr.mxu0 0.0
    %4098 = vmatpush1.msra.mxu0 0.0
    %4099 = vmatprep.subr.mxu0 0.0
    %4100 = vmatpush1.msra.mxu0 0.0
    %4101 = vmatprep.subr.mxu0 0.0
    %4102 = vmatpush1.msra.mxu0 0.0
    %4103 = vmatprep.subr.mxu0 0.0
    %4104 = vmatpush1.msra.mxu0 0.0
    %4105 = vmatprep.subr.mxu0 0.0
    %4106 = vmatpush1.msra.mxu0 0.0
    %4107 = vmatprep.subr.mxu0 0.0
    %4108 = vmatpush1.msra.mxu0 0.0
    %4109 = vmatprep.subr.mxu0 0.0
    %4110 = vmatpush1.msra.mxu0 0.0
    %4111 = vmatprep.subr.mxu0 0.0
    %4112 = vmatpush1.msra.mxu0 0.0
    %4113 = vmatprep.subr.mxu0 0.0
    %4114 = vmatpush1.msra.mxu0 0.0
    %4115 = vmatprep.subr.mxu0 0.0
    %4116 = vmatpush1.msra.mxu0 0.0
    %4117 = vmatprep.subr.mxu0 0.0
    %4118 = vmatpush1.msra.mxu0 0.0
    %4119 = vmatprep.subr.mxu0 0.0
    %4120 = vmatpush1.msra.mxu0 0.0
    %4121 = vmatprep.subr.mxu0 0.0
    %4122 = vmatpush1.msra.mxu0 0.0
    %4123 = vmatprep.subr.mxu0 0.0
    %4124 = vmatpush1.msra.mxu0 0.0
    %4125 = vmatprep.subr.mxu0 0.0
    %4126 = vmatpush1.msra.mxu0 0.0
    %4127 = vmatprep.subr.mxu0 0.0
    %4128 = vmatpush1.msra.mxu0 0.0
    %4129 = vmatprep.subr.mxu0 0.0
    %4130 = vmatpush1.msra.mxu0 0.0
    %4131 = vmatprep.subr.mxu0 0.0
    %4132 = vmatpush1.msra.mxu0 0.0
    %4133 = vmatprep.subr.mxu0 0.0
    %4134 = vmatpush1.msra.mxu0 0.0
    %4135 = vmatprep.subr.mxu0 0.0
    %4136 = vmatpush1.msra.mxu0 0.0
    %4137 = vmatprep.subr.mxu0 0.0
    %4138 = vmatpush1.msra.mxu0 0.0
    %4139 = vmatprep.subr.mxu0 0.0
    %4140 = vmatpush1.msra.mxu0 0.0
    %4141 = vmatprep.subr.mxu0 0.0
    %4142 = vmatpush1.msra.mxu0 0.0
    %4143 = vmatprep.mubr.f32.mxu0 0.0
    %4144 = vmatmul.mubr.f32.gmra.mrb[0].mxu0 %v4077
    %v4145 = vpop.f32.mrb[0].mxu0
    %v4146 = vadd.f32 0.0, %v4145
    %v4147 = vpop.f32.mrb[0].mxu0
    %4148 = vdwg.mxu0
    %4150 = vrot.lane.b32.xlu0 %v4146, 32
    %v4151 = vpop.permute.xlu0 %4150
    %v4153 = vadd.f32 %v4071, %v4151
    %v4154 = vmul.f32 %v4153, %v4153
    %v4155 = vmul.f32 %v4153, %v4154
    %v4156 = vmul.f32 %v4155, 0.044715
    %v4157 = vadd.f32 %v4153, %v4156
    %v4158 = vmul.f32 %v4157, 0.7978846
    %v4159 = vtanh.pop %v4158
    %v4160 = vadd.f32 %v4159, 1.0
    %v4161 = vmul.f32 %v4160, 0.5
    %v4162 = vmul.f32 %v4153, %v4161
    %v4163 = vld [vmem:[#allocation2 + $0x1a0] sm:$0xff]
    %v4164 = vld [vmem:[#allocation2 + $0x1a8] sm:$0xff]
    %v4165 = vld [vmem:[#allocation2 + $0x1b0] sm:$0xff]
    %v4166 = vld [vmem:[#allocation2 + $0x1b8] sm:$0xff]
    %v4167 = vld [vmem:[#allocation2 + $0x280] sm:$0x1]
    %v4168 = vlaneseq
    %v4169 = vshrl.u32 %v4168, 7
    %v4170 = vsub.s32 0, %v4169
    %v4171 = vrot.slane %v4167, %v4170
    %4173 = vrot.lane.b32.xlu0 %v4162, 96
    %v4174 = vpop.permute.xlu0 %4173
    %v4175 = vsel %vm48, %v4174, 0
    %4177 = vmatprep.subr.mxu0 0.0
    %4178 = vmatpush1.msra.mxu0 %v4163
    %4179 = vmatprep.subr.mxu0 0.0
    %4180 = vmatpush1.msra.mxu0 %v4164
    %4181 = vmatprep.subr.mxu0 0.0
    %4182 = vmatpush1.msra.mxu0 %v4165
    %4183 = vmatprep.subr.mxu0 0.0
    %4184 = vmatpush1.msra.mxu0 %v4166
    %4185 = vmatprep.subr.mxu0 0.0
    %4186 = vmatpush1.msra.mxu0 0.0
    %4187 = vmatprep.subr.mxu0 0.0
    %4188 = vmatpush1.msra.mxu0 0.0
    %4189 = vmatprep.subr.mxu0 0.0
    %4190 = vmatpush1.msra.mxu0 0.0
    %4191 = vmatprep.subr.mxu0 0.0
    %4192 = vmatpush1.msra.mxu0 0.0
    %4193 = vmatprep.subr.mxu0 0.0
    %4194 = vmatpush1.msra.mxu0 0.0
    %4195 = vmatprep.subr.mxu0 0.0
    %4196 = vmatpush1.msra.mxu0 0.0
    %4197 = vmatprep.subr.mxu0 0.0
    %4198 = vmatpush1.msra.mxu0 0.0
    %4199 = vmatprep.subr.mxu0 0.0
    %4200 = vmatpush1.msra.mxu0 0.0
    %4201 = vmatprep.subr.mxu0 0.0
    %4202 = vmatpush1.msra.mxu0 0.0
    %4203 = vmatprep.subr.mxu0 0.0
    %4204 = vmatpush1.msra.mxu0 0.0
    %4205 = vmatprep.subr.mxu0 0.0
    %4206 = vmatpush1.msra.mxu0 0.0
    %4207 = vmatprep.subr.mxu0 0.0
    %4208 = vmatpush1.msra.mxu0 0.0
    %4209 = vmatprep.subr.mxu0 0.0
    %4210 = vmatpush1.msra.mxu0 0.0
    %4211 = vmatprep.subr.mxu0 0.0
    %4212 = vmatpush1.msra.mxu0 0.0
    %4213 = vmatprep.subr.mxu0 0.0
    %4214 = vmatpush1.msra.mxu0 0.0
    %4215 = vmatprep.subr.mxu0 0.0
    %4216 = vmatpush1.msra.mxu0 0.0
    %4217 = vmatprep.subr.mxu0 0.0
    %4218 = vmatpush1.msra.mxu0 0.0
    %4219 = vmatprep.subr.mxu0 0.0
    %4220 = vmatpush1.msra.mxu0 0.0
    %4221 = vmatprep.subr.mxu0 0.0
    %4222 = vmatpush1.msra.mxu0 0.0
    %4223 = vmatprep.subr.mxu0 0.0
    %4224 = vmatpush1.msra.mxu0 0.0
    %4225 = vmatprep.subr.mxu0 0.0
    %4226 = vmatpush1.msra.mxu0 0.0
    %4227 = vmatprep.subr.mxu0 0.0
    %4228 = vmatpush1.msra.mxu0 0.0
    %4229 = vmatprep.subr.mxu0 0.0
    %4230 = vmatpush1.msra.mxu0 0.0
    %4231 = vmatprep.subr.mxu0 0.0
    %4232 = vmatpush1.msra.mxu0 0.0
    %4233 = vmatprep.subr.mxu0 0.0
    %4234 = vmatpush1.msra.mxu0 0.0
    %4235 = vmatprep.subr.mxu0 0.0
    %4236 = vmatpush1.msra.mxu0 0.0
    %4237 = vmatprep.subr.mxu0 0.0
    %4238 = vmatpush1.msra.mxu0 0.0
    %4239 = vmatprep.subr.mxu0 0.0
    %4240 = vmatpush1.msra.mxu0 0.0
    %4241 = vmatprep.mubr.f32.mxu0 0.0
    %4242 = vmatmul.mubr.f32.gmra.mrb[0].mxu0 %v4175
    %v4243 = vpop.f32.mrb[0].mxu0
    %v4244 = vadd.f32 %v4171, %v4243
    %v4245 = vpop.f32.mrb[0].mxu0
    %4246 = vdwg.mxu0
    %v4247 = vxor.u32 %v4244, 2147483648
    %v4248 = vmul.f32 %v4247, 1.442695
    %v4249 = vpow.pop %v4248
    %v4250 = vadd.f32 %v4249, 1.0
    %v4251 = vrcp.pop %v4250
    %v4252 = vmul.f32 1.0, %v4251
    %v4253 = vsub.f32 %v4070, %v2248
    %4255 = vset.pattern.permute.xlu0 0
    %4256 = vperm.xlu0 %4255, %v2526
    %v4257 = vpop.permute.xlu0 %4256
    %v4259 = vmul.f32 %v4257, %v4253
    %v4260 = vadd.f32 %v2248, %v4259
    %v4261 = vsub.f32 %v4252, 1.0
    %v4262 = vmul.f32 %v2526, %v4261
    %v4263 = vadd.f32 %v4262, 1.0
    %v4264 = vmul.f32 %v2251, %v4263
    %v4265 = vadd.f32 %v2252, %v2526
    %s4266 = scalar_lea.vmem [#allocation5], 16
    %4267 = vst.msk [vmem:[%s4266] sm:$0xff] %vm48, %v4260
    %v4268 = vld [vmem:[#allocation2] sm:$0xff]
    %v4269 = vld [vmem:[#allocation2 + $0x8] sm:$0xff]
    %v4270 = vld [vmem:[#allocation2 + $0x10] sm:$0xff]
    %v4271 = vld [vmem:[#allocation2 + $0x18] sm:$0xff]
    %v4272 = vld [vmem:[#allocation2 + $0x1f8] sm:$0x1]
    %v4273 = vlaneseq
    %v4274 = vshrl.u32 %v4273, 7
    %v4275 = vsub.s32 0, %v4274
    %v4276 = vrot.slane %v4272, %v4275
    %v4278 = vsel %vm48, %v4260, 0
    %4280 = vmatprep.subr.mxu0 0.0
    %4281 = vmatpush1.msra.mxu0 %v4268
    %4282 = vmatprep.subr.mxu0 0.0
    %4283 = vmatpush1.msra.mxu0 %v4269
    %4284 = vmatprep.subr.mxu0 0.0
    %4285 = vmatpush1.msra.mxu0 %v4270
    %4286 = vmatprep.subr.mxu0 0.0
    %4287 = vmatpush1.msra.mxu0 %v4271
    %4288 = vmatprep.subr.mxu0 0.0
    %4289 = vmatpush1.msra.mxu0 0.0
    %4290 = vmatprep.subr.mxu0 0.0
    %4291 = vmatpush1.msra.mxu0 0.0
    %4292 = vmatprep.subr.mxu0 0.0
    %4293 = vmatpush1.msra.mxu0 0.0
    %4294 = vmatprep.subr.mxu0 0.0
    %4295 = vmatpush1.msra.mxu0 0.0
    %4296 = vmatprep.subr.mxu0 0.0
    %4297 = vmatpush1.msra.mxu0 0.0
    %4298 = vmatprep.subr.mxu0 0.0
    %4299 = vmatpush1.msra.mxu0 0.0
    %4300 = vmatprep.subr.mxu0 0.0
    %4301 = vmatpush1.msra.mxu0 0.0
    %4302 = vmatprep.subr.mxu0 0.0
    %4303 = vmatpush1.msra.mxu0 0.0
    %4304 = vmatprep.subr.mxu0 0.0
    %4305 = vmatpush1.msra.mxu0 0.0
    %4306 = vmatprep.subr.mxu0 0.0
    %4307 = vmatpush1.msra.mxu0 0.0
    %4308 = vmatprep.subr.mxu0 0.0
    %4309 = vmatpush1.msra.mxu0 0.0
    %4310 = vmatprep.subr.mxu0 0.0
    %4311 = vmatpush1.msra.mxu0 0.0
    %4312 = vmatprep.subr.mxu0 0.0
    %4313 = vmatpush1.msra.mxu0 0.0
    %4314 = vmatprep.subr.mxu0 0.0
    %4315 = vmatpush1.msra.mxu0 0.0
    %4316 = vmatprep.subr.mxu0 0.0
    %4317 = vmatpush1.msra.mxu0 0.0
    %4318 = vmatprep.subr.mxu0 0.0
    %4319 = vmatpush1.msra.mxu0 0.0
    %4320 = vmatprep.subr.mxu0 0.0
    %4321 = vmatpush1.msra.mxu0 0.0
    %4322 = vmatprep.subr.mxu0 0.0
    %4323 = vmatpush1.msra.mxu0 0.0
    %4324 = vmatprep.subr.mxu0 0.0
    %4325 = vmatpush1.msra.mxu0 0.0
    %4326 = vmatprep.subr.mxu0 0.0
    %4327 = vmatpush1.msra.mxu0 0.0
    %4328 = vmatprep.subr.mxu0 0.0
    %4329 = vmatpush1.msra.mxu0 0.0
    %4330 = vmatprep.subr.mxu0 0.0
    %4331 = vmatpush1.msra.mxu0 0.0
    %4332 = vmatprep.subr.mxu0 0.0
    %4333 = vmatpush1.msra.mxu0 0.0
    %4334 = vmatprep.subr.mxu0 0.0
    %4335 = vmatpush1.msra.mxu0 0.0
    %4336 = vmatprep.subr.mxu0 0.0
    %4337 = vmatpush1.msra.mxu0 0.0
    %4338 = vmatprep.subr.mxu0 0.0
    %4339 = vmatpush1.msra.mxu0 0.0
    %4340 = vmatprep.subr.mxu0 0.0
    %4341 = vmatpush1.msra.mxu0 0.0
    %4342 = vmatprep.subr.mxu0 0.0
    %4343 = vmatpush1.msra.mxu0 0.0
    %4344 = vmatprep.mubr.f32.mxu0 0.0
    %4345 = vmatmul.mubr.f32.gmra.mrb[0].mxu0 %v4278
    %v4346 = vpop.f32.mrb[0].mxu0
    %v4347 = vadd.f32 %v4276, %v4346
    %v4348 = vpop.f32.mrb[0].mxu0
    %4349 = vdwg.mxu0
    %v4350 = vld [vmem:[#allocation2 + $0x20] sm:$0xff]
    %v4351 = vld [vmem:[#allocation2 + $0x28] sm:$0xff]
    %v4352 = vld [vmem:[#allocation2 + $0x30] sm:$0xff]
    %v4353 = vld [vmem:[#allocation2 + $0x38] sm:$0xff]
    %v4354 = vld [vmem:[#allocation2 + $0x200] sm:$0x1]
    %v4355 = vlaneseq
    %v4356 = vshrl.u32 %v4355, 7
    %v4357 = vsub.s32 0, %v4356
    %v4358 = vrot.slane %v4354, %v4357
    %4359 = vmatprep.subr.mxu0 0.0
    %4360 = vmatpush1.msra.mxu0 %v4350
    %4361 = vmatprep.subr.mxu0 0.0
    %4362 = vmatpush1.msra.mxu0 %v4351
    %4363 = vmatprep.subr.mxu0 0.0
    %4364 = vmatpush1.msra.mxu0 %v4352
    %4365 = vmatprep.subr.mxu0 0.0
    %4366 = vmatpush1.msra.mxu0 %v4353
    %4367 = vmatprep.subr.mxu0 0.0
    %4368 = vmatpush1.msra.mxu0 0.0
    %4369 = vmatprep.subr.mxu0 0.0
    %4370 = vmatpush1.msra.mxu0 0.0
    %4371 = vmatprep.subr.mxu0 0.0
    %4372 = vmatpush1.msra.mxu0 0.0
    %4373 = vmatprep.subr.mxu0 0.0
    %4374 = vmatpush1.msra.mxu0 0.0
    %4375 = vmatprep.subr.mxu0 0.0
    %4376 = vmatpush1.msra.mxu0 0.0
    %4377 = vmatprep.subr.mxu0 0.0
    %4378 = vmatpush1.msra.mxu0 0.0
    %4379 = vmatprep.subr.mxu0 0.0
    %4380 = vmatpush1.msra.mxu0 0.0
    %4381 = vmatprep.subr.mxu0 0.0
    %4382 = vmatpush1.msra.mxu0 0.0
    %4383 = vmatprep.subr.mxu0 0.0
    %4384 = vmatpush1.msra.mxu0 0.0
    %4385 = vmatprep.subr.mxu0 0.0
    %4386 = vmatpush1.msra.mxu0 0.0
    %4387 = vmatprep.subr.mxu0 0.0
    %4388 = vmatpush1.msra.mxu0 0.0
    %4389 = vmatprep.subr.mxu0 0.0
    %4390 = vmatpush1.msra.mxu0 0.0
    %4391 = vmatprep.subr.mxu0 0.0
    %4392 = vmatpush1.msra.mxu0 0.0
    %4393 = vmatprep.subr.mxu0 0.0
    %4394 = vmatpush1.msra.mxu0 0.0
    %4395 = vmatprep.subr.mxu0 0.0
    %4396 = vmatpush1.msra.mxu0 0.0
    %4397 = vmatprep.subr.mxu0 0.0
    %4398 = vmatpush1.msra.mxu0 0.0
    %4399 = vmatprep.subr.mxu0 0.0
    %4400 = vmatpush1.msra.mxu0 0.0
    %4401 = vmatprep.subr.mxu0 0.0
    %4402 = vmatpush1.msra.mxu0 0.0
    %4403 = vmatprep.subr.mxu0 0.0
    %4404 = vmatpush1.msra.mxu0 0.0
    %4405 = vmatprep.subr.mxu0 0.0
    %4406 = vmatpush1.msra.mxu0 0.0
    %4407 = vmatprep.subr.mxu0 0.0
    %4408 = vmatpush1.msra.mxu0 0.0
    %4409 = vmatprep.subr.mxu0 0.0
    %4410 = vmatpush1.msra.mxu0 0.0
    %4411 = vmatprep.subr.mxu0 0.0
    %4412 = vmatpush1.msra.mxu0 0.0
    %4413 = vmatprep.subr.mxu0 0.0
    %4414 = vmatpush1.msra.mxu0 0.0
    %4415 = vmatprep.subr.mxu0 0.0
    %4416 = vmatpush1.msra.mxu0 0.0
    %4417 = vmatprep.subr.mxu0 0.0
    %4418 = vmatpush1.msra.mxu0 0.0
    %4419 = vmatprep.subr.mxu0 0.0
    %4420 = vmatpush1.msra.mxu0 0.0
    %4421 = vmatprep.subr.mxu0 0.0
    %4422 = vmatpush1.msra.mxu0 0.0
    %4423 = vmatprep.mubr.f32.mxu0 0.0
    %4424 = vmatmul.mubr.f32.gmra.mrb[0].mxu0 %v4278
    %v4425 = vpop.f32.mrb[0].mxu0
    %v4426 = vadd.f32 %v4358, %v4425
    %v4427 = vpop.f32.mrb[0].mxu0
    %4428 = vdwg.mxu0
    %v4429 = vadd.f32 %v4426, %v119
    %v4430 = vmul.f32 %v4429, %v4429
    %v4431 = vmul.f32 %v4429, %v4430
    %v4432 = vmul.f32 %v4431, 0.044715
    %v4433 = vadd.f32 %v4429, %v4432
    %v4434 = vmul.f32 %v4433, 0.7978846
    %v4435 = vtanh.pop %v4434
    %v4436 = vadd.f32 %v4435, 1.0
    %v4437 = vmul.f32 %v4436, 0.5
    %v4438 = vmul.f32 %v4429, %v4437
    %v4439 = vld [vmem:[#allocation2 + $0xe0] sm:$0xff]
    %v4440 = vld [vmem:[#allocation2 + $0xe8] sm:$0xff]
    %v4441 = vld [vmem:[#allocation2 + $0xf0] sm:$0xff]
    %v4442 = vld [vmem:[#allocation2 + $0xf8] sm:$0xff]
    %v4443 = vld [vmem:[#allocation2 + $0x240] sm:$0x1]
    %v4444 = vlaneseq
    %v4445 = vshrl.u32 %v4444, 7
    %v4446 = vsub.s32 0, %v4445
    %v4447 = vrot.slane %v4443, %v4446
    %v4449 = vsel %vm48, %v4438, 0
    %4451 = vmatprep.subr.mxu0 0.0
    %4452 = vmatpush1.msra.mxu0 %v4439
    %4453 = vmatprep.subr.mxu0 0.0
    %4454 = vmatpush1.msra.mxu0 %v4440
    %4455 = vmatprep.subr.mxu0 0.0
    %4456 = vmatpush1.msra.mxu0 %v4441
    %4457 = vmatprep.subr.mxu0 0.0
    %4458 = vmatpush1.msra.mxu0 %v4442
    %4459 = vmatprep.subr.mxu0 0.0
    %4460 = vmatpush1.msra.mxu0 0.0
    %4461 = vmatprep.subr.mxu0 0.0
    %4462 = vmatpush1.msra.mxu0 0.0
    %4463 = vmatprep.subr.mxu0 0.0
    %4464 = vmatpush1.msra.mxu0 0.0
    %4465 = vmatprep.subr.mxu0 0.0
    %4466 = vmatpush1.msra.mxu0 0.0
    %4467 = vmatprep.subr.mxu0 0.0
    %4468 = vmatpush1.msra.mxu0 0.0
    %4469 = vmatprep.subr.mxu0 0.0
    %4470 = vmatpush1.msra.mxu0 0.0
    %4471 = vmatprep.subr.mxu0 0.0
    %4472 = vmatpush1.msra.mxu0 0.0
    %4473 = vmatprep.subr.mxu0 0.0
    %4474 = vmatpush1.msra.mxu0 0.0
    %4475 = vmatprep.subr.mxu0 0.0
    %4476 = vmatpush1.msra.mxu0 0.0
    %4477 = vmatprep.subr.mxu0 0.0
    %4478 = vmatpush1.msra.mxu0 0.0
    %4479 = vmatprep.subr.mxu0 0.0
    %4480 = vmatpush1.msra.mxu0 0.0
    %4481 = vmatprep.subr.mxu0 0.0
    %4482 = vmatpush1.msra.mxu0 0.0
    %4483 = vmatprep.subr.mxu0 0.0
    %4484 = vmatpush1.msra.mxu0 0.0
    %4485 = vmatprep.subr.mxu0 0.0
    %4486 = vmatpush1.msra.mxu0 0.0
    %4487 = vmatprep.subr.mxu0 0.0
    %4488 = vmatpush1.msra.mxu0 0.0
    %4489 = vmatprep.subr.mxu0 0.0
    %4490 = vmatpush1.msra.mxu0 0.0
    %4491 = vmatprep.subr.mxu0 0.0
    %4492 = vmatpush1.msra.mxu0 0.0
    %4493 = vmatprep.subr.mxu0 0.0
    %4494 = vmatpush1.msra.mxu0 0.0
    %4495 = vmatprep.subr.mxu0 0.0
    %4496 = vmatpush1.msra.mxu0 0.0
    %4497 = vmatprep.subr.mxu0 0.0
    %4498 = vmatpush1.msra.mxu0 0.0
    %4499 = vmatprep.subr.mxu0 0.0
    %4500 = vmatpush1.msra.mxu0 0.0
    %4501 = vmatprep.subr.mxu0 0.0
    %4502 = vmatpush1.msra.mxu0 0.0
    %4503 = vmatprep.subr.mxu0 0.0
    %4504 = vmatpush1.msra.mxu0 0.0
    %4505 = vmatprep.subr.mxu0 0.0
    %4506 = vmatpush1.msra.mxu0 0.0
    %4507 = vmatprep.subr.mxu0 0.0
    %4508 = vmatpush1.msra.mxu0 0.0
    %4509 = vmatprep.subr.mxu0 0.0
    %4510 = vmatpush1.msra.mxu0 0.0
    %4511 = vmatprep.subr.mxu0 0.0
    %4512 = vmatpush1.msra.mxu0 0.0
    %4513 = vmatprep.subr.mxu0 0.0
    %4514 = vmatpush1.msra.mxu0 0.0
    %4515 = vmatprep.mubr.f32.mxu0 0.0
    %4516 = vmatmul.mubr.f32.gmra.mrb[0].mxu0 %v4449
    %v4517 = vpop.f32.mrb[0].mxu0
    %v4518 = vadd.f32 %v4447, %v4517
    %v4519 = vpop.f32.mrb[0].mxu0
    %4520 = vdwg.mxu0
    %v4521 = vxor.u32 %v4518, 2147483648
    %v4522 = vmul.f32 %v4521, 1.442695
    %v4523 = vpow.pop %v4522
    %v4524 = vadd.f32 %v4523, 1.0
    %v4525 = vrcp.pop %v4524
    %v4526 = vmul.f32 1.0, %v4525
    %vm4527 = vcmp.gt.f32.partialorder %v4526, 0.9
    %v4528 = vsel %vm4527, 1, 0
    %v4529 = vcvt.s32.f32 %v4528
    %v4530 = vmax.f32 %v4529, %v37
    %v4531 = vsel %vm478, %v4530, inf
    %v4532 = vrot.slane %v4531, 4
    %v4533 = vmin.f32 %v4531, %v4532
    %v4534 = vrot.slane %v4533, 2
    %v4535 = vmin.f32 %v4533, %v4534
    %v4536 = vrot.slane %v4535, 1
    %v4537 = vmin.f32 %v4535, %v4536
    %v4538 = vmax.f32 %v2525, %v4537
    %v4539 = vsub.f32 1.0, %v4538
    %v4541 = vcombine.high %v4347, %v4347
    %v4543 = vunpack.c.l.s4 1966171168
    %v4544 = vunpack.c.0.s8 %v4543
    %v4545 = vlaneseq
    %v4546 = vshrl.u32 %v4545, 7
    %v4547 = vsub.s32 %v4544, %v4546
    %v4548 = vrot.slane %v4347, %v4547
    %v4550 = vunpack.c.l.s4 1966171168
    %v4551 = vunpack.c.0.s8 %v4550
    %v4552 = vlaneseq
    %v4553 = vshrl.u32 %v4552, 7
    %v4554 = vsub.s32 %v4551, %v4553
    %v4555 = vrot.slane %v4541, %v4554
    %v4556 = vcombine.high %v4548, %v4548
    %v4557 = vcombine.high %v4555, %v4555
    %v4559 = vunpack.c.l.s4 1966171168
    %v4560 = vunpack.c.0.s8 %v4559
    %v4561 = vlaneseq
    %v4562 = vshrl.u32 %v4561, 7
    %v4563 = vsub.s32 %v4560, %v4562
    %v4564 = vrot.slane %v4548, %v4563
    %v4566 = vunpack.c.l.s4 1966171168
    %v4567 = vunpack.c.0.s8 %v4566
    %v4568 = vlaneseq
    %v4569 = vshrl.u32 %v4568, 7
    %v4570 = vsub.s32 %v4567, %v4569
    %v4571 = vrot.slane %v4555, %v4570
    %v4573 = vunpack.c.l.s4 1966171168
    %v4574 = vunpack.c.0.s8 %v4573
    %v4575 = vlaneseq
    %v4576 = vshrl.u32 %v4575, 7
    %v4577 = vsub.s32 %v4574, %v4576
    %v4578 = vrot.slane %v4556, %v4577
    %v4580 = vunpack.c.l.s4 1966171168
    %v4581 = vunpack.c.0.s8 %v4580
    %v4582 = vlaneseq
    %v4583 = vshrl.u32 %v4582, 7
    %v4584 = vsub.s32 %v4581, %v4583
    %v4585 = vrot.slane %v4557, %v4584
    %v4586 = vcombine.high %v4564, %v4564
    %v4587 = vcombine.high %v4571, %v4571
    %v4588 = vcombine.high %v4578, %v4578
    %v4589 = vcombine.high %v4585, %v4585
    %v4590 = vlaneseq
    %v4591 = vshrl.u32 %v4590, 7
    %v4592 = vsub.s32 0, %v4591
    %v4593 = vrot.slane %v4564, %v4592
    %v4594 = vlaneseq
    %v4595 = vshrl.u32 %v4594, 7
    %v4596 = vsub.s32 0, %v4595
    %v4597 = vrot.slane %v4578, %v4596
    %v4598 = vlaneseq
    %v4599 = vshrl.u32 %v4598, 7
    %v4600 = vsub.s32 0, %v4599
    %v4601 = vrot.slane %v4586, %v4600
    %v4602 = vlaneseq
    %v4603 = vshrl.u32 %v4602, 7
    %v4604 = vsub.s32 0, %v4603
    %v4605 = vrot.slane %v4588, %v4604
    %v4606 = vlaneseq
    %v4607 = vshrl.u32 %v4606, 7
    %v4608 = vsub.s32 0, %v4607
    %v4609 = vrot.slane %v4571, %v4608
    %v4610 = vlaneseq
    %v4611 = vshrl.u32 %v4610, 7
    %v4612 = vsub.s32 0, %v4611
    %v4613 = vrot.slane %v4585, %v4612
    %v4614 = vlaneseq
    %v4615 = vshrl.u32 %v4614, 7
    %v4616 = vsub.s32 0, %v4615
    %v4617 = vrot.slane %v4587, %v4616
    %v4618 = vlaneseq
    %v4619 = vshrl.u32 %v4618, 7
    %v4620 = vsub.s32 0, %v4619
    %v4621 = vrot.slane %v4589, %v4620
    %v4630 = vadd.f32 %v4593, %v206
    %v4631 = vadd.f32 %v4593, %v211
    %v4632 = vadd.f32 %v4597, %v206
    %v4633 = vadd.f32 %v4597, %v211
    %v4634 = vadd.f32 %v4601, %v206
    %v4635 = vadd.f32 %v4601, %v211
    %v4636 = vadd.f32 %v4605, %v206
    %v4637 = vadd.f32 %v4605, %v211
    %v4638 = vadd.f32 %v4609, %v206
    %v4639 = vadd.f32 %v4609, %v211
    %v4640 = vadd.f32 %v4613, %v206
    %v4641 = vadd.f32 %v4613, %v211
    %v4642 = vadd.f32 %v4617, %v206
    %v4643 = vadd.f32 %v4617, %v211
    %v4644 = vadd.f32 %v4621, %v206
    %v4645 = vadd.f32 %v4621, %v211
    %v4646 = vmul.f32 %v4630, %v4630
    %v4647 = vmul.f32 %v4631, %v4631
    %v4648 = vmul.f32 %v4632, %v4632
    %v4649 = vmul.f32 %v4633, %v4633
    %v4650 = vmul.f32 %v4634, %v4634
    %v4651 = vmul.f32 %v4635, %v4635
    %v4652 = vmul.f32 %v4636, %v4636
    %v4653 = vmul.f32 %v4637, %v4637
    %v4654 = vmul.f32 %v4638, %v4638
    %v4655 = vmul.f32 %v4639, %v4639
    %v4656 = vmul.f32 %v4640, %v4640
    %v4657 = vmul.f32 %v4641, %v4641
    %v4658 = vmul.f32 %v4642, %v4642
    %v4659 = vmul.f32 %v4643, %v4643
    %v4660 = vmul.f32 %v4644, %v4644
    %v4661 = vmul.f32 %v4645, %v4645
    %v4662 = vmul.f32 %v4630, %v4646
    %v4663 = vmul.f32 %v4631, %v4647
    %v4664 = vmul.f32 %v4632, %v4648
    %v4665 = vmul.f32 %v4633, %v4649
    %v4666 = vmul.f32 %v4634, %v4650
    %v4667 = vmul.f32 %v4635, %v4651
    %v4668 = vmul.f32 %v4636, %v4652
    %v4669 = vmul.f32 %v4637, %v4653
    %v4670 = vmul.f32 %v4638, %v4654
    %v4671 = vmul.f32 %v4639, %v4655
    %v4672 = vmul.f32 %v4640, %v4656
    %v4673 = vmul.f32 %v4641, %v4657
    %v4674 = vmul.f32 %v4642, %v4658
    %v4675 = vmul.f32 %v4643, %v4659
    %v4676 = vmul.f32 %v4644, %v4660
    %v4677 = vmul.f32 %v4645, %v4661
    %v4678 = vmul.f32 %v4662, 0.044715
    %v4679 = vmul.f32 %v4663, 0.044715
    %v4680 = vmul.f32 %v4664, 0.044715
    %v4681 = vmul.f32 %v4665, 0.044715
    %v4682 = vmul.f32 %v4666, 0.044715
    %v4683 = vmul.f32 %v4667, 0.044715
    %v4684 = vmul.f32 %v4668, 0.044715
    %v4685 = vmul.f32 %v4669, 0.044715
    %v4686 = vmul.f32 %v4670, 0.044715
    %v4687 = vmul.f32 %v4671, 0.044715
    %v4688 = vmul.f32 %v4672, 0.044715
    %v4689 = vmul.f32 %v4673, 0.044715
    %v4690 = vmul.f32 %v4674, 0.044715
    %v4691 = vmul.f32 %v4675, 0.044715
    %v4692 = vmul.f32 %v4676, 0.044715
    %v4693 = vmul.f32 %v4677, 0.044715
    %v4694 = vadd.f32 %v4630, %v4678
    %v4695 = vadd.f32 %v4631, %v4679
    %v4696 = vadd.f32 %v4632, %v4680
    %v4697 = vadd.f32 %v4633, %v4681
    %v4698 = vadd.f32 %v4634, %v4682
    %v4699 = vadd.f32 %v4635, %v4683
    %v4700 = vadd.f32 %v4636, %v4684
    %v4701 = vadd.f32 %v4637, %v4685
    %v4702 = vadd.f32 %v4638, %v4686
    %v4703 = vadd.f32 %v4639, %v4687
    %v4704 = vadd.f32 %v4640, %v4688
    %v4705 = vadd.f32 %v4641, %v4689
    %v4706 = vadd.f32 %v4642, %v4690
    %v4707 = vadd.f32 %v4643, %v4691
    %v4708 = vadd.f32 %v4644, %v4692
    %v4709 = vadd.f32 %v4645, %v4693
    %v4710 = vmul.f32 %v4694, 0.7978846
    %v4711 = vmul.f32 %v4695, 0.7978846
    %v4712 = vmul.f32 %v4696, 0.7978846
    %v4713 = vmul.f32 %v4697, 0.7978846
    %v4714 = vmul.f32 %v4698, 0.7978846
    %v4715 = vmul.f32 %v4699, 0.7978846
    %v4716 = vmul.f32 %v4700, 0.7978846
    %v4717 = vmul.f32 %v4701, 0.7978846
    %v4718 = vmul.f32 %v4702, 0.7978846
    %v4719 = vmul.f32 %v4703, 0.7978846
    %v4720 = vmul.f32 %v4704, 0.7978846
    %v4721 = vmul.f32 %v4705, 0.7978846
    %v4722 = vmul.f32 %v4706, 0.7978846
    %v4723 = vmul.f32 %v4707, 0.7978846
    %v4724 = vmul.f32 %v4708, 0.7978846
    %v4725 = vmul.f32 %v4709, 0.7978846
    %v4726 = vtanh.pop %v4710
    %v4727 = vtanh.pop %v4711
    %v4728 = vtanh.pop %v4712
    %v4729 = vtanh.pop %v4713
    %v4730 = vtanh.pop %v4714
    %v4731 = vtanh.pop %v4715
    %v4732 = vtanh.pop %v4716
    %v4733 = vtanh.pop %v4717
    %v4734 = vtanh.pop %v4718
    %v4735 = vtanh.pop %v4719
    %v4736 = vtanh.pop %v4720
    %v4737 = vtanh.pop %v4721
    %v4738 = vtanh.pop %v4722
    %v4739 = vtanh.pop %v4723
    %v4740 = vtanh.pop %v4724
    %v4741 = vtanh.pop %v4725
    %v4742 = vadd.f32 %v4726, 1.0
    %v4743 = vadd.f32 %v4727, 1.0
    %v4744 = vadd.f32 %v4728, 1.0
    %v4745 = vadd.f32 %v4729, 1.0
    %v4746 = vadd.f32 %v4730, 1.0
    %v4747 = vadd.f32 %v4731, 1.0
    %v4748 = vadd.f32 %v4732, 1.0
    %v4749 = vadd.f32 %v4733, 1.0
    %v4750 = vadd.f32 %v4734, 1.0
    %v4751 = vadd.f32 %v4735, 1.0
    %v4752 = vadd.f32 %v4736, 1.0
    %v4753 = vadd.f32 %v4737, 1.0
    %v4754 = vadd.f32 %v4738, 1.0
    %v4755 = vadd.f32 %v4739, 1.0
    %v4756 = vadd.f32 %v4740, 1.0
    %v4757 = vadd.f32 %v4741, 1.0
    %v4758 = vmul.f32 %v4742, 0.5
    %v4759 = vmul.f32 %v4743, 0.5
    %v4760 = vmul.f32 %v4744, 0.5
    %v4761 = vmul.f32 %v4745, 0.5
    %v4762 = vmul.f32 %v4746, 0.5
    %v4763 = vmul.f32 %v4747, 0.5
    %v4764 = vmul.f32 %v4748, 0.5
    %v4765 = vmul.f32 %v4749, 0.5
    %v4766 = vmul.f32 %v4750, 0.5
    %v4767 = vmul.f32 %v4751, 0.5
    %v4768 = vmul.f32 %v4752, 0.5
    %v4769 = vmul.f32 %v4753, 0.5
    %v4770 = vmul.f32 %v4754, 0.5
    %v4771 = vmul.f32 %v4755, 0.5
    %v4772 = vmul.f32 %v4756, 0.5
    %v4773 = vmul.f32 %v4757, 0.5
    %v4774 = vmul.f32 %v4630, %v4758
    %v4775 = vmul.f32 %v4631, %v4759
    %v4776 = vmul.f32 %v4632, %v4760
    %v4777 = vmul.f32 %v4633, %v4761
    %v4778 = vmul.f32 %v4634, %v4762
    %v4779 = vmul.f32 %v4635, %v4763
    %v4780 = vmul.f32 %v4636, %v4764
    %v4781 = vmul.f32 %v4637, %v4765
    %v4782 = vmul.f32 %v4638, %v4766
    %v4783 = vmul.f32 %v4639, %v4767
    %v4784 = vmul.f32 %v4640, %v4768
    %v4785 = vmul.f32 %v4641, %v4769
    %v4786 = vmul.f32 %v4642, %v4770
    %v4787 = vmul.f32 %v4643, %v4771
    %v4788 = vmul.f32 %v4644, %v4772
    %v4789 = vmul.f32 %v4645, %v4773
    %v4790 = vld [vmem:[#allocation2 + $0x220] sm:$0x1]
    %v4791 = vlaneseq
    %v4792 = vshrl.u32 %v4791, 7
    %v4793 = vsub.s32 0, %v4792
    %v4794 = vrot.slane %v4790, %v4793
    %v4795 = vmul.f32 %v4774, %v4794
    %v4796 = vmul.f32 %v4775, %v4794
    %v4797 = vmul.f32 %v4776, %v4794
    %v4798 = vmul.f32 %v4777, %v4794
    %v4799 = vmul.f32 %v4778, %v4794
    %v4800 = vmul.f32 %v4779, %v4794
    %v4801 = vmul.f32 %v4780, %v4794
    %v4802 = vmul.f32 %v4781, %v4794
    %v4803 = vmul.f32 %v4782, %v4794
    %v4804 = vmul.f32 %v4783, %v4794
    %v4805 = vmul.f32 %v4784, %v4794
    %v4806 = vmul.f32 %v4785, %v4794
    %v4807 = vmul.f32 %v4786, %v4794
    %v4808 = vmul.f32 %v4787, %v4794
    %v4809 = vmul.f32 %v4788, %v4794
    %v4810 = vmul.f32 %v4789, %v4794
    %v4811 = vsel %vm48, %v4795, 0.0
    %4812 = vadd.xlane.f32.xlu0 %v4811
    %v4813 = vpop.xlane.xlu0 %4812
    %v4814 = vsel %vm48, %v4796, 0.0
    %4815 = vadd.xlane.f32.xlu0 %v4814
    %v4816 = vpop.xlane.xlu0 %4815
    %v4817 = vsel %vm48, %v4797, 0.0
    %4818 = vadd.xlane.f32.xlu0 %v4817
    %v4819 = vpop.xlane.xlu0 %4818
    %v4820 = vsel %vm48, %v4798, 0.0
    %4821 = vadd.xlane.f32.xlu0 %v4820
    %v4822 = vpop.xlane.xlu0 %4821
    %v4823 = vsel %vm48, %v4799, 0.0
    %4824 = vadd.xlane.f32.xlu0 %v4823
    %v4825 = vpop.xlane.xlu0 %4824
    %v4826 = vsel %vm48, %v4800, 0.0
    %4827 = vadd.xlane.f32.xlu0 %v4826
    %v4828 = vpop.xlane.xlu0 %4827
    %v4829 = vsel %vm48, %v4801, 0.0
    %4830 = vadd.xlane.f32.xlu0 %v4829
    %v4831 = vpop.xlane.xlu0 %4830
    %v4832 = vsel %vm48, %v4802, 0.0
    %4833 = vadd.xlane.f32.xlu0 %v4832
    %v4834 = vpop.xlane.xlu0 %4833
    %v4835 = vsel %vm48, %v4803, 0.0
    %4836 = vadd.xlane.f32.xlu0 %v4835
    %v4837 = vpop.xlane.xlu0 %4836
    %v4838 = vsel %vm48, %v4804, 0.0
    %4839 = vadd.xlane.f32.xlu0 %v4838
    %v4840 = vpop.xlane.xlu0 %4839
    %v4841 = vsel %vm48, %v4805, 0.0
    %4842 = vadd.xlane.f32.xlu0 %v4841
    %v4843 = vpop.xlane.xlu0 %4842
    %v4844 = vsel %vm48, %v4806, 0.0
    %4845 = vadd.xlane.f32.xlu0 %v4844
    %v4846 = vpop.xlane.xlu0 %4845
    %v4847 = vsel %vm48, %v4807, 0.0
    %4848 = vadd.xlane.f32.xlu0 %v4847
    %v4849 = vpop.xlane.xlu0 %4848
    %v4850 = vsel %vm48, %v4808, 0.0
    %4851 = vadd.xlane.f32.xlu0 %v4850
    %v4852 = vpop.xlane.xlu0 %4851
    %v4853 = vsel %vm48, %v4809, 0.0
    %4854 = vadd.xlane.f32.xlu0 %v4853
    %v4855 = vpop.xlane.xlu0 %4854
    %v4856 = vsel %vm48, %v4810, 0.0
    %4857 = vadd.xlane.f32.xlu0 %v4856
    %v4858 = vpop.xlane.xlu0 %4857
    %v4859 = vld [vmem:[#allocation2 + $0x228] sm:$0x1]
    %s4861 = vtos %v4859
    %v4862 = vstv %s4861
    %v4864 = vadd.f32 %v4813, %v4862
    %v4865 = vadd.f32 %v4816, %v4862
    %v4866 = vadd.f32 %v4819, %v4862
    %v4867 = vadd.f32 %v4822, %v4862
    %v4868 = vadd.f32 %v4825, %v4862
    %v4869 = vadd.f32 %v4828, %v4862
    %v4870 = vadd.f32 %v4831, %v4862
    %v4871 = vadd.f32 %v4834, %v4862
    %v4872 = vadd.f32 %v4837, %v4862
    %v4873 = vadd.f32 %v4840, %v4862
    %v4874 = vadd.f32 %v4843, %v4862
    %v4875 = vadd.f32 %v4846, %v4862
    %v4876 = vadd.f32 %v4849, %v4862
    %v4877 = vadd.f32 %v4852, %v4862
    %v4878 = vadd.f32 %v4855, %v4862
    %v4879 = vadd.f32 %v4858, %v4862
    %v4896 = vlaneseq
    %v4897 = vshrl.u32 %v4896, 7
    %v4898 = vsub.s32 %v829, %v4897
    %v4899 = vrot.slane %v4864, %v4898
    %v4900 = vlaneseq
    %v4901 = vshrl.u32 %v4900, 7
    %v4902 = vsub.s32 %v850, %v4901
    %v4903 = vrot.slane %v4865, %v4902
    %v4904 = vsel %vm855, %v4903, %v4899
    %v4905 = vlaneseq
    %v4906 = vshrl.u32 %v4905, 7
    %v4907 = vsub.s32 %v829, %v4906
    %v4908 = vrot.slane %v4866, %v4907
    %v4909 = vlaneseq
    %v4910 = vshrl.u32 %v4909, 7
    %v4911 = vsub.s32 %v850, %v4910
    %v4912 = vrot.slane %v4867, %v4911
    %v4913 = vsel %vm855, %v4912, %v4908
    %v4914 = vlaneseq
    %v4915 = vshrl.u32 %v4914, 7
    %v4916 = vsub.s32 %v829, %v4915
    %v4917 = vrot.slane %v4868, %v4916
    %v4918 = vlaneseq
    %v4919 = vshrl.u32 %v4918, 7
    %v4920 = vsub.s32 %v850, %v4919
    %v4921 = vrot.slane %v4869, %v4920
    %v4922 = vsel %vm855, %v4921, %v4917
    %v4923 = vlaneseq
    %v4924 = vshrl.u32 %v4923, 7
    %v4925 = vsub.s32 %v829, %v4924
    %v4926 = vrot.slane %v4870, %v4925
    %v4927 = vlaneseq
    %v4928 = vshrl.u32 %v4927, 7
    %v4929 = vsub.s32 %v850, %v4928
    %v4930 = vrot.slane %v4871, %v4929
    %v4931 = vsel %vm855, %v4930, %v4926
    %v4932 = vlaneseq
    %v4933 = vshrl.u32 %v4932, 7
    %v4934 = vsub.s32 %v829, %v4933
    %v4935 = vrot.slane %v4872, %v4934
    %v4936 = vlaneseq
    %v4937 = vshrl.u32 %v4936, 7
    %v4938 = vsub.s32 %v850, %v4937
    %v4939 = vrot.slane %v4873, %v4938
    %v4940 = vsel %vm855, %v4939, %v4935
    %v4941 = vlaneseq
    %v4942 = vshrl.u32 %v4941, 7
    %v4943 = vsub.s32 %v829, %v4942
    %v4944 = vrot.slane %v4874, %v4943
    %v4945 = vlaneseq
    %v4946 = vshrl.u32 %v4945, 7
    %v4947 = vsub.s32 %v850, %v4946
    %v4948 = vrot.slane %v4875, %v4947
    %v4949 = vsel %vm855, %v4948, %v4944
    %v4950 = vlaneseq
    %v4951 = vshrl.u32 %v4950, 7
    %v4952 = vsub.s32 %v829, %v4951
    %v4953 = vrot.slane %v4876, %v4952
    %v4954 = vlaneseq
    %v4955 = vshrl.u32 %v4954, 7
    %v4956 = vsub.s32 %v850, %v4955
    %v4957 = vrot.slane %v4877, %v4956
    %v4958 = vsel %vm855, %v4957, %v4953
    %v4959 = vlaneseq
    %v4960 = vshrl.u32 %v4959, 7
    %v4961 = vsub.s32 %v829, %v4960
    %v4962 = vrot.slane %v4878, %v4961
    %v4963 = vlaneseq
    %v4964 = vshrl.u32 %v4963, 7
    %v4965 = vsub.s32 %v850, %v4964
    %v4966 = vrot.slane %v4879, %v4965
    %v4967 = vsel %vm855, %v4966, %v4962
    %v4968 = vsel %vm920, %v4913, %v4904
    %v4969 = vsel %vm922, %v4922, %v4968
    %v4970 = vsel %vm924, %v4931, %v4969
    %v4971 = vsel %vm926, %v4940, %v4970
    %v4972 = vsel %vm928, %v4949, %v4971
    %v4973 = vsel %vm930, %v4958, %v4972
    %v4974 = vsel %vm932, %v4967, %v4973
    %v4976 = vsel %vm935, %v4974, -inf
    %4977 = vmax.xlane.f32.xlu0 %v4976
    %v4978 = vpop.xlane.xlu0 %4977
    %v4980 = vlaneseq
    %v4981 = vshrl.u32 %v4980, 7
    %v4982 = vsub.s32 0, %v4981
    %v4983 = vrot.slane %v4978, %v4982
    %v4984 = vlaneseq
    %v4985 = vshrl.u32 %v4984, 7
    %v4986 = vsub.s32 1, %v4985
    %v4987 = vrot.slane %v4978, %v4986
    %v4988 = vlaneseq
    %v4989 = vshrl.u32 %v4988, 7
    %v4990 = vsub.s32 2, %v4989
    %v4991 = vrot.slane %v4978, %v4990
    %v4992 = vlaneseq
    %v4993 = vshrl.u32 %v4992, 7
    %v4994 = vsub.s32 3, %v4993
    %v4995 = vrot.slane %v4978, %v4994
    %v4996 = vlaneseq
    %v4997 = vshrl.u32 %v4996, 7
    %v4998 = vsub.s32 4, %v4997
    %v4999 = vrot.slane %v4978, %v4998
    %v5000 = vlaneseq
    %v5001 = vshrl.u32 %v5000, 7
    %v5002 = vsub.s32 5, %v5001
    %v5003 = vrot.slane %v4978, %v5002
    %v5004 = vlaneseq
    %v5005 = vshrl.u32 %v5004, 7
    %v5006 = vsub.s32 6, %v5005
    %v5007 = vrot.slane %v4978, %v5006
    %v5008 = vlaneseq
    %v5009 = vshrl.u32 %v5008, 7
    %v5010 = vsub.s32 7, %v5009
    %v5011 = vrot.slane %v4978, %v5010
    %vm5020 = vcmp.eq.f32.partialorder %v4864, %v4983
    %vm5021 = vcmp.eq.f32.partialorder %v4865, %v4983
    %vm5022 = vcmp.eq.f32.partialorder %v4866, %v4987
    %vm5023 = vcmp.eq.f32.partialorder %v4867, %v4987
    %vm5024 = vcmp.eq.f32.partialorder %v4868, %v4991
    %vm5025 = vcmp.eq.f32.partialorder %v4869, %v4991
    %vm5026 = vcmp.eq.f32.partialorder %v4870, %v4995
    %vm5027 = vcmp.eq.f32.partialorder %v4871, %v4995
    %vm5028 = vcmp.eq.f32.partialorder %v4872, %v4999
    %vm5029 = vcmp.eq.f32.partialorder %v4873, %v4999
    %vm5030 = vcmp.eq.f32.partialorder %v4874, %v5003
    %vm5031 = vcmp.eq.f32.partialorder %v4875, %v5003
    %vm5032 = vcmp.eq.f32.partialorder %v4876, %v5007
    %vm5033 = vcmp.eq.f32.partialorder %v4877, %v5007
    %vm5034 = vcmp.eq.f32.partialorder %v4878, %v5011
    %vm5035 = vcmp.eq.f32.partialorder %v4879, %v5011
    %v5036 = vsel %vm5020, %v998, 16
    %v5037 = vsel %vm5021, %v1002, 16
    %v5038 = vsel %vm5022, %v998, 16
    %v5039 = vsel %vm5023, %v1002, 16
    %v5040 = vsel %vm5024, %v998, 16
    %v5041 = vsel %vm5025, %v1002, 16
    %v5042 = vsel %vm5026, %v998, 16
    %v5043 = vsel %vm5027, %v1002, 16
    %v5044 = vsel %vm5028, %v998, 16
    %v5045 = vsel %vm5029, %v1002, 16
    %v5046 = vsel %vm5030, %v998, 16
    %v5047 = vsel %vm5031, %v1002, 16
    %v5048 = vsel %vm5032, %v998, 16
    %v5049 = vsel %vm5033, %v1002, 16
    %v5050 = vsel %vm5034, %v998, 16
    %v5051 = vsel %vm5035, %v1002, 16
    %5052 = vset.pattern.permute.xlu0 0
    %5053 = vperm.xlu0 %5052, %v5036
    %v5054 = vpop.permute.xlu0 %5053
    %5055 = vset.pattern.permute.xlu0 0
    %5056 = vperm.xlu0 %5055, %v5037
    %v5057 = vpop.permute.xlu0 %5056
    %5058 = vset.pattern.permute.xlu0 0
    %5059 = vperm.xlu0 %5058, %v5038
    %v5060 = vpop.permute.xlu0 %5059
    %5061 = vset.pattern.permute.xlu0 0
    %5062 = vperm.xlu0 %5061, %v5039
    %v5063 = vpop.permute.xlu0 %5062
    %5064 = vset.pattern.permute.xlu0 0
    %5065 = vperm.xlu0 %5064, %v5040
    %v5066 = vpop.permute.xlu0 %5065
    %5067 = vset.pattern.permute.xlu0 0
    %5068 = vperm.xlu0 %5067, %v5041
    %v5069 = vpop.permute.xlu0 %5068
    %5070 = vset.pattern.permute.xlu0 0
    %5071 = vperm.xlu0 %5070, %v5042
    %v5072 = vpop.permute.xlu0 %5071
    %5073 = vset.pattern.permute.xlu0 0
    %5074 = vperm.xlu0 %5073, %v5043
    %v5075 = vpop.permute.xlu0 %5074
    %5076 = vset.pattern.permute.xlu0 0
    %5077 = vperm.xlu0 %5076, %v5044
    %v5078 = vpop.permute.xlu0 %5077
    %5079 = vset.pattern.permute.xlu0 0
    %5080 = vperm.xlu0 %5079, %v5045
    %v5081 = vpop.permute.xlu0 %5080
    %5082 = vset.pattern.permute.xlu0 0
    %5083 = vperm.xlu0 %5082, %v5046
    %v5084 = vpop.permute.xlu0 %5083
    %5085 = vset.pattern.permute.xlu0 0
    %5086 = vperm.xlu0 %5085, %v5047
    %v5087 = vpop.permute.xlu0 %5086
    %5088 = vset.pattern.permute.xlu0 0
    %5089 = vperm.xlu0 %5088, %v5048
    %v5090 = vpop.permute.xlu0 %5089
    %5091 = vset.pattern.permute.xlu0 0
    %5092 = vperm.xlu0 %5091, %v5049
    %v5093 = vpop.permute.xlu0 %5092
    %5094 = vset.pattern.permute.xlu0 0
    %5095 = vperm.xlu0 %5094, %v5050
    %v5096 = vpop.permute.xlu0 %5095
    %5097 = vset.pattern.permute.xlu0 0
    %5098 = vperm.xlu0 %5097, %v5051
    %v5099 = vpop.permute.xlu0 %5098
    %v5100 = vlaneseq
    %v5101 = vshrl.u32 %v5100, 7
    %v5102 = vsub.s32 %v829, %v5101
    %v5103 = vrot.slane %v5054, %v5102
    %v5104 = vlaneseq
    %v5105 = vshrl.u32 %v5104, 7
    %v5106 = vsub.s32 %v850, %v5105
    %v5107 = vrot.slane %v5057, %v5106
    %v5108 = vsel %vm855, %v5107, %v5103
    %v5109 = vlaneseq
    %v5110 = vshrl.u32 %v5109, 7
    %v5111 = vsub.s32 %v829, %v5110
    %v5112 = vrot.slane %v5060, %v5111
    %v5113 = vlaneseq
    %v5114 = vshrl.u32 %v5113, 7
    %v5115 = vsub.s32 %v850, %v5114
    %v5116 = vrot.slane %v5063, %v5115
    %v5117 = vsel %vm855, %v5116, %v5112
    %v5118 = vlaneseq
    %v5119 = vshrl.u32 %v5118, 7
    %v5120 = vsub.s32 %v829, %v5119
    %v5121 = vrot.slane %v5066, %v5120
    %v5122 = vlaneseq
    %v5123 = vshrl.u32 %v5122, 7
    %v5124 = vsub.s32 %v850, %v5123
    %v5125 = vrot.slane %v5069, %v5124
    %v5126 = vsel %vm855, %v5125, %v5121
    %v5127 = vlaneseq
    %v5128 = vshrl.u32 %v5127, 7
    %v5129 = vsub.s32 %v829, %v5128
    %v5130 = vrot.slane %v5072, %v5129
    %v5131 = vlaneseq
    %v5132 = vshrl.u32 %v5131, 7
    %v5133 = vsub.s32 %v850, %v5132
    %v5134 = vrot.slane %v5075, %v5133
    %v5135 = vsel %vm855, %v5134, %v5130
    %v5136 = vlaneseq
    %v5137 = vshrl.u32 %v5136, 7
    %v5138 = vsub.s32 %v829, %v5137
    %v5139 = vrot.slane %v5078, %v5138
    %v5140 = vlaneseq
    %v5141 = vshrl.u32 %v5140, 7
    %v5142 = vsub.s32 %v850, %v5141
    %v5143 = vrot.slane %v5081, %v5142
    %v5144 = vsel %vm855, %v5143, %v5139
    %v5145 = vlaneseq
    %v5146 = vshrl.u32 %v5145, 7
    %v5147 = vsub.s32 %v829, %v5146
    %v5148 = vrot.slane %v5084, %v5147
    %v5149 = vlaneseq
    %v5150 = vshrl.u32 %v5149, 7
    %v5151 = vsub.s32 %v850, %v5150
    %v5152 = vrot.slane %v5087, %v5151
    %v5153 = vsel %vm855, %v5152, %v5148
    %v5154 = vlaneseq
    %v5155 = vshrl.u32 %v5154, 7
    %v5156 = vsub.s32 %v829, %v5155
    %v5157 = vrot.slane %v5090, %v5156
    %v5158 = vlaneseq
    %v5159 = vshrl.u32 %v5158, 7
    %v5160 = vsub.s32 %v850, %v5159
    %v5161 = vrot.slane %v5093, %v5160
    %v5162 = vsel %vm855, %v5161, %v5157
    %v5163 = vlaneseq
    %v5164 = vshrl.u32 %v5163, 7
    %v5165 = vsub.s32 %v829, %v5164
    %v5166 = vrot.slane %v5096, %v5165
    %v5167 = vlaneseq
    %v5168 = vshrl.u32 %v5167, 7
    %v5169 = vsub.s32 %v850, %v5168
    %v5170 = vrot.slane %v5099, %v5169
    %v5171 = vsel %vm855, %v5170, %v5166
    %v5172 = vsel %vm920, %v5117, %v5108
    %v5173 = vsel %vm922, %v5126, %v5172
    %v5174 = vsel %vm924, %v5135, %v5173
    %v5175 = vsel %vm926, %v5144, %v5174
    %v5176 = vsel %vm928, %v5153, %v5175
    %v5177 = vsel %vm930, %v5162, %v5176
    %v5178 = vsel %vm932, %v5171, %v5177
    %v5179 = vsel %vm935, %v5178, 2147483647
    %v5180 = vand.u32 %v5179, 65535
    %v5181 = vshra.s32 %v5179, 16
    %v5182 = vcvt.s32.f32 %v5180
    %v5183 = vcvt.s32.f32 %v5181
    %5184 = vmin.xlane.f32.xlu0 %v5183
    %v5185 = vpop.xlane.xlu0 %5184
    %vm5186 = vcmp.eq.f32.partialorder %v5183, %v5185
    %v5187 = vsel %vm5186, %v5182, inf
    %5188 = vmin.xlane.f32.xlu0 %v5187
    %v5189 = vpop.xlane.xlu0 %5188
    %v5190 = vcvt.f32.s32 %v5189
    %v5191 = vcvt.f32.s32 %v5185
    %v5192 = vshll.u32 %v5191, 16
    %v5193 = vadd.s32 %v5192, %v5190
    %vm5194 = vcmp.eq.s32.totalorder %v829, %v5193
    %v5195 = vsel %vm5194, 1, 0
    %v5196 = vcvt.s32.f32 %v5195
    %v5197 = vld [vmem:[#allocation2 + $0x1e8] sm:$0xff]
    %v5198 = vld [vmem:[#allocation2 + $0x1f0] sm:$0xff]
    %v5200 = vsel %vm935, %v5196, 0
    %5202 = vmatprep.subr.mxu0 0.0
    %5203 = vmatpush1.msra.mxu0 %v5197
    %5204 = vmatprep.subr.mxu0 0.0
    %5205 = vmatpush1.msra.mxu0 %v5198
    %5206 = vmatprep.subr.mxu0 0.0
    %5207 = vmatpush1.msra.mxu0 0.0
    %5208 = vmatprep.subr.mxu0 0.0
    %5209 = vmatpush1.msra.mxu0 0.0
    %5210 = vmatprep.subr.mxu0 0.0
    %5211 = vmatpush1.msra.mxu0 0.0
    %5212 = vmatprep.subr.mxu0 0.0
    %5213 = vmatpush1.msra.mxu0 0.0
    %5214 = vmatprep.subr.mxu0 0.0
    %5215 = vmatpush1.msra.mxu0 0.0
    %5216 = vmatprep.subr.mxu0 0.0
    %5217 = vmatpush1.msra.mxu0 0.0
    %5218 = vmatprep.subr.mxu0 0.0
    %5219 = vmatpush1.msra.mxu0 0.0
    %5220 = vmatprep.subr.mxu0 0.0
    %5221 = vmatpush1.msra.mxu0 0.0
    %5222 = vmatprep.subr.mxu0 0.0
    %5223 = vmatpush1.msra.mxu0 0.0
    %5224 = vmatprep.subr.mxu0 0.0
    %5225 = vmatpush1.msra.mxu0 0.0
    %5226 = vmatprep.subr.mxu0 0.0
    %5227 = vmatpush1.msra.mxu0 0.0
    %5228 = vmatprep.subr.mxu0 0.0
    %5229 = vmatpush1.msra.mxu0 0.0
    %5230 = vmatprep.subr.mxu0 0.0
    %5231 = vmatpush1.msra.mxu0 0.0
    %5232 = vmatprep.subr.mxu0 0.0
    %5233 = vmatpush1.msra.mxu0 0.0
    %5234 = vmatprep.subr.mxu0 0.0
    %5235 = vmatpush1.msra.mxu0 0.0
    %5236 = vmatprep.subr.mxu0 0.0
    %5237 = vmatpush1.msra.mxu0 0.0
    %5238 = vmatprep.subr.mxu0 0.0
    %5239 = vmatpush1.msra.mxu0 0.0
    %5240 = vmatprep.subr.mxu0 0.0
    %5241 = vmatpush1.msra.mxu0 0.0
    %5242 = vmatprep.subr.mxu0 0.0
    %5243 = vmatpush1.msra.mxu0 0.0
    %5244 = vmatprep.subr.mxu0 0.0
    %5245 = vmatpush1.msra.mxu0 0.0
    %5246 = vmatprep.subr.mxu0 0.0
    %5247 = vmatpush1.msra.mxu0 0.0
    %5248 = vmatprep.subr.mxu0 0.0
    %5249 = vmatpush1.msra.mxu0 0.0
    %5250 = vmatprep.subr.mxu0 0.0
    %5251 = vmatpush1.msra.mxu0 0.0
    %5252 = vmatprep.subr.mxu0 0.0
    %5253 = vmatpush1.msra.mxu0 0.0
    %5254 = vmatprep.subr.mxu0 0.0
    %5255 = vmatpush1.msra.mxu0 0.0
    %5256 = vmatprep.subr.mxu0 0.0
    %5257 = vmatpush1.msra.mxu0 0.0
    %5258 = vmatprep.subr.mxu0 0.0
    %5259 = vmatpush1.msra.mxu0 0.0
    %5260 = vmatprep.subr.mxu0 0.0
    %5261 = vmatpush1.msra.mxu0 0.0
    %5262 = vmatprep.subr.mxu0 0.0
    %5263 = vmatpush1.msra.mxu0 0.0
    %5264 = vmatprep.subr.mxu0 0.0
    %5265 = vmatpush1.msra.mxu0 0.0
    %5266 = vmatprep.mubr.f32.mxu0 0.0
    %5267 = vmatmul.mubr.f32.gmra.mrb[0].mxu0 %v5200
    %v5268 = vpop.f32.mrb[0].mxu0
    %v5269 = vadd.f32 0.0, %v5268
    %v5270 = vpop.f32.mrb[0].mxu0
    %5271 = vdwg.mxu0
    %v5272 = vxor.u32 %v4978, 2147483648
    %v5273 = vmul.f32 %v5272, 1.442695
    %v5274 = vpow.pop %v5273
    %v5275 = vadd.f32 %v5274, 1.0
    %v5276 = vrcp.pop %v5275
    %v5277 = vmul.f32 1.0, %v5276
    %v5278 = vmul.f32 %v5269, %v5277
    %v5279 = vld [vmem:[#allocation2 + $0xa0] sm:$0xff]
    %v5280 = vld [vmem:[#allocation2 + $0xa8] sm:$0xff]
    %v5281 = vld [vmem:[#allocation2 + $0xb0] sm:$0xff]
    %v5282 = vld [vmem:[#allocation2 + $0xb8] sm:$0xff]
    %v5283 = vld [vmem:[#allocation2 + $0x230] sm:$0x1]
    %v5284 = vlaneseq
    %v5285 = vshrl.u32 %v5284, 7
    %v5286 = vsub.s32 0, %v5285
    %v5287 = vrot.slane %v5283, %v5286
    %v5289 = vsel %vm48, %v5278, 0
    %5291 = vmatprep.subr.mxu0 0.0
    %5292 = vmatpush1.msra.mxu0 %v5279
    %5293 = vmatprep.subr.mxu0 0.0
    %5294 = vmatpush1.msra.mxu0 %v5280
    %5295 = vmatprep.subr.mxu0 0.0
    %5296 = vmatpush1.msra.mxu0 %v5281
    %5297 = vmatprep.subr.mxu0 0.0
    %5298 = vmatpush1.msra.mxu0 %v5282
    %5299 = vmatprep.subr.mxu0 0.0
    %5300 = vmatpush1.msra.mxu0 0.0
    %5301 = vmatprep.subr.mxu0 0.0
    %5302 = vmatpush1.msra.mxu0 0.0
    %5303 = vmatprep.subr.mxu0 0.0
    %5304 = vmatpush1.msra.mxu0 0.0
    %5305 = vmatprep.subr.mxu0 0.0
    %5306 = vmatpush1.msra.mxu0 0.0
    %5307 = vmatprep.subr.mxu0 0.0
    %5308 = vmatpush1.msra.mxu0 0.0
    %5309 = vmatprep.subr.mxu0 0.0
    %5310 = vmatpush1.msra.mxu0 0.0
    %5311 = vmatprep.subr.mxu0 0.0
    %5312 = vmatpush1.msra.mxu0 0.0
    %5313 = vmatprep.subr.mxu0 0.0
    %5314 = vmatpush1.msra.mxu0 0.0
    %5315 = vmatprep.subr.mxu0 0.0
    %5316 = vmatpush1.msra.mxu0 0.0
    %5317 = vmatprep.subr.mxu0 0.0
    %5318 = vmatpush1.msra.mxu0 0.0
    %5319 = vmatprep.subr.mxu0 0.0
    %5320 = vmatpush1.msra.mxu0 0.0
    %5321 = vmatprep.subr.mxu0 0.0
    %5322 = vmatpush1.msra.mxu0 0.0
    %5323 = vmatprep.subr.mxu0 0.0
    %5324 = vmatpush1.msra.mxu0 0.0
    %5325 = vmatprep.subr.mxu0 0.0
    %5326 = vmatpush1.msra.mxu0 0.0
    %5327 = vmatprep.subr.mxu0 0.0
    %5328 = vmatpush1.msra.mxu0 0.0
    %5329 = vmatprep.subr.mxu0 0.0
    %5330 = vmatpush1.msra.mxu0 0.0
    %5331 = vmatprep.subr.mxu0 0.0
    %5332 = vmatpush1.msra.mxu0 0.0
    %5333 = vmatprep.subr.mxu0 0.0
    %5334 = vmatpush1.msra.mxu0 0.0
    %5335 = vmatprep.subr.mxu0 0.0
    %5336 = vmatpush1.msra.mxu0 0.0
    %5337 = vmatprep.subr.mxu0 0.0
    %5338 = vmatpush1.msra.mxu0 0.0
    %5339 = vmatprep.subr.mxu0 0.0
    %5340 = vmatpush1.msra.mxu0 0.0
    %5341 = vmatprep.subr.mxu0 0.0
    %5342 = vmatpush1.msra.mxu0 0.0
    %5343 = vmatprep.subr.mxu0 0.0
    %5344 = vmatpush1.msra.mxu0 0.0
    %5345 = vmatprep.subr.mxu0 0.0
    %5346 = vmatpush1.msra.mxu0 0.0
    %5347 = vmatprep.subr.mxu0 0.0
    %5348 = vmatpush1.msra.mxu0 0.0
    %5349 = vmatprep.subr.mxu0 0.0
    %5350 = vmatpush1.msra.mxu0 0.0
    %5351 = vmatprep.subr.mxu0 0.0
    %5352 = vmatpush1.msra.mxu0 0.0
    %5353 = vmatprep.subr.mxu0 0.0
    %5354 = vmatpush1.msra.mxu0 0.0
    %5355 = vmatprep.mubr.f32.mxu0 0.0
    %5356 = vmatmul.mubr.f32.gmra.mrb[0].mxu0 %v5289
    %v5357 = vpop.f32.mrb[0].mxu0
    %v5358 = vadd.f32 %v5287, %v5357
    %v5359 = vpop.f32.mrb[0].mxu0
    %5360 = vdwg.mxu0
    %v5361 = vmul.f32 %v5358, %v5358
    %v5362 = vmul.f32 %v5358, %v5361
    %v5363 = vmul.f32 %v5362, 0.044715
    %v5364 = vadd.f32 %v5358, %v5363
    %v5365 = vmul.f32 %v5364, 0.7978846
    %v5366 = vtanh.pop %v5365
    %v5367 = vadd.f32 %v5366, 1.0
    %v5368 = vmul.f32 %v5367, 0.5
    %v5369 = vmul.f32 %v5358, %v5368
    %v5370 = vld [vmem:[#allocation2 + $0xc0] sm:$0xff]
    %v5371 = vld [vmem:[#allocation2 + $0xc8] sm:$0xff]
    %v5372 = vld [vmem:[#allocation2 + $0xd0] sm:$0xff]
    %v5373 = vld [vmem:[#allocation2 + $0xd8] sm:$0xff]
    %v5374 = vld [vmem:[#allocation2 + $0x238] sm:$0x1]
    %v5375 = vlaneseq
    %v5376 = vshrl.u32 %v5375, 7
    %v5377 = vsub.s32 0, %v5376
    %v5378 = vrot.slane %v5374, %v5377
    %v5380 = vsel %vm48, %v5369, 0
    %5382 = vmatprep.subr.mxu0 0.0
    %5383 = vmatpush1.msra.mxu0 %v5370
    %5384 = vmatprep.subr.mxu0 0.0
    %5385 = vmatpush1.msra.mxu0 %v5371
    %5386 = vmatprep.subr.mxu0 0.0
    %5387 = vmatpush1.msra.mxu0 %v5372
    %5388 = vmatprep.subr.mxu0 0.0
    %5389 = vmatpush1.msra.mxu0 %v5373
    %5390 = vmatprep.subr.mxu0 0.0
    %5391 = vmatpush1.msra.mxu0 0.0
    %5392 = vmatprep.subr.mxu0 0.0
    %5393 = vmatpush1.msra.mxu0 0.0
    %5394 = vmatprep.subr.mxu0 0.0
    %5395 = vmatpush1.msra.mxu0 0.0
    %5396 = vmatprep.subr.mxu0 0.0
    %5397 = vmatpush1.msra.mxu0 0.0
    %5398 = vmatprep.subr.mxu0 0.0
    %5399 = vmatpush1.msra.mxu0 0.0
    %5400 = vmatprep.subr.mxu0 0.0
    %5401 = vmatpush1.msra.mxu0 0.0
    %5402 = vmatprep.subr.mxu0 0.0
    %5403 = vmatpush1.msra.mxu0 0.0
    %5404 = vmatprep.subr.mxu0 0.0
    %5405 = vmatpush1.msra.mxu0 0.0
    %5406 = vmatprep.subr.mxu0 0.0
    %5407 = vmatpush1.msra.mxu0 0.0
    %5408 = vmatprep.subr.mxu0 0.0
    %5409 = vmatpush1.msra.mxu0 0.0
    %5410 = vmatprep.subr.mxu0 0.0
    %5411 = vmatpush1.msra.mxu0 0.0
    %5412 = vmatprep.subr.mxu0 0.0
    %5413 = vmatpush1.msra.mxu0 0.0
    %5414 = vmatprep.subr.mxu0 0.0
    %5415 = vmatpush1.msra.mxu0 0.0
    %5416 = vmatprep.subr.mxu0 0.0
    %5417 = vmatpush1.msra.mxu0 0.0
    %5418 = vmatprep.subr.mxu0 0.0
    %5419 = vmatpush1.msra.mxu0 0.0
    %5420 = vmatprep.subr.mxu0 0.0
    %5421 = vmatpush1.msra.mxu0 0.0
    %5422 = vmatprep.subr.mxu0 0.0
    %5423 = vmatpush1.msra.mxu0 0.0
    %5424 = vmatprep.subr.mxu0 0.0
    %5425 = vmatpush1.msra.mxu0 0.0
    %5426 = vmatprep.subr.mxu0 0.0
    %5427 = vmatpush1.msra.mxu0 0.0
    %5428 = vmatprep.subr.mxu0 0.0
    %5429 = vmatpush1.msra.mxu0 0.0
    %5430 = vmatprep.subr.mxu0 0.0
    %5431 = vmatpush1.msra.mxu0 0.0
    %5432 = vmatprep.subr.mxu0 0.0
    %5433 = vmatpush1.msra.mxu0 0.0
    %5434 = vmatprep.subr.mxu0 0.0
    %5435 = vmatpush1.msra.mxu0 0.0
    %5436 = vmatprep.subr.mxu0 0.0
    %5437 = vmatpush1.msra.mxu0 0.0
    %5438 = vmatprep.subr.mxu0 0.0
    %5439 = vmatpush1.msra.mxu0 0.0
    %5440 = vmatprep.subr.mxu0 0.0
    %5441 = vmatpush1.msra.mxu0 0.0
    %5442 = vmatprep.subr.mxu0 0.0
    %5443 = vmatpush1.msra.mxu0 0.0
    %5444 = vmatprep.subr.mxu0 0.0
    %5445 = vmatpush1.msra.mxu0 0.0
    %5446 = vmatprep.mubr.f32.mxu0 0.0
    %5447 = vmatmul.mubr.f32.gmra.mrb[0].mxu0 %v5380
    %v5448 = vpop.f32.mrb[0].mxu0
    %v5449 = vadd.f32 %v5378, %v5448
    %v5450 = vpop.f32.mrb[0].mxu0
    %5451 = vdwg.mxu0
    %v5452 = vld [vmem:[#allocation2 + $0x40] sm:$0xff]
    %v5453 = vld [vmem:[#allocation2 + $0x48] sm:$0xff]
    %v5454 = vld [vmem:[#allocation2 + $0x50] sm:$0xff]
    %v5455 = vld [vmem:[#allocation2 + $0x58] sm:$0xff]
    %v5456 = vld [vmem:[#allocation2 + $0x208] sm:$0x1]
    %v5457 = vlaneseq
    %v5458 = vshrl.u32 %v5457, 7
    %v5459 = vsub.s32 0, %v5458
    %v5460 = vrot.slane %v5456, %v5459
    %v5462 = vsel %vm48, %v5449, 0
    %5464 = vmatprep.subr.mxu0 0.0
    %5465 = vmatpush1.msra.mxu0 %v5452
    %5466 = vmatprep.subr.mxu0 0.0
    %5467 = vmatpush1.msra.mxu0 %v5453
    %5468 = vmatprep.subr.mxu0 0.0
    %5469 = vmatpush1.msra.mxu0 %v5454
    %5470 = vmatprep.subr.mxu0 0.0
    %5471 = vmatpush1.msra.mxu0 %v5455
    %5472 = vmatprep.subr.mxu0 0.0
    %5473 = vmatpush1.msra.mxu0 0.0
    %5474 = vmatprep.subr.mxu0 0.0
    %5475 = vmatpush1.msra.mxu0 0.0
    %5476 = vmatprep.subr.mxu0 0.0
    %5477 = vmatpush1.msra.mxu0 0.0
    %5478 = vmatprep.subr.mxu0 0.0
    %5479 = vmatpush1.msra.mxu0 0.0
    %5480 = vmatprep.subr.mxu0 0.0
    %5481 = vmatpush1.msra.mxu0 0.0
    %5482 = vmatprep.subr.mxu0 0.0
    %5483 = vmatpush1.msra.mxu0 0.0
    %5484 = vmatprep.subr.mxu0 0.0
    %5485 = vmatpush1.msra.mxu0 0.0
    %5486 = vmatprep.subr.mxu0 0.0
    %5487 = vmatpush1.msra.mxu0 0.0
    %5488 = vmatprep.subr.mxu0 0.0
    %5489 = vmatpush1.msra.mxu0 0.0
    %5490 = vmatprep.subr.mxu0 0.0
    %5491 = vmatpush1.msra.mxu0 0.0
    %5492 = vmatprep.subr.mxu0 0.0
    %5493 = vmatpush1.msra.mxu0 0.0
    %5494 = vmatprep.subr.mxu0 0.0
    %5495 = vmatpush1.msra.mxu0 0.0
    %5496 = vmatprep.subr.mxu0 0.0
    %5497 = vmatpush1.msra.mxu0 0.0
    %5498 = vmatprep.subr.mxu0 0.0
    %5499 = vmatpush1.msra.mxu0 0.0
    %5500 = vmatprep.subr.mxu0 0.0
    %5501 = vmatpush1.msra.mxu0 0.0
    %5502 = vmatprep.subr.mxu0 0.0
    %5503 = vmatpush1.msra.mxu0 0.0
    %5504 = vmatprep.subr.mxu0 0.0
    %5505 = vmatpush1.msra.mxu0 0.0
    %5506 = vmatprep.subr.mxu0 0.0
    %5507 = vmatpush1.msra.mxu0 0.0
    %5508 = vmatprep.subr.mxu0 0.0
    %5509 = vmatpush1.msra.mxu0 0.0
    %5510 = vmatprep.subr.mxu0 0.0
    %5511 = vmatpush1.msra.mxu0 0.0
    %5512 = vmatprep.subr.mxu0 0.0
    %5513 = vmatpush1.msra.mxu0 0.0
    %5514 = vmatprep.subr.mxu0 0.0
    %5515 = vmatpush1.msra.mxu0 0.0
    %5516 = vmatprep.subr.mxu0 0.0
    %5517 = vmatpush1.msra.mxu0 0.0
    %5518 = vmatprep.subr.mxu0 0.0
    %5519 = vmatpush1.msra.mxu0 0.0
    %5520 = vmatprep.subr.mxu0 0.0
    %5521 = vmatpush1.msra.mxu0 0.0
    %5522 = vmatprep.subr.mxu0 0.0
    %5523 = vmatpush1.msra.mxu0 0.0
    %5524 = vmatprep.subr.mxu0 0.0
    %5525 = vmatpush1.msra.mxu0 0.0
    %5526 = vmatprep.subr.mxu0 0.0
    %5527 = vmatpush1.msra.mxu0 0.0
    %5528 = vmatprep.mubr.f32.mxu0 0.0
    %5529 = vmatmul.mubr.f32.gmra.mrb[0].mxu0 %v5462
    %v5530 = vpop.f32.mrb[0].mxu0
    %v5531 = vadd.f32 %v5460, %v5530
    %v5532 = vpop.f32.mrb[0].mxu0
    %5533 = vdwg.mxu0
    %5534 = vrot.lane.b32.xlu0 %v4347, 96
    %v5535 = vpop.permute.xlu0 %5534
    %v5537 = vmul.f32 %v4347, %v5535
    %5539 = vrot.lane.b32.xlu0 %v5531, 32
    %v5540 = vpop.permute.xlu0 %5539
    %v5542 = vmul.f32 %v4347, %v5540
    %v5543 = vmul.f32 %v4347, %v119
    %v5544 = vld [vmem:[#allocation2 + $0x1c0] sm:$0xff]
    %v5545 = vld [vmem:[#allocation2 + $0x1c8] sm:$0xff]
    %v5546 = vld [vmem:[#allocation2 + $0x1d0] sm:$0xff]
    %v5547 = vld [vmem:[#allocation2 + $0x1d8] sm:$0xff]
    %5551 = vrot.lane.b32.xlu0 %v5537, 96
    %v5552 = vpop.permute.xlu0 %5551
    %5553 = vrot.lane.b32.xlu0 %v5542, 96
    %v5554 = vpop.permute.xlu0 %5553
    %5555 = vrot.lane.b32.xlu0 %v5543, 96
    %v5556 = vpop.permute.xlu0 %5555
    %v5557 = vsel %vm48, %v5552, 0
    %v5559 = vsel %vm48, %v5554, 0
    %v5561 = vsel %vm48, %v5556, 0
    %5563 = vmatprep.subr.mxu0 0.0
    %5564 = vmatpush1.msra.mxu0 %v5544
    %5565 = vmatprep.subr.mxu0 0.0
    %5566 = vmatpush1.msra.mxu0 %v5545
    %5567 = vmatprep.subr.mxu0 0.0
    %5568 = vmatpush1.msra.mxu0 %v5546
    %5569 = vmatprep.subr.mxu0 0.0
    %5570 = vmatpush1.msra.mxu0 %v5547
    %5571 = vmatprep.subr.mxu0 0.0
    %5572 = vmatpush1.msra.mxu0 0.0
    %5573 = vmatprep.subr.mxu0 0.0
    %5574 = vmatpush1.msra.mxu0 0.0
    %5575 = vmatprep.subr.mxu0 0.0
    %5576 = vmatpush1.msra.mxu0 0.0
    %5577 = vmatprep.subr.mxu0 0.0
    %5578 = vmatpush1.msra.mxu0 0.0
    %5579 = vmatprep.subr.mxu0 0.0
    %5580 = vmatpush1.msra.mxu0 0.0
    %5581 = vmatprep.subr.mxu0 0.0
    %5582 = vmatpush1.msra.mxu0 0.0
    %5583 = vmatprep.subr.mxu0 0.0
    %5584 = vmatpush1.msra.mxu0 0.0
    %5585 = vmatprep.subr.mxu0 0.0
    %5586 = vmatpush1.msra.mxu0 0.0
    %5587 = vmatprep.subr.mxu0 0.0
    %5588 = vmatpush1.msra.mxu0 0.0
    %5589 = vmatprep.subr.mxu0 0.0
    %5590 = vmatpush1.msra.mxu0 0.0
    %5591 = vmatprep.subr.mxu0 0.0
    %5592 = vmatpush1.msra.mxu0 0.0
    %5593 = vmatprep.subr.mxu0 0.0
    %5594 = vmatpush1.msra.mxu0 0.0
    %5595 = vmatprep.subr.mxu0 0.0
    %5596 = vmatpush1.msra.mxu0 0.0
    %5597 = vmatprep.subr.mxu0 0.0
    %5598 = vmatpush1.msra.mxu0 0.0
    %5599 = vmatprep.subr.mxu0 0.0
    %5600 = vmatpush1.msra.mxu0 0.0
    %5601 = vmatprep.subr.mxu0 0.0
    %5602 = vmatpush1.msra.mxu0 0.0
    %5603 = vmatprep.subr.mxu0 0.0
    %5604 = vmatpush1.msra.mxu0 0.0
    %5605 = vmatprep.subr.mxu0 0.0
    %5606 = vmatpush1.msra.mxu0 0.0
    %5607 = vmatprep.subr.mxu0 0.0
    %5608 = vmatpush1.msra.mxu0 0.0
    %5609 = vmatprep.subr.mxu0 0.0
    %5610 = vmatpush1.msra.mxu0 0.0
    %5611 = vmatprep.subr.mxu0 0.0
    %5612 = vmatpush1.msra.mxu0 0.0
    %5613 = vmatprep.subr.mxu0 0.0
    %5614 = vmatpush1.msra.mxu0 0.0
    %5615 = vmatprep.subr.mxu0 0.0
    %5616 = vmatpush1.msra.mxu0 0.0
    %5617 = vmatprep.subr.mxu0 0.0
    %5618 = vmatpush1.msra.mxu0 0.0
    %5619 = vmatprep.subr.mxu0 0.0
    %5620 = vmatpush1.msra.mxu0 0.0
    %5621 = vmatprep.subr.mxu0 0.0
    %5622 = vmatpush1.msra.mxu0 0.0
    %5623 = vmatprep.subr.mxu0 0.0
    %5624 = vmatpush1.msra.mxu0 0.0
    %5625 = vmatprep.subr.mxu0 0.0
    %5626 = vmatpush1.msra.mxu0 0.0
    %5627 = vmatprep.mubr.f32.mxu0 0.0
    %5628 = vmatmul.mubr.f32.gmra.mrb[0].mxu0 %v5557
    %v5629 = vpop.f32.mrb[0].mxu0
    %v5630 = vadd.f32 0.0, %v5629
    %v5631 = vpop.f32.mrb[0].mxu0
    %5632 = vmatprep.mubr.f32.mxu0 0.0
    %5633 = vmatmul.mubr.f32.gmra.mrb[0].mxu0 %v5559
    %v5634 = vpop.f32.mrb[0].mxu0
    %v5635 = vadd.f32 0.0, %v5634
    %v5636 = vpop.f32.mrb[0].mxu0
    %5637 = vmatprep.mubr.f32.mxu0 0.0
    %5638 = vmatmul.mubr.f32.gmra.mrb[0].mxu0 %v5561
    %v5639 = vpop.f32.mrb[0].mxu0
    %v5640 = vadd.f32 0.0, %v5639
    %v5641 = vpop.f32.mrb[0].mxu0
    %5642 = vdwg.mxu0
    %v5643 = vmul.f32 %v5630, 0.35355338
    %v5644 = vmul.f32 %v5635, 0.35355338
    %v5645 = vmul.f32 %v5640, 0.35355338
    %v5646 = vmax.f32 %v5643, %v5644
    %v5647 = vmax.f32 %v5646, %v5645
    %v5648 = vsub.f32 %v5643, %v5647
    %v5649 = vmul.f32 %v5648, 1.442695
    %v5650 = vpow.pop %v5649
    %v5651 = vsub.f32 %v5644, %v5647
    %v5652 = vmul.f32 %v5651, 1.442695
    %v5653 = vpow.pop %v5652
    %v5654 = vsub.f32 %v5645, %v5647
    %v5655 = vmul.f32 %v5654, 1.442695
    %v5656 = vpow.pop %v5655
    %v5657 = vadd.f32 %v5650, %v5653
    %v5658 = vadd.f32 %v5657, %v5656
    %v5659 = vrcp.pop %v5658
    %v5660 = vld [vmem:[#allocation2 + $0x1e0] sm:$0xf]
    %v5662 = vsel %vm1628, %v5650, 0
    %v5665 = vsel %vm1628, %v5653, 0
    %v5668 = vsel %vm1628, %v5656, 0
    %v5671 = vsel %vm1628, %v5659, 0
    %v5674 = vsel %vm1641, %v5660, 0
    %5676 = vmatprep.subr.mxu0 0.0
    %5677 = vmatpush1.msra.mxu0 %v5674
    %5678 = vmatprep.subr.mxu0 0.0
    %5679 = vmatpush1.msra.mxu0 0.0
    %5680 = vmatprep.subr.mxu0 0.0
    %5681 = vmatpush1.msra.mxu0 0.0
    %5682 = vmatprep.subr.mxu0 0.0
    %5683 = vmatpush1.msra.mxu0 0.0
    %5684 = vmatprep.subr.mxu0 0.0
    %5685 = vmatpush1.msra.mxu0 0.0
    %5686 = vmatprep.subr.mxu0 0.0
    %5687 = vmatpush1.msra.mxu0 0.0
    %5688 = vmatprep.subr.mxu0 0.0
    %5689 = vmatpush1.msra.mxu0 0.0
    %5690 = vmatprep.subr.mxu0 0.0
    %5691 = vmatpush1.msra.mxu0 0.0
    %5692 = vmatprep.subr.mxu0 0.0
    %5693 = vmatpush1.msra.mxu0 0.0
    %5694 = vmatprep.subr.mxu0 0.0
    %5695 = vmatpush1.msra.mxu0 0.0
    %5696 = vmatprep.subr.mxu0 0.0
    %5697 = vmatpush1.msra.mxu0 0.0
    %5698 = vmatprep.subr.mxu0 0.0
    %5699 = vmatpush1.msra.mxu0 0.0
    %5700 = vmatprep.subr.mxu0 0.0
    %5701 = vmatpush1.msra.mxu0 0.0
    %5702 = vmatprep.subr.mxu0 0.0
    %5703 = vmatpush1.msra.mxu0 0.0
    %5704 = vmatprep.subr.mxu0 0.0
    %5705 = vmatpush1.msra.mxu0 0.0
    %5706 = vmatprep.subr.mxu0 0.0
    %5707 = vmatpush1.msra.mxu0 0.0
    %5708 = vmatprep.subr.mxu0 0.0
    %5709 = vmatpush1.msra.mxu0 0.0
    %5710 = vmatprep.subr.mxu0 0.0
    %5711 = vmatpush1.msra.mxu0 0.0
    %5712 = vmatprep.subr.mxu0 0.0
    %5713 = vmatpush1.msra.mxu0 0.0
    %5714 = vmatprep.subr.mxu0 0.0
    %5715 = vmatpush1.msra.mxu0 0.0
    %5716 = vmatprep.subr.mxu0 0.0
    %5717 = vmatpush1.msra.mxu0 0.0
    %5718 = vmatprep.subr.mxu0 0.0
    %5719 = vmatpush1.msra.mxu0 0.0
    %5720 = vmatprep.subr.mxu0 0.0
    %5721 = vmatpush1.msra.mxu0 0.0
    %5722 = vmatprep.subr.mxu0 0.0
    %5723 = vmatpush1.msra.mxu0 0.0
    %5724 = vmatprep.subr.mxu0 0.0
    %5725 = vmatpush1.msra.mxu0 0.0
    %5726 = vmatprep.subr.mxu0 0.0
    %5727 = vmatpush1.msra.mxu0 0.0
    %5728 = vmatprep.subr.mxu0 0.0
    %5729 = vmatpush1.msra.mxu0 0.0
    %5730 = vmatprep.subr.mxu0 0.0
    %5731 = vmatpush1.msra.mxu0 0.0
    %5732 = vmatprep.subr.mxu0 0.0
    %5733 = vmatpush1.msra.mxu0 0.0
    %5734 = vmatprep.subr.mxu0 0.0
    %5735 = vmatpush1.msra.mxu0 0.0
    %5736 = vmatprep.subr.mxu0 0.0
    %5737 = vmatpush1.msra.mxu0 0.0
    %5738 = vmatprep.subr.mxu0 0.0
    %5739 = vmatpush1.msra.mxu0 0.0
    %5740 = vmatprep.mubr.f32.mxu0 0.0
    %5741 = vmatmul.mubr.f32.gmra.mrb[0].mxu0 %v5662
    %v5742 = vpop.f32.mrb[0].mxu0
    %v5743 = vadd.f32 0.0, %v5742
    %v5744 = vpop.f32.mrb[0].mxu0
    %5745 = vmatprep.mubr.f32.mxu0 0.0
    %5746 = vmatmul.mubr.f32.gmra.mrb[0].mxu0 %v5665
    %v5747 = vpop.f32.mrb[0].mxu0
    %v5748 = vadd.f32 0.0, %v5747
    %v5749 = vpop.f32.mrb[0].mxu0
    %5750 = vmatprep.mubr.f32.mxu0 0.0
    %5751 = vmatmul.mubr.f32.gmra.mrb[0].mxu0 %v5668
    %v5752 = vpop.f32.mrb[0].mxu0
    %v5753 = vadd.f32 0.0, %v5752
    %v5754 = vpop.f32.mrb[0].mxu0
    %5755 = vmatprep.mubr.f32.mxu0 0.0
    %5756 = vmatmul.mubr.f32.gmra.mrb[0].mxu0 %v5671
    %v5757 = vpop.f32.mrb[0].mxu0
    %v5758 = vadd.f32 0.0, %v5757
    %v5759 = vpop.f32.mrb[0].mxu0
    %5760 = vdwg.mxu0
    %5761 = vrot.lane.b32.xlu0 %v4347, 32
    %v5762 = vpop.permute.xlu0 %5761
    %v5764 = vmul.f32 %v5743, %v5762
    %5765 = vrot.lane.b32.xlu0 %v5531, 96
    %v5766 = vpop.permute.xlu0 %5765
    %v5768 = vmul.f32 %v5748, %v5766
    %v5769 = vadd.f32 %v5764, %v5768
    %v5770 = vmul.f32 %v5753, %v1741
    %v5771 = vadd.f32 %v5769, %v5770
    %v5772 = vmul.f32 %v5771, %v5758
    %v5773 = vld [vmem:[#allocation2 + $0x100] sm:$0xff]
    %v5774 = vld [vmem:[#allocation2 + $0x108] sm:$0xff]
    %v5775 = vld [vmem:[#allocation2 + $0x110] sm:$0xff]
    %v5776 = vld [vmem:[#allocation2 + $0x118] sm:$0xff]
    %v5777 = vld [vmem:[#allocation2 + $0x248] sm:$0x1]
    %v5778 = vlaneseq
    %v5779 = vshrl.u32 %v5778, 7
    %v5780 = vsub.s32 0, %v5779
    %v5781 = vrot.slane %v5777, %v5780
    %v5783 = vsel %vm48, %v5772, 0
    %5785 = vmatprep.subr.mxu0 0.0
    %5786 = vmatpush1.msra.mxu0 %v5773
    %5787 = vmatprep.subr.mxu0 0.0
    %5788 = vmatpush1.msra.mxu0 %v5774
    %5789 = vmatprep.subr.mxu0 0.0
    %5790 = vmatpush1.msra.mxu0 %v5775
    %5791 = vmatprep.subr.mxu0 0.0
    %5792 = vmatpush1.msra.mxu0 %v5776
    %5793 = vmatprep.subr.mxu0 0.0
    %5794 = vmatpush1.msra.mxu0 0.0
    %5795 = vmatprep.subr.mxu0 0.0
    %5796 = vmatpush1.msra.mxu0 0.0
    %5797 = vmatprep.subr.mxu0 0.0
    %5798 = vmatpush1.msra.mxu0 0.0
    %5799 = vmatprep.subr.mxu0 0.0
    %5800 = vmatpush1.msra.mxu0 0.0
    %5801 = vmatprep.subr.mxu0 0.0
    %5802 = vmatpush1.msra.mxu0 0.0
    %5803 = vmatprep.subr.mxu0 0.0
    %5804 = vmatpush1.msra.mxu0 0.0
    %5805 = vmatprep.subr.mxu0 0.0
    %5806 = vmatpush1.msra.mxu0 0.0
    %5807 = vmatprep.subr.mxu0 0.0
    %5808 = vmatpush1.msra.mxu0 0.0
    %5809 = vmatprep.subr.mxu0 0.0
    %5810 = vmatpush1.msra.mxu0 0.0
    %5811 = vmatprep.subr.mxu0 0.0
    %5812 = vmatpush1.msra.mxu0 0.0
    %5813 = vmatprep.subr.mxu0 0.0
    %5814 = vmatpush1.msra.mxu0 0.0
    %5815 = vmatprep.subr.mxu0 0.0
    %5816 = vmatpush1.msra.mxu0 0.0
    %5817 = vmatprep.subr.mxu0 0.0
    %5818 = vmatpush1.msra.mxu0 0.0
    %5819 = vmatprep.subr.mxu0 0.0
    %5820 = vmatpush1.msra.mxu0 0.0
    %5821 = vmatprep.subr.mxu0 0.0
    %5822 = vmatpush1.msra.mxu0 0.0
    %5823 = vmatprep.subr.mxu0 0.0
    %5824 = vmatpush1.msra.mxu0 0.0
    %5825 = vmatprep.subr.mxu0 0.0
    %5826 = vmatpush1.msra.mxu0 0.0
    %5827 = vmatprep.subr.mxu0 0.0
    %5828 = vmatpush1.msra.mxu0 0.0
    %5829 = vmatprep.subr.mxu0 0.0
    %5830 = vmatpush1.msra.mxu0 0.0
    %5831 = vmatprep.subr.mxu0 0.0
    %5832 = vmatpush1.msra.mxu0 0.0
    %5833 = vmatprep.subr.mxu0 0.0
    %5834 = vmatpush1.msra.mxu0 0.0
    %5835 = vmatprep.subr.mxu0 0.0
    %5836 = vmatpush1.msra.mxu0 0.0
    %5837 = vmatprep.subr.mxu0 0.0
    %5838 = vmatpush1.msra.mxu0 0.0
    %5839 = vmatprep.subr.mxu0 0.0
    %5840 = vmatpush1.msra.mxu0 0.0
    %5841 = vmatprep.subr.mxu0 0.0
    %5842 = vmatpush1.msra.mxu0 0.0
    %5843 = vmatprep.subr.mxu0 0.0
    %5844 = vmatpush1.msra.mxu0 0.0
    %5845 = vmatprep.subr.mxu0 0.0
    %5846 = vmatpush1.msra.mxu0 0.0
    %5847 = vmatprep.subr.mxu0 0.0
    %5848 = vmatpush1.msra.mxu0 0.0
    %5849 = vmatprep.mubr.f32.mxu0 0.0
    %5850 = vmatmul.mubr.f32.gmra.mrb[0].mxu0 %v5783
    %v5851 = vpop.f32.mrb[0].mxu0
    %v5852 = vadd.f32 %v5781, %v5851
    %v5853 = vpop.f32.mrb[0].mxu0
    %5854 = vdwg.mxu0
    %v5855 = vadd.f32 %v4260, %v5852
    %v5856 = vld [vmem:[#allocation2 + $0x250] sm:$0x1]
    %v5857 = vld [vmem:[#allocation2 + $0x258] sm:$0x1]
    %v5858 = vsel %vm48, %v5855, 0.0
    %5859 = vadd.xlane.f32.xlu0 %v5858
    %v5860 = vpop.xlane.xlu0 %5859
    %v5861 = vmul.f32 %v5860, %v1834
    %v5862 = vsub.f32 %v5855, %v5861
    %v5863 = vmul.f32 %v5862, %v5862
    %v5864 = vsel %vm48, %v5863, 0.0
    %5865 = vadd.xlane.f32.xlu0 %v5864
    %v5866 = vpop.xlane.xlu0 %5865
    %v5867 = vmul.f32 %v5866, %v1834
    %v5868 = vadd.f32 %v5867, 1e-05
    %v5869 = vrsqrt.pop %v5868
    %v5870 = vmul.f32 %v5862, %v5869
    %v5871 = vlaneseq
    %v5872 = vshrl.u32 %v5871, 7
    %v5873 = vsub.s32 0, %v5872
    %v5874 = vrot.slane %v5856, %v5873
    %v5875 = vmul.f32 %v5870, %v5874
    %v5876 = vlaneseq
    %v5877 = vshrl.u32 %v5876, 7
    %v5878 = vsub.s32 0, %v5877
    %v5879 = vrot.slane %v5857, %v5878
    %v5880 = vadd.f32 %v5875, %v5879
    %v5881 = vld [vmem:[#allocation2 + $0x120] sm:$0xff]
    %v5882 = vld [vmem:[#allocation2 + $0x128] sm:$0xff]
    %v5883 = vld [vmem:[#allocation2 + $0x130] sm:$0xff]
    %v5884 = vld [vmem:[#allocation2 + $0x138] sm:$0xff]
    %v5885 = vld [vmem:[#allocation2 + $0x260] sm:$0x1]
    %v5886 = vlaneseq
    %v5887 = vshrl.u32 %v5886, 7
    %v5888 = vsub.s32 0, %v5887
    %v5889 = vrot.slane %v5885, %v5888
    %v5891 = vsel %vm48, %v5880, 0
    %5893 = vmatprep.subr.mxu0 0.0
    %5894 = vmatpush1.msra.mxu0 %v5881
    %5895 = vmatprep.subr.mxu0 0.0
    %5896 = vmatpush1.msra.mxu0 %v5882
    %5897 = vmatprep.subr.mxu0 0.0
    %5898 = vmatpush1.msra.mxu0 %v5883
    %5899 = vmatprep.subr.mxu0 0.0
    %5900 = vmatpush1.msra.mxu0 %v5884
    %5901 = vmatprep.subr.mxu0 0.0
    %5902 = vmatpush1.msra.mxu0 0.0
    %5903 = vmatprep.subr.mxu0 0.0
    %5904 = vmatpush1.msra.mxu0 0.0
    %5905 = vmatprep.subr.mxu0 0.0
    %5906 = vmatpush1.msra.mxu0 0.0
    %5907 = vmatprep.subr.mxu0 0.0
    %5908 = vmatpush1.msra.mxu0 0.0
    %5909 = vmatprep.subr.mxu0 0.0
    %5910 = vmatpush1.msra.mxu0 0.0
    %5911 = vmatprep.subr.mxu0 0.0
    %5912 = vmatpush1.msra.mxu0 0.0
    %5913 = vmatprep.subr.mxu0 0.0
    %5914 = vmatpush1.msra.mxu0 0.0
    %5915 = vmatprep.subr.mxu0 0.0
    %5916 = vmatpush1.msra.mxu0 0.0
    %5917 = vmatprep.subr.mxu0 0.0
    %5918 = vmatpush1.msra.mxu0 0.0
    %5919 = vmatprep.subr.mxu0 0.0
    %5920 = vmatpush1.msra.mxu0 0.0
    %5921 = vmatprep.subr.mxu0 0.0
    %5922 = vmatpush1.msra.mxu0 0.0
    %5923 = vmatprep.subr.mxu0 0.0
    %5924 = vmatpush1.msra.mxu0 0.0
    %5925 = vmatprep.subr.mxu0 0.0
    %5926 = vmatpush1.msra.mxu0 0.0
    %5927 = vmatprep.subr.mxu0 0.0
    %5928 = vmatpush1.msra.mxu0 0.0
    %5929 = vmatprep.subr.mxu0 0.0
    %5930 = vmatpush1.msra.mxu0 0.0
    %5931 = vmatprep.subr.mxu0 0.0
    %5932 = vmatpush1.msra.mxu0 0.0
    %5933 = vmatprep.subr.mxu0 0.0
    %5934 = vmatpush1.msra.mxu0 0.0
    %5935 = vmatprep.subr.mxu0 0.0
    %5936 = vmatpush1.msra.mxu0 0.0
    %5937 = vmatprep.subr.mxu0 0.0
    %5938 = vmatpush1.msra.mxu0 0.0
    %5939 = vmatprep.subr.mxu0 0.0
    %5940 = vmatpush1.msra.mxu0 0.0
    %5941 = vmatprep.subr.mxu0 0.0
    %5942 = vmatpush1.msra.mxu0 0.0
    %5943 = vmatprep.subr.mxu0 0.0
    %5944 = vmatpush1.msra.mxu0 0.0
    %5945 = vmatprep.subr.mxu0 0.0
    %5946 = vmatpush1.msra.mxu0 0.0
    %5947 = vmatprep.subr.mxu0 0.0
    %5948 = vmatpush1.msra.mxu0 0.0
    %5949 = vmatprep.subr.mxu0 0.0
    %5950 = vmatpush1.msra.mxu0 0.0
    %5951 = vmatprep.subr.mxu0 0.0
    %5952 = vmatpush1.msra.mxu0 0.0
    %5953 = vmatprep.subr.mxu0 0.0
    %5954 = vmatpush1.msra.mxu0 0.0
    %5955 = vmatprep.subr.mxu0 0.0
    %5956 = vmatpush1.msra.mxu0 0.0
    %5957 = vmatprep.mubr.f32.mxu0 0.0
    %5958 = vmatmul.mubr.f32.gmra.mrb[0].mxu0 %v5891
    %v5959 = vpop.f32.mrb[0].mxu0
    %v5960 = vadd.f32 %v5889, %v5959
    %v5961 = vpop.f32.mrb[0].mxu0
    %5962 = vdwg.mxu0
    %v5963 = vmul.f32 %v5960, %v5960
    %v5964 = vmul.f32 %v5960, %v5963
    %v5965 = vmul.f32 %v5964, 0.044715
    %v5966 = vadd.f32 %v5960, %v5965
    %v5967 = vmul.f32 %v5966, 0.7978846
    %v5968 = vtanh.pop %v5967
    %v5969 = vadd.f32 %v5968, 1.0
    %v5970 = vmul.f32 %v5969, 0.5
    %v5971 = vmul.f32 %v5960, %v5970
    %v5972 = vld [vmem:[#allocation2 + $0x140] sm:$0xff]
    %v5973 = vld [vmem:[#allocation2 + $0x148] sm:$0xff]
    %v5974 = vld [vmem:[#allocation2 + $0x150] sm:$0xff]
    %v5975 = vld [vmem:[#allocation2 + $0x158] sm:$0xff]
    %v5976 = vld [vmem:[#allocation2 + $0x160] sm:$0xff]
    %v5977 = vld [vmem:[#allocation2 + $0x168] sm:$0xff]
    %v5978 = vld [vmem:[#allocation2 + $0x170] sm:$0xff]
    %v5979 = vld [vmem:[#allocation2 + $0x178] sm:$0xff]
    %v5980 = vld [vmem:[#allocation2 + $0x268] sm:$0x1]
    %v5981 = vlaneseq
    %v5982 = vshrl.u32 %v5981, 7
    %v5983 = vsub.s32 0, %v5982
    %v5984 = vrot.slane %v5980, %v5983
    %v5986 = vsel %vm1959, %v5971, 0
    %5988 = vmatprep.subr.mxu0 0.0
    %5989 = vmatpush1.msra.mxu0 %v5972
    %5990 = vmatprep.subr.mxu0 0.0
    %5991 = vmatpush1.msra.mxu0 %v5973
    %5992 = vmatprep.subr.mxu0 0.0
    %5993 = vmatpush1.msra.mxu0 %v5974
    %5994 = vmatprep.subr.mxu0 0.0
    %5995 = vmatpush1.msra.mxu0 %v5975
    %5996 = vmatprep.subr.mxu0 0.0
    %5997 = vmatpush1.msra.mxu0 %v5976
    %5998 = vmatprep.subr.mxu0 0.0
    %5999 = vmatpush1.msra.mxu0 %v5977
    %6000 = vmatprep.subr.mxu0 0.0
    %6001 = vmatpush1.msra.mxu0 %v5978
    %6002 = vmatprep.subr.mxu0 0.0
    %6003 = vmatpush1.msra.mxu0 %v5979
    %6004 = vmatprep.subr.mxu0 0.0
    %6005 = vmatpush1.msra.mxu0 0.0
    %6006 = vmatprep.subr.mxu0 0.0
    %6007 = vmatpush1.msra.mxu0 0.0
    %6008 = vmatprep.subr.mxu0 0.0
    %6009 = vmatpush1.msra.mxu0 0.0
    %6010 = vmatprep.subr.mxu0 0.0
    %6011 = vmatpush1.msra.mxu0 0.0
    %6012 = vmatprep.subr.mxu0 0.0
    %6013 = vmatpush1.msra.mxu0 0.0
    %6014 = vmatprep.subr.mxu0 0.0
    %6015 = vmatpush1.msra.mxu0 0.0
    %6016 = vmatprep.subr.mxu0 0.0
    %6017 = vmatpush1.msra.mxu0 0.0
    %6018 = vmatprep.subr.mxu0 0.0
    %6019 = vmatpush1.msra.mxu0 0.0
    %6020 = vmatprep.subr.mxu0 0.0
    %6021 = vmatpush1.msra.mxu0 0.0
    %6022 = vmatprep.subr.mxu0 0.0
    %6023 = vmatpush1.msra.mxu0 0.0
    %6024 = vmatprep.subr.mxu0 0.0
    %6025 = vmatpush1.msra.mxu0 0.0
    %6026 = vmatprep.subr.mxu0 0.0
    %6027 = vmatpush1.msra.mxu0 0.0
    %6028 = vmatprep.subr.mxu0 0.0
    %6029 = vmatpush1.msra.mxu0 0.0
    %6030 = vmatprep.subr.mxu0 0.0
    %6031 = vmatpush1.msra.mxu0 0.0
    %6032 = vmatprep.subr.mxu0 0.0
    %6033 = vmatpush1.msra.mxu0 0.0
    %6034 = vmatprep.subr.mxu0 0.0
    %6035 = vmatpush1.msra.mxu0 0.0
    %6036 = vmatprep.subr.mxu0 0.0
    %6037 = vmatpush1.msra.mxu0 0.0
    %6038 = vmatprep.subr.mxu0 0.0
    %6039 = vmatpush1.msra.mxu0 0.0
    %6040 = vmatprep.subr.mxu0 0.0
    %6041 = vmatpush1.msra.mxu0 0.0
    %6042 = vmatprep.subr.mxu0 0.0
    %6043 = vmatpush1.msra.mxu0 0.0
    %6044 = vmatprep.subr.mxu0 0.0
    %6045 = vmatpush1.msra.mxu0 0.0
    %6046 = vmatprep.subr.mxu0 0.0
    %6047 = vmatpush1.msra.mxu0 0.0
    %6048 = vmatprep.subr.mxu0 0.0
    %6049 = vmatpush1.msra.mxu0 0.0
    %6050 = vmatprep.subr.mxu0 0.0
    %6051 = vmatpush1.msra.mxu0 0.0
    %6052 = vmatprep.mubr.f32.mxu0 0.0
    %6053 = vmatmul.mubr.f32.gmra.mrb[0].mxu0 %v5986
    %v6054 = vpop.f32.mrb[0].mxu0
    %v6055 = vadd.f32 %v5984, %v6054
    %v6056 = vpop.f32.mrb[0].mxu0
    %6057 = vdwg.mxu0
    %v6058 = vadd.f32 %v5880, %v6055
    %v6059 = vld [vmem:[#allocation2 + $0x270] sm:$0x1]
    %v6060 = vld [vmem:[#allocation2 + $0x278] sm:$0x1]
    %v6061 = vsel %vm48, %v6058, 0.0
    %6062 = vadd.xlane.f32.xlu0 %v6061
    %v6063 = vpop.xlane.xlu0 %6062
    %v6064 = vmul.f32 %v6063, %v1834
    %v6065 = vsub.f32 %v6058, %v6064
    %v6066 = vmul.f32 %v6065, %v6065
    %v6067 = vsel %vm48, %v6066, 0.0
    %6068 = vadd.xlane.f32.xlu0 %v6067
    %v6069 = vpop.xlane.xlu0 %6068
    %v6070 = vmul.f32 %v6069, %v1834
    %v6071 = vadd.f32 %v6070, 1e-05
    %v6072 = vrsqrt.pop %v6071
    %v6073 = vmul.f32 %v6065, %v6072
    %v6074 = vlaneseq
    %v6075 = vshrl.u32 %v6074, 7
    %v6076 = vsub.s32 0, %v6075
    %v6077 = vrot.slane %v6059, %v6076
    %v6078 = vmul.f32 %v6073, %v6077
    %v6079 = vlaneseq
    %v6080 = vshrl.u32 %v6079, 7
    %v6081 = vsub.s32 0, %v6080
    %v6082 = vrot.slane %v6060, %v6081
    %v6083 = vadd.f32 %v6078, %v6082
    %v6084 = vadd.f32 %v4426, %v5766
    %v6085 = vld [vmem:[#allocation2 + $0x180] sm:$0xff]
    %v6086 = vld [vmem:[#allocation2 + $0x188] sm:$0xff]
    %v6087 = vld [vmem:[#allocation2 + $0x190] sm:$0xff]
    %v6088 = vld [vmem:[#allocation2 + $0x198] sm:$0xff]
    %v6090 = vsel %vm48, %v6083, 0
    %6092 = vmatprep.subr.mxu0 0.0
    %6093 = vmatpush1.msra.mxu0 %v6085
    %6094 = vmatprep.subr.mxu0 0.0
    %6095 = vmatpush1.msra.mxu0 %v6086
    %6096 = vmatprep.subr.mxu0 0.0
    %6097 = vmatpush1.msra.mxu0 %v6087
    %6098 = vmatprep.subr.mxu0 0.0
    %6099 = vmatpush1.msra.mxu0 %v6088
    %6100 = vmatprep.subr.mxu0 0.0
    %6101 = vmatpush1.msra.mxu0 0.0
    %6102 = vmatprep.subr.mxu0 0.0
    %6103 = vmatpush1.msra.mxu0 0.0
    %6104 = vmatprep.subr.mxu0 0.0
    %6105 = vmatpush1.msra.mxu0 0.0
    %6106 = vmatprep.subr.mxu0 0.0
    %6107 = vmatpush1.msra.mxu0 0.0
    %6108 = vmatprep.subr.mxu0 0.0
    %6109 = vmatpush1.msra.mxu0 0.0
    %6110 = vmatprep.subr.mxu0 0.0
    %6111 = vmatpush1.msra.mxu0 0.0
    %6112 = vmatprep.subr.mxu0 0.0
    %6113 = vmatpush1.msra.mxu0 0.0
    %6114 = vmatprep.subr.mxu0 0.0
    %6115 = vmatpush1.msra.mxu0 0.0
    %6116 = vmatprep.subr.mxu0 0.0
    %6117 = vmatpush1.msra.mxu0 0.0
    %6118 = vmatprep.subr.mxu0 0.0
    %6119 = vmatpush1.msra.mxu0 0.0
    %6120 = vmatprep.subr.mxu0 0.0
    %6121 = vmatpush1.msra.mxu0 0.0
    %6122 = vmatprep.subr.mxu0 0.0
    %6123 = vmatpush1.msra.mxu0 0.0
    %6124 = vmatprep.subr.mxu0 0.0
    %6125 = vmatpush1.msra.mxu0 0.0
    %6126 = vmatprep.subr.mxu0 0.0
    %6127 = vmatpush1.msra.mxu0 0.0
    %6128 = vmatprep.subr.mxu0 0.0
    %6129 = vmatpush1.msra.mxu0 0.0
    %6130 = vmatprep.subr.mxu0 0.0
    %6131 = vmatpush1.msra.mxu0 0.0
    %6132 = vmatprep.subr.mxu0 0.0
    %6133 = vmatpush1.msra.mxu0 0.0
    %6134 = vmatprep.subr.mxu0 0.0
    %6135 = vmatpush1.msra.mxu0 0.0
    %6136 = vmatprep.subr.mxu0 0.0
    %6137 = vmatpush1.msra.mxu0 0.0
    %6138 = vmatprep.subr.mxu0 0.0
    %6139 = vmatpush1.msra.mxu0 0.0
    %6140 = vmatprep.subr.mxu0 0.0
    %6141 = vmatpush1.msra.mxu0 0.0
    %6142 = vmatprep.subr.mxu0 0.0
    %6143 = vmatpush1.msra.mxu0 0.0
    %6144 = vmatprep.subr.mxu0 0.0
    %6145 = vmatpush1.msra.mxu0 0.0
    %6146 = vmatprep.subr.mxu0 0.0
    %6147 = vmatpush1.msra.mxu0 0.0
    %6148 = vmatprep.subr.mxu0 0.0
    %6149 = vmatpush1.msra.mxu0 0.0
    %6150 = vmatprep.subr.mxu0 0.0
    %6151 = vmatpush1.msra.mxu0 0.0
    %6152 = vmatprep.subr.mxu0 0.0
    %6153 = vmatpush1.msra.mxu0 0.0
    %6154 = vmatprep.subr.mxu0 0.0
    %6155 = vmatpush1.msra.mxu0 0.0
    %6156 = vmatprep.mubr.f32.mxu0 0.0
    %6157 = vmatmul.mubr.f32.gmra.mrb[0].mxu0 %v6090
    %v6158 = vpop.f32.mrb[0].mxu0
    %v6159 = vadd.f32 0.0, %v6158
    %v6160 = vpop.f32.mrb[0].mxu0
    %6161 = vdwg.mxu0
    %6163 = vrot.lane.b32.xlu0 %v6159, 32
    %v6164 = vpop.permute.xlu0 %6163
    %v6166 = vadd.f32 %v6084, %v6164
    %v6167 = vmul.f32 %v6166, %v6166
    %v6168 = vmul.f32 %v6166, %v6167
    %v6169 = vmul.f32 %v6168, 0.044715
    %v6170 = vadd.f32 %v6166, %v6169
    %v6171 = vmul.f32 %v6170, 0.7978846
    %v6172 = vtanh.pop %v6171
    %v6173 = vadd.f32 %v6172, 1.0
    %v6174 = vmul.f32 %v6173, 0.5
    %v6175 = vmul.f32 %v6166, %v6174
    %v6176 = vld [vmem:[#allocation2 + $0x1a0] sm:$0xff]
    %v6177 = vld [vmem:[#allocation2 + $0x1a8] sm:$0xff]
    %v6178 = vld [vmem:[#allocation2 + $0x1b0] sm:$0xff]
    %v6179 = vld [vmem:[#allocation2 + $0x1b8] sm:$0xff]
    %v6180 = vld [vmem:[#allocation2 + $0x280] sm:$0x1]
    %v6181 = vlaneseq
    %v6182 = vshrl.u32 %v6181, 7
    %v6183 = vsub.s32 0, %v6182
    %v6184 = vrot.slane %v6180, %v6183
    %6186 = vrot.lane.b32.xlu0 %v6175, 96
    %v6187 = vpop.permute.xlu0 %6186
    %v6188 = vsel %vm48, %v6187, 0
    %6190 = vmatprep.subr.mxu0 0.0
    %6191 = vmatpush1.msra.mxu0 %v6176
    %6192 = vmatprep.subr.mxu0 0.0
    %6193 = vmatpush1.msra.mxu0 %v6177
    %6194 = vmatprep.subr.mxu0 0.0
    %6195 = vmatpush1.msra.mxu0 %v6178
    %6196 = vmatprep.subr.mxu0 0.0
    %6197 = vmatpush1.msra.mxu0 %v6179
    %6198 = vmatprep.subr.mxu0 0.0
    %6199 = vmatpush1.msra.mxu0 0.0
    %6200 = vmatprep.subr.mxu0 0.0
    %6201 = vmatpush1.msra.mxu0 0.0
    %6202 = vmatprep.subr.mxu0 0.0
    %6203 = vmatpush1.msra.mxu0 0.0
    %6204 = vmatprep.subr.mxu0 0.0
    %6205 = vmatpush1.msra.mxu0 0.0
    %6206 = vmatprep.subr.mxu0 0.0
    %6207 = vmatpush1.msra.mxu0 0.0
    %6208 = vmatprep.subr.mxu0 0.0
    %6209 = vmatpush1.msra.mxu0 0.0
    %6210 = vmatprep.subr.mxu0 0.0
    %6211 = vmatpush1.msra.mxu0 0.0
    %6212 = vmatprep.subr.mxu0 0.0
    %6213 = vmatpush1.msra.mxu0 0.0
    %6214 = vmatprep.subr.mxu0 0.0
    %6215 = vmatpush1.msra.mxu0 0.0
    %6216 = vmatprep.subr.mxu0 0.0
    %6217 = vmatpush1.msra.mxu0 0.0
    %6218 = vmatprep.subr.mxu0 0.0
    %6219 = vmatpush1.msra.mxu0 0.0
    %6220 = vmatprep.subr.mxu0 0.0
    %6221 = vmatpush1.msra.mxu0 0.0
    %6222 = vmatprep.subr.mxu0 0.0
    %6223 = vmatpush1.msra.mxu0 0.0
    %6224 = vmatprep.subr.mxu0 0.0
    %6225 = vmatpush1.msra.mxu0 0.0
    %6226 = vmatprep.subr.mxu0 0.0
    %6227 = vmatpush1.msra.mxu0 0.0
    %6228 = vmatprep.subr.mxu0 0.0
    %6229 = vmatpush1.msra.mxu0 0.0
    %6230 = vmatprep.subr.mxu0 0.0
    %6231 = vmatpush1.msra.mxu0 0.0
    %6232 = vmatprep.subr.mxu0 0.0
    %6233 = vmatpush1.msra.mxu0 0.0
    %6234 = vmatprep.subr.mxu0 0.0
    %6235 = vmatpush1.msra.mxu0 0.0
    %6236 = vmatprep.subr.mxu0 0.0
    %6237 = vmatpush1.msra.mxu0 0.0
    %6238 = vmatprep.subr.mxu0 0.0
    %6239 = vmatpush1.msra.mxu0 0.0
    %6240 = vmatprep.subr.mxu0 0.0
    %6241 = vmatpush1.msra.mxu0 0.0
    %6242 = vmatprep.subr.mxu0 0.0
    %6243 = vmatpush1.msra.mxu0 0.0
    %6244 = vmatprep.subr.mxu0 0.0
    %6245 = vmatpush1.msra.mxu0 0.0
    %6246 = vmatprep.subr.mxu0 0.0
    %6247 = vmatpush1.msra.mxu0 0.0
    %6248 = vmatprep.subr.mxu0 0.0
    %6249 = vmatpush1.msra.mxu0 0.0
    %6250 = vmatprep.subr.mxu0 0.0
    %6251 = vmatpush1.msra.mxu0 0.0
    %6252 = vmatprep.subr.mxu0 0.0
    %6253 = vmatpush1.msra.mxu0 0.0
    %6254 = vmatprep.mubr.f32.mxu0 0.0
    %6255 = vmatmul.mubr.f32.gmra.mrb[0].mxu0 %v6188
    %v6256 = vpop.f32.mrb[0].mxu0
    %v6257 = vadd.f32 %v6184, %v6256
    %v6258 = vpop.f32.mrb[0].mxu0
    %6259 = vdwg.mxu0
    %v6260 = vxor.u32 %v6257, 2147483648
    %v6261 = vmul.f32 %v6260, 1.442695
    %v6262 = vpow.pop %v6261
    %v6263 = vadd.f32 %v6262, 1.0
    %v6264 = vrcp.pop %v6263
    %v6265 = vmul.f32 1.0, %v6264
    %v6266 = vsub.f32 %v6083, %v4260
    %6268 = vset.pattern.permute.xlu0 0
    %6269 = vperm.xlu0 %6268, %v4539
    %v6270 = vpop.permute.xlu0 %6269
    %v6272 = vmul.f32 %v6270, %v6266
    %v6273 = vadd.f32 %v4260, %v6272
    %v6274 = vsub.f32 %v6265, 1.0
    %v6275 = vmul.f32 %v4539, %v6274
    %v6276 = vadd.f32 %v6275, 1.0
    %v6277 = vmul.f32 %v4264, %v6276
    %v6278 = vadd.f32 %v4265, %v4539
    %s6279 = scalar_lea.vmem [#allocation5], 24
    %6280 = vst.msk [vmem:[%s6279] sm:$0xff] %vm48, %v6273
    %v6281 = vld [vmem:[#allocation2] sm:$0xff]
    %v6282 = vld [vmem:[#allocation2 + $0x8] sm:$0xff]
    %v6283 = vld [vmem:[#allocation2 + $0x10] sm:$0xff]
    %v6284 = vld [vmem:[#allocation2 + $0x18] sm:$0xff]
    %v6285 = vld [vmem:[#allocation2 + $0x1f8] sm:$0x1]
    %v6286 = vlaneseq
    %v6287 = vshrl.u32 %v6286, 7
    %v6288 = vsub.s32 0, %v6287
    %v6289 = vrot.slane %v6285, %v6288
    %v6291 = vsel %vm48, %v6273, 0
    %6293 = vmatprep.subr.mxu0 0.0
    %6294 = vmatpush1.msra.mxu0 %v6281
    %6295 = vmatprep.subr.mxu0 0.0
    %6296 = vmatpush1.msra.mxu0 %v6282
    %6297 = vmatprep.subr.mxu0 0.0
    %6298 = vmatpush1.msra.mxu0 %v6283
    %6299 = vmatprep.subr.mxu0 0.0
    %6300 = vmatpush1.msra.mxu0 %v6284
    %6301 = vmatprep.subr.mxu0 0.0
    %6302 = vmatpush1.msra.mxu0 0.0
    %6303 = vmatprep.subr.mxu0 0.0
    %6304 = vmatpush1.msra.mxu0 0.0
    %6305 = vmatprep.subr.mxu0 0.0
    %6306 = vmatpush1.msra.mxu0 0.0
    %6307 = vmatprep.subr.mxu0 0.0
    %6308 = vmatpush1.msra.mxu0 0.0
    %6309 = vmatprep.subr.mxu0 0.0
    %6310 = vmatpush1.msra.mxu0 0.0
    %6311 = vmatprep.subr.mxu0 0.0
    %6312 = vmatpush1.msra.mxu0 0.0
    %6313 = vmatprep.subr.mxu0 0.0
    %6314 = vmatpush1.msra.mxu0 0.0
    %6315 = vmatprep.subr.mxu0 0.0
    %6316 = vmatpush1.msra.mxu0 0.0
    %6317 = vmatprep.subr.mxu0 0.0
    %6318 = vmatpush1.msra.mxu0 0.0
    %6319 = vmatprep.subr.mxu0 0.0
    %6320 = vmatpush1.msra.mxu0 0.0
    %6321 = vmatprep.subr.mxu0 0.0
    %6322 = vmatpush1.msra.mxu0 0.0
    %6323 = vmatprep.subr.mxu0 0.0
    %6324 = vmatpush1.msra.mxu0 0.0
    %6325 = vmatprep.subr.mxu0 0.0
    %6326 = vmatpush1.msra.mxu0 0.0
    %6327 = vmatprep.subr.mxu0 0.0
    %6328 = vmatpush1.msra.mxu0 0.0
    %6329 = vmatprep.subr.mxu0 0.0
    %6330 = vmatpush1.msra.mxu0 0.0
    %6331 = vmatprep.subr.mxu0 0.0
    %6332 = vmatpush1.msra.mxu0 0.0
    %6333 = vmatprep.subr.mxu0 0.0
    %6334 = vmatpush1.msra.mxu0 0.0
    %6335 = vmatprep.subr.mxu0 0.0
    %6336 = vmatpush1.msra.mxu0 0.0
    %6337 = vmatprep.subr.mxu0 0.0
    %6338 = vmatpush1.msra.mxu0 0.0
    %6339 = vmatprep.subr.mxu0 0.0
    %6340 = vmatpush1.msra.mxu0 0.0
    %6341 = vmatprep.subr.mxu0 0.0
    %6342 = vmatpush1.msra.mxu0 0.0
    %6343 = vmatprep.subr.mxu0 0.0
    %6344 = vmatpush1.msra.mxu0 0.0
    %6345 = vmatprep.subr.mxu0 0.0
    %6346 = vmatpush1.msra.mxu0 0.0
    %6347 = vmatprep.subr.mxu0 0.0
    %6348 = vmatpush1.msra.mxu0 0.0
    %6349 = vmatprep.subr.mxu0 0.0
    %6350 = vmatpush1.msra.mxu0 0.0
    %6351 = vmatprep.subr.mxu0 0.0
    %6352 = vmatpush1.msra.mxu0 0.0
    %6353 = vmatprep.subr.mxu0 0.0
    %6354 = vmatpush1.msra.mxu0 0.0
    %6355 = vmatprep.subr.mxu0 0.0
    %6356 = vmatpush1.msra.mxu0 0.0
    %6357 = vmatprep.mubr.f32.mxu0 0.0
    %6358 = vmatmul.mubr.f32.gmra.mrb[0].mxu0 %v6291
    %v6359 = vpop.f32.mrb[0].mxu0
    %v6360 = vadd.f32 %v6289, %v6359
    %v6361 = vpop.f32.mrb[0].mxu0
    %6362 = vdwg.mxu0
    %v6363 = vld [vmem:[#allocation2 + $0x20] sm:$0xff]
    %v6364 = vld [vmem:[#allocation2 + $0x28] sm:$0xff]
    %v6365 = vld [vmem:[#allocation2 + $0x30] sm:$0xff]
    %v6366 = vld [vmem:[#allocation2 + $0x38] sm:$0xff]
    %v6367 = vld [vmem:[#allocation2 + $0x200] sm:$0x1]
    %v6368 = vlaneseq
    %v6369 = vshrl.u32 %v6368, 7
    %v6370 = vsub.s32 0, %v6369
    %v6371 = vrot.slane %v6367, %v6370
    %6372 = vmatprep.subr.mxu0 0.0
    %6373 = vmatpush1.msra.mxu0 %v6363
    %6374 = vmatprep.subr.mxu0 0.0
    %6375 = vmatpush1.msra.mxu0 %v6364
    %6376 = vmatprep.subr.mxu0 0.0
    %6377 = vmatpush1.msra.mxu0 %v6365
    %6378 = vmatprep.subr.mxu0 0.0
    %6379 = vmatpush1.msra.mxu0 %v6366
    %6380 = vmatprep.subr.mxu0 0.0
    %6381 = vmatpush1.msra.mxu0 0.0
    %6382 = vmatprep.subr.mxu0 0.0
    %6383 = vmatpush1.msra.mxu0 0.0
    %6384 = vmatprep.subr.mxu0 0.0
    %6385 = vmatpush1.msra.mxu0 0.0
    %6386 = vmatprep.subr.mxu0 0.0
    %6387 = vmatpush1.msra.mxu0 0.0
    %6388 = vmatprep.subr.mxu0 0.0
    %6389 = vmatpush1.msra.mxu0 0.0
    %6390 = vmatprep.subr.mxu0 0.0
    %6391 = vmatpush1.msra.mxu0 0.0
    %6392 = vmatprep.subr.mxu0 0.0
    %6393 = vmatpush1.msra.mxu0 0.0
    %6394 = vmatprep.subr.mxu0 0.0
    %6395 = vmatpush1.msra.mxu0 0.0
    %6396 = vmatprep.subr.mxu0 0.0
    %6397 = vmatpush1.msra.mxu0 0.0
    %6398 = vmatprep.subr.mxu0 0.0
    %6399 = vmatpush1.msra.mxu0 0.0
    %6400 = vmatprep.subr.mxu0 0.0
    %6401 = vmatpush1.msra.mxu0 0.0
    %6402 = vmatprep.subr.mxu0 0.0
    %6403 = vmatpush1.msra.mxu0 0.0
    %6404 = vmatprep.subr.mxu0 0.0
    %6405 = vmatpush1.msra.mxu0 0.0
    %6406 = vmatprep.subr.mxu0 0.0
    %6407 = vmatpush1.msra.mxu0 0.0
    %6408 = vmatprep.subr.mxu0 0.0
    %6409 = vmatpush1.msra.mxu0 0.0
    %6410 = vmatprep.subr.mxu0 0.0
    %6411 = vmatpush1.msra.mxu0 0.0
    %6412 = vmatprep.subr.mxu0 0.0
    %6413 = vmatpush1.msra.mxu0 0.0
    %6414 = vmatprep.subr.mxu0 0.0
    %6415 = vmatpush1.msra.mxu0 0.0
    %6416 = vmatprep.subr.mxu0 0.0
    %6417 = vmatpush1.msra.mxu0 0.0
    %6418 = vmatprep.subr.mxu0 0.0
    %6419 = vmatpush1.msra.mxu0 0.0
    %6420 = vmatprep.subr.mxu0 0.0
    %6421 = vmatpush1.msra.mxu0 0.0
    %6422 = vmatprep.subr.mxu0 0.0
    %6423 = vmatpush1.msra.mxu0 0.0
    %6424 = vmatprep.subr.mxu0 0.0
    %6425 = vmatpush1.msra.mxu0 0.0
    %6426 = vmatprep.subr.mxu0 0.0
    %6427 = vmatpush1.msra.mxu0 0.0
    %6428 = vmatprep.subr.mxu0 0.0
    %6429 = vmatpush1.msra.mxu0 0.0
    %6430 = vmatprep.subr.mxu0 0.0
    %6431 = vmatpush1.msra.mxu0 0.0
    %6432 = vmatprep.subr.mxu0 0.0
    %6433 = vmatpush1.msra.mxu0 0.0
    %6434 = vmatprep.subr.mxu0 0.0
    %6435 = vmatpush1.msra.mxu0 0.0
    %6436 = vmatprep.mubr.f32.mxu0 0.0
    %6437 = vmatmul.mubr.f32.gmra.mrb[0].mxu0 %v6291
    %v6438 = vpop.f32.mrb[0].mxu0
    %v6439 = vadd.f32 %v6371, %v6438
    %v6440 = vpop.f32.mrb[0].mxu0
    %6441 = vdwg.mxu0
    %v6442 = vadd.f32 %v6439, %v119
    %v6443 = vmul.f32 %v6442, %v6442
    %v6444 = vmul.f32 %v6442, %v6443
    %v6445 = vmul.f32 %v6444, 0.044715
    %v6446 = vadd.f32 %v6442, %v6445
    %v6447 = vmul.f32 %v6446, 0.7978846
    %v6448 = vtanh.pop %v6447
    %v6449 = vadd.f32 %v6448, 1.0
    %v6450 = vmul.f32 %v6449, 0.5
    %v6451 = vmul.f32 %v6442, %v6450
    %v6452 = vld [vmem:[#allocation2 + $0xe0] sm:$0xff]
    %v6453 = vld [vmem:[#allocation2 + $0xe8] sm:$0xff]
    %v6454 = vld [vmem:[#allocation2 + $0xf0] sm:$0xff]
    %v6455 = vld [vmem:[#allocation2 + $0xf8] sm:$0xff]
    %v6456 = vld [vmem:[#allocation2 + $0x240] sm:$0x1]
    %v6457 = vlaneseq
    %v6458 = vshrl.u32 %v6457, 7
    %v6459 = vsub.s32 0, %v6458
    %v6460 = vrot.slane %v6456, %v6459
    %v6462 = vsel %vm48, %v6451, 0
    %6464 = vmatprep.subr.mxu0 0.0
    %6465 = vmatpush1.msra.mxu0 %v6452
    %6466 = vmatprep.subr.mxu0 0.0
    %6467 = vmatpush1.msra.mxu0 %v6453
    %6468 = vmatprep.subr.mxu0 0.0
    %6469 = vmatpush1.msra.mxu0 %v6454
    %6470 = vmatprep.subr.mxu0 0.0
    %6471 = vmatpush1.msra.mxu0 %v6455
    %6472 = vmatprep.subr.mxu0 0.0
    %6473 = vmatpush1.msra.mxu0 0.0
    %6474 = vmatprep.subr.mxu0 0.0
    %6475 = vmatpush1.msra.mxu0 0.0
    %6476 = vmatprep.subr.mxu0 0.0
    %6477 = vmatpush1.msra.mxu0 0.0
    %6478 = vmatprep.subr.mxu0 0.0
    %6479 = vmatpush1.msra.mxu0 0.0
    %6480 = vmatprep.subr.mxu0 0.0
    %6481 = vmatpush1.msra.mxu0 0.0
    %6482 = vmatprep.subr.mxu0 0.0
    %6483 = vmatpush1.msra.mxu0 0.0
    %6484 = vmatprep.subr.mxu0 0.0
    %6485 = vmatpush1.msra.mxu0 0.0
    %6486 = vmatprep.subr.mxu0 0.0
    %6487 = vmatpush1.msra.mxu0 0.0
    %6488 = vmatprep.subr.mxu0 0.0
    %6489 = vmatpush1.msra.mxu0 0.0
    %6490 = vmatprep.subr.mxu0 0.0
    %6491 = vmatpush1.msra.mxu0 0.0
    %6492 = vmatprep.subr.mxu0 0.0
    %6493 = vmatpush1.msra.mxu0 0.0
    %6494 = vmatprep.subr.mxu0 0.0
    %6495 = vmatpush1.msra.mxu0 0.0
    %6496 = vmatprep.subr.mxu0 0.0
    %6497 = vmatpush1.msra.mxu0 0.0
    %6498 = vmatprep.subr.mxu0 0.0
    %6499 = vmatpush1.msra.mxu0 0.0
    %6500 = vmatprep.subr.mxu0 0.0
    %6501 = vmatpush1.msra.mxu0 0.0
    %6502 = vmatprep.subr.mxu0 0.0
    %6503 = vmatpush1.msra.mxu0 0.0
    %6504 = vmatprep.subr.mxu0 0.0
    %6505 = vmatpush1.msra.mxu0 0.0
    %6506 = vmatprep.subr.mxu0 0.0
    %6507 = vmatpush1.msra.mxu0 0.0
    %6508 = vmatprep.subr.mxu0 0.0
    %6509 = vmatpush1.msra.mxu0 0.0
    %6510 = vmatprep.subr.mxu0 0.0
    %6511 = vmatpush1.msra.mxu0 0.0
    %6512 = vmatprep.subr.mxu0 0.0
    %6513 = vmatpush1.msra.mxu0 0.0
    %6514 = vmatprep.subr.mxu0 0.0
    %6515 = vmatpush1.msra.mxu0 0.0
    %6516 = vmatprep.subr.mxu0 0.0
    %6517 = vmatpush1.msra.mxu0 0.0
    %6518 = vmatprep.subr.mxu0 0.0
    %6519 = vmatpush1.msra.mxu0 0.0
    %6520 = vmatprep.subr.mxu0 0.0
    %6521 = vmatpush1.msra.mxu0 0.0
    %6522 = vmatprep.subr.mxu0 0.0
    %6523 = vmatpush1.msra.mxu0 0.0
    %6524 = vmatprep.subr.mxu0 0.0
    %6525 = vmatpush1.msra.mxu0 0.0
    %6526 = vmatprep.subr.mxu0 0.0
    %6527 = vmatpush1.msra.mxu0 0.0
    %6528 = vmatprep.mubr.f32.mxu0 0.0
    %6529 = vmatmul.mubr.f32.gmra.mrb[0].mxu0 %v6462
    %v6530 = vpop.f32.mrb[0].mxu0
    %v6531 = vadd.f32 %v6460, %v6530
    %v6532 = vpop.f32.mrb[0].mxu0
    %6533 = vdwg.mxu0
    %v6534 = vxor.u32 %v6531, 2147483648
    %v6535 = vmul.f32 %v6534, 1.442695
    %v6536 = vpow.pop %v6535
    %v6537 = vadd.f32 %v6536, 1.0
    %v6538 = vrcp.pop %v6537
    %v6539 = vmul.f32 1.0, %v6538
    %vm6540 = vcmp.gt.f32.partialorder %v6539, 0.9
    %v6541 = vsel %vm6540, 1, 0
    %v6542 = vcvt.s32.f32 %v6541
    %v6543 = vmax.f32 %v6542, %v37
    %v6544 = vsel %vm478, %v6543, inf
    %v6545 = vrot.slane %v6544, 4
    %v6546 = vmin.f32 %v6544, %v6545
    %v6547 = vrot.slane %v6546, 2
    %v6548 = vmin.f32 %v6546, %v6547
    %v6549 = vrot.slane %v6548, 1
    %v6550 = vmin.f32 %v6548, %v6549
    %v6551 = vmax.f32 %v4538, %v6550
    %v6552 = vsub.f32 1.0, %v6551
    %v6554 = vcombine.high %v6360, %v6360
    %v6556 = vunpack.c.l.s4 1966171168
    %v6557 = vunpack.c.0.s8 %v6556
    %v6558 = vlaneseq
    %v6559 = vshrl.u32 %v6558, 7
    %v6560 = vsub.s32 %v6557, %v6559
    %v6561 = vrot.slane %v6360, %v6560
    %v6563 = vunpack.c.l.s4 1966171168
    %v6564 = vunpack.c.0.s8 %v6563
    %v6565 = vlaneseq
    %v6566 = vshrl.u32 %v6565, 7
    %v6567 = vsub.s32 %v6564, %v6566
    %v6568 = vrot.slane %v6554, %v6567
    %v6569 = vcombine.high %v6561, %v6561
    %v6570 = vcombine.high %v6568, %v6568
    %v6572 = vunpack.c.l.s4 1966171168
    %v6573 = vunpack.c.0.s8 %v6572
    %v6574 = vlaneseq
    %v6575 = vshrl.u32 %v6574, 7
    %v6576 = vsub.s32 %v6573, %v6575
    %v6577 = vrot.slane %v6561, %v6576
    %v6579 = vunpack.c.l.s4 1966171168
    %v6580 = vunpack.c.0.s8 %v6579
    %v6581 = vlaneseq
    %v6582 = vshrl.u32 %v6581, 7
    %v6583 = vsub.s32 %v6580, %v6582
    %v6584 = vrot.slane %v6568, %v6583
    %v6586 = vunpack.c.l.s4 1966171168
    %v6587 = vunpack.c.0.s8 %v6586
    %v6588 = vlaneseq
    %v6589 = vshrl.u32 %v6588, 7
    %v6590 = vsub.s32 %v6587, %v6589
    %v6591 = vrot.slane %v6569, %v6590
    %v6593 = vunpack.c.l.s4 1966171168
    %v6594 = vunpack.c.0.s8 %v6593
    %v6595 = vlaneseq
    %v6596 = vshrl.u32 %v6595, 7
    %v6597 = vsub.s32 %v6594, %v6596
    %v6598 = vrot.slane %v6570, %v6597
    %v6599 = vcombine.high %v6577, %v6577
    %v6600 = vcombine.high %v6584, %v6584
    %v6601 = vcombine.high %v6591, %v6591
    %v6602 = vcombine.high %v6598, %v6598
    %v6603 = vlaneseq
    %v6604 = vshrl.u32 %v6603, 7
    %v6605 = vsub.s32 0, %v6604
    %v6606 = vrot.slane %v6577, %v6605
    %v6607 = vlaneseq
    %v6608 = vshrl.u32 %v6607, 7
    %v6609 = vsub.s32 0, %v6608
    %v6610 = vrot.slane %v6591, %v6609
    %v6611 = vlaneseq
    %v6612 = vshrl.u32 %v6611, 7
    %v6613 = vsub.s32 0, %v6612
    %v6614 = vrot.slane %v6599, %v6613
    %v6615 = vlaneseq
    %v6616 = vshrl.u32 %v6615, 7
    %v6617 = vsub.s32 0, %v6616
    %v6618 = vrot.slane %v6601, %v6617
    %v6619 = vlaneseq
    %v6620 = vshrl.u32 %v6619, 7
    %v6621 = vsub.s32 0, %v6620
    %v6622 = vrot.slane %v6584, %v6621
    %v6623 = vlaneseq
    %v6624 = vshrl.u32 %v6623, 7
    %v6625 = vsub.s32 0, %v6624
    %v6626 = vrot.slane %v6598, %v6625
    %v6627 = vlaneseq
    %v6628 = vshrl.u32 %v6627, 7
    %v6629 = vsub.s32 0, %v6628
    %v6630 = vrot.slane %v6600, %v6629
    %v6631 = vlaneseq
    %v6632 = vshrl.u32 %v6631, 7
    %v6633 = vsub.s32 0, %v6632
    %v6634 = vrot.slane %v6602, %v6633
    %v6643 = vadd.f32 %v6606, %v206
    %v6644 = vadd.f32 %v6606, %v211
    %v6645 = vadd.f32 %v6610, %v206
    %v6646 = vadd.f32 %v6610, %v211
    %v6647 = vadd.f32 %v6614, %v206
    %v6648 = vadd.f32 %v6614, %v211
    %v6649 = vadd.f32 %v6618, %v206
    %v6650 = vadd.f32 %v6618, %v211
    %v6651 = vadd.f32 %v6622, %v206
    %v6652 = vadd.f32 %v6622, %v211
    %v6653 = vadd.f32 %v6626, %v206
    %v6654 = vadd.f32 %v6626, %v211
    %v6655 = vadd.f32 %v6630, %v206
    %v6656 = vadd.f32 %v6630, %v211
    %v6657 = vadd.f32 %v6634, %v206
    %v6658 = vadd.f32 %v6634, %v211
    %v6659 = vmul.f32 %v6643, %v6643
    %v6660 = vmul.f32 %v6644, %v6644
    %v6661 = vmul.f32 %v6645, %v6645
    %v6662 = vmul.f32 %v6646, %v6646
    %v6663 = vmul.f32 %v6647, %v6647
    %v6664 = vmul.f32 %v6648, %v6648
    %v6665 = vmul.f32 %v6649, %v6649
    %v6666 = vmul.f32 %v6650, %v6650
    %v6667 = vmul.f32 %v6651, %v6651
    %v6668 = vmul.f32 %v6652, %v6652
    %v6669 = vmul.f32 %v6653, %v6653
    %v6670 = vmul.f32 %v6654, %v6654
    %v6671 = vmul.f32 %v6655, %v6655
    %v6672 = vmul.f32 %v6656, %v6656
    %v6673 = vmul.f32 %v6657, %v6657
    %v6674 = vmul.f32 %v6658, %v6658
    %v6675 = vmul.f32 %v6643, %v6659
    %v6676 = vmul.f32 %v6644, %v6660
    %v6677 = vmul.f32 %v6645, %v6661
    %v6678 = vmul.f32 %v6646, %v6662
    %v6679 = vmul.f32 %v6647, %v6663
    %v6680 = vmul.f32 %v6648, %v6664
    %v6681 = vmul.f32 %v6649, %v6665
    %v6682 = vmul.f32 %v6650, %v6666
    %v6683 = vmul.f32 %v6651, %v6667
    %v6684 = vmul.f32 %v6652, %v6668
    %v6685 = vmul.f32 %v6653, %v6669
    %v6686 = vmul.f32 %v6654, %v6670
    %v6687 = vmul.f32 %v6655, %v6671
    %v6688 = vmul.f32 %v6656, %v6672
    %v6689 = vmul.f32 %v6657, %v6673
    %v6690 = vmul.f32 %v6658, %v6674
    %v6691 = vmul.f32 %v6675, 0.044715
    %v6692 = vmul.f32 %v6676, 0.044715
    %v6693 = vmul.f32 %v6677, 0.044715
    %v6694 = vmul.f32 %v6678, 0.044715
    %v6695 = vmul.f32 %v6679, 0.044715
    %v6696 = vmul.f32 %v6680, 0.044715
    %v6697 = vmul.f32 %v6681, 0.044715
    %v6698 = vmul.f32 %v6682, 0.044715
    %v6699 = vmul.f32 %v6683, 0.044715
    %v6700 = vmul.f32 %v6684, 0.044715
    %v6701 = vmul.f32 %v6685, 0.044715
    %v6702 = vmul.f32 %v6686, 0.044715
    %v6703 = vmul.f32 %v6687, 0.044715
    %v6704 = vmul.f32 %v6688, 0.044715
    %v6705 = vmul.f32 %v6689, 0.044715
    %v6706 = vmul.f32 %v6690, 0.044715
    %v6707 = vadd.f32 %v6643, %v6691
    %v6708 = vadd.f32 %v6644, %v6692
    %v6709 = vadd.f32 %v6645, %v6693
    %v6710 = vadd.f32 %v6646, %v6694
    %v6711 = vadd.f32 %v6647, %v6695
    %v6712 = vadd.f32 %v6648, %v6696
    %v6713 = vadd.f32 %v6649, %v6697
    %v6714 = vadd.f32 %v6650, %v6698
    %v6715 = vadd.f32 %v6651, %v6699
    %v6716 = vadd.f32 %v6652, %v6700
    %v6717 = vadd.f32 %v6653, %v6701
    %v6718 = vadd.f32 %v6654, %v6702
    %v6719 = vadd.f32 %v6655, %v6703
    %v6720 = vadd.f32 %v6656, %v6704
    %v6721 = vadd.f32 %v6657, %v6705
    %v6722 = vadd.f32 %v6658, %v6706
    %v6723 = vmul.f32 %v6707, 0.7978846
    %v6724 = vmul.f32 %v6708, 0.7978846
    %v6725 = vmul.f32 %v6709, 0.7978846
    %v6726 = vmul.f32 %v6710, 0.7978846
    %v6727 = vmul.f32 %v6711, 0.7978846
    %v6728 = vmul.f32 %v6712, 0.7978846
    %v6729 = vmul.f32 %v6713, 0.7978846
    %v6730 = vmul.f32 %v6714, 0.7978846
    %v6731 = vmul.f32 %v6715, 0.7978846
    %v6732 = vmul.f32 %v6716, 0.7978846
    %v6733 = vmul.f32 %v6717, 0.7978846
    %v6734 = vmul.f32 %v6718, 0.7978846
    %v6735 = vmul.f32 %v6719, 0.7978846
    %v6736 = vmul.f32 %v6720, 0.7978846
    %v6737 = vmul.f32 %v6721, 0.7978846
    %v6738 = vmul.f32 %v6722, 0.7978846
    %v6739 = vtanh.pop %v6723
    %v6740 = vtanh.pop %v6724
    %v6741 = vtanh.pop %v6725
    %v6742 = vtanh.pop %v6726
    %v6743 = vtanh.pop %v6727
    %v6744 = vtanh.pop %v6728
    %v6745 = vtanh.pop %v6729
    %v6746 = vtanh.pop %v6730
    %v6747 = vtanh.pop %v6731
    %v6748 = vtanh.pop %v6732
    %v6749 = vtanh.pop %v6733
    %v6750 = vtanh.pop %v6734
    %v6751 = vtanh.pop %v6735
    %v6752 = vtanh.pop %v6736
    %v6753 = vtanh.pop %v6737
    %v6754 = vtanh.pop %v6738
    %v6755 = vadd.f32 %v6739, 1.0
    %v6756 = vadd.f32 %v6740, 1.0
    %v6757 = vadd.f32 %v6741, 1.0
    %v6758 = vadd.f32 %v6742, 1.0
    %v6759 = vadd.f32 %v6743, 1.0
    %v6760 = vadd.f32 %v6744, 1.0
    %v6761 = vadd.f32 %v6745, 1.0
    %v6762 = vadd.f32 %v6746, 1.0
    %v6763 = vadd.f32 %v6747, 1.0
    %v6764 = vadd.f32 %v6748, 1.0
    %v6765 = vadd.f32 %v6749, 1.0
    %v6766 = vadd.f32 %v6750, 1.0
    %v6767 = vadd.f32 %v6751, 1.0
    %v6768 = vadd.f32 %v6752, 1.0
    %v6769 = vadd.f32 %v6753, 1.0
    %v6770 = vadd.f32 %v6754, 1.0
    %v6771 = vmul.f32 %v6755, 0.5
    %v6772 = vmul.f32 %v6756, 0.5
    %v6773 = vmul.f32 %v6757, 0.5
    %v6774 = vmul.f32 %v6758, 0.5
    %v6775 = vmul.f32 %v6759, 0.5
    %v6776 = vmul.f32 %v6760, 0.5
    %v6777 = vmul.f32 %v6761, 0.5
    %v6778 = vmul.f32 %v6762, 0.5
    %v6779 = vmul.f32 %v6763, 0.5
    %v6780 = vmul.f32 %v6764, 0.5
    %v6781 = vmul.f32 %v6765, 0.5
    %v6782 = vmul.f32 %v6766, 0.5
    %v6783 = vmul.f32 %v6767, 0.5
    %v6784 = vmul.f32 %v6768, 0.5
    %v6785 = vmul.f32 %v6769, 0.5
    %v6786 = vmul.f32 %v6770, 0.5
    %v6787 = vmul.f32 %v6643, %v6771
    %v6788 = vmul.f32 %v6644, %v6772
    %v6789 = vmul.f32 %v6645, %v6773
    %v6790 = vmul.f32 %v6646, %v6774
    %v6791 = vmul.f32 %v6647, %v6775
    %v6792 = vmul.f32 %v6648, %v6776
    %v6793 = vmul.f32 %v6649, %v6777
    %v6794 = vmul.f32 %v6650, %v6778
    %v6795 = vmul.f32 %v6651, %v6779
    %v6796 = vmul.f32 %v6652, %v6780
    %v6797 = vmul.f32 %v6653, %v6781
    %v6798 = vmul.f32 %v6654, %v6782
    %v6799 = vmul.f32 %v6655, %v6783
    %v6800 = vmul.f32 %v6656, %v6784
    %v6801 = vmul.f32 %v6657, %v6785
    %v6802 = vmul.f32 %v6658, %v6786
    %v6803 = vld [vmem:[#allocation2 + $0x220] sm:$0x1]
    %v6804 = vlaneseq
    %v6805 = vshrl.u32 %v6804, 7
    %v6806 = vsub.s32 0, %v6805
    %v6807 = vrot.slane %v6803, %v6806
    %v6808 = vmul.f32 %v6787, %v6807
    %v6809 = vmul.f32 %v6788, %v6807
    %v6810 = vmul.f32 %v6789, %v6807
    %v6811 = vmul.f32 %v6790, %v6807
    %v6812 = vmul.f32 %v6791, %v6807
    %v6813 = vmul.f32 %v6792, %v6807
    %v6814 = vmul.f32 %v6793, %v6807
    %v6815 = vmul.f32 %v6794, %v6807
    %v6816 = vmul.f32 %v6795, %v6807
    %v6817 = vmul.f32 %v6796, %v6807
    %v6818 = vmul.f32 %v6797, %v6807
    %v6819 = vmul.f32 %v6798, %v6807
    %v6820 = vmul.f32 %v6799, %v6807
    %v6821 = vmul.f32 %v6800, %v6807
    %v6822 = vmul.f32 %v6801, %v6807
    %v6823 = vmul.f32 %v6802, %v6807
    %v6824 = vsel %vm48, %v6808, 0.0
    %6825 = vadd.xlane.f32.xlu0 %v6824
    %v6826 = vpop.xlane.xlu0 %6825
    %v6827 = vsel %vm48, %v6809, 0.0
    %6828 = vadd.xlane.f32.xlu0 %v6827
    %v6829 = vpop.xlane.xlu0 %6828
    %v6830 = vsel %vm48, %v6810, 0.0
    %6831 = vadd.xlane.f32.xlu0 %v6830
    %v6832 = vpop.xlane.xlu0 %6831
    %v6833 = vsel %vm48, %v6811, 0.0
    %6834 = vadd.xlane.f32.xlu0 %v6833
    %v6835 = vpop.xlane.xlu0 %6834
    %v6836 = vsel %vm48, %v6812, 0.0
    %6837 = vadd.xlane.f32.xlu0 %v6836
    %v6838 = vpop.xlane.xlu0 %6837
    %v6839 = vsel %vm48, %v6813, 0.0
    %6840 = vadd.xlane.f32.xlu0 %v6839
    %v6841 = vpop.xlane.xlu0 %6840
    %v6842 = vsel %vm48, %v6814, 0.0
    %6843 = vadd.xlane.f32.xlu0 %v6842
    %v6844 = vpop.xlane.xlu0 %6843
    %v6845 = vsel %vm48, %v6815, 0.0
    %6846 = vadd.xlane.f32.xlu0 %v6845
    %v6847 = vpop.xlane.xlu0 %6846
    %v6848 = vsel %vm48, %v6816, 0.0
    %6849 = vadd.xlane.f32.xlu0 %v6848
    %v6850 = vpop.xlane.xlu0 %6849
    %v6851 = vsel %vm48, %v6817, 0.0
    %6852 = vadd.xlane.f32.xlu0 %v6851
    %v6853 = vpop.xlane.xlu0 %6852
    %v6854 = vsel %vm48, %v6818, 0.0
    %6855 = vadd.xlane.f32.xlu0 %v6854
    %v6856 = vpop.xlane.xlu0 %6855
    %v6857 = vsel %vm48, %v6819, 0.0
    %6858 = vadd.xlane.f32.xlu0 %v6857
    %v6859 = vpop.xlane.xlu0 %6858
    %v6860 = vsel %vm48, %v6820, 0.0
    %6861 = vadd.xlane.f32.xlu0 %v6860
    %v6862 = vpop.xlane.xlu0 %6861
    %v6863 = vsel %vm48, %v6821, 0.0
    %6864 = vadd.xlane.f32.xlu0 %v6863
    %v6865 = vpop.xlane.xlu0 %6864
    %v6866 = vsel %vm48, %v6822, 0.0
    %6867 = vadd.xlane.f32.xlu0 %v6866
    %v6868 = vpop.xlane.xlu0 %6867
    %v6869 = vsel %vm48, %v6823, 0.0
    %6870 = vadd.xlane.f32.xlu0 %v6869
    %v6871 = vpop.xlane.xlu0 %6870
    %v6872 = vld [vmem:[#allocation2 + $0x228] sm:$0x1]
    %s6874 = vtos %v6872
    %v6875 = vstv %s6874
    %v6877 = vadd.f32 %v6826, %v6875
    %v6878 = vadd.f32 %v6829, %v6875
    %v6879 = vadd.f32 %v6832, %v6875
    %v6880 = vadd.f32 %v6835, %v6875
    %v6881 = vadd.f32 %v6838, %v6875
    %v6882 = vadd.f32 %v6841, %v6875
    %v6883 = vadd.f32 %v6844, %v6875
    %v6884 = vadd.f32 %v6847, %v6875
    %v6885 = vadd.f32 %v6850, %v6875
    %v6886 = vadd.f32 %v6853, %v6875
    %v6887 = vadd.f32 %v6856, %v6875
    %v6888 = vadd.f32 %v6859, %v6875
    %v6889 = vadd.f32 %v6862, %v6875
    %v6890 = vadd.f32 %v6865, %v6875
    %v6891 = vadd.f32 %v6868, %v6875
    %v6892 = vadd.f32 %v6871, %v6875
    %v6909 = vlaneseq
    %v6910 = vshrl.u32 %v6909, 7
    %v6911 = vsub.s32 %v829, %v6910
    %v6912 = vrot.slane %v6877, %v6911
    %v6913 = vlaneseq
    %v6914 = vshrl.u32 %v6913, 7
    %v6915 = vsub.s32 %v850, %v6914
    %v6916 = vrot.slane %v6878, %v6915
    %v6917 = vsel %vm855, %v6916, %v6912
    %v6918 = vlaneseq
    %v6919 = vshrl.u32 %v6918, 7
    %v6920 = vsub.s32 %v829, %v6919
    %v6921 = vrot.slane %v6879, %v6920
    %v6922 = vlaneseq
    %v6923 = vshrl.u32 %v6922, 7
    %v6924 = vsub.s32 %v850, %v6923
    %v6925 = vrot.slane %v6880, %v6924
    %v6926 = vsel %vm855, %v6925, %v6921
    %v6927 = vlaneseq
    %v6928 = vshrl.u32 %v6927, 7
    %v6929 = vsub.s32 %v829, %v6928
    %v6930 = vrot.slane %v6881, %v6929
    %v6931 = vlaneseq
    %v6932 = vshrl.u32 %v6931, 7
    %v6933 = vsub.s32 %v850, %v6932
    %v6934 = vrot.slane %v6882, %v6933
    %v6935 = vsel %vm855, %v6934, %v6930
    %v6936 = vlaneseq
    %v6937 = vshrl.u32 %v6936, 7
    %v6938 = vsub.s32 %v829, %v6937
    %v6939 = vrot.slane %v6883, %v6938
    %v6940 = vlaneseq
    %v6941 = vshrl.u32 %v6940, 7
    %v6942 = vsub.s32 %v850, %v6941
    %v6943 = vrot.slane %v6884, %v6942
    %v6944 = vsel %vm855, %v6943, %v6939
    %v6945 = vlaneseq
    %v6946 = vshrl.u32 %v6945, 7
    %v6947 = vsub.s32 %v829, %v6946
    %v6948 = vrot.slane %v6885, %v6947
    %v6949 = vlaneseq
    %v6950 = vshrl.u32 %v6949, 7
    %v6951 = vsub.s32 %v850, %v6950
    %v6952 = vrot.slane %v6886, %v6951
    %v6953 = vsel %vm855, %v6952, %v6948
    %v6954 = vlaneseq
    %v6955 = vshrl.u32 %v6954, 7
    %v6956 = vsub.s32 %v829, %v6955
    %v6957 = vrot.slane %v6887, %v6956
    %v6958 = vlaneseq
    %v6959 = vshrl.u32 %v6958, 7
    %v6960 = vsub.s32 %v850, %v6959
    %v6961 = vrot.slane %v6888, %v6960
    %v6962 = vsel %vm855, %v6961, %v6957
    %v6963 = vlaneseq
    %v6964 = vshrl.u32 %v6963, 7
    %v6965 = vsub.s32 %v829, %v6964
    %v6966 = vrot.slane %v6889, %v6965
    %v6967 = vlaneseq
    %v6968 = vshrl.u32 %v6967, 7
    %v6969 = vsub.s32 %v850, %v6968
    %v6970 = vrot.slane %v6890, %v6969
    %v6971 = vsel %vm855, %v6970, %v6966
    %v6972 = vlaneseq
    %v6973 = vshrl.u32 %v6972, 7
    %v6974 = vsub.s32 %v829, %v6973
    %v6975 = vrot.slane %v6891, %v6974
    %v6976 = vlaneseq
    %v6977 = vshrl.u32 %v6976, 7
    %v6978 = vsub.s32 %v850, %v6977
    %v6979 = vrot.slane %v6892, %v6978
    %v6980 = vsel %vm855, %v6979, %v6975
    %v6981 = vsel %vm920, %v6926, %v6917
    %v6982 = vsel %vm922, %v6935, %v6981
    %v6983 = vsel %vm924, %v6944, %v6982
    %v6984 = vsel %vm926, %v6953, %v6983
    %v6985 = vsel %vm928, %v6962, %v6984
    %v6986 = vsel %vm930, %v6971, %v6985
    %v6987 = vsel %vm932, %v6980, %v6986
    %v6989 = vsel %vm935, %v6987, -inf
    %6990 = vmax.xlane.f32.xlu0 %v6989
    %v6991 = vpop.xlane.xlu0 %6990
    %v6993 = vlaneseq
    %v6994 = vshrl.u32 %v6993, 7
    %v6995 = vsub.s32 0, %v6994
    %v6996 = vrot.slane %v6991, %v6995
    %v6997 = vlaneseq
    %v6998 = vshrl.u32 %v6997, 7
    %v6999 = vsub.s32 1, %v6998
    %v7000 = vrot.slane %v6991, %v6999
    %v7001 = vlaneseq
    %v7002 = vshrl.u32 %v7001, 7
    %v7003 = vsub.s32 2, %v7002
    %v7004 = vrot.slane %v6991, %v7003
    %v7005 = vlaneseq
    %v7006 = vshrl.u32 %v7005, 7
    %v7007 = vsub.s32 3, %v7006
    %v7008 = vrot.slane %v6991, %v7007
    %v7009 = vlaneseq
    %v7010 = vshrl.u32 %v7009, 7
    %v7011 = vsub.s32 4, %v7010
    %v7012 = vrot.slane %v6991, %v7011
    %v7013 = vlaneseq
    %v7014 = vshrl.u32 %v7013, 7
    %v7015 = vsub.s32 5, %v7014
    %v7016 = vrot.slane %v6991, %v7015
    %v7017 = vlaneseq
    %v7018 = vshrl.u32 %v7017, 7
    %v7019 = vsub.s32 6, %v7018
    %v7020 = vrot.slane %v6991, %v7019
    %v7021 = vlaneseq
    %v7022 = vshrl.u32 %v7021, 7
    %v7023 = vsub.s32 7, %v7022
    %v7024 = vrot.slane %v6991, %v7023
    %vm7033 = vcmp.eq.f32.partialorder %v6877, %v6996
    %vm7034 = vcmp.eq.f32.partialorder %v6878, %v6996
    %vm7035 = vcmp.eq.f32.partialorder %v6879, %v7000
    %vm7036 = vcmp.eq.f32.partialorder %v6880, %v7000
    %vm7037 = vcmp.eq.f32.partialorder %v6881, %v7004
    %vm7038 = vcmp.eq.f32.partialorder %v6882, %v7004
    %vm7039 = vcmp.eq.f32.partialorder %v6883, %v7008
    %vm7040 = vcmp.eq.f32.partialorder %v6884, %v7008
    %vm7041 = vcmp.eq.f32.partialorder %v6885, %v7012
    %vm7042 = vcmp.eq.f32.partialorder %v6886, %v7012
    %vm7043 = vcmp.eq.f32.partialorder %v6887, %v7016
    %vm7044 = vcmp.eq.f32.partialorder %v6888, %v7016
    %vm7045 = vcmp.eq.f32.partialorder %v6889, %v7020
    %vm7046 = vcmp.eq.f32.partialorder %v6890, %v7020
    %vm7047 = vcmp.eq.f32.partialorder %v6891, %v7024
    %vm7048 = vcmp.eq.f32.partialorder %v6892, %v7024
    %v7049 = vsel %vm7033, %v998, 16
    %v7050 = vsel %vm7034, %v1002, 16
    %v7051 = vsel %vm7035, %v998, 16
    %v7052 = vsel %vm7036, %v1002, 16
    %v7053 = vsel %vm7037, %v998, 16
    %v7054 = vsel %vm7038, %v1002, 16
    %v7055 = vsel %vm7039, %v998, 16
    %v7056 = vsel %vm7040, %v1002, 16
    %v7057 = vsel %vm7041, %v998, 16
    %v7058 = vsel %vm7042, %v1002, 16
    %v7059 = vsel %vm7043, %v998, 16
    %v7060 = vsel %vm7044, %v1002, 16
    %v7061 = vsel %vm7045, %v998, 16
    %v7062 = vsel %vm7046, %v1002, 16
    %v7063 = vsel %vm7047, %v998, 16
    %v7064 = vsel %vm7048, %v1002, 16
    %7065 = vset.pattern.permute.xlu0 0
    %7066 = vperm.xlu0 %7065, %v7049
    %v7067 = vpop.permute.xlu0 %7066
    %7068 = vset.pattern.permute.xlu0 0
    %7069 = vperm.xlu0 %7068, %v7050
    %v7070 = vpop.permute.xlu0 %7069
    %7071 = vset.pattern.permute.xlu0 0
    %7072 = vperm.xlu0 %7071, %v7051
    %v7073 = vpop.permute.xlu0 %7072
    %7074 = vset.pattern.permute.xlu0 0
    %7075 = vperm.xlu0 %7074, %v7052
    %v7076 = vpop.permute.xlu0 %7075
    %7077 = vset.pattern.permute.xlu0 0
    %7078 = vperm.xlu0 %7077, %v7053
    %v7079 = vpop.permute.xlu0 %7078
    %7080 = vset.pattern.permute.xlu0 0
    %7081 = vperm.xlu0 %7080, %v7054
    %v7082 = vpop.permute.xlu0 %7081
    %7083 = vset.pattern.permute.xlu0 0
    %7084 = vperm.xlu0 %7083, %v7055
    %v7085 = vpop.permute.xlu0 %7084
    %7086 = vset.pattern.permute.xlu0 0
    %7087 = vperm.xlu0 %7086, %v7056
    %v7088 = vpop.permute.xlu0 %7087
    %7089 = vset.pattern.permute.xlu0 0
    %7090 = vperm.xlu0 %7089, %v7057
    %v7091 = vpop.permute.xlu0 %7090
    %7092 = vset.pattern.permute.xlu0 0
    %7093 = vperm.xlu0 %7092, %v7058
    %v7094 = vpop.permute.xlu0 %7093
    %7095 = vset.pattern.permute.xlu0 0
    %7096 = vperm.xlu0 %7095, %v7059
    %v7097 = vpop.permute.xlu0 %7096
    %7098 = vset.pattern.permute.xlu0 0
    %7099 = vperm.xlu0 %7098, %v7060
    %v7100 = vpop.permute.xlu0 %7099
    %7101 = vset.pattern.permute.xlu0 0
    %7102 = vperm.xlu0 %7101, %v7061
    %v7103 = vpop.permute.xlu0 %7102
    %7104 = vset.pattern.permute.xlu0 0
    %7105 = vperm.xlu0 %7104, %v7062
    %v7106 = vpop.permute.xlu0 %7105
    %7107 = vset.pattern.permute.xlu0 0
    %7108 = vperm.xlu0 %7107, %v7063
    %v7109 = vpop.permute.xlu0 %7108
    %7110 = vset.pattern.permute.xlu0 0
    %7111 = vperm.xlu0 %7110, %v7064
    %v7112 = vpop.permute.xlu0 %7111
    %v7113 = vlaneseq
    %v7114 = vshrl.u32 %v7113, 7
    %v7115 = vsub.s32 %v829, %v7114
    %v7116 = vrot.slane %v7067, %v7115
    %v7117 = vlaneseq
    %v7118 = vshrl.u32 %v7117, 7
    %v7119 = vsub.s32 %v850, %v7118
    %v7120 = vrot.slane %v7070, %v7119
    %v7121 = vsel %vm855, %v7120, %v7116
    %v7122 = vlaneseq
    %v7123 = vshrl.u32 %v7122, 7
    %v7124 = vsub.s32 %v829, %v7123
    %v7125 = vrot.slane %v7073, %v7124
    %v7126 = vlaneseq
    %v7127 = vshrl.u32 %v7126, 7
    %v7128 = vsub.s32 %v850, %v7127
    %v7129 = vrot.slane %v7076, %v7128
    %v7130 = vsel %vm855, %v7129, %v7125
    %v7131 = vlaneseq
    %v7132 = vshrl.u32 %v7131, 7
    %v7133 = vsub.s32 %v829, %v7132
    %v7134 = vrot.slane %v7079, %v7133
    %v7135 = vlaneseq
    %v7136 = vshrl.u32 %v7135, 7
    %v7137 = vsub.s32 %v850, %v7136
    %v7138 = vrot.slane %v7082, %v7137
    %v7139 = vsel %vm855, %v7138, %v7134
    %v7140 = vlaneseq
    %v7141 = vshrl.u32 %v7140, 7
    %v7142 = vsub.s32 %v829, %v7141
    %v7143 = vrot.slane %v7085, %v7142
    %v7144 = vlaneseq
    %v7145 = vshrl.u32 %v7144, 7
    %v7146 = vsub.s32 %v850, %v7145
    %v7147 = vrot.slane %v7088, %v7146
    %v7148 = vsel %vm855, %v7147, %v7143
    %v7149 = vlaneseq
    %v7150 = vshrl.u32 %v7149, 7
    %v7151 = vsub.s32 %v829, %v7150
    %v7152 = vrot.slane %v7091, %v7151
    %v7153 = vlaneseq
    %v7154 = vshrl.u32 %v7153, 7
    %v7155 = vsub.s32 %v850, %v7154
    %v7156 = vrot.slane %v7094, %v7155
    %v7157 = vsel %vm855, %v7156, %v7152
    %v7158 = vlaneseq
    %v7159 = vshrl.u32 %v7158, 7
    %v7160 = vsub.s32 %v829, %v7159
    %v7161 = vrot.slane %v7097, %v7160
    %v7162 = vlaneseq
    %v7163 = vshrl.u32 %v7162, 7
    %v7164 = vsub.s32 %v850, %v7163
    %v7165 = vrot.slane %v7100, %v7164
    %v7166 = vsel %vm855, %v7165, %v7161
    %v7167 = vlaneseq
    %v7168 = vshrl.u32 %v7167, 7
    %v7169 = vsub.s32 %v829, %v7168
    %v7170 = vrot.slane %v7103, %v7169
    %v7171 = vlaneseq
    %v7172 = vshrl.u32 %v7171, 7
    %v7173 = vsub.s32 %v850, %v7172
    %v7174 = vrot.slane %v7106, %v7173
    %v7175 = vsel %vm855, %v7174, %v7170
    %v7176 = vlaneseq
    %v7177 = vshrl.u32 %v7176, 7
    %v7178 = vsub.s32 %v829, %v7177
    %v7179 = vrot.slane %v7109, %v7178
    %v7180 = vlaneseq
    %v7181 = vshrl.u32 %v7180, 7
    %v7182 = vsub.s32 %v850, %v7181
    %v7183 = vrot.slane %v7112, %v7182
    %v7184 = vsel %vm855, %v7183, %v7179
    %v7185 = vsel %vm920, %v7130, %v7121
    %v7186 = vsel %vm922, %v7139, %v7185
    %v7187 = vsel %vm924, %v7148, %v7186
    %v7188 = vsel %vm926, %v7157, %v7187
    %v7189 = vsel %vm928, %v7166, %v7188
    %v7190 = vsel %vm930, %v7175, %v7189
    %v7191 = vsel %vm932, %v7184, %v7190
    %v7192 = vsel %vm935, %v7191, 2147483647
    %v7193 = vand.u32 %v7192, 65535
    %v7194 = vshra.s32 %v7192, 16
    %v7195 = vcvt.s32.f32 %v7193
    %v7196 = vcvt.s32.f32 %v7194
    %7197 = vmin.xlane.f32.xlu0 %v7196
    %v7198 = vpop.xlane.xlu0 %7197
    %vm7199 = vcmp.eq.f32.partialorder %v7196, %v7198
    %v7200 = vsel %vm7199, %v7195, inf
    %7201 = vmin.xlane.f32.xlu0 %v7200
    %v7202 = vpop.xlane.xlu0 %7201
    %v7203 = vcvt.f32.s32 %v7202
    %v7204 = vcvt.f32.s32 %v7198
    %v7205 = vshll.u32 %v7204, 16
    %v7206 = vadd.s32 %v7205, %v7203
    %vm7207 = vcmp.eq.s32.totalorder %v829, %v7206
    %v7208 = vsel %vm7207, 1, 0
    %v7209 = vcvt.s32.f32 %v7208
    %v7210 = vld [vmem:[#allocation2 + $0x1e8] sm:$0xff]
    %v7211 = vld [vmem:[#allocation2 + $0x1f0] sm:$0xff]
    %v7213 = vsel %vm935, %v7209, 0
    %7215 = vmatprep.subr.mxu0 0.0
    %7216 = vmatpush1.msra.mxu0 %v7210
    %7217 = vmatprep.subr.mxu0 0.0
    %7218 = vmatpush1.msra.mxu0 %v7211
    %7219 = vmatprep.subr.mxu0 0.0
    %7220 = vmatpush1.msra.mxu0 0.0
    %7221 = vmatprep.subr.mxu0 0.0
    %7222 = vmatpush1.msra.mxu0 0.0
    %7223 = vmatprep.subr.mxu0 0.0
    %7224 = vmatpush1.msra.mxu0 0.0
    %7225 = vmatprep.subr.mxu0 0.0
    %7226 = vmatpush1.msra.mxu0 0.0
    %7227 = vmatprep.subr.mxu0 0.0
    %7228 = vmatpush1.msra.mxu0 0.0
    %7229 = vmatprep.subr.mxu0 0.0
    %7230 = vmatpush1.msra.mxu0 0.0
    %7231 = vmatprep.subr.mxu0 0.0
    %7232 = vmatpush1.msra.mxu0 0.0
    %7233 = vmatprep.subr.mxu0 0.0
    %7234 = vmatpush1.msra.mxu0 0.0
    %7235 = vmatprep.subr.mxu0 0.0
    %7236 = vmatpush1.msra.mxu0 0.0
    %7237 = vmatprep.subr.mxu0 0.0
    %7238 = vmatpush1.msra.mxu0 0.0
    %7239 = vmatprep.subr.mxu0 0.0
    %7240 = vmatpush1.msra.mxu0 0.0
    %7241 = vmatprep.subr.mxu0 0.0
    %7242 = vmatpush1.msra.mxu0 0.0
    %7243 = vmatprep.subr.mxu0 0.0
    %7244 = vmatpush1.msra.mxu0 0.0
    %7245 = vmatprep.subr.mxu0 0.0
    %7246 = vmatpush1.msra.mxu0 0.0
    %7247 = vmatprep.subr.mxu0 0.0
    %7248 = vmatpush1.msra.mxu0 0.0
    %7249 = vmatprep.subr.mxu0 0.0
    %7250 = vmatpush1.msra.mxu0 0.0
    %7251 = vmatprep.subr.mxu0 0.0
    %7252 = vmatpush1.msra.mxu0 0.0
    %7253 = vmatprep.subr.mxu0 0.0
    %7254 = vmatpush1.msra.mxu0 0.0
    %7255 = vmatprep.subr.mxu0 0.0
    %7256 = vmatpush1.msra.mxu0 0.0
    %7257 = vmatprep.subr.mxu0 0.0
    %7258 = vmatpush1.msra.mxu0 0.0
    %7259 = vmatprep.subr.mxu0 0.0
    %7260 = vmatpush1.msra.mxu0 0.0
    %7261 = vmatprep.subr.mxu0 0.0
    %7262 = vmatpush1.msra.mxu0 0.0
    %7263 = vmatprep.subr.mxu0 0.0
    %7264 = vmatpush1.msra.mxu0 0.0
    %7265 = vmatprep.subr.mxu0 0.0
    %7266 = vmatpush1.msra.mxu0 0.0
    %7267 = vmatprep.subr.mxu0 0.0
    %7268 = vmatpush1.msra.mxu0 0.0
    %7269 = vmatprep.subr.mxu0 0.0
    %7270 = vmatpush1.msra.mxu0 0.0
    %7271 = vmatprep.subr.mxu0 0.0
    %7272 = vmatpush1.msra.mxu0 0.0
    %7273 = vmatprep.subr.mxu0 0.0
    %7274 = vmatpush1.msra.mxu0 0.0
    %7275 = vmatprep.subr.mxu0 0.0
    %7276 = vmatpush1.msra.mxu0 0.0
    %7277 = vmatprep.subr.mxu0 0.0
    %7278 = vmatpush1.msra.mxu0 0.0
    %7279 = vmatprep.mubr.f32.mxu0 0.0
    %7280 = vmatmul.mubr.f32.gmra.mrb[0].mxu0 %v7213
    %v7281 = vpop.f32.mrb[0].mxu0
    %v7282 = vadd.f32 0.0, %v7281
    %v7283 = vpop.f32.mrb[0].mxu0
    %7284 = vdwg.mxu0
    %v7285 = vxor.u32 %v6991, 2147483648
    %v7286 = vmul.f32 %v7285, 1.442695
    %v7287 = vpow.pop %v7286
    %v7288 = vadd.f32 %v7287, 1.0
    %v7289 = vrcp.pop %v7288
    %v7290 = vmul.f32 1.0, %v7289
    %v7291 = vmul.f32 %v7282, %v7290
    %v7292 = vld [vmem:[#allocation2 + $0xa0] sm:$0xff]
    %v7293 = vld [vmem:[#allocation2 + $0xa8] sm:$0xff]
    %v7294 = vld [vmem:[#allocation2 + $0xb0] sm:$0xff]
    %v7295 = vld [vmem:[#allocation2 + $0xb8] sm:$0xff]
    %v7296 = vld [vmem:[#allocation2 + $0x230] sm:$0x1]
    %v7297 = vlaneseq
    %v7298 = vshrl.u32 %v7297, 7
    %v7299 = vsub.s32 0, %v7298
    %v7300 = vrot.slane %v7296, %v7299
    %v7302 = vsel %vm48, %v7291, 0
    %7304 = vmatprep.subr.mxu0 0.0
    %7305 = vmatpush1.msra.mxu0 %v7292
    %7306 = vmatprep.subr.mxu0 0.0
    %7307 = vmatpush1.msra.mxu0 %v7293
    %7308 = vmatprep.subr.mxu0 0.0
    %7309 = vmatpush1.msra.mxu0 %v7294
    %7310 = vmatprep.subr.mxu0 0.0
    %7311 = vmatpush1.msra.mxu0 %v7295
    %7312 = vmatprep.subr.mxu0 0.0
    %7313 = vmatpush1.msra.mxu0 0.0
    %7314 = vmatprep.subr.mxu0 0.0
    %7315 = vmatpush1.msra.mxu0 0.0
    %7316 = vmatprep.subr.mxu0 0.0
    %7317 = vmatpush1.msra.mxu0 0.0
    %7318 = vmatprep.subr.mxu0 0.0
    %7319 = vmatpush1.msra.mxu0 0.0
    %7320 = vmatprep.subr.mxu0 0.0
    %7321 = vmatpush1.msra.mxu0 0.0
    %7322 = vmatprep.subr.mxu0 0.0
    %7323 = vmatpush1.msra.mxu0 0.0
    %7324 = vmatprep.subr.mxu0 0.0
    %7325 = vmatpush1.msra.mxu0 0.0
    %7326 = vmatprep.subr.mxu0 0.0
    %7327 = vmatpush1.msra.mxu0 0.0
    %7328 = vmatprep.subr.mxu0 0.0
    %7329 = vmatpush1.msra.mxu0 0.0
    %7330 = vmatprep.subr.mxu0 0.0
    %7331 = vmatpush1.msra.mxu0 0.0
    %7332 = vmatprep.subr.mxu0 0.0
    %7333 = vmatpush1.msra.mxu0 0.0
    %7334 = vmatprep.subr.mxu0 0.0
    %7335 = vmatpush1.msra.mxu0 0.0
    %7336 = vmatprep.subr.mxu0 0.0
    %7337 = vmatpush1.msra.mxu0 0.0
    %7338 = vmatprep.subr.mxu0 0.0
    %7339 = vmatpush1.msra.mxu0 0.0
    %7340 = vmatprep.subr.mxu0 0.0
    %7341 = vmatpush1.msra.mxu0 0.0
    %7342 = vmatprep.subr.mxu0 0.0
    %7343 = vmatpush1.msra.mxu0 0.0
    %7344 = vmatprep.subr.mxu0 0.0
    %7345 = vmatpush1.msra.mxu0 0.0
    %7346 = vmatprep.subr.mxu0 0.0
    %7347 = vmatpush1.msra.mxu0 0.0
    %7348 = vmatprep.subr.mxu0 0.0
    %7349 = vmatpush1.msra.mxu0 0.0
    %7350 = vmatprep.subr.mxu0 0.0
    %7351 = vmatpush1.msra.mxu0 0.0
    %7352 = vmatprep.subr.mxu0 0.0
    %7353 = vmatpush1.msra.mxu0 0.0
    %7354 = vmatprep.subr.mxu0 0.0
    %7355 = vmatpush1.msra.mxu0 0.0
    %7356 = vmatprep.subr.mxu0 0.0
    %7357 = vmatpush1.msra.mxu0 0.0
    %7358 = vmatprep.subr.mxu0 0.0
    %7359 = vmatpush1.msra.mxu0 0.0
    %7360 = vmatprep.subr.mxu0 0.0
    %7361 = vmatpush1.msra.mxu0 0.0
    %7362 = vmatprep.subr.mxu0 0.0
    %7363 = vmatpush1.msra.mxu0 0.0
    %7364 = vmatprep.subr.mxu0 0.0
    %7365 = vmatpush1.msra.mxu0 0.0
    %7366 = vmatprep.subr.mxu0 0.0
    %7367 = vmatpush1.msra.mxu0 0.0
    %7368 = vmatprep.mubr.f32.mxu0 0.0
    %7369 = vmatmul.mubr.f32.gmra.mrb[0].mxu0 %v7302
    %v7370 = vpop.f32.mrb[0].mxu0
    %v7371 = vadd.f32 %v7300, %v7370
    %v7372 = vpop.f32.mrb[0].mxu0
    %7373 = vdwg.mxu0
    %v7374 = vmul.f32 %v7371, %v7371
    %v7375 = vmul.f32 %v7371, %v7374
    %v7376 = vmul.f32 %v7375, 0.044715
    %v7377 = vadd.f32 %v7371, %v7376
    %v7378 = vmul.f32 %v7377, 0.7978846
    %v7379 = vtanh.pop %v7378
    %v7380 = vadd.f32 %v7379, 1.0
    %v7381 = vmul.f32 %v7380, 0.5
    %v7382 = vmul.f32 %v7371, %v7381
    %v7383 = vld [vmem:[#allocation2 + $0xc0] sm:$0xff]
    %v7384 = vld [vmem:[#allocation2 + $0xc8] sm:$0xff]
    %v7385 = vld [vmem:[#allocation2 + $0xd0] sm:$0xff]
    %v7386 = vld [vmem:[#allocation2 + $0xd8] sm:$0xff]
    %v7387 = vld [vmem:[#allocation2 + $0x238] sm:$0x1]
    %v7388 = vlaneseq
    %v7389 = vshrl.u32 %v7388, 7
    %v7390 = vsub.s32 0, %v7389
    %v7391 = vrot.slane %v7387, %v7390
    %v7393 = vsel %vm48, %v7382, 0
    %7395 = vmatprep.subr.mxu0 0.0
    %7396 = vmatpush1.msra.mxu0 %v7383
    %7397 = vmatprep.subr.mxu0 0.0
    %7398 = vmatpush1.msra.mxu0 %v7384
    %7399 = vmatprep.subr.mxu0 0.0
    %7400 = vmatpush1.msra.mxu0 %v7385
    %7401 = vmatprep.subr.mxu0 0.0
    %7402 = vmatpush1.msra.mxu0 %v7386
    %7403 = vmatprep.subr.mxu0 0.0
    %7404 = vmatpush1.msra.mxu0 0.0
    %7405 = vmatprep.subr.mxu0 0.0
    %7406 = vmatpush1.msra.mxu0 0.0
    %7407 = vmatprep.subr.mxu0 0.0
    %7408 = vmatpush1.msra.mxu0 0.0
    %7409 = vmatprep.subr.mxu0 0.0
    %7410 = vmatpush1.msra.mxu0 0.0
    %7411 = vmatprep.subr.mxu0 0.0
    %7412 = vmatpush1.msra.mxu0 0.0
    %7413 = vmatprep.subr.mxu0 0.0
    %7414 = vmatpush1.msra.mxu0 0.0
    %7415 = vmatprep.subr.mxu0 0.0
    %7416 = vmatpush1.msra.mxu0 0.0
    %7417 = vmatprep.subr.mxu0 0.0
    %7418 = vmatpush1.msra.mxu0 0.0
    %7419 = vmatprep.subr.mxu0 0.0
    %7420 = vmatpush1.msra.mxu0 0.0
    %7421 = vmatprep.subr.mxu0 0.0
    %7422 = vmatpush1.msra.mxu0 0.0
    %7423 = vmatprep.subr.mxu0 0.0
    %7424 = vmatpush1.msra.mxu0 0.0
    %7425 = vmatprep.subr.mxu0 0.0
    %7426 = vmatpush1.msra.mxu0 0.0
    %7427 = vmatprep.subr.mxu0 0.0
    %7428 = vmatpush1.msra.mxu0 0.0
    %7429 = vmatprep.subr.mxu0 0.0
    %7430 = vmatpush1.msra.mxu0 0.0
    %7431 = vmatprep.subr.mxu0 0.0
    %7432 = vmatpush1.msra.mxu0 0.0
    %7433 = vmatprep.subr.mxu0 0.0
    %7434 = vmatpush1.msra.mxu0 0.0
    %7435 = vmatprep.subr.mxu0 0.0
    %7436 = vmatpush1.msra.mxu0 0.0
    %7437 = vmatprep.subr.mxu0 0.0
    %7438 = vmatpush1.msra.mxu0 0.0
    %7439 = vmatprep.subr.mxu0 0.0
    %7440 = vmatpush1.msra.mxu0 0.0
    %7441 = vmatprep.subr.mxu0 0.0
    %7442 = vmatpush1.msra.mxu0 0.0
    %7443 = vmatprep.subr.mxu0 0.0
    %7444 = vmatpush1.msra.mxu0 0.0
    %7445 = vmatprep.subr.mxu0 0.0
    %7446 = vmatpush1.msra.mxu0 0.0
    %7447 = vmatprep.subr.mxu0 0.0
    %7448 = vmatpush1.msra.mxu0 0.0
    %7449 = vmatprep.subr.mxu0 0.0
    %7450 = vmatpush1.msra.mxu0 0.0
    %7451 = vmatprep.subr.mxu0 0.0
    %7452 = vmatpush1.msra.mxu0 0.0
    %7453 = vmatprep.subr.mxu0 0.0
    %7454 = vmatpush1.msra.mxu0 0.0
    %7455 = vmatprep.subr.mxu0 0.0
    %7456 = vmatpush1.msra.mxu0 0.0
    %7457 = vmatprep.subr.mxu0 0.0
    %7458 = vmatpush1.msra.mxu0 0.0
    %7459 = vmatprep.mubr.f32.mxu0 0.0
    %7460 = vmatmul.mubr.f32.gmra.mrb[0].mxu0 %v7393
    %v7461 = vpop.f32.mrb[0].mxu0
    %v7462 = vadd.f32 %v7391, %v7461
    %v7463 = vpop.f32.mrb[0].mxu0
    %7464 = vdwg.mxu0
    %v7465 = vld [vmem:[#allocation2 + $0x40] sm:$0xff]
    %v7466 = vld [vmem:[#allocation2 + $0x48] sm:$0xff]
    %v7467 = vld [vmem:[#allocation2 + $0x50] sm:$0xff]
    %v7468 = vld [vmem:[#allocation2 + $0x58] sm:$0xff]
    %v7469 = vld [vmem:[#allocation2 + $0x208] sm:$0x1]
    %v7470 = vlaneseq
    %v7471 = vshrl.u32 %v7470, 7
    %v7472 = vsub.s32 0, %v7471
    %v7473 = vrot.slane %v7469, %v7472
    %v7475 = vsel %vm48, %v7462, 0
    %7477 = vmatprep.subr.mxu0 0.0
    %7478 = vmatpush1.msra.mxu0 %v7465
    %7479 = vmatprep.subr.mxu0 0.0
    %7480 = vmatpush1.msra.mxu0 %v7466
    %7481 = vmatprep.subr.mxu0 0.0
    %7482 = vmatpush1.msra.mxu0 %v7467
    %7483 = vmatprep.subr.mxu0 0.0
    %7484 = vmatpush1.msra.mxu0 %v7468
    %7485 = vmatprep.subr.mxu0 0.0
    %7486 = vmatpush1.msra.mxu0 0.0
    %7487 = vmatprep.subr.mxu0 0.0
    %7488 = vmatpush1.msra.mxu0 0.0
    %7489 = vmatprep.subr.mxu0 0.0
    %7490 = vmatpush1.msra.mxu0 0.0
    %7491 = vmatprep.subr.mxu0 0.0
    %7492 = vmatpush1.msra.mxu0 0.0
    %7493 = vmatprep.subr.mxu0 0.0
    %7494 = vmatpush1.msra.mxu0 0.0
    %7495 = vmatprep.subr.mxu0 0.0
    %7496 = vmatpush1.msra.mxu0 0.0
    %7497 = vmatprep.subr.mxu0 0.0
    %7498 = vmatpush1.msra.mxu0 0.0
    %7499 = vmatprep.subr.mxu0 0.0
    %7500 = vmatpush1.msra.mxu0 0.0
    %7501 = vmatprep.subr.mxu0 0.0
    %7502 = vmatpush1.msra.mxu0 0.0
    %7503 = vmatprep.subr.mxu0 0.0
    %7504 = vmatpush1.msra.mxu0 0.0
    %7505 = vmatprep.subr.mxu0 0.0
    %7506 = vmatpush1.msra.mxu0 0.0
    %7507 = vmatprep.subr.mxu0 0.0
    %7508 = vmatpush1.msra.mxu0 0.0
    %7509 = vmatprep.subr.mxu0 0.0
    %7510 = vmatpush1.msra.mxu0 0.0
    %7511 = vmatprep.subr.mxu0 0.0
    %7512 = vmatpush1.msra.mxu0 0.0
    %7513 = vmatprep.subr.mxu0 0.0
    %7514 = vmatpush1.msra.mxu0 0.0
    %7515 = vmatprep.subr.mxu0 0.0
    %7516 = vmatpush1.msra.mxu0 0.0
    %7517 = vmatprep.subr.mxu0 0.0
    %7518 = vmatpush1.msra.mxu0 0.0
    %7519 = vmatprep.subr.mxu0 0.0
    %7520 = vmatpush1.msra.mxu0 0.0
    %7521 = vmatprep.subr.mxu0 0.0
    %7522 = vmatpush1.msra.mxu0 0.0
    %7523 = vmatprep.subr.mxu0 0.0
    %7524 = vmatpush1.msra.mxu0 0.0
    %7525 = vmatprep.subr.mxu0 0.0
    %7526 = vmatpush1.msra.mxu0 0.0
    %7527 = vmatprep.subr.mxu0 0.0
    %7528 = vmatpush1.msra.mxu0 0.0
    %7529 = vmatprep.subr.mxu0 0.0
    %7530 = vmatpush1.msra.mxu0 0.0
    %7531 = vmatprep.subr.mxu0 0.0
    %7532 = vmatpush1.msra.mxu0 0.0
    %7533 = vmatprep.subr.mxu0 0.0
    %7534 = vmatpush1.msra.mxu0 0.0
    %7535 = vmatprep.subr.mxu0 0.0
    %7536 = vmatpush1.msra.mxu0 0.0
    %7537 = vmatprep.subr.mxu0 0.0
    %7538 = vmatpush1.msra.mxu0 0.0
    %7539 = vmatprep.subr.mxu0 0.0
    %7540 = vmatpush1.msra.mxu0 0.0
    %7541 = vmatprep.mubr.f32.mxu0 0.0
    %7542 = vmatmul.mubr.f32.gmra.mrb[0].mxu0 %v7475
    %v7543 = vpop.f32.mrb[0].mxu0
    %v7544 = vadd.f32 %v7473, %v7543
    %v7545 = vpop.f32.mrb[0].mxu0
    %7546 = vdwg.mxu0
    %7547 = vrot.lane.b32.xlu0 %v6360, 96
    %v7548 = vpop.permute.xlu0 %7547
    %v7550 = vmul.f32 %v6360, %v7548
    %7552 = vrot.lane.b32.xlu0 %v7544, 32
    %v7553 = vpop.permute.xlu0 %7552
    %v7555 = vmul.f32 %v6360, %v7553
    %v7556 = vmul.f32 %v6360, %v119
    %v7557 = vld [vmem:[#allocation2 + $0x1c0] sm:$0xff]
    %v7558 = vld [vmem:[#allocation2 + $0x1c8] sm:$0xff]
    %v7559 = vld [vmem:[#allocation2 + $0x1d0] sm:$0xff]
    %v7560 = vld [vmem:[#allocation2 + $0x1d8] sm:$0xff]
    %7564 = vrot.lane.b32.xlu0 %v7550, 96
    %v7565 = vpop.permute.xlu0 %7564
    %7566 = vrot.lane.b32.xlu0 %v7555, 96
    %v7567 = vpop.permute.xlu0 %7566
    %7568 = vrot.lane.b32.xlu0 %v7556, 96
    %v7569 = vpop.permute.xlu0 %7568
    %v7570 = vsel %vm48, %v7565, 0
    %v7572 = vsel %vm48, %v7567, 0
    %v7574 = vsel %vm48, %v7569, 0
    %7576 = vmatprep.subr.mxu0 0.0
    %7577 = vmatpush1.msra.mxu0 %v7557
    %7578 = vmatprep.subr.mxu0 0.0
    %7579 = vmatpush1.msra.mxu0 %v7558
    %7580 = vmatprep.subr.mxu0 0.0
    %7581 = vmatpush1.msra.mxu0 %v7559
    %7582 = vmatprep.subr.mxu0 0.0
    %7583 = vmatpush1.msra.mxu0 %v7560
    %7584 = vmatprep.subr.mxu0 0.0
    %7585 = vmatpush1.msra.mxu0 0.0
    %7586 = vmatprep.subr.mxu0 0.0
    %7587 = vmatpush1.msra.mxu0 0.0
    %7588 = vmatprep.subr.mxu0 0.0
    %7589 = vmatpush1.msra.mxu0 0.0
    %7590 = vmatprep.subr.mxu0 0.0
    %7591 = vmatpush1.msra.mxu0 0.0
    %7592 = vmatprep.subr.mxu0 0.0
    %7593 = vmatpush1.msra.mxu0 0.0
    %7594 = vmatprep.subr.mxu0 0.0
    %7595 = vmatpush1.msra.mxu0 0.0
    %7596 = vmatprep.subr.mxu0 0.0
    %7597 = vmatpush1.msra.mxu0 0.0
    %7598 = vmatprep.subr.mxu0 0.0
    %7599 = vmatpush1.msra.mxu0 0.0
    %7600 = vmatprep.subr.mxu0 0.0
    %7601 = vmatpush1.msra.mxu0 0.0
    %7602 = vmatprep.subr.mxu0 0.0
    %7603 = vmatpush1.msra.mxu0 0.0
    %7604 = vmatprep.subr.mxu0 0.0
    %7605 = vmatpush1.msra.mxu0 0.0
    %7606 = vmatprep.subr.mxu0 0.0
    %7607 = vmatpush1.msra.mxu0 0.0
    %7608 = vmatprep.subr.mxu0 0.0
    %7609 = vmatpush1.msra.mxu0 0.0
    %7610 = vmatprep.subr.mxu0 0.0
    %7611 = vmatpush1.msra.mxu0 0.0
    %7612 = vmatprep.subr.mxu0 0.0
    %7613 = vmatpush1.msra.mxu0 0.0
    %7614 = vmatprep.subr.mxu0 0.0
    %7615 = vmatpush1.msra.mxu0 0.0
    %7616 = vmatprep.subr.mxu0 0.0
    %7617 = vmatpush1.msra.mxu0 0.0
    %7618 = vmatprep.subr.mxu0 0.0
    %7619 = vmatpush1.msra.mxu0 0.0
    %7620 = vmatprep.subr.mxu0 0.0
    %7621 = vmatpush1.msra.mxu0 0.0
    %7622 = vmatprep.subr.mxu0 0.0
    %7623 = vmatpush1.msra.mxu0 0.0
    %7624 = vmatprep.subr.mxu0 0.0
    %7625 = vmatpush1.msra.mxu0 0.0
    %7626 = vmatprep.subr.mxu0 0.0
    %7627 = vmatpush1.msra.mxu0 0.0
    %7628 = vmatprep.subr.mxu0 0.0
    %7629 = vmatpush1.msra.mxu0 0.0
    %7630 = vmatprep.subr.mxu0 0.0
    %7631 = vmatpush1.msra.mxu0 0.0
    %7632 = vmatprep.subr.mxu0 0.0
    %7633 = vmatpush1.msra.mxu0 0.0
    %7634 = vmatprep.subr.mxu0 0.0
    %7635 = vmatpush1.msra.mxu0 0.0
    %7636 = vmatprep.subr.mxu0 0.0
    %7637 = vmatpush1.msra.mxu0 0.0
    %7638 = vmatprep.subr.mxu0 0.0
    %7639 = vmatpush1.msra.mxu0 0.0
    %7640 = vmatprep.mubr.f32.mxu0 0.0
    %7641 = vmatmul.mubr.f32.gmra.mrb[0].mxu0 %v7570
    %v7642 = vpop.f32.mrb[0].mxu0
    %v7643 = vadd.f32 0.0, %v7642
    %v7644 = vpop.f32.mrb[0].mxu0
    %7645 = vmatprep.mubr.f32.mxu0 0.0
    %7646 = vmatmul.mubr.f32.gmra.mrb[0].mxu0 %v7572
    %v7647 = vpop.f32.mrb[0].mxu0
    %v7648 = vadd.f32 0.0, %v7647
    %v7649 = vpop.f32.mrb[0].mxu0
    %7650 = vmatprep.mubr.f32.mxu0 0.0
    %7651 = vmatmul.mubr.f32.gmra.mrb[0].mxu0 %v7574
    %v7652 = vpop.f32.mrb[0].mxu0
    %v7653 = vadd.f32 0.0, %v7652
    %v7654 = vpop.f32.mrb[0].mxu0
    %7655 = vdwg.mxu0
    %v7656 = vmul.f32 %v7643, 0.35355338
    %v7657 = vmul.f32 %v7648, 0.35355338
    %v7658 = vmul.f32 %v7653, 0.35355338
    %v7659 = vmax.f32 %v7656, %v7657
    %v7660 = vmax.f32 %v7659, %v7658
    %v7661 = vsub.f32 %v7656, %v7660
    %v7662 = vmul.f32 %v7661, 1.442695
    %v7663 = vpow.pop %v7662
    %v7664 = vsub.f32 %v7657, %v7660
    %v7665 = vmul.f32 %v7664, 1.442695
    %v7666 = vpow.pop %v7665
    %v7667 = vsub.f32 %v7658, %v7660
    %v7668 = vmul.f32 %v7667, 1.442695
    %v7669 = vpow.pop %v7668
    %v7670 = vadd.f32 %v7663, %v7666
    %v7671 = vadd.f32 %v7670, %v7669
    %v7672 = vrcp.pop %v7671
    %v7673 = vld [vmem:[#allocation2 + $0x1e0] sm:$0xf]
    %v7675 = vsel %vm1628, %v7663, 0
    %v7678 = vsel %vm1628, %v7666, 0
    %v7681 = vsel %vm1628, %v7669, 0
    %v7684 = vsel %vm1628, %v7672, 0
    %v7687 = vsel %vm1641, %v7673, 0
    %7689 = vmatprep.subr.mxu0 0.0
    %7690 = vmatpush1.msra.mxu0 %v7687
    %7691 = vmatprep.subr.mxu0 0.0
    %7692 = vmatpush1.msra.mxu0 0.0
    %7693 = vmatprep.subr.mxu0 0.0
    %7694 = vmatpush1.msra.mxu0 0.0
    %7695 = vmatprep.subr.mxu0 0.0
    %7696 = vmatpush1.msra.mxu0 0.0
    %7697 = vmatprep.subr.mxu0 0.0
    %7698 = vmatpush1.msra.mxu0 0.0
    %7699 = vmatprep.subr.mxu0 0.0
    %7700 = vmatpush1.msra.mxu0 0.0
    %7701 = vmatprep.subr.mxu0 0.0
    %7702 = vmatpush1.msra.mxu0 0.0
    %7703 = vmatprep.subr.mxu0 0.0
    %7704 = vmatpush1.msra.mxu0 0.0
    %7705 = vmatprep.subr.mxu0 0.0
    %7706 = vmatpush1.msra.mxu0 0.0
    %7707 = vmatprep.subr.mxu0 0.0
    %7708 = vmatpush1.msra.mxu0 0.0
    %7709 = vmatprep.subr.mxu0 0.0
    %7710 = vmatpush1.msra.mxu0 0.0
    %7711 = vmatprep.subr.mxu0 0.0
    %7712 = vmatpush1.msra.mxu0 0.0
    %7713 = vmatprep.subr.mxu0 0.0
    %7714 = vmatpush1.msra.mxu0 0.0
    %7715 = vmatprep.subr.mxu0 0.0
    %7716 = vmatpush1.msra.mxu0 0.0
    %7717 = vmatprep.subr.mxu0 0.0
    %7718 = vmatpush1.msra.mxu0 0.0
    %7719 = vmatprep.subr.mxu0 0.0
    %7720 = vmatpush1.msra.mxu0 0.0
    %7721 = vmatprep.subr.mxu0 0.0
    %7722 = vmatpush1.msra.mxu0 0.0
    %7723 = vmatprep.subr.mxu0 0.0
    %7724 = vmatpush1.msra.mxu0 0.0
    %7725 = vmatprep.subr.mxu0 0.0
    %7726 = vmatpush1.msra.mxu0 0.0
    %7727 = vmatprep.subr.mxu0 0.0
    %7728 = vmatpush1.msra.mxu0 0.0
    %7729 = vmatprep.subr.mxu0 0.0
    %7730 = vmatpush1.msra.mxu0 0.0
    %7731 = vmatprep.subr.mxu0 0.0
    %7732 = vmatpush1.msra.mxu0 0.0
    %7733 = vmatprep.subr.mxu0 0.0
    %7734 = vmatpush1.msra.mxu0 0.0
    %7735 = vmatprep.subr.mxu0 0.0
    %7736 = vmatpush1.msra.mxu0 0.0
    %7737 = vmatprep.subr.mxu0 0.0
    %7738 = vmatpush1.msra.mxu0 0.0
    %7739 = vmatprep.subr.mxu0 0.0
    %7740 = vmatpush1.msra.mxu0 0.0
    %7741 = vmatprep.subr.mxu0 0.0
    %7742 = vmatpush1.msra.mxu0 0.0
    %7743 = vmatprep.subr.mxu0 0.0
    %7744 = vmatpush1.msra.mxu0 0.0
    %7745 = vmatprep.subr.mxu0 0.0
    %7746 = vmatpush1.msra.mxu0 0.0
    %7747 = vmatprep.subr.mxu0 0.0
    %7748 = vmatpush1.msra.mxu0 0.0
    %7749 = vmatprep.subr.mxu0 0.0
    %7750 = vmatpush1.msra.mxu0 0.0
    %7751 = vmatprep.subr.mxu0 0.0
    %7752 = vmatpush1.msra.mxu0 0.0
    %7753 = vmatprep.mubr.f32.mxu0 0.0
    %7754 = vmatmul.mubr.f32.gmra.mrb[0].mxu0 %v7675
    %v7755 = vpop.f32.mrb[0].mxu0
    %v7756 = vadd.f32 0.0, %v7755
    %v7757 = vpop.f32.mrb[0].mxu0
    %7758 = vmatprep.mubr.f32.mxu0 0.0
    %7759 = vmatmul.mubr.f32.gmra.mrb[0].mxu0 %v7678
    %v7760 = vpop.f32.mrb[0].mxu0
    %v7761 = vadd.f32 0.0, %v7760
    %v7762 = vpop.f32.mrb[0].mxu0
    %7763 = vmatprep.mubr.f32.mxu0 0.0
    %7764 = vmatmul.mubr.f32.gmra.mrb[0].mxu0 %v7681
    %v7765 = vpop.f32.mrb[0].mxu0
    %v7766 = vadd.f32 0.0, %v7765
    %v7767 = vpop.f32.mrb[0].mxu0
    %7768 = vmatprep.mubr.f32.mxu0 0.0
    %7769 = vmatmul.mubr.f32.gmra.mrb[0].mxu0 %v7684
    %v7770 = vpop.f32.mrb[0].mxu0
    %v7771 = vadd.f32 0.0, %v7770
    %v7772 = vpop.f32.mrb[0].mxu0
    %7773 = vdwg.mxu0
    %7774 = vrot.lane.b32.xlu0 %v6360, 32
    %v7775 = vpop.permute.xlu0 %7774
    %v7777 = vmul.f32 %v7756, %v7775
    %7778 = vrot.lane.b32.xlu0 %v7544, 96
    %v7779 = vpop.permute.xlu0 %7778
    %v7781 = vmul.f32 %v7761, %v7779
    %v7782 = vadd.f32 %v7777, %v7781
    %v7783 = vmul.f32 %v7766, %v1741
    %v7784 = vadd.f32 %v7782, %v7783
    %v7785 = vmul.f32 %v7784, %v7771
    %v7786 = vld [vmem:[#allocation2 + $0x100] sm:$0xff]
    %v7787 = vld [vmem:[#allocation2 + $0x108] sm:$0xff]
    %v7788 = vld [vmem:[#allocation2 + $0x110] sm:$0xff]
    %v7789 = vld [vmem:[#allocation2 + $0x118] sm:$0xff]
    %v7790 = vld [vmem:[#allocation2 + $0x248] sm:$0x1]
    %v7791 = vlaneseq
    %v7792 = vshrl.u32 %v7791, 7
    %v7793 = vsub.s32 0, %v7792
    %v7794 = vrot.slane %v7790, %v7793
    %v7796 = vsel %vm48, %v7785, 0
    %7798 = vmatprep.subr.mxu0 0.0
    %7799 = vmatpush1.msra.mxu0 %v7786
    %7800 = vmatprep.subr.mxu0 0.0
    %7801 = vmatpush1.msra.mxu0 %v7787
    %7802 = vmatprep.subr.mxu0 0.0
    %7803 = vmatpush1.msra.mxu0 %v7788
    %7804 = vmatprep.subr.mxu0 0.0
    %7805 = vmatpush1.msra.mxu0 %v7789
    %7806 = vmatprep.subr.mxu0 0.0
    %7807 = vmatpush1.msra.mxu0 0.0
    %7808 = vmatprep.subr.mxu0 0.0
    %7809 = vmatpush1.msra.mxu0 0.0
    %7810 = vmatprep.subr.mxu0 0.0
    %7811 = vmatpush1.msra.mxu0 0.0
    %7812 = vmatprep.subr.mxu0 0.0
    %7813 = vmatpush1.msra.mxu0 0.0
    %7814 = vmatprep.subr.mxu0 0.0
    %7815 = vmatpush1.msra.mxu0 0.0
    %7816 = vmatprep.subr.mxu0 0.0
    %7817 = vmatpush1.msra.mxu0 0.0
    %7818 = vmatprep.subr.mxu0 0.0
    %7819 = vmatpush1.msra.mxu0 0.0
    %7820 = vmatprep.subr.mxu0 0.0
    %7821 = vmatpush1.msra.mxu0 0.0
    %7822 = vmatprep.subr.mxu0 0.0
    %7823 = vmatpush1.msra.mxu0 0.0
    %7824 = vmatprep.subr.mxu0 0.0
    %7825 = vmatpush1.msra.mxu0 0.0
    %7826 = vmatprep.subr.mxu0 0.0
    %7827 = vmatpush1.msra.mxu0 0.0
    %7828 = vmatprep.subr.mxu0 0.0
    %7829 = vmatpush1.msra.mxu0 0.0
    %7830 = vmatprep.subr.mxu0 0.0
    %7831 = vmatpush1.msra.mxu0 0.0
    %7832 = vmatprep.subr.mxu0 0.0
    %7833 = vmatpush1.msra.mxu0 0.0
    %7834 = vmatprep.subr.mxu0 0.0
    %7835 = vmatpush1.msra.mxu0 0.0
    %7836 = vmatprep.subr.mxu0 0.0
    %7837 = vmatpush1.msra.mxu0 0.0
    %7838 = vmatprep.subr.mxu0 0.0
    %7839 = vmatpush1.msra.mxu0 0.0
    %7840 = vmatprep.subr.mxu0 0.0
    %7841 = vmatpush1.msra.mxu0 0.0
    %7842 = vmatprep.subr.mxu0 0.0
    %7843 = vmatpush1.msra.mxu0 0.0
    %7844 = vmatprep.subr.mxu0 0.0
    %7845 = vmatpush1.msra.mxu0 0.0
    %7846 = vmatprep.subr.mxu0 0.0
    %7847 = vmatpush1.msra.mxu0 0.0
    %7848 = vmatprep.subr.mxu0 0.0
    %7849 = vmatpush1.msra.mxu0 0.0
    %7850 = vmatprep.subr.mxu0 0.0
    %7851 = vmatpush1.msra.mxu0 0.0
    %7852 = vmatprep.subr.mxu0 0.0
    %7853 = vmatpush1.msra.mxu0 0.0
    %7854 = vmatprep.subr.mxu0 0.0
    %7855 = vmatpush1.msra.mxu0 0.0
    %7856 = vmatprep.subr.mxu0 0.0
    %7857 = vmatpush1.msra.mxu0 0.0
    %7858 = vmatprep.subr.mxu0 0.0
    %7859 = vmatpush1.msra.mxu0 0.0
    %7860 = vmatprep.subr.mxu0 0.0
    %7861 = vmatpush1.msra.mxu0 0.0
    %7862 = vmatprep.mubr.f32.mxu0 0.0
    %7863 = vmatmul.mubr.f32.gmra.mrb[0].mxu0 %v7796
    %v7864 = vpop.f32.mrb[0].mxu0
    %v7865 = vadd.f32 %v7794, %v7864
    %v7866 = vpop.f32.mrb[0].mxu0
    %7867 = vdwg.mxu0
    %v7868 = vadd.f32 %v6273, %v7865
    %v7869 = vld [vmem:[#allocation2 + $0x250] sm:$0x1]
    %v7870 = vld [vmem:[#allocation2 + $0x258] sm:$0x1]
    %v7871 = vsel %vm48, %v7868, 0.0
    %7872 = vadd.xlane.f32.xlu0 %v7871
    %v7873 = vpop.xlane.xlu0 %7872
    %v7874 = vmul.f32 %v7873, %v1834
    %v7875 = vsub.f32 %v7868, %v7874
    %v7876 = vmul.f32 %v7875, %v7875
    %v7877 = vsel %vm48, %v7876, 0.0
    %7878 = vadd.xlane.f32.xlu0 %v7877
    %v7879 = vpop.xlane.xlu0 %7878
    %v7880 = vmul.f32 %v7879, %v1834
    %v7881 = vadd.f32 %v7880, 1e-05
    %v7882 = vrsqrt.pop %v7881
    %v7883 = vmul.f32 %v7875, %v7882
    %v7884 = vlaneseq
    %v7885 = vshrl.u32 %v7884, 7
    %v7886 = vsub.s32 0, %v7885
    %v7887 = vrot.slane %v7869, %v7886
    %v7888 = vmul.f32 %v7883, %v7887
    %v7889 = vlaneseq
    %v7890 = vshrl.u32 %v7889, 7
    %v7891 = vsub.s32 0, %v7890
    %v7892 = vrot.slane %v7870, %v7891
    %v7893 = vadd.f32 %v7888, %v7892
    %v7894 = vld [vmem:[#allocation2 + $0x120] sm:$0xff]
    %v7895 = vld [vmem:[#allocation2 + $0x128] sm:$0xff]
    %v7896 = vld [vmem:[#allocation2 + $0x130] sm:$0xff]
    %v7897 = vld [vmem:[#allocation2 + $0x138] sm:$0xff]
    %v7898 = vld [vmem:[#allocation2 + $0x260] sm:$0x1]
    %v7899 = vlaneseq
    %v7900 = vshrl.u32 %v7899, 7
    %v7901 = vsub.s32 0, %v7900
    %v7902 = vrot.slane %v7898, %v7901
    %v7904 = vsel %vm48, %v7893, 0
    %7906 = vmatprep.subr.mxu0 0.0
    %7907 = vmatpush1.msra.mxu0 %v7894
    %7908 = vmatprep.subr.mxu0 0.0
    %7909 = vmatpush1.msra.mxu0 %v7895
    %7910 = vmatprep.subr.mxu0 0.0
    %7911 = vmatpush1.msra.mxu0 %v7896
    %7912 = vmatprep.subr.mxu0 0.0
    %7913 = vmatpush1.msra.mxu0 %v7897
    %7914 = vmatprep.subr.mxu0 0.0
    %7915 = vmatpush1.msra.mxu0 0.0
    %7916 = vmatprep.subr.mxu0 0.0
    %7917 = vmatpush1.msra.mxu0 0.0
    %7918 = vmatprep.subr.mxu0 0.0
    %7919 = vmatpush1.msra.mxu0 0.0
    %7920 = vmatprep.subr.mxu0 0.0
    %7921 = vmatpush1.msra.mxu0 0.0
    %7922 = vmatprep.subr.mxu0 0.0
    %7923 = vmatpush1.msra.mxu0 0.0
    %7924 = vmatprep.subr.mxu0 0.0
    %7925 = vmatpush1.msra.mxu0 0.0
    %7926 = vmatprep.subr.mxu0 0.0
    %7927 = vmatpush1.msra.mxu0 0.0
    %7928 = vmatprep.subr.mxu0 0.0
    %7929 = vmatpush1.msra.mxu0 0.0
    %7930 = vmatprep.subr.mxu0 0.0
    %7931 = vmatpush1.msra.mxu0 0.0
    %7932 = vmatprep.subr.mxu0 0.0
    %7933 = vmatpush1.msra.mxu0 0.0
    %7934 = vmatprep.subr.mxu0 0.0
    %7935 = vmatpush1.msra.mxu0 0.0
    %7936 = vmatprep.subr.mxu0 0.0
    %7937 = vmatpush1.msra.mxu0 0.0
    %7938 = vmatprep.subr.mxu0 0.0
    %7939 = vmatpush1.msra.mxu0 0.0
    %7940 = vmatprep.subr.mxu0 0.0
    %7941 = vmatpush1.msra.mxu0 0.0
    %7942 = vmatprep.subr.mxu0 0.0
    %7943 = vmatpush1.msra.mxu0 0.0
    %7944 = vmatprep.subr.mxu0 0.0
    %7945 = vmatpush1.msra.mxu0 0.0
    %7946 = vmatprep.subr.mxu0 0.0
    %7947 = vmatpush1.msra.mxu0 0.0
    %7948 = vmatprep.subr.mxu0 0.0
    %7949 = vmatpush1.msra.mxu0 0.0
    %7950 = vmatprep.subr.mxu0 0.0
    %7951 = vmatpush1.msra.mxu0 0.0
    %7952 = vmatprep.subr.mxu0 0.0
    %7953 = vmatpush1.msra.mxu0 0.0
    %7954 = vmatprep.subr.mxu0 0.0
    %7955 = vmatpush1.msra.mxu0 0.0
    %7956 = vmatprep.subr.mxu0 0.0
    %7957 = vmatpush1.msra.mxu0 0.0
    %7958 = vmatprep.subr.mxu0 0.0
    %7959 = vmatpush1.msra.mxu0 0.0
    %7960 = vmatprep.subr.mxu0 0.0
    %7961 = vmatpush1.msra.mxu0 0.0
    %7962 = vmatprep.subr.mxu0 0.0
    %7963 = vmatpush1.msra.mxu0 0.0
    %7964 = vmatprep.subr.mxu0 0.0
    %7965 = vmatpush1.msra.mxu0 0.0
    %7966 = vmatprep.subr.mxu0 0.0
    %7967 = vmatpush1.msra.mxu0 0.0
    %7968 = vmatprep.subr.mxu0 0.0
    %7969 = vmatpush1.msra.mxu0 0.0
    %7970 = vmatprep.mubr.f32.mxu0 0.0
    %7971 = vmatmul.mubr.f32.gmra.mrb[0].mxu0 %v7904
    %v7972 = vpop.f32.mrb[0].mxu0
    %v7973 = vadd.f32 %v7902, %v7972
    %v7974 = vpop.f32.mrb[0].mxu0
    %7975 = vdwg.mxu0
    %v7976 = vmul.f32 %v7973, %v7973
    %v7977 = vmul.f32 %v7973, %v7976
    %v7978 = vmul.f32 %v7977, 0.044715
    %v7979 = vadd.f32 %v7973, %v7978
    %v7980 = vmul.f32 %v7979, 0.7978846
    %v7981 = vtanh.pop %v7980
    %v7982 = vadd.f32 %v7981, 1.0
    %v7983 = vmul.f32 %v7982, 0.5
    %v7984 = vmul.f32 %v7973, %v7983
    %v7985 = vld [vmem:[#allocation2 + $0x140] sm:$0xff]
    %v7986 = vld [vmem:[#allocation2 + $0x148] sm:$0xff]
    %v7987 = vld [vmem:[#allocation2 + $0x150] sm:$0xff]
    %v7988 = vld [vmem:[#allocation2 + $0x158] sm:$0xff]
    %v7989 = vld [vmem:[#allocation2 + $0x160] sm:$0xff]
    %v7990 = vld [vmem:[#allocation2 + $0x168] sm:$0xff]
    %v7991 = vld [vmem:[#allocation2 + $0x170] sm:$0xff]
    %v7992 = vld [vmem:[#allocation2 + $0x178] sm:$0xff]
    %v7993 = vld [vmem:[#allocation2 + $0x268] sm:$0x1]
    %v7994 = vlaneseq
    %v7995 = vshrl.u32 %v7994, 7
    %v7996 = vsub.s32 0, %v7995
    %v7997 = vrot.slane %v7993, %v7996
    %v7999 = vsel %vm1959, %v7984, 0
    %8001 = vmatprep.subr.mxu0 0.0
    %8002 = vmatpush1.msra.mxu0 %v7985
    %8003 = vmatprep.subr.mxu0 0.0
    %8004 = vmatpush1.msra.mxu0 %v7986
    %8005 = vmatprep.subr.mxu0 0.0
    %8006 = vmatpush1.msra.mxu0 %v7987
    %8007 = vmatprep.subr.mxu0 0.0
    %8008 = vmatpush1.msra.mxu0 %v7988
    %8009 = vmatprep.subr.mxu0 0.0
    %8010 = vmatpush1.msra.mxu0 %v7989
    %8011 = vmatprep.subr.mxu0 0.0
    %8012 = vmatpush1.msra.mxu0 %v7990
    %8013 = vmatprep.subr.mxu0 0.0
    %8014 = vmatpush1.msra.mxu0 %v7991
    %8015 = vmatprep.subr.mxu0 0.0
    %8016 = vmatpush1.msra.mxu0 %v7992
    %8017 = vmatprep.subr.mxu0 0.0
    %8018 = vmatpush1.msra.mxu0 0.0
    %8019 = vmatprep.subr.mxu0 0.0
    %8020 = vmatpush1.msra.mxu0 0.0
    %8021 = vmatprep.subr.mxu0 0.0
    %8022 = vmatpush1.msra.mxu0 0.0
    %8023 = vmatprep.subr.mxu0 0.0
    %8024 = vmatpush1.msra.mxu0 0.0
    %8025 = vmatprep.subr.mxu0 0.0
    %8026 = vmatpush1.msra.mxu0 0.0
    %8027 = vmatprep.subr.mxu0 0.0
    %8028 = vmatpush1.msra.mxu0 0.0
    %8029 = vmatprep.subr.mxu0 0.0
    %8030 = vmatpush1.msra.mxu0 0.0
    %8031 = vmatprep.subr.mxu0 0.0
    %8032 = vmatpush1.msra.mxu0 0.0
    %8033 = vmatprep.subr.mxu0 0.0
    %8034 = vmatpush1.msra.mxu0 0.0
    %8035 = vmatprep.subr.mxu0 0.0
    %8036 = vmatpush1.msra.mxu0 0.0
    %8037 = vmatprep.subr.mxu0 0.0
    %8038 = vmatpush1.msra.mxu0 0.0
    %8039 = vmatprep.subr.mxu0 0.0
    %8040 = vmatpush1.msra.mxu0 0.0
    %8041 = vmatprep.subr.mxu0 0.0
    %8042 = vmatpush1.msra.mxu0 0.0
    %8043 = vmatprep.subr.mxu0 0.0
    %8044 = vmatpush1.msra.mxu0 0.0
    %8045 = vmatprep.subr.mxu0 0.0
    %8046 = vmatpush1.msra.mxu0 0.0
    %8047 = vmatprep.subr.mxu0 0.0
    %8048 = vmatpush1.msra.mxu0 0.0
    %8049 = vmatprep.subr.mxu0 0.0
    %8050 = vmatpush1.msra.mxu0 0.0
    %8051 = vmatprep.subr.mxu0 0.0
    %8052 = vmatpush1.msra.mxu0 0.0
    %8053 = vmatprep.subr.mxu0 0.0
    %8054 = vmatpush1.msra.mxu0 0.0
    %8055 = vmatprep.subr.mxu0 0.0
    %8056 = vmatpush1.msra.mxu0 0.0
    %8057 = vmatprep.subr.mxu0 0.0
    %8058 = vmatpush1.msra.mxu0 0.0
    %8059 = vmatprep.subr.mxu0 0.0
    %8060 = vmatpush1.msra.mxu0 0.0
    %8061 = vmatprep.subr.mxu0 0.0
    %8062 = vmatpush1.msra.mxu0 0.0
    %8063 = vmatprep.subr.mxu0 0.0
    %8064 = vmatpush1.msra.mxu0 0.0
    %8065 = vmatprep.mubr.f32.mxu0 0.0
    %8066 = vmatmul.mubr.f32.gmra.mrb[0].mxu0 %v7999
    %v8067 = vpop.f32.mrb[0].mxu0
    %v8068 = vadd.f32 %v7997, %v8067
    %v8069 = vpop.f32.mrb[0].mxu0
    %8070 = vdwg.mxu0
    %v8071 = vadd.f32 %v7893, %v8068
    %v8072 = vld [vmem:[#allocation2 + $0x270] sm:$0x1]
    %v8073 = vld [vmem:[#allocation2 + $0x278] sm:$0x1]
    %v8074 = vsel %vm48, %v8071, 0.0
    %8075 = vadd.xlane.f32.xlu0 %v8074
    %v8076 = vpop.xlane.xlu0 %8075
    %v8077 = vmul.f32 %v8076, %v1834
    %v8078 = vsub.f32 %v8071, %v8077
    %v8079 = vmul.f32 %v8078, %v8078
    %v8080 = vsel %vm48, %v8079, 0.0
    %8081 = vadd.xlane.f32.xlu0 %v8080
    %v8082 = vpop.xlane.xlu0 %8081
    %v8083 = vmul.f32 %v8082, %v1834
    %v8084 = vadd.f32 %v8083, 1e-05
    %v8085 = vrsqrt.pop %v8084
    %v8086 = vmul.f32 %v8078, %v8085
    %v8087 = vlaneseq
    %v8088 = vshrl.u32 %v8087, 7
    %v8089 = vsub.s32 0, %v8088
    %v8090 = vrot.slane %v8072, %v8089
    %v8091 = vmul.f32 %v8086, %v8090
    %v8092 = vlaneseq
    %v8093 = vshrl.u32 %v8092, 7
    %v8094 = vsub.s32 0, %v8093
    %v8095 = vrot.slane %v8073, %v8094
    %v8096 = vadd.f32 %v8091, %v8095
    %v8097 = vadd.f32 %v6439, %v7779
    %v8098 = vld [vmem:[#allocation2 + $0x180] sm:$0xff]
    %v8099 = vld [vmem:[#allocation2 + $0x188] sm:$0xff]
    %v8100 = vld [vmem:[#allocation2 + $0x190] sm:$0xff]
    %v8101 = vld [vmem:[#allocation2 + $0x198] sm:$0xff]
    %v8103 = vsel %vm48, %v8096, 0
    %8105 = vmatprep.subr.mxu0 0.0
    %8106 = vmatpush1.msra.mxu0 %v8098
    %8107 = vmatprep.subr.mxu0 0.0
    %8108 = vmatpush1.msra.mxu0 %v8099
    %8109 = vmatprep.subr.mxu0 0.0
    %8110 = vmatpush1.msra.mxu0 %v8100
    %8111 = vmatprep.subr.mxu0 0.0
    %8112 = vmatpush1.msra.mxu0 %v8101
    %8113 = vmatprep.subr.mxu0 0.0
    %8114 = vmatpush1.msra.mxu0 0.0
    %8115 = vmatprep.subr.mxu0 0.0
    %8116 = vmatpush1.msra.mxu0 0.0
    %8117 = vmatprep.subr.mxu0 0.0
    %8118 = vmatpush1.msra.mxu0 0.0
    %8119 = vmatprep.subr.mxu0 0.0
    %8120 = vmatpush1.msra.mxu0 0.0
    %8121 = vmatprep.subr.mxu0 0.0
    %8122 = vmatpush1.msra.mxu0 0.0
    %8123 = vmatprep.subr.mxu0 0.0
    %8124 = vmatpush1.msra.mxu0 0.0
    %8125 = vmatprep.subr.mxu0 0.0
    %8126 = vmatpush1.msra.mxu0 0.0
    %8127 = vmatprep.subr.mxu0 0.0
    %8128 = vmatpush1.msra.mxu0 0.0
    %8129 = vmatprep.subr.mxu0 0.0
    %8130 = vmatpush1.msra.mxu0 0.0
    %8131 = vmatprep.subr.mxu0 0.0
    %8132 = vmatpush1.msra.mxu0 0.0
    %8133 = vmatprep.subr.mxu0 0.0
    %8134 = vmatpush1.msra.mxu0 0.0
    %8135 = vmatprep.subr.mxu0 0.0
    %8136 = vmatpush1.msra.mxu0 0.0
    %8137 = vmatprep.subr.mxu0 0.0
    %8138 = vmatpush1.msra.mxu0 0.0
    %8139 = vmatprep.subr.mxu0 0.0
    %8140 = vmatpush1.msra.mxu0 0.0
    %8141 = vmatprep.subr.mxu0 0.0
    %8142 = vmatpush1.msra.mxu0 0.0
    %8143 = vmatprep.subr.mxu0 0.0
    %8144 = vmatpush1.msra.mxu0 0.0
    %8145 = vmatprep.subr.mxu0 0.0
    %8146 = vmatpush1.msra.mxu0 0.0
    %8147 = vmatprep.subr.mxu0 0.0
    %8148 = vmatpush1.msra.mxu0 0.0
    %8149 = vmatprep.subr.mxu0 0.0
    %8150 = vmatpush1.msra.mxu0 0.0
    %8151 = vmatprep.subr.mxu0 0.0
    %8152 = vmatpush1.msra.mxu0 0.0
    %8153 = vmatprep.subr.mxu0 0.0
    %8154 = vmatpush1.msra.mxu0 0.0
    %8155 = vmatprep.subr.mxu0 0.0
    %8156 = vmatpush1.msra.mxu0 0.0
    %8157 = vmatprep.subr.mxu0 0.0
    %8158 = vmatpush1.msra.mxu0 0.0
    %8159 = vmatprep.subr.mxu0 0.0
    %8160 = vmatpush1.msra.mxu0 0.0
    %8161 = vmatprep.subr.mxu0 0.0
    %8162 = vmatpush1.msra.mxu0 0.0
    %8163 = vmatprep.subr.mxu0 0.0
    %8164 = vmatpush1.msra.mxu0 0.0
    %8165 = vmatprep.subr.mxu0 0.0
    %8166 = vmatpush1.msra.mxu0 0.0
    %8167 = vmatprep.subr.mxu0 0.0
    %8168 = vmatpush1.msra.mxu0 0.0
    %8169 = vmatprep.mubr.f32.mxu0 0.0
    %8170 = vmatmul.mubr.f32.gmra.mrb[0].mxu0 %v8103
    %v8171 = vpop.f32.mrb[0].mxu0
    %v8172 = vadd.f32 0.0, %v8171
    %v8173 = vpop.f32.mrb[0].mxu0
    %8174 = vdwg.mxu0
    %8176 = vrot.lane.b32.xlu0 %v8172, 32
    %v8177 = vpop.permute.xlu0 %8176
    %v8179 = vadd.f32 %v8097, %v8177
    %v8180 = vmul.f32 %v8179, %v8179
    %v8181 = vmul.f32 %v8179, %v8180
    %v8182 = vmul.f32 %v8181, 0.044715
    %v8183 = vadd.f32 %v8179, %v8182
    %v8184 = vmul.f32 %v8183, 0.7978846
    %v8185 = vtanh.pop %v8184
    %v8186 = vadd.f32 %v8185, 1.0
    %v8187 = vmul.f32 %v8186, 0.5
    %v8188 = vmul.f32 %v8179, %v8187
    %v8189 = vld [vmem:[#allocation2 + $0x1a0] sm:$0xff]
    %v8190 = vld [vmem:[#allocation2 + $0x1a8] sm:$0xff]
    %v8191 = vld [vmem:[#allocation2 + $0x1b0] sm:$0xff]
    %v8192 = vld [vmem:[#allocation2 + $0x1b8] sm:$0xff]
    %v8193 = vld [vmem:[#allocation2 + $0x280] sm:$0x1]
    %v8194 = vlaneseq
    %v8195 = vshrl.u32 %v8194, 7
    %v8196 = vsub.s32 0, %v8195
    %v8197 = vrot.slane %v8193, %v8196
    %8199 = vrot.lane.b32.xlu0 %v8188, 96
    %v8200 = vpop.permute.xlu0 %8199
    %v8201 = vsel %vm48, %v8200, 0
    %8203 = vmatprep.subr.mxu0 0.0
    %8204 = vmatpush1.msra.mxu0 %v8189
    %8205 = vmatprep.subr.mxu0 0.0
    %8206 = vmatpush1.msra.mxu0 %v8190
    %8207 = vmatprep.subr.mxu0 0.0
    %8208 = vmatpush1.msra.mxu0 %v8191
    %8209 = vmatprep.subr.mxu0 0.0
    %8210 = vmatpush1.msra.mxu0 %v8192
    %8211 = vmatprep.subr.mxu0 0.0
    %8212 = vmatpush1.msra.mxu0 0.0
    %8213 = vmatprep.subr.mxu0 0.0
    %8214 = vmatpush1.msra.mxu0 0.0
    %8215 = vmatprep.subr.mxu0 0.0
    %8216 = vmatpush1.msra.mxu0 0.0
    %8217 = vmatprep.subr.mxu0 0.0
    %8218 = vmatpush1.msra.mxu0 0.0
    %8219 = vmatprep.subr.mxu0 0.0
    %8220 = vmatpush1.msra.mxu0 0.0
    %8221 = vmatprep.subr.mxu0 0.0
    %8222 = vmatpush1.msra.mxu0 0.0
    %8223 = vmatprep.subr.mxu0 0.0
    %8224 = vmatpush1.msra.mxu0 0.0
    %8225 = vmatprep.subr.mxu0 0.0
    %8226 = vmatpush1.msra.mxu0 0.0
    %8227 = vmatprep.subr.mxu0 0.0
    %8228 = vmatpush1.msra.mxu0 0.0
    %8229 = vmatprep.subr.mxu0 0.0
    %8230 = vmatpush1.msra.mxu0 0.0
    %8231 = vmatprep.subr.mxu0 0.0
    %8232 = vmatpush1.msra.mxu0 0.0
    %8233 = vmatprep.subr.mxu0 0.0
    %8234 = vmatpush1.msra.mxu0 0.0
    %8235 = vmatprep.subr.mxu0 0.0
    %8236 = vmatpush1.msra.mxu0 0.0
    %8237 = vmatprep.subr.mxu0 0.0
    %8238 = vmatpush1.msra.mxu0 0.0
    %8239 = vmatprep.subr.mxu0 0.0
    %8240 = vmatpush1.msra.mxu0 0.0
    %8241 = vmatprep.subr.mxu0 0.0
    %8242 = vmatpush1.msra.mxu0 0.0
    %8243 = vmatprep.subr.mxu0 0.0
    %8244 = vmatpush1.msra.mxu0 0.0
    %8245 = vmatprep.subr.mxu0 0.0
    %8246 = vmatpush1.msra.mxu0 0.0
    %8247 = vmatprep.subr.mxu0 0.0
    %8248 = vmatpush1.msra.mxu0 0.0
    %8249 = vmatprep.subr.mxu0 0.0
    %8250 = vmatpush1.msra.mxu0 0.0
    %8251 = vmatprep.subr.mxu0 0.0
    %8252 = vmatpush1.msra.mxu0 0.0
    %8253 = vmatprep.subr.mxu0 0.0
    %8254 = vmatpush1.msra.mxu0 0.0
    %8255 = vmatprep.subr.mxu0 0.0
    %8256 = vmatpush1.msra.mxu0 0.0
    %8257 = vmatprep.subr.mxu0 0.0
    %8258 = vmatpush1.msra.mxu0 0.0
    %8259 = vmatprep.subr.mxu0 0.0
    %8260 = vmatpush1.msra.mxu0 0.0
    %8261 = vmatprep.subr.mxu0 0.0
    %8262 = vmatpush1.msra.mxu0 0.0
    %8263 = vmatprep.subr.mxu0 0.0
    %8264 = vmatpush1.msra.mxu0 0.0
    %8265 = vmatprep.subr.mxu0 0.0
    %8266 = vmatpush1.msra.mxu0 0.0
    %8267 = vmatprep.mubr.f32.mxu0 0.0
    %8268 = vmatmul.mubr.f32.gmra.mrb[0].mxu0 %v8201
    %v8269 = vpop.f32.mrb[0].mxu0
    %v8270 = vadd.f32 %v8197, %v8269
    %v8271 = vpop.f32.mrb[0].mxu0
    %8272 = vdwg.mxu0
    %v8273 = vxor.u32 %v8270, 2147483648
    %v8274 = vmul.f32 %v8273, 1.442695
    %v8275 = vpow.pop %v8274
    %v8276 = vadd.f32 %v8275, 1.0
    %v8277 = vrcp.pop %v8276
    %v8278 = vmul.f32 1.0, %v8277
    %v8279 = vsub.f32 %v8096, %v6273
    %8281 = vset.pattern.permute.xlu0 0
    %8282 = vperm.xlu0 %8281, %v6552
    %v8283 = vpop.permute.xlu0 %8282
    %v8285 = vmul.f32 %v8283, %v8279
    %v8286 = vadd.f32 %v6273, %v8285
    %v8287 = vsub.f32 %v8278, 1.0
    %v8288 = vmul.f32 %v6552, %v8287
    %v8289 = vadd.f32 %v8288, 1.0
    %v8290 = vmul.f32 %v6277, %v8289
    %v8291 = vadd.f32 %v6278, %v6552
    %s8292 = scalar_lea.vmem [#allocation5], 32
    %8293 = vst.msk [vmem:[%s8292] sm:$0xff] %vm48, %v8286
    %v8294 = vmul.f32 %v8291, 0.25
    %v8295 = vmin.f32 %v8294, 1.0
    %vm8296 = vcmp.eq.s32.totalorder %v829, 0
    %8298 = vset.pattern.permute.xlu0 0
    %8299 = vperm.xlu0 %8298, %v8290
    %v8300 = vpop.permute.xlu0 %8299
    %v8302 = vsel %vm8296, %v8300, 0.0
    %vm8303 = vcmp.eq.s32.totalorder %v829, 1
    %v8304 = vsub.f32 1.0, %v8290
    %v8305 = vmul.f32 %v8295, 0.5
    %v8306 = vadd.f32 %v8305, 0.5
    %v8307 = vmul.f32 %v8304, %v8306
    %8309 = vset.pattern.permute.xlu0 0
    %8310 = vperm.xlu0 %8309, %v8307
    %v8311 = vpop.permute.xlu0 %8310
    %v8313 = vsel %vm8303, %v8311, %v8302
    %vm8314 = vcmp.eq.s32.totalorder %v829, 2
    %8316 = vset.pattern.permute.xlu0 0
    %8317 = vperm.xlu0 %8316, %v8291
    %v8318 = vpop.permute.xlu0 %8317
    %v8320 = vsel %vm8314, %v8318, %v8313
    %8321 = vst [vmem:[#allocation6] sm:$0xff] %v8320
    // Predicated region
    $region18: #{_proof_search_device.1} parent=1 // pred_check
      _
    $region19: #{_proof_search_device.1} parent=1 // pred_check_branch
      %8323 = sbr.rel (0) target = $region21
    $region20: #{_proof_search_device.1} parent=1 // pred_region
      %s8325 = ssub.s32 640, 640
      %8326 = vsyncadd [#allocation4], %s8325
      %s8327 = sshll.u32 [#allocation5], 4
      %s8328 = int_to_ptr.vmem [resolvable:$true] %s8327
      %8333 = dma.vmem_to_hbm [thread:$0]  %s8328, 640, %s3, [#allocation4], 128, 128, 8
    $region21: #{_proof_search_device.1} parent=1 // pred_fallthru
      _
    // Predicated region
    $region22: #{_proof_search_device.1} parent=1 // pred_check
      _
    $region23: #{_proof_search_device.1} parent=1 // pred_check_branch
      %8335 = sbr.rel (0) target = $region25
    $region24: #{_proof_search_device.1} parent=1 // pred_region
      %s8337 = ssub.s32 128, 128
      %8338 = vsyncadd [#allocation7], %s8337
      %s8340 = sshll.u32 [#allocation6], 4
      %s8341 = int_to_ptr.vmem [resolvable:$true] %s8340
      %8343 = dma.vmem_to_hbm [thread:$0]  %s8341, 128, %s4, [#allocation7]
    $region25: #{_proof_search_device.1} parent=1 // pred_fallthru
      _
    // Predicated region
    $region26: #{_proof_search_device.1} parent=1 // pred_check
      _
    $region27: #{_proof_search_device.1} parent=1 // pred_check_branch
      %8345 = sbr.rel (0) target = $region29
    $region28: #{_proof_search_device.1} parent=1 // pred_region
      %8346 = dma.done [#allocation4], 640
    $region29: #{_proof_search_device.1} parent=1 // pred_fallthru
      _
    // Predicated region
    $region30: #{_proof_search_device.1} parent=1 // pred_check
      _
    $region31: #{_proof_search_device.1} parent=1 // pred_check_branch
      %8348 = sbr.rel (0) target = $region33
    $region32: #{_proof_search_device.1} parent=1 // pred_region
      %8349 = dma.done [#allocation7], 128
    $region33: #{_proof_search_device.1} parent=1 // pred_fallthru
      _
    %8350 = vsyncpa [#allocation3], 1
    %8351 = vsyncpa [#allocation4], 1
    %8352 = vsyncpa [#allocation7], 1

</llo_original>
